<compile_context>
chip_gen: v6e
topology: v6e:2x2x1
jax: 0.10.0
libtpu: 0.0.40
codegen_flags: <defaults>
</compile_context>

<pallas_src>
import math

import jax
import jax.numpy as jnp
from jax import lax
from jax.experimental import pallas as pl
from jax.experimental.pallas import tpu as pltpu

_LANE = 128
_SUBLANE = 8


def _epsp_decoder_kernel(x_ref, w_ref, b_ref, o_ref):
    # x_ref: (TR, G*A*S)  packed activations (G batch rows per packed row)
    # w_ref: (G*A*S, G*A) block-diagonal grouped-conv weights (resident)
    # b_ref: (1, G*A)     tiled bias (resident)
    # o_ref: (TR, G*A)    packed outputs
    x = x_ref[...].astype(jnp.float32)
    w = w_ref[...].astype(jnp.float32)
    b = b_ref[...].astype(jnp.float32)
    # Grouped conv (per-channel dot over S) + segment packing fused into one
    # block-diagonal matmul; f32 accumulate, full f32 precision.
    acc = jnp.dot(x, w, preferred_element_type=jnp.float32,
                  precision=lax.Precision.HIGHEST)          # (TR, G*A)
    o_ref[...] = jnp.tanh(acc + b).astype(o_ref.dtype)


def epsp_decoder(spine_act, weight, bias, act_dim, spine_dim, *, block_rows=512):
    """EpspDecoder forward.

    spine_act: (..., act_dim*spine_dim) float array (any leading batch shape).
    weight:    (act_dim, spine_dim) grouped-conv weights (Conv1d weight
               (A, 1, S) may be passed; it is flattened identically).
    bias:      (act_dim,)
    Returns:   (B, act_dim) with B = prod(leading dims).
    block_rows must be a multiple of 8 (rows of the packed slab per grid step).
    """
    A, S = act_dim, spine_dim
    x = spine_act.reshape(-1, A * S)          # free, contiguous
    B = x.shape[0]
    dt = x.dtype

    # Pack G batch rows per kernel row so the *output* last dim (G*A) is a
    # multiple of 128 lanes (lane-dense stores); the input row width G*A*S is
    # then automatically a multiple of 128 too (lane-dense loads).
    G = _LANE // math.gcd(A, _LANE)
    GA = G * A
    L = GA * S

    # Pad batch to a multiple of 8*G: every block is a clean
    # (mult-of-8, mult-of-128) tile and the matmul M-dim is always >= 8.
    pad_to = _SUBLANE * G
    Bp = ((B + pad_to - 1) // pad_to) * pad_to
    if Bp != B:
        x = jnp.concatenate([x, jnp.zeros((Bp - B, A * S), dtype=dt)], axis=0)
    R = Bp // G
    x_packed = x.reshape(R, L)                # free, contiguous

    # Batch tile over the packed rows; biggest tile that fits comfortably in
    # VMEM with double buffering (block_rows=512 -> ~10 MiB total).
    TR = R if R <= block_rows else block_rows
    grid = (pl.cdiv(R, TR),)

    # Block-diagonal grouped-conv weights:
    #   w_big[g*A*S + a*S + s, g*A + a] = weight[a, s]
    w_flat = weight.reshape(A * S).astype(dt)
    rows = jnp.arange(A * S)
    w_bd = jnp.zeros((A * S, A), dtype=dt).at[rows, rows // S].set(w_flat)
    w_big = jnp.kron(jnp.eye(G, dtype=dt), w_bd)             # (L, GA)
    b_big = jnp.tile(bias.reshape(1, A).astype(dt), (1, G))  # (1, GA)

    out_packed = pl.pallas_call(
        _epsp_decoder_kernel,
        out_shape=jax.ShapeDtypeStruct((R, GA), dt),
        grid=grid,
        in_specs=[
            pl.BlockSpec((TR, L), lambda i: (i, 0)),    # streamed activations
            pl.BlockSpec((L, GA), lambda i: (0, 0)),    # resident weights
            pl.BlockSpec((1, GA), lambda i: (0, 0)),    # resident bias
        ],
        out_specs=pl.BlockSpec((TR, GA), lambda i: (i, 0)),
        compiler_params=pltpu.CompilerParams(
            dimension_semantics=("parallel",),          # megacore on v7x
            vmem_limit_bytes=32 * 1024 * 1024),
    )(x_packed, w_big, b_big)

    # (R, G*A) -> (Bp, A) is a free contiguous un-packing; drop padding rows.
    return out_packed.reshape(Bp, A)[:B]


if __name__ == "__main__":
    act_dim, spine_dim, batch = 4, 16, 2

    key = jax.random.PRNGKey(0)
    k_x, k_w, k_b, k_x2 = jax.random.split(key, 4)

    # Input: population activity, flattened like the PyTorch module expects.
    spine_act = jax.random.normal(k_x, (batch, act_dim * spine_dim),
                                  dtype=jnp.float32)

    # Param init mimicking Conv1d default (uniform +-1/sqrt(fan_in)),
    # fan_in = (in_channels/groups) * kernel_size = spine_dim.
    bound = 1.0 / math.sqrt(spine_dim)
    weight = jax.random.uniform(k_w, (act_dim, spine_dim),
                                minval=-bound, maxval=bound, dtype=jnp.float32)
    bias = jax.random.uniform(k_b, (act_dim,),
                              minval=-bound, maxval=bound, dtype=jnp.float32)

    def reference(sa):
        x3 = sa.reshape(-1, act_dim, spine_dim)
        return jnp.tanh(jnp.sum(x3 * weight[None, :, :], axis=-1) + bias[None, :])

    # Small demo shape (matches the module's intended usage).
    out = jax.block_until_ready(
        epsp_decoder(spine_act, weight, bias, act_dim, spine_dim))
    assert out.shape == (batch, act_dim)
    assert jnp.allclose(out, reference(spine_act), atol=1e-5, rtol=1e-5)

    # Larger batch: exercises zero-padding, lane-dense packing and the
    # multi-step double-buffered grid (block_rows=8 -> 4 pipelined steps).
    batch2 = 1000
    spine_act2 = jax.random.normal(k_x2, (batch2, act_dim * spine_dim),
                                   dtype=jnp.float32)
    out2 = jax.block_until_ready(
        epsp_decoder(spine_act2, weight, bias, act_dim, spine_dim, block_rows=8))
    assert out2.shape == (batch2, act_dim)
    assert jnp.allclose(out2, reference(spine_act2), atol=1e-5, rtol=1e-5)

    print("KERNEL_OK")
</pallas_src>

<mosaic_0001>
module attributes {stable_mosaic.version = 11 : i64} {
  func.func @_epsp_decoder_kernel(%arg0: i32, %arg1: memref<8x2048xf32, #tpu.memory_space<vmem>>, %arg2: memref<2048x128xf32, #tpu.memory_space<vmem>>, %arg3: memref<1x128xf32, #tpu.memory_space<vmem>>, %arg4: memref<8x128xf32, #tpu.memory_space<vmem>>) attributes {dimension_semantics = [#tpu.dimension_semantics<parallel>], iteration_bounds = array<i64: 1>, scalar_prefetch = 0 : i64, scratch_operands = 0 : i64, tpu.core_type = #tpu.core_type<tc>, window_params = [{transform_indices = @transform_0, window_bounds = array<i64: 8, 2048>}, {pipeline_mode = #tpu.pipeline_mode<synchronous>, transform_indices = @transform_1, window_bounds = array<i64: 2048, 128>}, {pipeline_mode = #tpu.pipeline_mode<synchronous>, transform_indices = @transform_2, window_bounds = array<i64: 1, 128>}, {transform_indices = @transform_3, window_bounds = array<i64: 8, 128>}]} {
    %c0 = arith.constant 0 : index
    %c0_0 = arith.constant 0 : index
    %0 = vector.load %arg1[%c0, %c0_0] : memref<8x2048xf32, #tpu.memory_space<vmem>>, vector<8x2048xf32>
    %c0_1 = arith.constant 0 : index
    %c0_2 = arith.constant 0 : index
    %1 = vector.load %arg2[%c0_1, %c0_2] : memref<2048x128xf32, #tpu.memory_space<vmem>>, vector<2048x128xf32>
    %c0_3 = arith.constant 0 : index
    %c0_4 = arith.constant 0 : index
    %2 = vector.load %arg3[%c0_3, %c0_4] : memref<1x128xf32, #tpu.memory_space<vmem>>, vector<1x128xf32>
    %cst = arith.constant dense<0.000000e+00> : vector<8x128xf32>
    %3 = tpu.matmul %0, %1, %cst {dimension_numbers = #tpu.dot_dimension_numbers<[1], [0], [0], [1], [0, 0, 1, 1], [], []>, precision = #tpu.contract_precision<fp32>} : vector<8x2048xf32>, vector<2048x128xf32>, vector<8x128xf32> -> vector<8x128xf32>
    %4 = vector.broadcast %2 : vector<1x128xf32> to vector<8x128xf32>
    %5 = arith.addf %3, %4 : vector<8x128xf32>
    %6 = math.tanh %5 : vector<8x128xf32>
    %c0_5 = arith.constant 0 : index
    %c0_6 = arith.constant 0 : index
    %7 = vector.load %arg4[%c0_5, %c0_6] : memref<8x128xf32, #tpu.memory_space<vmem>>, vector<8x128xf32>
    tpu.vector_store %arg4[%c0_5, %c0_6], %6 {strides = array<i32>} : memref<8x128xf32, #tpu.memory_space<vmem>>, vector<8x128xf32>,
    return
  }
  func.func @transform_0(%arg0: i32) -> (i32, i32) {
    %c0_i32 = arith.constant 0 : i32
    %c0_i32_0 = arith.constant 0 : i32
    return %arg0, %c0_i32 : i32, i32
  }
  func.func @transform_1(%arg0: i32) -> (i32, i32) {
    %c0_i32 = arith.constant 0 : i32
    %c0_i32_0 = arith.constant 0 : i32
    %c0_i32_1 = arith.constant 0 : i32
    return %c0_i32, %c0_i32_0 : i32, i32
  }
  func.func @transform_2(%arg0: i32) -> (i32, i32) {
    %c0_i32 = arith.constant 0 : i32
    %c0_i32_0 = arith.constant 0 : i32
    %c0_i32_1 = arith.constant 0 : i32
    return %c0_i32, %c0_i32_0 : i32, i32
  }
  func.func @transform_3(%arg0: i32) -> (i32, i32) {
    %c0_i32 = arith.constant 0 : i32
    %c0_i32_0 = arith.constant 0 : i32
    return %arg0, %c0_i32 : i32, i32
  }
}

</mosaic_0001>

<llo_original>
// kernel: tpu_custom_call.1
$region0: #{tpu_custom_call.1}
  #allocation0 [shape = 'u32[]', space=smem, size = 0x4, offset = 0x4, fixed_abs, tag = 'smem constant byte address 0x4 - core index']
  #allocation1 [shape = 'u32[144,128]{1,0:T(1,128)}', space=vmem, size = 0x12000, scoped, tag = 'internal scratch']
  %s0 = inlined_call_operand.hbm [shape: f32[8,2048], index: 0, kind: input, shape index: {}]
  %s1 = inlined_call_operand.hbm [shape: f32[2048,128], index: 1, kind: input, shape index: {}]
  %s2 = inlined_call_operand.vmem [shape: f32[1,128], index: 2, kind: input, shape index: {}]
  %s3 = inlined_call_operand.hbm [shape: f32[8,128], index: 3, kind: output, shape index: {}]
  %s4 = sld [smem:[#allocation0]]
  $region30: #{tpu_custom_call.1} parent=0
    _
  %s6 = ssub.s32 1, %s4
  %s7 = scalar_select 0, %s6, %s4
  $region1: #{tpu_custom_call.1} parent=0
    #allocation2 [shape = 'u8[65536]{0}', space=vmem, size = 0x10000, scoped, tag = 'input window, operand 0, single buffered']
    #allocation3 [shape = 's32[1]{0}', space=sflag, size = 0x4, scoped, tag = 'scoped memory for tpu_custom_call.1']
    #allocation4 [shape = 's32[1]{0}', space=sflag, size = 0x4, scoped, tag = 'scoped memory for tpu_custom_call.1']
    #allocation5 [shape = 'u8[1048576]{0}', space=vmem, size = 0x100000, scoped, tag = 'input window, operand 1, single buffered']
    #allocation6 [shape = 's32[1]{0}', space=sflag, size = 0x4, scoped, tag = 'scoped memory for tpu_custom_call.1']
    #allocation7 [shape = 'u8[4096]{0}', space=vmem, size = 0x1000, scoped, tag = 'output window, operand 0, single buffered']
    %8 = vsyncpa [#allocation3], 0
    %9 = vsyncpa [#allocation6], 0
    %10 = vsyncpa [#allocation4], 0
    // Predicated region
    $region2: #{tpu_custom_call.1} parent=1 // pred_check
      _
    $region3: #{tpu_custom_call.1} parent=1 // pred_check_branch
      %12 = sbr.rel (0) target = $region5
    $region4: #{tpu_custom_call.1} parent=1 // pred_region
      %s14 = ssub.s32 2048, 2048
      %15 = vsyncadd [#allocation3], %s14
      %s17 = sshll.u32 [#allocation2], 4
      %s18 = int_to_ptr.vmem [resolvable:$true] %s17
      %20 = dma.hbm_to_vmem [thread:$0]  %s0, 2048, %s18, [#allocation3]
    $region5: #{tpu_custom_call.1} parent=1 // pred_fallthru
      _
    // Predicated region
    $region6: #{tpu_custom_call.1} parent=1 // pred_check
      _
    $region7: #{tpu_custom_call.1} parent=1 // pred_check_branch
      %22 = sbr.rel (0) target = $region9
    $region8: #{tpu_custom_call.1} parent=1 // pred_region
      %s24 = ssub.s32 32768, 32768
      %25 = vsyncadd [#allocation6], %s24
      %s26 = sshll.u32 [#allocation5], 4
      %s27 = int_to_ptr.vmem [resolvable:$true] %s26
      %32 = dma.hbm_to_vmem [thread:$0]  %s1, 32768, %s27, [#allocation6], 128, 128, 8
    $region9: #{tpu_custom_call.1} parent=1 // pred_fallthru
      _
    // Predicated region
    $region10: #{tpu_custom_call.1} parent=1 // pred_check
      _
    $region11: #{tpu_custom_call.1} parent=1 // pred_check_branch
      %34 = sbr.rel (0) target = $region13
    $region12: #{tpu_custom_call.1} parent=1 // pred_region
      _
    $region13: #{tpu_custom_call.1} parent=1 // pred_fallthru
      _
    // Predicated region
    $region14: #{tpu_custom_call.1} parent=1 // pred_check
      _
    $region15: #{tpu_custom_call.1} parent=1 // pred_check_branch
      %36 = sbr.rel (0) target = $region17
    $region16: #{tpu_custom_call.1} parent=1 // pred_region
      %37 = dma.done [#allocation3], 2048
    $region17: #{tpu_custom_call.1} parent=1 // pred_fallthru
      _
    // Predicated region
    $region18: #{tpu_custom_call.1} parent=1 // pred_check
      _
    $region19: #{tpu_custom_call.1} parent=1 // pred_check_branch
      %39 = sbr.rel (0) target = $region21
    $region20: #{tpu_custom_call.1} parent=1 // pred_region
      %40 = dma.done [#allocation6], 32768
    $region21: #{tpu_custom_call.1} parent=1 // pred_fallthru
      _
    %v41 = vld [vmem:[#allocation2] sm:$0xff]
    %v42 = vld [vmem:[#allocation2 + $0x8] sm:$0xff]
    %v43 = vld [vmem:[#allocation2 + $0x10] sm:$0xff]
    %v44 = vld [vmem:[#allocation2 + $0x18] sm:$0xff]
    %v45 = vld [vmem:[#allocation2 + $0x20] sm:$0xff]
    %v46 = vld [vmem:[#allocation2 + $0x28] sm:$0xff]
    %v47 = vld [vmem:[#allocation2 + $0x30] sm:$0xff]
    %v48 = vld [vmem:[#allocation2 + $0x38] sm:$0xff]
    %v49 = vld [vmem:[#allocation2 + $0x40] sm:$0xff]
    %v50 = vld [vmem:[#allocation2 + $0x48] sm:$0xff]
    %v51 = vld [vmem:[#allocation2 + $0x50] sm:$0xff]
    %v52 = vld [vmem:[#allocation2 + $0x58] sm:$0xff]
    %v53 = vld [vmem:[#allocation2 + $0x60] sm:$0xff]
    %v54 = vld [vmem:[#allocation2 + $0x68] sm:$0xff]
    %v55 = vld [vmem:[#allocation2 + $0x70] sm:$0xff]
    %v56 = vld [vmem:[#allocation2 + $0x78] sm:$0xff]
    %v57 = vld [vmem:[#allocation5] sm:$0xff]
    %v58 = vld [vmem:[#allocation5 + $0x8] sm:$0xff]
    %v59 = vld [vmem:[#allocation5 + $0x10] sm:$0xff]
    %v60 = vld [vmem:[#allocation5 + $0x18] sm:$0xff]
    %v61 = vld [vmem:[#allocation5 + $0x20] sm:$0xff]
    %v62 = vld [vmem:[#allocation5 + $0x28] sm:$0xff]
    %v63 = vld [vmem:[#allocation5 + $0x30] sm:$0xff]
    %v64 = vld [vmem:[#allocation5 + $0x38] sm:$0xff]
    %v65 = vld [vmem:[#allocation5 + $0x40] sm:$0xff]
    %v66 = vld [vmem:[#allocation5 + $0x48] sm:$0xff]
    %v67 = vld [vmem:[#allocation5 + $0x50] sm:$0xff]
    %v68 = vld [vmem:[#allocation5 + $0x58] sm:$0xff]
    %v69 = vld [vmem:[#allocation5 + $0x60] sm:$0xff]
    %v70 = vld [vmem:[#allocation5 + $0x68] sm:$0xff]
    %v71 = vld [vmem:[#allocation5 + $0x70] sm:$0xff]
    %v72 = vld [vmem:[#allocation5 + $0x78] sm:$0xff]
    %v73 = vld [vmem:[#allocation5 + $0x80] sm:$0xff]
    %v74 = vld [vmem:[#allocation5 + $0x88] sm:$0xff]
    %v75 = vld [vmem:[#allocation5 + $0x90] sm:$0xff]
    %v76 = vld [vmem:[#allocation5 + $0x98] sm:$0xff]
    %v77 = vld [vmem:[#allocation5 + $0xa0] sm:$0xff]
    %v78 = vld [vmem:[#allocation5 + $0xa8] sm:$0xff]
    %v79 = vld [vmem:[#allocation5 + $0xb0] sm:$0xff]
    %v80 = vld [vmem:[#allocation5 + $0xb8] sm:$0xff]
    %v81 = vld [vmem:[#allocation5 + $0xc0] sm:$0xff]
    %v82 = vld [vmem:[#allocation5 + $0xc8] sm:$0xff]
    %v83 = vld [vmem:[#allocation5 + $0xd0] sm:$0xff]
    %v84 = vld [vmem:[#allocation5 + $0xd8] sm:$0xff]
    %v85 = vld [vmem:[#allocation5 + $0xe0] sm:$0xff]
    %v86 = vld [vmem:[#allocation5 + $0xe8] sm:$0xff]
    %v87 = vld [vmem:[#allocation5 + $0xf0] sm:$0xff]
    %v88 = vld [vmem:[#allocation5 + $0xf8] sm:$0xff]
    %v89 = vld [vmem:[#allocation5 + $0x100] sm:$0xff]
    %v90 = vld [vmem:[#allocation5 + $0x108] sm:$0xff]
    %v91 = vld [vmem:[#allocation5 + $0x110] sm:$0xff]
    %v92 = vld [vmem:[#allocation5 + $0x118] sm:$0xff]
    %v93 = vld [vmem:[#allocation5 + $0x120] sm:$0xff]
    %v94 = vld [vmem:[#allocation5 + $0x128] sm:$0xff]
    %v95 = vld [vmem:[#allocation5 + $0x130] sm:$0xff]
    %v96 = vld [vmem:[#allocation5 + $0x138] sm:$0xff]
    %v97 = vld [vmem:[#allocation5 + $0x140] sm:$0xff]
    %v98 = vld [vmem:[#allocation5 + $0x148] sm:$0xff]
    %v99 = vld [vmem:[#allocation5 + $0x150] sm:$0xff]
    %v100 = vld [vmem:[#allocation5 + $0x158] sm:$0xff]
    %v101 = vld [vmem:[#allocation5 + $0x160] sm:$0xff]
    %v102 = vld [vmem:[#allocation5 + $0x168] sm:$0xff]
    %v103 = vld [vmem:[#allocation5 + $0x170] sm:$0xff]
    %v104 = vld [vmem:[#allocation5 + $0x178] sm:$0xff]
    %v105 = vld [vmem:[#allocation5 + $0x180] sm:$0xff]
    %v106 = vld [vmem:[#allocation5 + $0x188] sm:$0xff]
    %v107 = vld [vmem:[#allocation5 + $0x190] sm:$0xff]
    %v108 = vld [vmem:[#allocation5 + $0x198] sm:$0xff]
    %v109 = vld [vmem:[#allocation5 + $0x1a0] sm:$0xff]
    %v110 = vld [vmem:[#allocation5 + $0x1a8] sm:$0xff]
    %v111 = vld [vmem:[#allocation5 + $0x1b0] sm:$0xff]
    %v112 = vld [vmem:[#allocation5 + $0x1b8] sm:$0xff]
    %v113 = vld [vmem:[#allocation5 + $0x1c0] sm:$0xff]
    %v114 = vld [vmem:[#allocation5 + $0x1c8] sm:$0xff]
    %v115 = vld [vmem:[#allocation5 + $0x1d0] sm:$0xff]
    %v116 = vld [vmem:[#allocation5 + $0x1d8] sm:$0xff]
    %v117 = vld [vmem:[#allocation5 + $0x1e0] sm:$0xff]
    %v118 = vld [vmem:[#allocation5 + $0x1e8] sm:$0xff]
    %v119 = vld [vmem:[#allocation5 + $0x1f0] sm:$0xff]
    %v120 = vld [vmem:[#allocation5 + $0x1f8] sm:$0xff]
    %v121 = vld [vmem:[#allocation5 + $0x200] sm:$0xff]
    %v122 = vld [vmem:[#allocation5 + $0x208] sm:$0xff]
    %v123 = vld [vmem:[#allocation5 + $0x210] sm:$0xff]
    %v124 = vld [vmem:[#allocation5 + $0x218] sm:$0xff]
    %v125 = vld [vmem:[#allocation5 + $0x220] sm:$0xff]
    %v126 = vld [vmem:[#allocation5 + $0x228] sm:$0xff]
    %v127 = vld [vmem:[#allocation5 + $0x230] sm:$0xff]
    %v128 = vld [vmem:[#allocation5 + $0x238] sm:$0xff]
    %v129 = vld [vmem:[#allocation5 + $0x240] sm:$0xff]
    %v130 = vld [vmem:[#allocation5 + $0x248] sm:$0xff]
    %v131 = vld [vmem:[#allocation5 + $0x250] sm:$0xff]
    %v132 = vld [vmem:[#allocation5 + $0x258] sm:$0xff]
    %v133 = vld [vmem:[#allocation5 + $0x260] sm:$0xff]
    %v134 = vld [vmem:[#allocation5 + $0x268] sm:$0xff]
    %v135 = vld [vmem:[#allocation5 + $0x270] sm:$0xff]
    %v136 = vld [vmem:[#allocation5 + $0x278] sm:$0xff]
    %v137 = vld [vmem:[#allocation5 + $0x280] sm:$0xff]
    %v138 = vld [vmem:[#allocation5 + $0x288] sm:$0xff]
    %v139 = vld [vmem:[#allocation5 + $0x290] sm:$0xff]
    %v140 = vld [vmem:[#allocation5 + $0x298] sm:$0xff]
    %v141 = vld [vmem:[#allocation5 + $0x2a0] sm:$0xff]
    %v142 = vld [vmem:[#allocation5 + $0x2a8] sm:$0xff]
    %v143 = vld [vmem:[#allocation5 + $0x2b0] sm:$0xff]
    %v144 = vld [vmem:[#allocation5 + $0x2b8] sm:$0xff]
    %v145 = vld [vmem:[#allocation5 + $0x2c0] sm:$0xff]
    %v146 = vld [vmem:[#allocation5 + $0x2c8] sm:$0xff]
    %v147 = vld [vmem:[#allocation5 + $0x2d0] sm:$0xff]
    %v148 = vld [vmem:[#allocation5 + $0x2d8] sm:$0xff]
    %v149 = vld [vmem:[#allocation5 + $0x2e0] sm:$0xff]
    %v150 = vld [vmem:[#allocation5 + $0x2e8] sm:$0xff]
    %v151 = vld [vmem:[#allocation5 + $0x2f0] sm:$0xff]
    %v152 = vld [vmem:[#allocation5 + $0x2f8] sm:$0xff]
    %v153 = vld [vmem:[#allocation5 + $0x300] sm:$0xff]
    %v154 = vld [vmem:[#allocation5 + $0x308] sm:$0xff]
    %v155 = vld [vmem:[#allocation5 + $0x310] sm:$0xff]
    %v156 = vld [vmem:[#allocation5 + $0x318] sm:$0xff]
    %v157 = vld [vmem:[#allocation5 + $0x320] sm:$0xff]
    %v158 = vld [vmem:[#allocation5 + $0x328] sm:$0xff]
    %v159 = vld [vmem:[#allocation5 + $0x330] sm:$0xff]
    %v160 = vld [vmem:[#allocation5 + $0x338] sm:$0xff]
    %v161 = vld [vmem:[#allocation5 + $0x340] sm:$0xff]
    %v162 = vld [vmem:[#allocation5 + $0x348] sm:$0xff]
    %v163 = vld [vmem:[#allocation5 + $0x350] sm:$0xff]
    %v164 = vld [vmem:[#allocation5 + $0x358] sm:$0xff]
    %v165 = vld [vmem:[#allocation5 + $0x360] sm:$0xff]
    %v166 = vld [vmem:[#allocation5 + $0x368] sm:$0xff]
    %v167 = vld [vmem:[#allocation5 + $0x370] sm:$0xff]
    %v168 = vld [vmem:[#allocation5 + $0x378] sm:$0xff]
    %v169 = vld [vmem:[#allocation5 + $0x380] sm:$0xff]
    %v170 = vld [vmem:[#allocation5 + $0x388] sm:$0xff]
    %v171 = vld [vmem:[#allocation5 + $0x390] sm:$0xff]
    %v172 = vld [vmem:[#allocation5 + $0x398] sm:$0xff]
    %v173 = vld [vmem:[#allocation5 + $0x3a0] sm:$0xff]
    %v174 = vld [vmem:[#allocation5 + $0x3a8] sm:$0xff]
    %v175 = vld [vmem:[#allocation5 + $0x3b0] sm:$0xff]
    %v176 = vld [vmem:[#allocation5 + $0x3b8] sm:$0xff]
    %v177 = vld [vmem:[#allocation5 + $0x3c0] sm:$0xff]
    %v178 = vld [vmem:[#allocation5 + $0x3c8] sm:$0xff]
    %v179 = vld [vmem:[#allocation5 + $0x3d0] sm:$0xff]
    %v180 = vld [vmem:[#allocation5 + $0x3d8] sm:$0xff]
    %v181 = vld [vmem:[#allocation5 + $0x3e0] sm:$0xff]
    %v182 = vld [vmem:[#allocation5 + $0x3e8] sm:$0xff]
    %v183 = vld [vmem:[#allocation5 + $0x3f0] sm:$0xff]
    %v184 = vld [vmem:[#allocation5 + $0x3f8] sm:$0xff]
    %v185 = vld [vmem:[#allocation5 + $0x400] sm:$0xff]
    %v186 = vld [vmem:[#allocation5 + $0x408] sm:$0xff]
    %v187 = vld [vmem:[#allocation5 + $0x410] sm:$0xff]
    %v188 = vld [vmem:[#allocation5 + $0x418] sm:$0xff]
    %v189 = vld [vmem:[#allocation5 + $0x420] sm:$0xff]
    %v190 = vld [vmem:[#allocation5 + $0x428] sm:$0xff]
    %v191 = vld [vmem:[#allocation5 + $0x430] sm:$0xff]
    %v192 = vld [vmem:[#allocation5 + $0x438] sm:$0xff]
    %v193 = vld [vmem:[#allocation5 + $0x440] sm:$0xff]
    %v194 = vld [vmem:[#allocation5 + $0x448] sm:$0xff]
    %v195 = vld [vmem:[#allocation5 + $0x450] sm:$0xff]
    %v196 = vld [vmem:[#allocation5 + $0x458] sm:$0xff]
    %v197 = vld [vmem:[#allocation5 + $0x460] sm:$0xff]
    %v198 = vld [vmem:[#allocation5 + $0x468] sm:$0xff]
    %v199 = vld [vmem:[#allocation5 + $0x470] sm:$0xff]
    %v200 = vld [vmem:[#allocation5 + $0x478] sm:$0xff]
    %v201 = vld [vmem:[#allocation5 + $0x480] sm:$0xff]
    %v202 = vld [vmem:[#allocation5 + $0x488] sm:$0xff]
    %v203 = vld [vmem:[#allocation5 + $0x490] sm:$0xff]
    %v204 = vld [vmem:[#allocation5 + $0x498] sm:$0xff]
    %v205 = vld [vmem:[#allocation5 + $0x4a0] sm:$0xff]
    %v206 = vld [vmem:[#allocation5 + $0x4a8] sm:$0xff]
    %v207 = vld [vmem:[#allocation5 + $0x4b0] sm:$0xff]
    %v208 = vld [vmem:[#allocation5 + $0x4b8] sm:$0xff]
    %v209 = vld [vmem:[#allocation5 + $0x4c0] sm:$0xff]
    %v210 = vld [vmem:[#allocation5 + $0x4c8] sm:$0xff]
    %v211 = vld [vmem:[#allocation5 + $0x4d0] sm:$0xff]
    %v212 = vld [vmem:[#allocation5 + $0x4d8] sm:$0xff]
    %v213 = vld [vmem:[#allocation5 + $0x4e0] sm:$0xff]
    %v214 = vld [vmem:[#allocation5 + $0x4e8] sm:$0xff]
    %v215 = vld [vmem:[#allocation5 + $0x4f0] sm:$0xff]
    %v216 = vld [vmem:[#allocation5 + $0x4f8] sm:$0xff]
    %v217 = vld [vmem:[#allocation5 + $0x500] sm:$0xff]
    %v218 = vld [vmem:[#allocation5 + $0x508] sm:$0xff]
    %v219 = vld [vmem:[#allocation5 + $0x510] sm:$0xff]
    %v220 = vld [vmem:[#allocation5 + $0x518] sm:$0xff]
    %v221 = vld [vmem:[#allocation5 + $0x520] sm:$0xff]
    %v222 = vld [vmem:[#allocation5 + $0x528] sm:$0xff]
    %v223 = vld [vmem:[#allocation5 + $0x530] sm:$0xff]
    %v224 = vld [vmem:[#allocation5 + $0x538] sm:$0xff]
    %v225 = vld [vmem:[#allocation5 + $0x540] sm:$0xff]
    %v226 = vld [vmem:[#allocation5 + $0x548] sm:$0xff]
    %v227 = vld [vmem:[#allocation5 + $0x550] sm:$0xff]
    %v228 = vld [vmem:[#allocation5 + $0x558] sm:$0xff]
    %v229 = vld [vmem:[#allocation5 + $0x560] sm:$0xff]
    %v230 = vld [vmem:[#allocation5 + $0x568] sm:$0xff]
    %v231 = vld [vmem:[#allocation5 + $0x570] sm:$0xff]
    %v232 = vld [vmem:[#allocation5 + $0x578] sm:$0xff]
    %v233 = vld [vmem:[#allocation5 + $0x580] sm:$0xff]
    %v234 = vld [vmem:[#allocation5 + $0x588] sm:$0xff]
    %v235 = vld [vmem:[#allocation5 + $0x590] sm:$0xff]
    %v236 = vld [vmem:[#allocation5 + $0x598] sm:$0xff]
    %v237 = vld [vmem:[#allocation5 + $0x5a0] sm:$0xff]
    %v238 = vld [vmem:[#allocation5 + $0x5a8] sm:$0xff]
    %v239 = vld [vmem:[#allocation5 + $0x5b0] sm:$0xff]
    %v240 = vld [vmem:[#allocation5 + $0x5b8] sm:$0xff]
    %v241 = vld [vmem:[#allocation5 + $0x5c0] sm:$0xff]
    %v242 = vld [vmem:[#allocation5 + $0x5c8] sm:$0xff]
    %v243 = vld [vmem:[#allocation5 + $0x5d0] sm:$0xff]
    %v244 = vld [vmem:[#allocation5 + $0x5d8] sm:$0xff]
    %v245 = vld [vmem:[#allocation5 + $0x5e0] sm:$0xff]
    %v246 = vld [vmem:[#allocation5 + $0x5e8] sm:$0xff]
    %v247 = vld [vmem:[#allocation5 + $0x5f0] sm:$0xff]
    %v248 = vld [vmem:[#allocation5 + $0x5f8] sm:$0xff]
    %v249 = vld [vmem:[#allocation5 + $0x600] sm:$0xff]
    %v250 = vld [vmem:[#allocation5 + $0x608] sm:$0xff]
    %v251 = vld [vmem:[#allocation5 + $0x610] sm:$0xff]
    %v252 = vld [vmem:[#allocation5 + $0x618] sm:$0xff]
    %v253 = vld [vmem:[#allocation5 + $0x620] sm:$0xff]
    %v254 = vld [vmem:[#allocation5 + $0x628] sm:$0xff]
    %v255 = vld [vmem:[#allocation5 + $0x630] sm:$0xff]
    %v256 = vld [vmem:[#allocation5 + $0x638] sm:$0xff]
    %v257 = vld [vmem:[#allocation5 + $0x640] sm:$0xff]
    %v258 = vld [vmem:[#allocation5 + $0x648] sm:$0xff]
    %v259 = vld [vmem:[#allocation5 + $0x650] sm:$0xff]
    %v260 = vld [vmem:[#allocation5 + $0x658] sm:$0xff]
    %v261 = vld [vmem:[#allocation5 + $0x660] sm:$0xff]
    %v262 = vld [vmem:[#allocation5 + $0x668] sm:$0xff]
    %v263 = vld [vmem:[#allocation5 + $0x670] sm:$0xff]
    %v264 = vld [vmem:[#allocation5 + $0x678] sm:$0xff]
    %v265 = vld [vmem:[#allocation5 + $0x680] sm:$0xff]
    %v266 = vld [vmem:[#allocation5 + $0x688] sm:$0xff]
    %v267 = vld [vmem:[#allocation5 + $0x690] sm:$0xff]
    %v268 = vld [vmem:[#allocation5 + $0x698] sm:$0xff]
    %v269 = vld [vmem:[#allocation5 + $0x6a0] sm:$0xff]
    %v270 = vld [vmem:[#allocation5 + $0x6a8] sm:$0xff]
    %v271 = vld [vmem:[#allocation5 + $0x6b0] sm:$0xff]
    %v272 = vld [vmem:[#allocation5 + $0x6b8] sm:$0xff]
    %v273 = vld [vmem:[#allocation5 + $0x6c0] sm:$0xff]
    %v274 = vld [vmem:[#allocation5 + $0x6c8] sm:$0xff]
    %v275 = vld [vmem:[#allocation5 + $0x6d0] sm:$0xff]
    %v276 = vld [vmem:[#allocation5 + $0x6d8] sm:$0xff]
    %v277 = vld [vmem:[#allocation5 + $0x6e0] sm:$0xff]
    %v278 = vld [vmem:[#allocation5 + $0x6e8] sm:$0xff]
    %v279 = vld [vmem:[#allocation5 + $0x6f0] sm:$0xff]
    %v280 = vld [vmem:[#allocation5 + $0x6f8] sm:$0xff]
    %v281 = vld [vmem:[#allocation5 + $0x700] sm:$0xff]
    %v282 = vld [vmem:[#allocation5 + $0x708] sm:$0xff]
    %v283 = vld [vmem:[#allocation5 + $0x710] sm:$0xff]
    %v284 = vld [vmem:[#allocation5 + $0x718] sm:$0xff]
    %v285 = vld [vmem:[#allocation5 + $0x720] sm:$0xff]
    %v286 = vld [vmem:[#allocation5 + $0x728] sm:$0xff]
    %v287 = vld [vmem:[#allocation5 + $0x730] sm:$0xff]
    %v288 = vld [vmem:[#allocation5 + $0x738] sm:$0xff]
    %v289 = vld [vmem:[#allocation5 + $0x740] sm:$0xff]
    %v290 = vld [vmem:[#allocation5 + $0x748] sm:$0xff]
    %v291 = vld [vmem:[#allocation5 + $0x750] sm:$0xff]
    %v292 = vld [vmem:[#allocation5 + $0x758] sm:$0xff]
    %v293 = vld [vmem:[#allocation5 + $0x760] sm:$0xff]
    %v294 = vld [vmem:[#allocation5 + $0x768] sm:$0xff]
    %v295 = vld [vmem:[#allocation5 + $0x770] sm:$0xff]
    %v296 = vld [vmem:[#allocation5 + $0x778] sm:$0xff]
    %v297 = vld [vmem:[#allocation5 + $0x780] sm:$0xff]
    %v298 = vld [vmem:[#allocation5 + $0x788] sm:$0xff]
    %v299 = vld [vmem:[#allocation5 + $0x790] sm:$0xff]
    %v300 = vld [vmem:[#allocation5 + $0x798] sm:$0xff]
    %v301 = vld [vmem:[#allocation5 + $0x7a0] sm:$0xff]
    %v302 = vld [vmem:[#allocation5 + $0x7a8] sm:$0xff]
    %v303 = vld [vmem:[#allocation5 + $0x7b0] sm:$0xff]
    %v304 = vld [vmem:[#allocation5 + $0x7b8] sm:$0xff]
    %v305 = vld [vmem:[#allocation5 + $0x7c0] sm:$0xff]
    %v306 = vld [vmem:[#allocation5 + $0x7c8] sm:$0xff]
    %v307 = vld [vmem:[#allocation5 + $0x7d0] sm:$0xff]
    %v308 = vld [vmem:[#allocation5 + $0x7d8] sm:$0xff]
    %v309 = vld [vmem:[#allocation5 + $0x7e0] sm:$0xff]
    %v310 = vld [vmem:[#allocation5 + $0x7e8] sm:$0xff]
    %v311 = vld [vmem:[#allocation5 + $0x7f0] sm:$0xff]
    %v312 = vld [vmem:[#allocation5 + $0x7f8] sm:$0xff]
    %v313 = vld [vmem:[%s2] sm:$0x1]
    %v315 = vlaneseq
    %v316 = vshrl.u32 %v315, 7
    %v317 = vsub.s32 0, %v316
    %v318 = vrot.slane %v313, %v317
    %320 = vmatprep.subr.mxu0 0.0
    %v321 = vand.u32 %v72, 4294901760
    %322 = vmatpush1.msra.mxu0 %v321
    %323 = vmatprep.subr.mxu0 0.0
    %v324 = vand.u32 %v71, 4294901760
    %325 = vmatpush1.msra.mxu0 %v324
    %326 = vmatprep.subr.mxu0 0.0
    %v327 = vand.u32 %v70, 4294901760
    %328 = vmatpush1.msra.mxu0 %v327
    %329 = vmatprep.subr.mxu0 0.0
    %v330 = vand.u32 %v69, 4294901760
    %331 = vmatpush1.msra.mxu0 %v330
    %332 = vmatprep.subr.mxu0 0.0
    %v333 = vand.u32 %v68, 4294901760
    %334 = vmatpush1.msra.mxu0 %v333
    %335 = vmatprep.subr.mxu0 0.0
    %v336 = vand.u32 %v67, 4294901760
    %337 = vmatpush1.msra.mxu0 %v336
    %338 = vmatprep.subr.mxu0 0.0
    %v339 = vand.u32 %v66, 4294901760
    %340 = vmatpush1.msra.mxu0 %v339
    %341 = vmatprep.subr.mxu0 0.0
    %v342 = vand.u32 %v65, 4294901760
    %343 = vmatpush1.msra.mxu0 %v342
    %344 = vmatprep.subr.mxu0 0.0
    %v345 = vand.u32 %v64, 4294901760
    %346 = vmatpush1.msra.mxu0 %v345
    %347 = vmatprep.subr.mxu0 0.0
    %v348 = vand.u32 %v63, 4294901760
    %349 = vmatpush1.msra.mxu0 %v348
    %350 = vmatprep.subr.mxu0 0.0
    %v351 = vand.u32 %v62, 4294901760
    %352 = vmatpush1.msra.mxu0 %v351
    %353 = vmatprep.subr.mxu0 0.0
    %v354 = vand.u32 %v61, 4294901760
    %355 = vmatpush1.msra.mxu0 %v354
    %356 = vmatprep.subr.mxu0 0.0
    %v357 = vand.u32 %v60, 4294901760
    %358 = vmatpush1.msra.mxu0 %v357
    %359 = vmatprep.subr.mxu0 0.0
    %v360 = vand.u32 %v59, 4294901760
    %361 = vmatpush1.msra.mxu0 %v360
    %362 = vmatprep.subr.mxu0 0.0
    %v363 = vand.u32 %v58, 4294901760
    %364 = vmatpush1.msra.mxu0 %v363
    %365 = vmatprep.subr.mxu0 0.0
    %v366 = vand.u32 %v57, 4294901760
    %367 = vmatpush1.msra.mxu0 %v366
    %368 = vmatprep.subr.mxu0 0.0
    %v369 = vand.u32 %v88, 4294901760
    %370 = vmatpush2.msra.mxu0 %v369
    %371 = vmatprep.subr.mxu0 0.0
    %v372 = vand.u32 %v87, 4294901760
    %373 = vmatpush2.msra.mxu0 %v372
    %374 = vmatprep.subr.mxu0 0.0
    %v375 = vand.u32 %v86, 4294901760
    %376 = vmatpush2.msra.mxu0 %v375
    %377 = vmatprep.subr.mxu0 0.0
    %v378 = vand.u32 %v85, 4294901760
    %379 = vmatpush2.msra.mxu0 %v378
    %380 = vmatprep.subr.mxu0 0.0
    %v381 = vand.u32 %v84, 4294901760
    %382 = vmatpush2.msra.mxu0 %v381
    %383 = vmatprep.subr.mxu0 0.0
    %v384 = vand.u32 %v83, 4294901760
    %385 = vmatpush2.msra.mxu0 %v384
    %386 = vmatprep.subr.mxu0 0.0
    %v387 = vand.u32 %v82, 4294901760
    %388 = vmatpush2.msra.mxu0 %v387
    %389 = vmatprep.subr.mxu0 0.0
    %v390 = vand.u32 %v81, 4294901760
    %391 = vmatpush2.msra.mxu0 %v390
    %392 = vmatprep.subr.mxu0 0.0
    %v393 = vand.u32 %v80, 4294901760
    %394 = vmatpush2.msra.mxu0 %v393
    %395 = vmatprep.subr.mxu0 0.0
    %v396 = vand.u32 %v79, 4294901760
    %397 = vmatpush2.msra.mxu0 %v396
    %398 = vmatprep.subr.mxu0 0.0
    %v399 = vand.u32 %v78, 4294901760
    %400 = vmatpush2.msra.mxu0 %v399
    %401 = vmatprep.subr.mxu0 0.0
    %v402 = vand.u32 %v77, 4294901760
    %403 = vmatpush2.msra.mxu0 %v402
    %404 = vmatprep.subr.mxu0 0.0
    %v405 = vand.u32 %v76, 4294901760
    %406 = vmatpush2.msra.mxu0 %v405
    %407 = vmatprep.subr.mxu0 0.0
    %v408 = vand.u32 %v75, 4294901760
    %409 = vmatpush2.msra.mxu0 %v408
    %410 = vmatprep.subr.mxu0 0.0
    %v411 = vand.u32 %v74, 4294901760
    %412 = vmatpush2.msra.mxu0 %v411
    %413 = vmatprep.subr.mxu0 0.0
    %v414 = vand.u32 %v73, 4294901760
    %415 = vmatpush2.msra.mxu0 %v414
    %v416 = vand.u32 %v42, 4294901760
    %v417 = vsub.f32 %v42, %v416
    %v418 = vand.u32 %v417, 4294901760
    %v419 = vsub.f32 %v417, %v418
    %v420 = vand.u32 %v419, 4294901760
    %421 = vmatprep.mubr.f32.mxu0 %v420
    %v422 = vand.u32 %v41, 4294901760
    %v423 = vsub.f32 %v41, %v422
    %v424 = vand.u32 %v423, 4294901760
    %v425 = vsub.f32 %v423, %v424
    %v426 = vand.u32 %v425, 4294901760
    %427 = vmatmul.mubr.f32.gmra.mxu0 %v426
    %v428 = vpop.f32.mrf.mxu0
    %v429 = vadd.f32 %v318, %v428
    %v430 = vpop.f32.mrf.mxu0
    %431 = vdwg.mxu0
    %432 = vmatprep.subr.mxu0 0.0
    %v433 = vand.u32 %v72, 4294901760
    %v434 = vsub.f32 %v72, %v433
    %v435 = vand.u32 %v434, 4294901760
    %v436 = vsub.f32 %v434, %v435
    %v437 = vand.u32 %v436, 4294901760
    %438 = vmatpush1.msra.mxu0 %v437
    %439 = vmatprep.subr.mxu0 0.0
    %v440 = vand.u32 %v71, 4294901760
    %v441 = vsub.f32 %v71, %v440
    %v442 = vand.u32 %v441, 4294901760
    %v443 = vsub.f32 %v441, %v442
    %v444 = vand.u32 %v443, 4294901760
    %445 = vmatpush1.msra.mxu0 %v444
    %446 = vmatprep.subr.mxu0 0.0
    %v447 = vand.u32 %v70, 4294901760
    %v448 = vsub.f32 %v70, %v447
    %v449 = vand.u32 %v448, 4294901760
    %v450 = vsub.f32 %v448, %v449
    %v451 = vand.u32 %v450, 4294901760
    %452 = vmatpush1.msra.mxu0 %v451
    %453 = vmatprep.subr.mxu0 0.0
    %v454 = vand.u32 %v69, 4294901760
    %v455 = vsub.f32 %v69, %v454
    %v456 = vand.u32 %v455, 4294901760
    %v457 = vsub.f32 %v455, %v456
    %v458 = vand.u32 %v457, 4294901760
    %459 = vmatpush1.msra.mxu0 %v458
    %460 = vmatprep.subr.mxu0 0.0
    %v461 = vand.u32 %v68, 4294901760
    %v462 = vsub.f32 %v68, %v461
    %v463 = vand.u32 %v462, 4294901760
    %v464 = vsub.f32 %v462, %v463
    %v465 = vand.u32 %v464, 4294901760
    %466 = vmatpush1.msra.mxu0 %v465
    %467 = vmatprep.subr.mxu0 0.0
    %v468 = vand.u32 %v67, 4294901760
    %v469 = vsub.f32 %v67, %v468
    %v470 = vand.u32 %v469, 4294901760
    %v471 = vsub.f32 %v469, %v470
    %v472 = vand.u32 %v471, 4294901760
    %473 = vmatpush1.msra.mxu0 %v472
    %474 = vmatprep.subr.mxu0 0.0
    %v475 = vand.u32 %v66, 4294901760
    %v476 = vsub.f32 %v66, %v475
    %v477 = vand.u32 %v476, 4294901760
    %v478 = vsub.f32 %v476, %v477
    %v479 = vand.u32 %v478, 4294901760
    %480 = vmatpush1.msra.mxu0 %v479
    %481 = vmatprep.subr.mxu0 0.0
    %v482 = vand.u32 %v65, 4294901760
    %v483 = vsub.f32 %v65, %v482
    %v484 = vand.u32 %v483, 4294901760
    %v485 = vsub.f32 %v483, %v484
    %v486 = vand.u32 %v485, 4294901760
    %487 = vmatpush1.msra.mxu0 %v486
    %488 = vmatprep.subr.mxu0 0.0
    %v489 = vand.u32 %v64, 4294901760
    %v490 = vsub.f32 %v64, %v489
    %v491 = vand.u32 %v490, 4294901760
    %v492 = vsub.f32 %v490, %v491
    %v493 = vand.u32 %v492, 4294901760
    %494 = vmatpush1.msra.mxu0 %v493
    %495 = vmatprep.subr.mxu0 0.0
    %v496 = vand.u32 %v63, 4294901760
    %v497 = vsub.f32 %v63, %v496
    %v498 = vand.u32 %v497, 4294901760
    %v499 = vsub.f32 %v497, %v498
    %v500 = vand.u32 %v499, 4294901760
    %501 = vmatpush1.msra.mxu0 %v500
    %502 = vmatprep.subr.mxu0 0.0
    %v503 = vand.u32 %v62, 4294901760
    %v504 = vsub.f32 %v62, %v503
    %v505 = vand.u32 %v504, 4294901760
    %v506 = vsub.f32 %v504, %v505
    %v507 = vand.u32 %v506, 4294901760
    %508 = vmatpush1.msra.mxu0 %v507
    %509 = vmatprep.subr.mxu0 0.0
    %v510 = vand.u32 %v61, 4294901760
    %v511 = vsub.f32 %v61, %v510
    %v512 = vand.u32 %v511, 4294901760
    %v513 = vsub.f32 %v511, %v512
    %v514 = vand.u32 %v513, 4294901760
    %515 = vmatpush1.msra.mxu0 %v514
    %516 = vmatprep.subr.mxu0 0.0
    %v517 = vand.u32 %v60, 4294901760
    %v518 = vsub.f32 %v60, %v517
    %v519 = vand.u32 %v518, 4294901760
    %v520 = vsub.f32 %v518, %v519
    %v521 = vand.u32 %v520, 4294901760
    %522 = vmatpush1.msra.mxu0 %v521
    %523 = vmatprep.subr.mxu0 0.0
    %v524 = vand.u32 %v59, 4294901760
    %v525 = vsub.f32 %v59, %v524
    %v526 = vand.u32 %v525, 4294901760
    %v527 = vsub.f32 %v525, %v526
    %v528 = vand.u32 %v527, 4294901760
    %529 = vmatpush1.msra.mxu0 %v528
    %530 = vmatprep.subr.mxu0 0.0
    %v531 = vand.u32 %v58, 4294901760
    %v532 = vsub.f32 %v58, %v531
    %v533 = vand.u32 %v532, 4294901760
    %v534 = vsub.f32 %v532, %v533
    %v535 = vand.u32 %v534, 4294901760
    %536 = vmatpush1.msra.mxu0 %v535
    %537 = vmatprep.subr.mxu0 0.0
    %v538 = vand.u32 %v57, 4294901760
    %v539 = vsub.f32 %v57, %v538
    %v540 = vand.u32 %v539, 4294901760
    %v541 = vsub.f32 %v539, %v540
    %v542 = vand.u32 %v541, 4294901760
    %543 = vmatpush1.msra.mxu0 %v542
    %544 = vmatprep.subr.mxu0 0.0
    %v545 = vand.u32 %v88, 4294901760
    %v546 = vsub.f32 %v88, %v545
    %v547 = vand.u32 %v546, 4294901760
    %v548 = vsub.f32 %v546, %v547
    %v549 = vand.u32 %v548, 4294901760
    %550 = vmatpush2.msra.mxu0 %v549
    %551 = vmatprep.subr.mxu0 0.0
    %v552 = vand.u32 %v87, 4294901760
    %v553 = vsub.f32 %v87, %v552
    %v554 = vand.u32 %v553, 4294901760
    %v555 = vsub.f32 %v553, %v554
    %v556 = vand.u32 %v555, 4294901760
    %557 = vmatpush2.msra.mxu0 %v556
    %558 = vmatprep.subr.mxu0 0.0
    %v559 = vand.u32 %v86, 4294901760
    %v560 = vsub.f32 %v86, %v559
    %v561 = vand.u32 %v560, 4294901760
    %v562 = vsub.f32 %v560, %v561
    %v563 = vand.u32 %v562, 4294901760
    %564 = vmatpush2.msra.mxu0 %v563
    %565 = vmatprep.subr.mxu0 0.0
    %v566 = vand.u32 %v85, 4294901760
    %v567 = vsub.f32 %v85, %v566
    %v568 = vand.u32 %v567, 4294901760
    %v569 = vsub.f32 %v567, %v568
    %v570 = vand.u32 %v569, 4294901760
    %571 = vmatpush2.msra.mxu0 %v570
    %572 = vmatprep.subr.mxu0 0.0
    %v573 = vand.u32 %v84, 4294901760
    %v574 = vsub.f32 %v84, %v573
    %v575 = vand.u32 %v574, 4294901760
    %v576 = vsub.f32 %v574, %v575
    %v577 = vand.u32 %v576, 4294901760
    %578 = vmatpush2.msra.mxu0 %v577
    %579 = vmatprep.subr.mxu0 0.0
    %v580 = vand.u32 %v83, 4294901760
    %v581 = vsub.f32 %v83, %v580
    %v582 = vand.u32 %v581, 4294901760
    %v583 = vsub.f32 %v581, %v582
    %v584 = vand.u32 %v583, 4294901760
    %585 = vmatpush2.msra.mxu0 %v584
    %586 = vmatprep.subr.mxu0 0.0
    %v587 = vand.u32 %v82, 4294901760
    %v588 = vsub.f32 %v82, %v587
    %v589 = vand.u32 %v588, 4294901760
    %v590 = vsub.f32 %v588, %v589
    %v591 = vand.u32 %v590, 4294901760
    %592 = vmatpush2.msra.mxu0 %v591
    %593 = vmatprep.subr.mxu0 0.0
    %v594 = vand.u32 %v81, 4294901760
    %v595 = vsub.f32 %v81, %v594
    %v596 = vand.u32 %v595, 4294901760
    %v597 = vsub.f32 %v595, %v596
    %v598 = vand.u32 %v597, 4294901760
    %599 = vmatpush2.msra.mxu0 %v598
    %600 = vmatprep.subr.mxu0 0.0
    %v601 = vand.u32 %v80, 4294901760
    %v602 = vsub.f32 %v80, %v601
    %v603 = vand.u32 %v602, 4294901760
    %v604 = vsub.f32 %v602, %v603
    %v605 = vand.u32 %v604, 4294901760
    %606 = vmatpush2.msra.mxu0 %v605
    %607 = vmatprep.subr.mxu0 0.0
    %v608 = vand.u32 %v79, 4294901760
    %v609 = vsub.f32 %v79, %v608
    %v610 = vand.u32 %v609, 4294901760
    %v611 = vsub.f32 %v609, %v610
    %v612 = vand.u32 %v611, 4294901760
    %613 = vmatpush2.msra.mxu0 %v612
    %614 = vmatprep.subr.mxu0 0.0
    %v615 = vand.u32 %v78, 4294901760
    %v616 = vsub.f32 %v78, %v615
    %v617 = vand.u32 %v616, 4294901760
    %v618 = vsub.f32 %v616, %v617
    %v619 = vand.u32 %v618, 4294901760
    %620 = vmatpush2.msra.mxu0 %v619
    %621 = vmatprep.subr.mxu0 0.0
    %v622 = vand.u32 %v77, 4294901760
    %v623 = vsub.f32 %v77, %v622
    %v624 = vand.u32 %v623, 4294901760
    %v625 = vsub.f32 %v623, %v624
    %v626 = vand.u32 %v625, 4294901760
    %627 = vmatpush2.msra.mxu0 %v626
    %628 = vmatprep.subr.mxu0 0.0
    %v629 = vand.u32 %v76, 4294901760
    %v630 = vsub.f32 %v76, %v629
    %v631 = vand.u32 %v630, 4294901760
    %v632 = vsub.f32 %v630, %v631
    %v633 = vand.u32 %v632, 4294901760
    %634 = vmatpush2.msra.mxu0 %v633
    %635 = vmatprep.subr.mxu0 0.0
    %v636 = vand.u32 %v75, 4294901760
    %v637 = vsub.f32 %v75, %v636
    %v638 = vand.u32 %v637, 4294901760
    %v639 = vsub.f32 %v637, %v638
    %v640 = vand.u32 %v639, 4294901760
    %641 = vmatpush2.msra.mxu0 %v640
    %642 = vmatprep.subr.mxu0 0.0
    %v643 = vand.u32 %v74, 4294901760
    %v644 = vsub.f32 %v74, %v643
    %v645 = vand.u32 %v644, 4294901760
    %v646 = vsub.f32 %v644, %v645
    %v647 = vand.u32 %v646, 4294901760
    %648 = vmatpush2.msra.mxu0 %v647
    %649 = vmatprep.subr.mxu0 0.0
    %v650 = vand.u32 %v73, 4294901760
    %v651 = vsub.f32 %v73, %v650
    %v652 = vand.u32 %v651, 4294901760
    %v653 = vsub.f32 %v651, %v652
    %v654 = vand.u32 %v653, 4294901760
    %655 = vmatpush2.msra.mxu0 %v654
    %v656 = vand.u32 %v42, 4294901760
    %657 = vmatprep.mubr.f32.mxu0 %v656
    %v658 = vand.u32 %v41, 4294901760
    %659 = vmatmul.mubr.f32.gmra.mxu0 %v658
    %v660 = vpop.f32.mrf.mxu0
    %v661 = vadd.f32 %v429, %v660
    %v662 = vpop.f32.mrf.mxu0
    %663 = vdwg.mxu0
    %664 = vmatprep.subr.mxu0 0.0
    %v665 = vand.u32 %v72, 4294901760
    %v666 = vsub.f32 %v72, %v665
    %667 = vmatpush1.msra.mxu0 %v666
    %668 = vmatprep.subr.mxu0 0.0
    %v669 = vand.u32 %v71, 4294901760
    %v670 = vsub.f32 %v71, %v669
    %671 = vmatpush1.msra.mxu0 %v670
    %672 = vmatprep.subr.mxu0 0.0
    %v673 = vand.u32 %v70, 4294901760
    %v674 = vsub.f32 %v70, %v673
    %675 = vmatpush1.msra.mxu0 %v674
    %676 = vmatprep.subr.mxu0 0.0
    %v677 = vand.u32 %v69, 4294901760
    %v678 = vsub.f32 %v69, %v677
    %679 = vmatpush1.msra.mxu0 %v678
    %680 = vmatprep.subr.mxu0 0.0
    %v681 = vand.u32 %v68, 4294901760
    %v682 = vsub.f32 %v68, %v681
    %683 = vmatpush1.msra.mxu0 %v682
    %684 = vmatprep.subr.mxu0 0.0
    %v685 = vand.u32 %v67, 4294901760
    %v686 = vsub.f32 %v67, %v685
    %687 = vmatpush1.msra.mxu0 %v686
    %688 = vmatprep.subr.mxu0 0.0
    %v689 = vand.u32 %v66, 4294901760
    %v690 = vsub.f32 %v66, %v689
    %691 = vmatpush1.msra.mxu0 %v690
    %692 = vmatprep.subr.mxu0 0.0
    %v693 = vand.u32 %v65, 4294901760
    %v694 = vsub.f32 %v65, %v693
    %695 = vmatpush1.msra.mxu0 %v694
    %696 = vmatprep.subr.mxu0 0.0
    %v697 = vand.u32 %v64, 4294901760
    %v698 = vsub.f32 %v64, %v697
    %699 = vmatpush1.msra.mxu0 %v698
    %700 = vmatprep.subr.mxu0 0.0
    %v701 = vand.u32 %v63, 4294901760
    %v702 = vsub.f32 %v63, %v701
    %703 = vmatpush1.msra.mxu0 %v702
    %704 = vmatprep.subr.mxu0 0.0
    %v705 = vand.u32 %v62, 4294901760
    %v706 = vsub.f32 %v62, %v705
    %707 = vmatpush1.msra.mxu0 %v706
    %708 = vmatprep.subr.mxu0 0.0
    %v709 = vand.u32 %v61, 4294901760
    %v710 = vsub.f32 %v61, %v709
    %711 = vmatpush1.msra.mxu0 %v710
    %712 = vmatprep.subr.mxu0 0.0
    %v713 = vand.u32 %v60, 4294901760
    %v714 = vsub.f32 %v60, %v713
    %715 = vmatpush1.msra.mxu0 %v714
    %716 = vmatprep.subr.mxu0 0.0
    %v717 = vand.u32 %v59, 4294901760
    %v718 = vsub.f32 %v59, %v717
    %719 = vmatpush1.msra.mxu0 %v718
    %720 = vmatprep.subr.mxu0 0.0
    %v721 = vand.u32 %v58, 4294901760
    %v722 = vsub.f32 %v58, %v721
    %723 = vmatpush1.msra.mxu0 %v722
    %724 = vmatprep.subr.mxu0 0.0
    %v725 = vand.u32 %v57, 4294901760
    %v726 = vsub.f32 %v57, %v725
    %727 = vmatpush1.msra.mxu0 %v726
    %728 = vmatprep.subr.mxu0 0.0
    %v729 = vand.u32 %v88, 4294901760
    %v730 = vsub.f32 %v88, %v729
    %731 = vmatpush2.msra.mxu0 %v730
    %732 = vmatprep.subr.mxu0 0.0
    %v733 = vand.u32 %v87, 4294901760
    %v734 = vsub.f32 %v87, %v733
    %735 = vmatpush2.msra.mxu0 %v734
    %736 = vmatprep.subr.mxu0 0.0
    %v737 = vand.u32 %v86, 4294901760
    %v738 = vsub.f32 %v86, %v737
    %739 = vmatpush2.msra.mxu0 %v738
    %740 = vmatprep.subr.mxu0 0.0
    %v741 = vand.u32 %v85, 4294901760
    %v742 = vsub.f32 %v85, %v741
    %743 = vmatpush2.msra.mxu0 %v742
    %744 = vmatprep.subr.mxu0 0.0
    %v745 = vand.u32 %v84, 4294901760
    %v746 = vsub.f32 %v84, %v745
    %747 = vmatpush2.msra.mxu0 %v746
    %748 = vmatprep.subr.mxu0 0.0
    %v749 = vand.u32 %v83, 4294901760
    %v750 = vsub.f32 %v83, %v749
    %751 = vmatpush2.msra.mxu0 %v750
    %752 = vmatprep.subr.mxu0 0.0
    %v753 = vand.u32 %v82, 4294901760
    %v754 = vsub.f32 %v82, %v753
    %755 = vmatpush2.msra.mxu0 %v754
    %756 = vmatprep.subr.mxu0 0.0
    %v757 = vand.u32 %v81, 4294901760
    %v758 = vsub.f32 %v81, %v757
    %759 = vmatpush2.msra.mxu0 %v758
    %760 = vmatprep.subr.mxu0 0.0
    %v761 = vand.u32 %v80, 4294901760
    %v762 = vsub.f32 %v80, %v761
    %763 = vmatpush2.msra.mxu0 %v762
    %764 = vmatprep.subr.mxu0 0.0
    %v765 = vand.u32 %v79, 4294901760
    %v766 = vsub.f32 %v79, %v765
    %767 = vmatpush2.msra.mxu0 %v766
    %768 = vmatprep.subr.mxu0 0.0
    %v769 = vand.u32 %v78, 4294901760
    %v770 = vsub.f32 %v78, %v769
    %771 = vmatpush2.msra.mxu0 %v770
    %772 = vmatprep.subr.mxu0 0.0
    %v773 = vand.u32 %v77, 4294901760
    %v774 = vsub.f32 %v77, %v773
    %775 = vmatpush2.msra.mxu0 %v774
    %776 = vmatprep.subr.mxu0 0.0
    %v777 = vand.u32 %v76, 4294901760
    %v778 = vsub.f32 %v76, %v777
    %779 = vmatpush2.msra.mxu0 %v778
    %780 = vmatprep.subr.mxu0 0.0
    %v781 = vand.u32 %v75, 4294901760
    %v782 = vsub.f32 %v75, %v781
    %783 = vmatpush2.msra.mxu0 %v782
    %784 = vmatprep.subr.mxu0 0.0
    %v785 = vand.u32 %v74, 4294901760
    %v786 = vsub.f32 %v74, %v785
    %787 = vmatpush2.msra.mxu0 %v786
    %788 = vmatprep.subr.mxu0 0.0
    %v789 = vand.u32 %v73, 4294901760
    %v790 = vsub.f32 %v73, %v789
    %791 = vmatpush2.msra.mxu0 %v790
    %v792 = vand.u32 %v42, 4294901760
    %v793 = vsub.f32 %v42, %v792
    %794 = vmatprep.mubr.f32.mxu0 %v793
    %v795 = vand.u32 %v41, 4294901760
    %v796 = vsub.f32 %v41, %v795
    %797 = vmatmul.mubr.f32.gmra.mxu0 %v796
    %v798 = vpop.f32.mrf.mxu0
    %v799 = vadd.f32 %v661, %v798
    %v800 = vpop.f32.mrf.mxu0
    %801 = vdwg.mxu0
    %802 = vmatprep.subr.mxu0 0.0
    %v803 = vand.u32 %v72, 4294901760
    %804 = vmatpush1.msra.mxu0 %v803
    %805 = vmatprep.subr.mxu0 0.0
    %v806 = vand.u32 %v71, 4294901760
    %807 = vmatpush1.msra.mxu0 %v806
    %808 = vmatprep.subr.mxu0 0.0
    %v809 = vand.u32 %v70, 4294901760
    %810 = vmatpush1.msra.mxu0 %v809
    %811 = vmatprep.subr.mxu0 0.0
    %v812 = vand.u32 %v69, 4294901760
    %813 = vmatpush1.msra.mxu0 %v812
    %814 = vmatprep.subr.mxu0 0.0
    %v815 = vand.u32 %v68, 4294901760
    %816 = vmatpush1.msra.mxu0 %v815
    %817 = vmatprep.subr.mxu0 0.0
    %v818 = vand.u32 %v67, 4294901760
    %819 = vmatpush1.msra.mxu0 %v818
    %820 = vmatprep.subr.mxu0 0.0
    %v821 = vand.u32 %v66, 4294901760
    %822 = vmatpush1.msra.mxu0 %v821
    %823 = vmatprep.subr.mxu0 0.0
    %v824 = vand.u32 %v65, 4294901760
    %825 = vmatpush1.msra.mxu0 %v824
    %826 = vmatprep.subr.mxu0 0.0
    %v827 = vand.u32 %v64, 4294901760
    %828 = vmatpush1.msra.mxu0 %v827
    %829 = vmatprep.subr.mxu0 0.0
    %v830 = vand.u32 %v63, 4294901760
    %831 = vmatpush1.msra.mxu0 %v830
    %832 = vmatprep.subr.mxu0 0.0
    %v833 = vand.u32 %v62, 4294901760
    %834 = vmatpush1.msra.mxu0 %v833
    %835 = vmatprep.subr.mxu0 0.0
    %v836 = vand.u32 %v61, 4294901760
    %837 = vmatpush1.msra.mxu0 %v836
    %838 = vmatprep.subr.mxu0 0.0
    %v839 = vand.u32 %v60, 4294901760
    %840 = vmatpush1.msra.mxu0 %v839
    %841 = vmatprep.subr.mxu0 0.0
    %v842 = vand.u32 %v59, 4294901760
    %843 = vmatpush1.msra.mxu0 %v842
    %844 = vmatprep.subr.mxu0 0.0
    %v845 = vand.u32 %v58, 4294901760
    %846 = vmatpush1.msra.mxu0 %v845
    %847 = vmatprep.subr.mxu0 0.0
    %v848 = vand.u32 %v57, 4294901760
    %849 = vmatpush1.msra.mxu0 %v848
    %850 = vmatprep.subr.mxu0 0.0
    %v851 = vand.u32 %v88, 4294901760
    %852 = vmatpush2.msra.mxu0 %v851
    %853 = vmatprep.subr.mxu0 0.0
    %v854 = vand.u32 %v87, 4294901760
    %855 = vmatpush2.msra.mxu0 %v854
    %856 = vmatprep.subr.mxu0 0.0
    %v857 = vand.u32 %v86, 4294901760
    %858 = vmatpush2.msra.mxu0 %v857
    %859 = vmatprep.subr.mxu0 0.0
    %v860 = vand.u32 %v85, 4294901760
    %861 = vmatpush2.msra.mxu0 %v860
    %862 = vmatprep.subr.mxu0 0.0
    %v863 = vand.u32 %v84, 4294901760
    %864 = vmatpush2.msra.mxu0 %v863
    %865 = vmatprep.subr.mxu0 0.0
    %v866 = vand.u32 %v83, 4294901760
    %867 = vmatpush2.msra.mxu0 %v866
    %868 = vmatprep.subr.mxu0 0.0
    %v869 = vand.u32 %v82, 4294901760
    %870 = vmatpush2.msra.mxu0 %v869
    %871 = vmatprep.subr.mxu0 0.0
    %v872 = vand.u32 %v81, 4294901760
    %873 = vmatpush2.msra.mxu0 %v872
    %874 = vmatprep.subr.mxu0 0.0
    %v875 = vand.u32 %v80, 4294901760
    %876 = vmatpush2.msra.mxu0 %v875
    %877 = vmatprep.subr.mxu0 0.0
    %v878 = vand.u32 %v79, 4294901760
    %879 = vmatpush2.msra.mxu0 %v878
    %880 = vmatprep.subr.mxu0 0.0
    %v881 = vand.u32 %v78, 4294901760
    %882 = vmatpush2.msra.mxu0 %v881
    %883 = vmatprep.subr.mxu0 0.0
    %v884 = vand.u32 %v77, 4294901760
    %885 = vmatpush2.msra.mxu0 %v884
    %886 = vmatprep.subr.mxu0 0.0
    %v887 = vand.u32 %v76, 4294901760
    %888 = vmatpush2.msra.mxu0 %v887
    %889 = vmatprep.subr.mxu0 0.0
    %v890 = vand.u32 %v75, 4294901760
    %891 = vmatpush2.msra.mxu0 %v890
    %892 = vmatprep.subr.mxu0 0.0
    %v893 = vand.u32 %v74, 4294901760
    %894 = vmatpush2.msra.mxu0 %v893
    %895 = vmatprep.subr.mxu0 0.0
    %v896 = vand.u32 %v73, 4294901760
    %897 = vmatpush2.msra.mxu0 %v896
    %v898 = vand.u32 %v42, 4294901760
    %v899 = vsub.f32 %v42, %v898
    %v900 = vand.u32 %v899, 4294901760
    %901 = vmatprep.mubr.f32.mxu0 %v900
    %v902 = vand.u32 %v41, 4294901760
    %v903 = vsub.f32 %v41, %v902
    %v904 = vand.u32 %v903, 4294901760
    %905 = vmatmul.mubr.f32.gmra.mxu0 %v904
    %v906 = vpop.f32.mrf.mxu0
    %v907 = vadd.f32 %v799, %v906
    %v908 = vpop.f32.mrf.mxu0
    %909 = vdwg.mxu0
    %910 = vmatprep.subr.mxu0 0.0
    %v911 = vand.u32 %v72, 4294901760
    %v912 = vsub.f32 %v72, %v911
    %v913 = vand.u32 %v912, 4294901760
    %914 = vmatpush1.msra.mxu0 %v913
    %915 = vmatprep.subr.mxu0 0.0
    %v916 = vand.u32 %v71, 4294901760
    %v917 = vsub.f32 %v71, %v916
    %v918 = vand.u32 %v917, 4294901760
    %919 = vmatpush1.msra.mxu0 %v918
    %920 = vmatprep.subr.mxu0 0.0
    %v921 = vand.u32 %v70, 4294901760
    %v922 = vsub.f32 %v70, %v921
    %v923 = vand.u32 %v922, 4294901760
    %924 = vmatpush1.msra.mxu0 %v923
    %925 = vmatprep.subr.mxu0 0.0
    %v926 = vand.u32 %v69, 4294901760
    %v927 = vsub.f32 %v69, %v926
    %v928 = vand.u32 %v927, 4294901760
    %929 = vmatpush1.msra.mxu0 %v928
    %930 = vmatprep.subr.mxu0 0.0
    %v931 = vand.u32 %v68, 4294901760
    %v932 = vsub.f32 %v68, %v931
    %v933 = vand.u32 %v932, 4294901760
    %934 = vmatpush1.msra.mxu0 %v933
    %935 = vmatprep.subr.mxu0 0.0
    %v936 = vand.u32 %v67, 4294901760
    %v937 = vsub.f32 %v67, %v936
    %v938 = vand.u32 %v937, 4294901760
    %939 = vmatpush1.msra.mxu0 %v938
    %940 = vmatprep.subr.mxu0 0.0
    %v941 = vand.u32 %v66, 4294901760
    %v942 = vsub.f32 %v66, %v941
    %v943 = vand.u32 %v942, 4294901760
    %944 = vmatpush1.msra.mxu0 %v943
    %945 = vmatprep.subr.mxu0 0.0
    %v946 = vand.u32 %v65, 4294901760
    %v947 = vsub.f32 %v65, %v946
    %v948 = vand.u32 %v947, 4294901760
    %949 = vmatpush1.msra.mxu0 %v948
    %950 = vmatprep.subr.mxu0 0.0
    %v951 = vand.u32 %v64, 4294901760
    %v952 = vsub.f32 %v64, %v951
    %v953 = vand.u32 %v952, 4294901760
    %954 = vmatpush1.msra.mxu0 %v953
    %955 = vmatprep.subr.mxu0 0.0
    %v956 = vand.u32 %v63, 4294901760
    %v957 = vsub.f32 %v63, %v956
    %v958 = vand.u32 %v957, 4294901760
    %959 = vmatpush1.msra.mxu0 %v958
    %960 = vmatprep.subr.mxu0 0.0
    %v961 = vand.u32 %v62, 4294901760
    %v962 = vsub.f32 %v62, %v961
    %v963 = vand.u32 %v962, 4294901760
    %964 = vmatpush1.msra.mxu0 %v963
    %965 = vmatprep.subr.mxu0 0.0
    %v966 = vand.u32 %v61, 4294901760
    %v967 = vsub.f32 %v61, %v966
    %v968 = vand.u32 %v967, 4294901760
    %969 = vmatpush1.msra.mxu0 %v968
    %970 = vmatprep.subr.mxu0 0.0
    %v971 = vand.u32 %v60, 4294901760
    %v972 = vsub.f32 %v60, %v971
    %v973 = vand.u32 %v972, 4294901760
    %974 = vmatpush1.msra.mxu0 %v973
    %975 = vmatprep.subr.mxu0 0.0
    %v976 = vand.u32 %v59, 4294901760
    %v977 = vsub.f32 %v59, %v976
    %v978 = vand.u32 %v977, 4294901760
    %979 = vmatpush1.msra.mxu0 %v978
    %980 = vmatprep.subr.mxu0 0.0
    %v981 = vand.u32 %v58, 4294901760
    %v982 = vsub.f32 %v58, %v981
    %v983 = vand.u32 %v982, 4294901760
    %984 = vmatpush1.msra.mxu0 %v983
    %985 = vmatprep.subr.mxu0 0.0
    %v986 = vand.u32 %v57, 4294901760
    %v987 = vsub.f32 %v57, %v986
    %v988 = vand.u32 %v987, 4294901760
    %989 = vmatpush1.msra.mxu0 %v988
    %990 = vmatprep.subr.mxu0 0.0
    %v991 = vand.u32 %v88, 4294901760
    %v992 = vsub.f32 %v88, %v991
    %v993 = vand.u32 %v992, 4294901760
    %994 = vmatpush2.msra.mxu0 %v993
    %995 = vmatprep.subr.mxu0 0.0
    %v996 = vand.u32 %v87, 4294901760
    %v997 = vsub.f32 %v87, %v996
    %v998 = vand.u32 %v997, 4294901760
    %999 = vmatpush2.msra.mxu0 %v998
    %1000 = vmatprep.subr.mxu0 0.0
    %v1001 = vand.u32 %v86, 4294901760
    %v1002 = vsub.f32 %v86, %v1001
    %v1003 = vand.u32 %v1002, 4294901760
    %1004 = vmatpush2.msra.mxu0 %v1003
    %1005 = vmatprep.subr.mxu0 0.0
    %v1006 = vand.u32 %v85, 4294901760
    %v1007 = vsub.f32 %v85, %v1006
    %v1008 = vand.u32 %v1007, 4294901760
    %1009 = vmatpush2.msra.mxu0 %v1008
    %1010 = vmatprep.subr.mxu0 0.0
    %v1011 = vand.u32 %v84, 4294901760
    %v1012 = vsub.f32 %v84, %v1011
    %v1013 = vand.u32 %v1012, 4294901760
    %1014 = vmatpush2.msra.mxu0 %v1013
    %1015 = vmatprep.subr.mxu0 0.0
    %v1016 = vand.u32 %v83, 4294901760
    %v1017 = vsub.f32 %v83, %v1016
    %v1018 = vand.u32 %v1017, 4294901760
    %1019 = vmatpush2.msra.mxu0 %v1018
    %1020 = vmatprep.subr.mxu0 0.0
    %v1021 = vand.u32 %v82, 4294901760
    %v1022 = vsub.f32 %v82, %v1021
    %v1023 = vand.u32 %v1022, 4294901760
    %1024 = vmatpush2.msra.mxu0 %v1023
    %1025 = vmatprep.subr.mxu0 0.0
    %v1026 = vand.u32 %v81, 4294901760
    %v1027 = vsub.f32 %v81, %v1026
    %v1028 = vand.u32 %v1027, 4294901760
    %1029 = vmatpush2.msra.mxu0 %v1028
    %1030 = vmatprep.subr.mxu0 0.0
    %v1031 = vand.u32 %v80, 4294901760
    %v1032 = vsub.f32 %v80, %v1031
    %v1033 = vand.u32 %v1032, 4294901760
    %1034 = vmatpush2.msra.mxu0 %v1033
    %1035 = vmatprep.subr.mxu0 0.0
    %v1036 = vand.u32 %v79, 4294901760
    %v1037 = vsub.f32 %v79, %v1036
    %v1038 = vand.u32 %v1037, 4294901760
    %1039 = vmatpush2.msra.mxu0 %v1038
    %1040 = vmatprep.subr.mxu0 0.0
    %v1041 = vand.u32 %v78, 4294901760
    %v1042 = vsub.f32 %v78, %v1041
    %v1043 = vand.u32 %v1042, 4294901760
    %1044 = vmatpush2.msra.mxu0 %v1043
    %1045 = vmatprep.subr.mxu0 0.0
    %v1046 = vand.u32 %v77, 4294901760
    %v1047 = vsub.f32 %v77, %v1046
    %v1048 = vand.u32 %v1047, 4294901760
    %1049 = vmatpush2.msra.mxu0 %v1048
    %1050 = vmatprep.subr.mxu0 0.0
    %v1051 = vand.u32 %v76, 4294901760
    %v1052 = vsub.f32 %v76, %v1051
    %v1053 = vand.u32 %v1052, 4294901760
    %1054 = vmatpush2.msra.mxu0 %v1053
    %1055 = vmatprep.subr.mxu0 0.0
    %v1056 = vand.u32 %v75, 4294901760
    %v1057 = vsub.f32 %v75, %v1056
    %v1058 = vand.u32 %v1057, 4294901760
    %1059 = vmatpush2.msra.mxu0 %v1058
    %1060 = vmatprep.subr.mxu0 0.0
    %v1061 = vand.u32 %v74, 4294901760
    %v1062 = vsub.f32 %v74, %v1061
    %v1063 = vand.u32 %v1062, 4294901760
    %1064 = vmatpush2.msra.mxu0 %v1063
    %1065 = vmatprep.subr.mxu0 0.0
    %v1066 = vand.u32 %v73, 4294901760
    %v1067 = vsub.f32 %v73, %v1066
    %v1068 = vand.u32 %v1067, 4294901760
    %1069 = vmatpush2.msra.mxu0 %v1068
    %v1070 = vand.u32 %v42, 4294901760
    %1071 = vmatprep.mubr.f32.mxu0 %v1070
    %v1072 = vand.u32 %v41, 4294901760
    %1073 = vmatmul.mubr.f32.gmra.mxu0 %v1072
    %v1074 = vpop.f32.mrf.mxu0
    %v1075 = vadd.f32 %v907, %v1074
    %v1076 = vpop.f32.mrf.mxu0
    %1077 = vdwg.mxu0
    %1078 = vmatprep.subr.mxu0 0.0
    %v1079 = vand.u32 %v72, 4294901760
    %1080 = vmatpush1.msra.mxu0 %v1079
    %1081 = vmatprep.subr.mxu0 0.0
    %v1082 = vand.u32 %v71, 4294901760
    %1083 = vmatpush1.msra.mxu0 %v1082
    %1084 = vmatprep.subr.mxu0 0.0
    %v1085 = vand.u32 %v70, 4294901760
    %1086 = vmatpush1.msra.mxu0 %v1085
    %1087 = vmatprep.subr.mxu0 0.0
    %v1088 = vand.u32 %v69, 4294901760
    %1089 = vmatpush1.msra.mxu0 %v1088
    %1090 = vmatprep.subr.mxu0 0.0
    %v1091 = vand.u32 %v68, 4294901760
    %1092 = vmatpush1.msra.mxu0 %v1091
    %1093 = vmatprep.subr.mxu0 0.0
    %v1094 = vand.u32 %v67, 4294901760
    %1095 = vmatpush1.msra.mxu0 %v1094
    %1096 = vmatprep.subr.mxu0 0.0
    %v1097 = vand.u32 %v66, 4294901760
    %1098 = vmatpush1.msra.mxu0 %v1097
    %1099 = vmatprep.subr.mxu0 0.0
    %v1100 = vand.u32 %v65, 4294901760
    %1101 = vmatpush1.msra.mxu0 %v1100
    %1102 = vmatprep.subr.mxu0 0.0
    %v1103 = vand.u32 %v64, 4294901760
    %1104 = vmatpush1.msra.mxu0 %v1103
    %1105 = vmatprep.subr.mxu0 0.0
    %v1106 = vand.u32 %v63, 4294901760
    %1107 = vmatpush1.msra.mxu0 %v1106
    %1108 = vmatprep.subr.mxu0 0.0
    %v1109 = vand.u32 %v62, 4294901760
    %1110 = vmatpush1.msra.mxu0 %v1109
    %1111 = vmatprep.subr.mxu0 0.0
    %v1112 = vand.u32 %v61, 4294901760
    %1113 = vmatpush1.msra.mxu0 %v1112
    %1114 = vmatprep.subr.mxu0 0.0
    %v1115 = vand.u32 %v60, 4294901760
    %1116 = vmatpush1.msra.mxu0 %v1115
    %1117 = vmatprep.subr.mxu0 0.0
    %v1118 = vand.u32 %v59, 4294901760
    %1119 = vmatpush1.msra.mxu0 %v1118
    %1120 = vmatprep.subr.mxu0 0.0
    %v1121 = vand.u32 %v58, 4294901760
    %1122 = vmatpush1.msra.mxu0 %v1121
    %1123 = vmatprep.subr.mxu0 0.0
    %v1124 = vand.u32 %v57, 4294901760
    %1125 = vmatpush1.msra.mxu0 %v1124
    %1126 = vmatprep.subr.mxu0 0.0
    %v1127 = vand.u32 %v88, 4294901760
    %1128 = vmatpush2.msra.mxu0 %v1127
    %1129 = vmatprep.subr.mxu0 0.0
    %v1130 = vand.u32 %v87, 4294901760
    %1131 = vmatpush2.msra.mxu0 %v1130
    %1132 = vmatprep.subr.mxu0 0.0
    %v1133 = vand.u32 %v86, 4294901760
    %1134 = vmatpush2.msra.mxu0 %v1133
    %1135 = vmatprep.subr.mxu0 0.0
    %v1136 = vand.u32 %v85, 4294901760
    %1137 = vmatpush2.msra.mxu0 %v1136
    %1138 = vmatprep.subr.mxu0 0.0
    %v1139 = vand.u32 %v84, 4294901760
    %1140 = vmatpush2.msra.mxu0 %v1139
    %1141 = vmatprep.subr.mxu0 0.0
    %v1142 = vand.u32 %v83, 4294901760
    %1143 = vmatpush2.msra.mxu0 %v1142
    %1144 = vmatprep.subr.mxu0 0.0
    %v1145 = vand.u32 %v82, 4294901760
    %1146 = vmatpush2.msra.mxu0 %v1145
    %1147 = vmatprep.subr.mxu0 0.0
    %v1148 = vand.u32 %v81, 4294901760
    %1149 = vmatpush2.msra.mxu0 %v1148
    %1150 = vmatprep.subr.mxu0 0.0
    %v1151 = vand.u32 %v80, 4294901760
    %1152 = vmatpush2.msra.mxu0 %v1151
    %1153 = vmatprep.subr.mxu0 0.0
    %v1154 = vand.u32 %v79, 4294901760
    %1155 = vmatpush2.msra.mxu0 %v1154
    %1156 = vmatprep.subr.mxu0 0.0
    %v1157 = vand.u32 %v78, 4294901760
    %1158 = vmatpush2.msra.mxu0 %v1157
    %1159 = vmatprep.subr.mxu0 0.0
    %v1160 = vand.u32 %v77, 4294901760
    %1161 = vmatpush2.msra.mxu0 %v1160
    %1162 = vmatprep.subr.mxu0 0.0
    %v1163 = vand.u32 %v76, 4294901760
    %1164 = vmatpush2.msra.mxu0 %v1163
    %1165 = vmatprep.subr.mxu0 0.0
    %v1166 = vand.u32 %v75, 4294901760
    %1167 = vmatpush2.msra.mxu0 %v1166
    %1168 = vmatprep.subr.mxu0 0.0
    %v1169 = vand.u32 %v74, 4294901760
    %1170 = vmatpush2.msra.mxu0 %v1169
    %1171 = vmatprep.subr.mxu0 0.0
    %v1172 = vand.u32 %v73, 4294901760
    %1173 = vmatpush2.msra.mxu0 %v1172
    %v1174 = vand.u32 %v42, 4294901760
    %1175 = vmatprep.mubr.f32.mxu0 %v1174
    %v1176 = vand.u32 %v41, 4294901760
    %1177 = vmatmul.mubr.f32.gmra.mxu0 %v1176
    %v1178 = vpop.f32.mrf.mxu0
    %v1179 = vadd.f32 %v1075, %v1178
    %v1180 = vpop.f32.mrf.mxu0
    %1181 = vdwg.mxu0
    %1182 = vmatprep.subr.mxu0 0.0
    %v1183 = vand.u32 %v104, 4294901760
    %1184 = vmatpush1.msra.mxu0 %v1183
    %1185 = vmatprep.subr.mxu0 0.0
    %v1186 = vand.u32 %v103, 4294901760
    %1187 = vmatpush1.msra.mxu0 %v1186
    %1188 = vmatprep.subr.mxu0 0.0
    %v1189 = vand.u32 %v102, 4294901760
    %1190 = vmatpush1.msra.mxu0 %v1189
    %1191 = vmatprep.subr.mxu0 0.0
    %v1192 = vand.u32 %v101, 4294901760
    %1193 = vmatpush1.msra.mxu0 %v1192
    %1194 = vmatprep.subr.mxu0 0.0
    %v1195 = vand.u32 %v100, 4294901760
    %1196 = vmatpush1.msra.mxu0 %v1195
    %1197 = vmatprep.subr.mxu0 0.0
    %v1198 = vand.u32 %v99, 4294901760
    %1199 = vmatpush1.msra.mxu0 %v1198
    %1200 = vmatprep.subr.mxu0 0.0
    %v1201 = vand.u32 %v98, 4294901760
    %1202 = vmatpush1.msra.mxu0 %v1201
    %1203 = vmatprep.subr.mxu0 0.0
    %v1204 = vand.u32 %v97, 4294901760
    %1205 = vmatpush1.msra.mxu0 %v1204
    %1206 = vmatprep.subr.mxu0 0.0
    %v1207 = vand.u32 %v96, 4294901760
    %1208 = vmatpush1.msra.mxu0 %v1207
    %1209 = vmatprep.subr.mxu0 0.0
    %v1210 = vand.u32 %v95, 4294901760
    %1211 = vmatpush1.msra.mxu0 %v1210
    %1212 = vmatprep.subr.mxu0 0.0
    %v1213 = vand.u32 %v94, 4294901760
    %1214 = vmatpush1.msra.mxu0 %v1213
    %1215 = vmatprep.subr.mxu0 0.0
    %v1216 = vand.u32 %v93, 4294901760
    %1217 = vmatpush1.msra.mxu0 %v1216
    %1218 = vmatprep.subr.mxu0 0.0
    %v1219 = vand.u32 %v92, 4294901760
    %1220 = vmatpush1.msra.mxu0 %v1219
    %1221 = vmatprep.subr.mxu0 0.0
    %v1222 = vand.u32 %v91, 4294901760
    %1223 = vmatpush1.msra.mxu0 %v1222
    %1224 = vmatprep.subr.mxu0 0.0
    %v1225 = vand.u32 %v90, 4294901760
    %1226 = vmatpush1.msra.mxu0 %v1225
    %1227 = vmatprep.subr.mxu0 0.0
    %v1228 = vand.u32 %v89, 4294901760
    %1229 = vmatpush1.msra.mxu0 %v1228
    %1230 = vmatprep.subr.mxu0 0.0
    %v1231 = vand.u32 %v120, 4294901760
    %1232 = vmatpush2.msra.mxu0 %v1231
    %1233 = vmatprep.subr.mxu0 0.0
    %v1234 = vand.u32 %v119, 4294901760
    %1235 = vmatpush2.msra.mxu0 %v1234
    %1236 = vmatprep.subr.mxu0 0.0
    %v1237 = vand.u32 %v118, 4294901760
    %1238 = vmatpush2.msra.mxu0 %v1237
    %1239 = vmatprep.subr.mxu0 0.0
    %v1240 = vand.u32 %v117, 4294901760
    %1241 = vmatpush2.msra.mxu0 %v1240
    %1242 = vmatprep.subr.mxu0 0.0
    %v1243 = vand.u32 %v116, 4294901760
    %1244 = vmatpush2.msra.mxu0 %v1243
    %1245 = vmatprep.subr.mxu0 0.0
    %v1246 = vand.u32 %v115, 4294901760
    %1247 = vmatpush2.msra.mxu0 %v1246
    %1248 = vmatprep.subr.mxu0 0.0
    %v1249 = vand.u32 %v114, 4294901760
    %1250 = vmatpush2.msra.mxu0 %v1249
    %1251 = vmatprep.subr.mxu0 0.0
    %v1252 = vand.u32 %v113, 4294901760
    %1253 = vmatpush2.msra.mxu0 %v1252
    %1254 = vmatprep.subr.mxu0 0.0
    %v1255 = vand.u32 %v112, 4294901760
    %1256 = vmatpush2.msra.mxu0 %v1255
    %1257 = vmatprep.subr.mxu0 0.0
    %v1258 = vand.u32 %v111, 4294901760
    %1259 = vmatpush2.msra.mxu0 %v1258
    %1260 = vmatprep.subr.mxu0 0.0
    %v1261 = vand.u32 %v110, 4294901760
    %1262 = vmatpush2.msra.mxu0 %v1261
    %1263 = vmatprep.subr.mxu0 0.0
    %v1264 = vand.u32 %v109, 4294901760
    %1265 = vmatpush2.msra.mxu0 %v1264
    %1266 = vmatprep.subr.mxu0 0.0
    %v1267 = vand.u32 %v108, 4294901760
    %1268 = vmatpush2.msra.mxu0 %v1267
    %1269 = vmatprep.subr.mxu0 0.0
    %v1270 = vand.u32 %v107, 4294901760
    %1271 = vmatpush2.msra.mxu0 %v1270
    %1272 = vmatprep.subr.mxu0 0.0
    %v1273 = vand.u32 %v106, 4294901760
    %1274 = vmatpush2.msra.mxu0 %v1273
    %1275 = vmatprep.subr.mxu0 0.0
    %v1276 = vand.u32 %v105, 4294901760
    %1277 = vmatpush2.msra.mxu0 %v1276
    %v1278 = vand.u32 %v44, 4294901760
    %v1279 = vsub.f32 %v44, %v1278
    %v1280 = vand.u32 %v1279, 4294901760
    %v1281 = vsub.f32 %v1279, %v1280
    %v1282 = vand.u32 %v1281, 4294901760
    %1283 = vmatprep.mubr.f32.mxu0 %v1282
    %v1284 = vand.u32 %v43, 4294901760
    %v1285 = vsub.f32 %v43, %v1284
    %v1286 = vand.u32 %v1285, 4294901760
    %v1287 = vsub.f32 %v1285, %v1286
    %v1288 = vand.u32 %v1287, 4294901760
    %1289 = vmatmul.mubr.f32.gmra.mxu0 %v1288
    %v1290 = vpop.f32.mrf.mxu0
    %v1291 = vadd.f32 %v1179, %v1290
    %v1292 = vpop.f32.mrf.mxu0
    %1293 = vdwg.mxu0
    %1294 = vmatprep.subr.mxu0 0.0
    %v1295 = vand.u32 %v104, 4294901760
    %v1296 = vsub.f32 %v104, %v1295
    %v1297 = vand.u32 %v1296, 4294901760
    %v1298 = vsub.f32 %v1296, %v1297
    %v1299 = vand.u32 %v1298, 4294901760
    %1300 = vmatpush1.msra.mxu0 %v1299
    %1301 = vmatprep.subr.mxu0 0.0
    %v1302 = vand.u32 %v103, 4294901760
    %v1303 = vsub.f32 %v103, %v1302
    %v1304 = vand.u32 %v1303, 4294901760
    %v1305 = vsub.f32 %v1303, %v1304
    %v1306 = vand.u32 %v1305, 4294901760
    %1307 = vmatpush1.msra.mxu0 %v1306
    %1308 = vmatprep.subr.mxu0 0.0
    %v1309 = vand.u32 %v102, 4294901760
    %v1310 = vsub.f32 %v102, %v1309
    %v1311 = vand.u32 %v1310, 4294901760
    %v1312 = vsub.f32 %v1310, %v1311
    %v1313 = vand.u32 %v1312, 4294901760
    %1314 = vmatpush1.msra.mxu0 %v1313
    %1315 = vmatprep.subr.mxu0 0.0
    %v1316 = vand.u32 %v101, 4294901760
    %v1317 = vsub.f32 %v101, %v1316
    %v1318 = vand.u32 %v1317, 4294901760
    %v1319 = vsub.f32 %v1317, %v1318
    %v1320 = vand.u32 %v1319, 4294901760
    %1321 = vmatpush1.msra.mxu0 %v1320
    %1322 = vmatprep.subr.mxu0 0.0
    %v1323 = vand.u32 %v100, 4294901760
    %v1324 = vsub.f32 %v100, %v1323
    %v1325 = vand.u32 %v1324, 4294901760
    %v1326 = vsub.f32 %v1324, %v1325
    %v1327 = vand.u32 %v1326, 4294901760
    %1328 = vmatpush1.msra.mxu0 %v1327
    %1329 = vmatprep.subr.mxu0 0.0
    %v1330 = vand.u32 %v99, 4294901760
    %v1331 = vsub.f32 %v99, %v1330
    %v1332 = vand.u32 %v1331, 4294901760
    %v1333 = vsub.f32 %v1331, %v1332
    %v1334 = vand.u32 %v1333, 4294901760
    %1335 = vmatpush1.msra.mxu0 %v1334
    %1336 = vmatprep.subr.mxu0 0.0
    %v1337 = vand.u32 %v98, 4294901760
    %v1338 = vsub.f32 %v98, %v1337
    %v1339 = vand.u32 %v1338, 4294901760
    %v1340 = vsub.f32 %v1338, %v1339
    %v1341 = vand.u32 %v1340, 4294901760
    %1342 = vmatpush1.msra.mxu0 %v1341
    %1343 = vmatprep.subr.mxu0 0.0
    %v1344 = vand.u32 %v97, 4294901760
    %v1345 = vsub.f32 %v97, %v1344
    %v1346 = vand.u32 %v1345, 4294901760
    %v1347 = vsub.f32 %v1345, %v1346
    %v1348 = vand.u32 %v1347, 4294901760
    %1349 = vmatpush1.msra.mxu0 %v1348
    %1350 = vmatprep.subr.mxu0 0.0
    %v1351 = vand.u32 %v96, 4294901760
    %v1352 = vsub.f32 %v96, %v1351
    %v1353 = vand.u32 %v1352, 4294901760
    %v1354 = vsub.f32 %v1352, %v1353
    %v1355 = vand.u32 %v1354, 4294901760
    %1356 = vmatpush1.msra.mxu0 %v1355
    %1357 = vmatprep.subr.mxu0 0.0
    %v1358 = vand.u32 %v95, 4294901760
    %v1359 = vsub.f32 %v95, %v1358
    %v1360 = vand.u32 %v1359, 4294901760
    %v1361 = vsub.f32 %v1359, %v1360
    %v1362 = vand.u32 %v1361, 4294901760
    %1363 = vmatpush1.msra.mxu0 %v1362
    %1364 = vmatprep.subr.mxu0 0.0
    %v1365 = vand.u32 %v94, 4294901760
    %v1366 = vsub.f32 %v94, %v1365
    %v1367 = vand.u32 %v1366, 4294901760
    %v1368 = vsub.f32 %v1366, %v1367
    %v1369 = vand.u32 %v1368, 4294901760
    %1370 = vmatpush1.msra.mxu0 %v1369
    %1371 = vmatprep.subr.mxu0 0.0
    %v1372 = vand.u32 %v93, 4294901760
    %v1373 = vsub.f32 %v93, %v1372
    %v1374 = vand.u32 %v1373, 4294901760
    %v1375 = vsub.f32 %v1373, %v1374
    %v1376 = vand.u32 %v1375, 4294901760
    %1377 = vmatpush1.msra.mxu0 %v1376
    %1378 = vmatprep.subr.mxu0 0.0
    %v1379 = vand.u32 %v92, 4294901760
    %v1380 = vsub.f32 %v92, %v1379
    %v1381 = vand.u32 %v1380, 4294901760
    %v1382 = vsub.f32 %v1380, %v1381
    %v1383 = vand.u32 %v1382, 4294901760
    %1384 = vmatpush1.msra.mxu0 %v1383
    %1385 = vmatprep.subr.mxu0 0.0
    %v1386 = vand.u32 %v91, 4294901760
    %v1387 = vsub.f32 %v91, %v1386
    %v1388 = vand.u32 %v1387, 4294901760
    %v1389 = vsub.f32 %v1387, %v1388
    %v1390 = vand.u32 %v1389, 4294901760
    %1391 = vmatpush1.msra.mxu0 %v1390
    %1392 = vmatprep.subr.mxu0 0.0
    %v1393 = vand.u32 %v90, 4294901760
    %v1394 = vsub.f32 %v90, %v1393
    %v1395 = vand.u32 %v1394, 4294901760
    %v1396 = vsub.f32 %v1394, %v1395
    %v1397 = vand.u32 %v1396, 4294901760
    %1398 = vmatpush1.msra.mxu0 %v1397
    %1399 = vmatprep.subr.mxu0 0.0
    %v1400 = vand.u32 %v89, 4294901760
    %v1401 = vsub.f32 %v89, %v1400
    %v1402 = vand.u32 %v1401, 4294901760
    %v1403 = vsub.f32 %v1401, %v1402
    %v1404 = vand.u32 %v1403, 4294901760
    %1405 = vmatpush1.msra.mxu0 %v1404
    %1406 = vmatprep.subr.mxu0 0.0
    %v1407 = vand.u32 %v120, 4294901760
    %v1408 = vsub.f32 %v120, %v1407
    %v1409 = vand.u32 %v1408, 4294901760
    %v1410 = vsub.f32 %v1408, %v1409
    %v1411 = vand.u32 %v1410, 4294901760
    %1412 = vmatpush2.msra.mxu0 %v1411
    %1413 = vmatprep.subr.mxu0 0.0
    %v1414 = vand.u32 %v119, 4294901760
    %v1415 = vsub.f32 %v119, %v1414
    %v1416 = vand.u32 %v1415, 4294901760
    %v1417 = vsub.f32 %v1415, %v1416
    %v1418 = vand.u32 %v1417, 4294901760
    %1419 = vmatpush2.msra.mxu0 %v1418
    %1420 = vmatprep.subr.mxu0 0.0
    %v1421 = vand.u32 %v118, 4294901760
    %v1422 = vsub.f32 %v118, %v1421
    %v1423 = vand.u32 %v1422, 4294901760
    %v1424 = vsub.f32 %v1422, %v1423
    %v1425 = vand.u32 %v1424, 4294901760
    %1426 = vmatpush2.msra.mxu0 %v1425
    %1427 = vmatprep.subr.mxu0 0.0
    %v1428 = vand.u32 %v117, 4294901760
    %v1429 = vsub.f32 %v117, %v1428
    %v1430 = vand.u32 %v1429, 4294901760
    %v1431 = vsub.f32 %v1429, %v1430
    %v1432 = vand.u32 %v1431, 4294901760
    %1433 = vmatpush2.msra.mxu0 %v1432
    %1434 = vmatprep.subr.mxu0 0.0
    %v1435 = vand.u32 %v116, 4294901760
    %v1436 = vsub.f32 %v116, %v1435
    %v1437 = vand.u32 %v1436, 4294901760
    %v1438 = vsub.f32 %v1436, %v1437
    %v1439 = vand.u32 %v1438, 4294901760
    %1440 = vmatpush2.msra.mxu0 %v1439
    %1441 = vmatprep.subr.mxu0 0.0
    %v1442 = vand.u32 %v115, 4294901760
    %v1443 = vsub.f32 %v115, %v1442
    %v1444 = vand.u32 %v1443, 4294901760
    %v1445 = vsub.f32 %v1443, %v1444
    %v1446 = vand.u32 %v1445, 4294901760
    %1447 = vmatpush2.msra.mxu0 %v1446
    %1448 = vmatprep.subr.mxu0 0.0
    %v1449 = vand.u32 %v114, 4294901760
    %v1450 = vsub.f32 %v114, %v1449
    %v1451 = vand.u32 %v1450, 4294901760
    %v1452 = vsub.f32 %v1450, %v1451
    %v1453 = vand.u32 %v1452, 4294901760
    %1454 = vmatpush2.msra.mxu0 %v1453
    %1455 = vmatprep.subr.mxu0 0.0
    %v1456 = vand.u32 %v113, 4294901760
    %v1457 = vsub.f32 %v113, %v1456
    %v1458 = vand.u32 %v1457, 4294901760
    %v1459 = vsub.f32 %v1457, %v1458
    %v1460 = vand.u32 %v1459, 4294901760
    %1461 = vmatpush2.msra.mxu0 %v1460
    %1462 = vmatprep.subr.mxu0 0.0
    %v1463 = vand.u32 %v112, 4294901760
    %v1464 = vsub.f32 %v112, %v1463
    %v1465 = vand.u32 %v1464, 4294901760
    %v1466 = vsub.f32 %v1464, %v1465
    %v1467 = vand.u32 %v1466, 4294901760
    %1468 = vmatpush2.msra.mxu0 %v1467
    %1469 = vmatprep.subr.mxu0 0.0
    %v1470 = vand.u32 %v111, 4294901760
    %v1471 = vsub.f32 %v111, %v1470
    %v1472 = vand.u32 %v1471, 4294901760
    %v1473 = vsub.f32 %v1471, %v1472
    %v1474 = vand.u32 %v1473, 4294901760
    %1475 = vmatpush2.msra.mxu0 %v1474
    %1476 = vmatprep.subr.mxu0 0.0
    %v1477 = vand.u32 %v110, 4294901760
    %v1478 = vsub.f32 %v110, %v1477
    %v1479 = vand.u32 %v1478, 4294901760
    %v1480 = vsub.f32 %v1478, %v1479
    %v1481 = vand.u32 %v1480, 4294901760
    %1482 = vmatpush2.msra.mxu0 %v1481
    %1483 = vmatprep.subr.mxu0 0.0
    %v1484 = vand.u32 %v109, 4294901760
    %v1485 = vsub.f32 %v109, %v1484
    %v1486 = vand.u32 %v1485, 4294901760
    %v1487 = vsub.f32 %v1485, %v1486
    %v1488 = vand.u32 %v1487, 4294901760
    %1489 = vmatpush2.msra.mxu0 %v1488
    %1490 = vmatprep.subr.mxu0 0.0
    %v1491 = vand.u32 %v108, 4294901760
    %v1492 = vsub.f32 %v108, %v1491
    %v1493 = vand.u32 %v1492, 4294901760
    %v1494 = vsub.f32 %v1492, %v1493
    %v1495 = vand.u32 %v1494, 4294901760
    %1496 = vmatpush2.msra.mxu0 %v1495
    %1497 = vmatprep.subr.mxu0 0.0
    %v1498 = vand.u32 %v107, 4294901760
    %v1499 = vsub.f32 %v107, %v1498
    %v1500 = vand.u32 %v1499, 4294901760
    %v1501 = vsub.f32 %v1499, %v1500
    %v1502 = vand.u32 %v1501, 4294901760
    %1503 = vmatpush2.msra.mxu0 %v1502
    %1504 = vmatprep.subr.mxu0 0.0
    %v1505 = vand.u32 %v106, 4294901760
    %v1506 = vsub.f32 %v106, %v1505
    %v1507 = vand.u32 %v1506, 4294901760
    %v1508 = vsub.f32 %v1506, %v1507
    %v1509 = vand.u32 %v1508, 4294901760
    %1510 = vmatpush2.msra.mxu0 %v1509
    %1511 = vmatprep.subr.mxu0 0.0
    %v1512 = vand.u32 %v105, 4294901760
    %v1513 = vsub.f32 %v105, %v1512
    %v1514 = vand.u32 %v1513, 4294901760
    %v1515 = vsub.f32 %v1513, %v1514
    %v1516 = vand.u32 %v1515, 4294901760
    %1517 = vmatpush2.msra.mxu0 %v1516
    %v1518 = vand.u32 %v44, 4294901760
    %1519 = vmatprep.mubr.f32.mxu0 %v1518
    %v1520 = vand.u32 %v43, 4294901760
    %1521 = vmatmul.mubr.f32.gmra.mxu0 %v1520
    %v1522 = vpop.f32.mrf.mxu0
    %v1523 = vadd.f32 %v1291, %v1522
    %v1524 = vpop.f32.mrf.mxu0
    %1525 = vdwg.mxu0
    %1526 = vmatprep.subr.mxu0 0.0
    %v1527 = vand.u32 %v104, 4294901760
    %v1528 = vsub.f32 %v104, %v1527
    %1529 = vmatpush1.msra.mxu0 %v1528
    %1530 = vmatprep.subr.mxu0 0.0
    %v1531 = vand.u32 %v103, 4294901760
    %v1532 = vsub.f32 %v103, %v1531
    %1533 = vmatpush1.msra.mxu0 %v1532
    %1534 = vmatprep.subr.mxu0 0.0
    %v1535 = vand.u32 %v102, 4294901760
    %v1536 = vsub.f32 %v102, %v1535
    %1537 = vmatpush1.msra.mxu0 %v1536
    %1538 = vmatprep.subr.mxu0 0.0
    %v1539 = vand.u32 %v101, 4294901760
    %v1540 = vsub.f32 %v101, %v1539
    %1541 = vmatpush1.msra.mxu0 %v1540
    %1542 = vmatprep.subr.mxu0 0.0
    %v1543 = vand.u32 %v100, 4294901760
    %v1544 = vsub.f32 %v100, %v1543
    %1545 = vmatpush1.msra.mxu0 %v1544
    %1546 = vmatprep.subr.mxu0 0.0
    %v1547 = vand.u32 %v99, 4294901760
    %v1548 = vsub.f32 %v99, %v1547
    %1549 = vmatpush1.msra.mxu0 %v1548
    %1550 = vmatprep.subr.mxu0 0.0
    %v1551 = vand.u32 %v98, 4294901760
    %v1552 = vsub.f32 %v98, %v1551
    %1553 = vmatpush1.msra.mxu0 %v1552
    %1554 = vmatprep.subr.mxu0 0.0
    %v1555 = vand.u32 %v97, 4294901760
    %v1556 = vsub.f32 %v97, %v1555
    %1557 = vmatpush1.msra.mxu0 %v1556
    %1558 = vmatprep.subr.mxu0 0.0
    %v1559 = vand.u32 %v96, 4294901760
    %v1560 = vsub.f32 %v96, %v1559
    %1561 = vmatpush1.msra.mxu0 %v1560
    %1562 = vmatprep.subr.mxu0 0.0
    %v1563 = vand.u32 %v95, 4294901760
    %v1564 = vsub.f32 %v95, %v1563
    %1565 = vmatpush1.msra.mxu0 %v1564
    %1566 = vmatprep.subr.mxu0 0.0
    %v1567 = vand.u32 %v94, 4294901760
    %v1568 = vsub.f32 %v94, %v1567
    %1569 = vmatpush1.msra.mxu0 %v1568
    %1570 = vmatprep.subr.mxu0 0.0
    %v1571 = vand.u32 %v93, 4294901760
    %v1572 = vsub.f32 %v93, %v1571
    %1573 = vmatpush1.msra.mxu0 %v1572
    %1574 = vmatprep.subr.mxu0 0.0
    %v1575 = vand.u32 %v92, 4294901760
    %v1576 = vsub.f32 %v92, %v1575
    %1577 = vmatpush1.msra.mxu0 %v1576
    %1578 = vmatprep.subr.mxu0 0.0
    %v1579 = vand.u32 %v91, 4294901760
    %v1580 = vsub.f32 %v91, %v1579
    %1581 = vmatpush1.msra.mxu0 %v1580
    %1582 = vmatprep.subr.mxu0 0.0
    %v1583 = vand.u32 %v90, 4294901760
    %v1584 = vsub.f32 %v90, %v1583
    %1585 = vmatpush1.msra.mxu0 %v1584
    %1586 = vmatprep.subr.mxu0 0.0
    %v1587 = vand.u32 %v89, 4294901760
    %v1588 = vsub.f32 %v89, %v1587
    %1589 = vmatpush1.msra.mxu0 %v1588
    %1590 = vmatprep.subr.mxu0 0.0
    %v1591 = vand.u32 %v120, 4294901760
    %v1592 = vsub.f32 %v120, %v1591
    %1593 = vmatpush2.msra.mxu0 %v1592
    %1594 = vmatprep.subr.mxu0 0.0
    %v1595 = vand.u32 %v119, 4294901760
    %v1596 = vsub.f32 %v119, %v1595
    %1597 = vmatpush2.msra.mxu0 %v1596
    %1598 = vmatprep.subr.mxu0 0.0
    %v1599 = vand.u32 %v118, 4294901760
    %v1600 = vsub.f32 %v118, %v1599
    %1601 = vmatpush2.msra.mxu0 %v1600
    %1602 = vmatprep.subr.mxu0 0.0
    %v1603 = vand.u32 %v117, 4294901760
    %v1604 = vsub.f32 %v117, %v1603
    %1605 = vmatpush2.msra.mxu0 %v1604
    %1606 = vmatprep.subr.mxu0 0.0
    %v1607 = vand.u32 %v116, 4294901760
    %v1608 = vsub.f32 %v116, %v1607
    %1609 = vmatpush2.msra.mxu0 %v1608
    %1610 = vmatprep.subr.mxu0 0.0
    %v1611 = vand.u32 %v115, 4294901760
    %v1612 = vsub.f32 %v115, %v1611
    %1613 = vmatpush2.msra.mxu0 %v1612
    %1614 = vmatprep.subr.mxu0 0.0
    %v1615 = vand.u32 %v114, 4294901760
    %v1616 = vsub.f32 %v114, %v1615
    %1617 = vmatpush2.msra.mxu0 %v1616
    %1618 = vmatprep.subr.mxu0 0.0
    %v1619 = vand.u32 %v113, 4294901760
    %v1620 = vsub.f32 %v113, %v1619
    %1621 = vmatpush2.msra.mxu0 %v1620
    %1622 = vmatprep.subr.mxu0 0.0
    %v1623 = vand.u32 %v112, 4294901760
    %v1624 = vsub.f32 %v112, %v1623
    %1625 = vmatpush2.msra.mxu0 %v1624
    %1626 = vmatprep.subr.mxu0 0.0
    %v1627 = vand.u32 %v111, 4294901760
    %v1628 = vsub.f32 %v111, %v1627
    %1629 = vmatpush2.msra.mxu0 %v1628
    %1630 = vmatprep.subr.mxu0 0.0
    %v1631 = vand.u32 %v110, 4294901760
    %v1632 = vsub.f32 %v110, %v1631
    %1633 = vmatpush2.msra.mxu0 %v1632
    %1634 = vmatprep.subr.mxu0 0.0
    %v1635 = vand.u32 %v109, 4294901760
    %v1636 = vsub.f32 %v109, %v1635
    %1637 = vmatpush2.msra.mxu0 %v1636
    %1638 = vmatprep.subr.mxu0 0.0
    %v1639 = vand.u32 %v108, 4294901760
    %v1640 = vsub.f32 %v108, %v1639
    %1641 = vmatpush2.msra.mxu0 %v1640
    %1642 = vmatprep.subr.mxu0 0.0
    %v1643 = vand.u32 %v107, 4294901760
    %v1644 = vsub.f32 %v107, %v1643
    %1645 = vmatpush2.msra.mxu0 %v1644
    %1646 = vmatprep.subr.mxu0 0.0
    %v1647 = vand.u32 %v106, 4294901760
    %v1648 = vsub.f32 %v106, %v1647
    %1649 = vmatpush2.msra.mxu0 %v1648
    %1650 = vmatprep.subr.mxu0 0.0
    %v1651 = vand.u32 %v105, 4294901760
    %v1652 = vsub.f32 %v105, %v1651
    %1653 = vmatpush2.msra.mxu0 %v1652
    %v1654 = vand.u32 %v44, 4294901760
    %v1655 = vsub.f32 %v44, %v1654
    %1656 = vmatprep.mubr.f32.mxu0 %v1655
    %v1657 = vand.u32 %v43, 4294901760
    %v1658 = vsub.f32 %v43, %v1657
    %1659 = vmatmul.mubr.f32.gmra.mxu0 %v1658
    %v1660 = vpop.f32.mrf.mxu0
    %v1661 = vadd.f32 %v1523, %v1660
    %v1662 = vpop.f32.mrf.mxu0
    %1663 = vdwg.mxu0
    %1664 = vmatprep.subr.mxu0 0.0
    %v1665 = vand.u32 %v104, 4294901760
    %1666 = vmatpush1.msra.mxu0 %v1665
    %1667 = vmatprep.subr.mxu0 0.0
    %v1668 = vand.u32 %v103, 4294901760
    %1669 = vmatpush1.msra.mxu0 %v1668
    %1670 = vmatprep.subr.mxu0 0.0
    %v1671 = vand.u32 %v102, 4294901760
    %1672 = vmatpush1.msra.mxu0 %v1671
    %1673 = vmatprep.subr.mxu0 0.0
    %v1674 = vand.u32 %v101, 4294901760
    %1675 = vmatpush1.msra.mxu0 %v1674
    %1676 = vmatprep.subr.mxu0 0.0
    %v1677 = vand.u32 %v100, 4294901760
    %1678 = vmatpush1.msra.mxu0 %v1677
    %1679 = vmatprep.subr.mxu0 0.0
    %v1680 = vand.u32 %v99, 4294901760
    %1681 = vmatpush1.msra.mxu0 %v1680
    %1682 = vmatprep.subr.mxu0 0.0
    %v1683 = vand.u32 %v98, 4294901760
    %1684 = vmatpush1.msra.mxu0 %v1683
    %1685 = vmatprep.subr.mxu0 0.0
    %v1686 = vand.u32 %v97, 4294901760
    %1687 = vmatpush1.msra.mxu0 %v1686
    %1688 = vmatprep.subr.mxu0 0.0
    %v1689 = vand.u32 %v96, 4294901760
    %1690 = vmatpush1.msra.mxu0 %v1689
    %1691 = vmatprep.subr.mxu0 0.0
    %v1692 = vand.u32 %v95, 4294901760
    %1693 = vmatpush1.msra.mxu0 %v1692
    %1694 = vmatprep.subr.mxu0 0.0
    %v1695 = vand.u32 %v94, 4294901760
    %1696 = vmatpush1.msra.mxu0 %v1695
    %1697 = vmatprep.subr.mxu0 0.0
    %v1698 = vand.u32 %v93, 4294901760
    %1699 = vmatpush1.msra.mxu0 %v1698
    %1700 = vmatprep.subr.mxu0 0.0
    %v1701 = vand.u32 %v92, 4294901760
    %1702 = vmatpush1.msra.mxu0 %v1701
    %1703 = vmatprep.subr.mxu0 0.0
    %v1704 = vand.u32 %v91, 4294901760
    %1705 = vmatpush1.msra.mxu0 %v1704
    %1706 = vmatprep.subr.mxu0 0.0
    %v1707 = vand.u32 %v90, 4294901760
    %1708 = vmatpush1.msra.mxu0 %v1707
    %1709 = vmatprep.subr.mxu0 0.0
    %v1710 = vand.u32 %v89, 4294901760
    %1711 = vmatpush1.msra.mxu0 %v1710
    %1712 = vmatprep.subr.mxu0 0.0
    %v1713 = vand.u32 %v120, 4294901760
    %1714 = vmatpush2.msra.mxu0 %v1713
    %1715 = vmatprep.subr.mxu0 0.0
    %v1716 = vand.u32 %v119, 4294901760
    %1717 = vmatpush2.msra.mxu0 %v1716
    %1718 = vmatprep.subr.mxu0 0.0
    %v1719 = vand.u32 %v118, 4294901760
    %1720 = vmatpush2.msra.mxu0 %v1719
    %1721 = vmatprep.subr.mxu0 0.0
    %v1722 = vand.u32 %v117, 4294901760
    %1723 = vmatpush2.msra.mxu0 %v1722
    %1724 = vmatprep.subr.mxu0 0.0
    %v1725 = vand.u32 %v116, 4294901760
    %1726 = vmatpush2.msra.mxu0 %v1725
    %1727 = vmatprep.subr.mxu0 0.0
    %v1728 = vand.u32 %v115, 4294901760
    %1729 = vmatpush2.msra.mxu0 %v1728
    %1730 = vmatprep.subr.mxu0 0.0
    %v1731 = vand.u32 %v114, 4294901760
    %1732 = vmatpush2.msra.mxu0 %v1731
    %1733 = vmatprep.subr.mxu0 0.0
    %v1734 = vand.u32 %v113, 4294901760
    %1735 = vmatpush2.msra.mxu0 %v1734
    %1736 = vmatprep.subr.mxu0 0.0
    %v1737 = vand.u32 %v112, 4294901760
    %1738 = vmatpush2.msra.mxu0 %v1737
    %1739 = vmatprep.subr.mxu0 0.0
    %v1740 = vand.u32 %v111, 4294901760
    %1741 = vmatpush2.msra.mxu0 %v1740
    %1742 = vmatprep.subr.mxu0 0.0
    %v1743 = vand.u32 %v110, 4294901760
    %1744 = vmatpush2.msra.mxu0 %v1743
    %1745 = vmatprep.subr.mxu0 0.0
    %v1746 = vand.u32 %v109, 4294901760
    %1747 = vmatpush2.msra.mxu0 %v1746
    %1748 = vmatprep.subr.mxu0 0.0
    %v1749 = vand.u32 %v108, 4294901760
    %1750 = vmatpush2.msra.mxu0 %v1749
    %1751 = vmatprep.subr.mxu0 0.0
    %v1752 = vand.u32 %v107, 4294901760
    %1753 = vmatpush2.msra.mxu0 %v1752
    %1754 = vmatprep.subr.mxu0 0.0
    %v1755 = vand.u32 %v106, 4294901760
    %1756 = vmatpush2.msra.mxu0 %v1755
    %1757 = vmatprep.subr.mxu0 0.0
    %v1758 = vand.u32 %v105, 4294901760
    %1759 = vmatpush2.msra.mxu0 %v1758
    %v1760 = vand.u32 %v44, 4294901760
    %v1761 = vsub.f32 %v44, %v1760
    %v1762 = vand.u32 %v1761, 4294901760
    %1763 = vmatprep.mubr.f32.mxu0 %v1762
    %v1764 = vand.u32 %v43, 4294901760
    %v1765 = vsub.f32 %v43, %v1764
    %v1766 = vand.u32 %v1765, 4294901760
    %1767 = vmatmul.mubr.f32.gmra.mxu0 %v1766
    %v1768 = vpop.f32.mrf.mxu0
    %v1769 = vadd.f32 %v1661, %v1768
    %v1770 = vpop.f32.mrf.mxu0
    %1771 = vdwg.mxu0
    %1772 = vmatprep.subr.mxu0 0.0
    %v1773 = vand.u32 %v104, 4294901760
    %v1774 = vsub.f32 %v104, %v1773
    %v1775 = vand.u32 %v1774, 4294901760
    %1776 = vmatpush1.msra.mxu0 %v1775
    %1777 = vmatprep.subr.mxu0 0.0
    %v1778 = vand.u32 %v103, 4294901760
    %v1779 = vsub.f32 %v103, %v1778
    %v1780 = vand.u32 %v1779, 4294901760
    %1781 = vmatpush1.msra.mxu0 %v1780
    %1782 = vmatprep.subr.mxu0 0.0
    %v1783 = vand.u32 %v102, 4294901760
    %v1784 = vsub.f32 %v102, %v1783
    %v1785 = vand.u32 %v1784, 4294901760
    %1786 = vmatpush1.msra.mxu0 %v1785
    %1787 = vmatprep.subr.mxu0 0.0
    %v1788 = vand.u32 %v101, 4294901760
    %v1789 = vsub.f32 %v101, %v1788
    %v1790 = vand.u32 %v1789, 4294901760
    %1791 = vmatpush1.msra.mxu0 %v1790
    %1792 = vmatprep.subr.mxu0 0.0
    %v1793 = vand.u32 %v100, 4294901760
    %v1794 = vsub.f32 %v100, %v1793
    %v1795 = vand.u32 %v1794, 4294901760
    %1796 = vmatpush1.msra.mxu0 %v1795
    %1797 = vmatprep.subr.mxu0 0.0
    %v1798 = vand.u32 %v99, 4294901760
    %v1799 = vsub.f32 %v99, %v1798
    %v1800 = vand.u32 %v1799, 4294901760
    %1801 = vmatpush1.msra.mxu0 %v1800
    %1802 = vmatprep.subr.mxu0 0.0
    %v1803 = vand.u32 %v98, 4294901760
    %v1804 = vsub.f32 %v98, %v1803
    %v1805 = vand.u32 %v1804, 4294901760
    %1806 = vmatpush1.msra.mxu0 %v1805
    %1807 = vmatprep.subr.mxu0 0.0
    %v1808 = vand.u32 %v97, 4294901760
    %v1809 = vsub.f32 %v97, %v1808
    %v1810 = vand.u32 %v1809, 4294901760
    %1811 = vmatpush1.msra.mxu0 %v1810
    %1812 = vmatprep.subr.mxu0 0.0
    %v1813 = vand.u32 %v96, 4294901760
    %v1814 = vsub.f32 %v96, %v1813
    %v1815 = vand.u32 %v1814, 4294901760
    %1816 = vmatpush1.msra.mxu0 %v1815
    %1817 = vmatprep.subr.mxu0 0.0
    %v1818 = vand.u32 %v95, 4294901760
    %v1819 = vsub.f32 %v95, %v1818
    %v1820 = vand.u32 %v1819, 4294901760
    %1821 = vmatpush1.msra.mxu0 %v1820
    %1822 = vmatprep.subr.mxu0 0.0
    %v1823 = vand.u32 %v94, 4294901760
    %v1824 = vsub.f32 %v94, %v1823
    %v1825 = vand.u32 %v1824, 4294901760
    %1826 = vmatpush1.msra.mxu0 %v1825
    %1827 = vmatprep.subr.mxu0 0.0
    %v1828 = vand.u32 %v93, 4294901760
    %v1829 = vsub.f32 %v93, %v1828
    %v1830 = vand.u32 %v1829, 4294901760
    %1831 = vmatpush1.msra.mxu0 %v1830
    %1832 = vmatprep.subr.mxu0 0.0
    %v1833 = vand.u32 %v92, 4294901760
    %v1834 = vsub.f32 %v92, %v1833
    %v1835 = vand.u32 %v1834, 4294901760
    %1836 = vmatpush1.msra.mxu0 %v1835
    %1837 = vmatprep.subr.mxu0 0.0
    %v1838 = vand.u32 %v91, 4294901760
    %v1839 = vsub.f32 %v91, %v1838
    %v1840 = vand.u32 %v1839, 4294901760
    %1841 = vmatpush1.msra.mxu0 %v1840
    %1842 = vmatprep.subr.mxu0 0.0
    %v1843 = vand.u32 %v90, 4294901760
    %v1844 = vsub.f32 %v90, %v1843
    %v1845 = vand.u32 %v1844, 4294901760
    %1846 = vmatpush1.msra.mxu0 %v1845
    %1847 = vmatprep.subr.mxu0 0.0
    %v1848 = vand.u32 %v89, 4294901760
    %v1849 = vsub.f32 %v89, %v1848
    %v1850 = vand.u32 %v1849, 4294901760
    %1851 = vmatpush1.msra.mxu0 %v1850
    %1852 = vmatprep.subr.mxu0 0.0
    %v1853 = vand.u32 %v120, 4294901760
    %v1854 = vsub.f32 %v120, %v1853
    %v1855 = vand.u32 %v1854, 4294901760
    %1856 = vmatpush2.msra.mxu0 %v1855
    %1857 = vmatprep.subr.mxu0 0.0
    %v1858 = vand.u32 %v119, 4294901760
    %v1859 = vsub.f32 %v119, %v1858
    %v1860 = vand.u32 %v1859, 4294901760
    %1861 = vmatpush2.msra.mxu0 %v1860
    %1862 = vmatprep.subr.mxu0 0.0
    %v1863 = vand.u32 %v118, 4294901760
    %v1864 = vsub.f32 %v118, %v1863
    %v1865 = vand.u32 %v1864, 4294901760
    %1866 = vmatpush2.msra.mxu0 %v1865
    %1867 = vmatprep.subr.mxu0 0.0
    %v1868 = vand.u32 %v117, 4294901760
    %v1869 = vsub.f32 %v117, %v1868
    %v1870 = vand.u32 %v1869, 4294901760
    %1871 = vmatpush2.msra.mxu0 %v1870
    %1872 = vmatprep.subr.mxu0 0.0
    %v1873 = vand.u32 %v116, 4294901760
    %v1874 = vsub.f32 %v116, %v1873
    %v1875 = vand.u32 %v1874, 4294901760
    %1876 = vmatpush2.msra.mxu0 %v1875
    %1877 = vmatprep.subr.mxu0 0.0
    %v1878 = vand.u32 %v115, 4294901760
    %v1879 = vsub.f32 %v115, %v1878
    %v1880 = vand.u32 %v1879, 4294901760
    %1881 = vmatpush2.msra.mxu0 %v1880
    %1882 = vmatprep.subr.mxu0 0.0
    %v1883 = vand.u32 %v114, 4294901760
    %v1884 = vsub.f32 %v114, %v1883
    %v1885 = vand.u32 %v1884, 4294901760
    %1886 = vmatpush2.msra.mxu0 %v1885
    %1887 = vmatprep.subr.mxu0 0.0
    %v1888 = vand.u32 %v113, 4294901760
    %v1889 = vsub.f32 %v113, %v1888
    %v1890 = vand.u32 %v1889, 4294901760
    %1891 = vmatpush2.msra.mxu0 %v1890
    %1892 = vmatprep.subr.mxu0 0.0
    %v1893 = vand.u32 %v112, 4294901760
    %v1894 = vsub.f32 %v112, %v1893
    %v1895 = vand.u32 %v1894, 4294901760
    %1896 = vmatpush2.msra.mxu0 %v1895
    %1897 = vmatprep.subr.mxu0 0.0
    %v1898 = vand.u32 %v111, 4294901760
    %v1899 = vsub.f32 %v111, %v1898
    %v1900 = vand.u32 %v1899, 4294901760
    %1901 = vmatpush2.msra.mxu0 %v1900
    %1902 = vmatprep.subr.mxu0 0.0
    %v1903 = vand.u32 %v110, 4294901760
    %v1904 = vsub.f32 %v110, %v1903
    %v1905 = vand.u32 %v1904, 4294901760
    %1906 = vmatpush2.msra.mxu0 %v1905
    %1907 = vmatprep.subr.mxu0 0.0
    %v1908 = vand.u32 %v109, 4294901760
    %v1909 = vsub.f32 %v109, %v1908
    %v1910 = vand.u32 %v1909, 4294901760
    %1911 = vmatpush2.msra.mxu0 %v1910
    %1912 = vmatprep.subr.mxu0 0.0
    %v1913 = vand.u32 %v108, 4294901760
    %v1914 = vsub.f32 %v108, %v1913
    %v1915 = vand.u32 %v1914, 4294901760
    %1916 = vmatpush2.msra.mxu0 %v1915
    %1917 = vmatprep.subr.mxu0 0.0
    %v1918 = vand.u32 %v107, 4294901760
    %v1919 = vsub.f32 %v107, %v1918
    %v1920 = vand.u32 %v1919, 4294901760
    %1921 = vmatpush2.msra.mxu0 %v1920
    %1922 = vmatprep.subr.mxu0 0.0
    %v1923 = vand.u32 %v106, 4294901760
    %v1924 = vsub.f32 %v106, %v1923
    %v1925 = vand.u32 %v1924, 4294901760
    %1926 = vmatpush2.msra.mxu0 %v1925
    %1927 = vmatprep.subr.mxu0 0.0
    %v1928 = vand.u32 %v105, 4294901760
    %v1929 = vsub.f32 %v105, %v1928
    %v1930 = vand.u32 %v1929, 4294901760
    %1931 = vmatpush2.msra.mxu0 %v1930
    %v1932 = vand.u32 %v44, 4294901760
    %1933 = vmatprep.mubr.f32.mxu0 %v1932
    %v1934 = vand.u32 %v43, 4294901760
    %1935 = vmatmul.mubr.f32.gmra.mxu0 %v1934
    %v1936 = vpop.f32.mrf.mxu0
    %v1937 = vadd.f32 %v1769, %v1936
    %v1938 = vpop.f32.mrf.mxu0
    %1939 = vdwg.mxu0
    %1940 = vmatprep.subr.mxu0 0.0
    %v1941 = vand.u32 %v104, 4294901760
    %1942 = vmatpush1.msra.mxu0 %v1941
    %1943 = vmatprep.subr.mxu0 0.0
    %v1944 = vand.u32 %v103, 4294901760
    %1945 = vmatpush1.msra.mxu0 %v1944
    %1946 = vmatprep.subr.mxu0 0.0
    %v1947 = vand.u32 %v102, 4294901760
    %1948 = vmatpush1.msra.mxu0 %v1947
    %1949 = vmatprep.subr.mxu0 0.0
    %v1950 = vand.u32 %v101, 4294901760
    %1951 = vmatpush1.msra.mxu0 %v1950
    %1952 = vmatprep.subr.mxu0 0.0
    %v1953 = vand.u32 %v100, 4294901760
    %1954 = vmatpush1.msra.mxu0 %v1953
    %1955 = vmatprep.subr.mxu0 0.0
    %v1956 = vand.u32 %v99, 4294901760
    %1957 = vmatpush1.msra.mxu0 %v1956
    %1958 = vmatprep.subr.mxu0 0.0
    %v1959 = vand.u32 %v98, 4294901760
    %1960 = vmatpush1.msra.mxu0 %v1959
    %1961 = vmatprep.subr.mxu0 0.0
    %v1962 = vand.u32 %v97, 4294901760
    %1963 = vmatpush1.msra.mxu0 %v1962
    %1964 = vmatprep.subr.mxu0 0.0
    %v1965 = vand.u32 %v96, 4294901760
    %1966 = vmatpush1.msra.mxu0 %v1965
    %1967 = vmatprep.subr.mxu0 0.0
    %v1968 = vand.u32 %v95, 4294901760
    %1969 = vmatpush1.msra.mxu0 %v1968
    %1970 = vmatprep.subr.mxu0 0.0
    %v1971 = vand.u32 %v94, 4294901760
    %1972 = vmatpush1.msra.mxu0 %v1971
    %1973 = vmatprep.subr.mxu0 0.0
    %v1974 = vand.u32 %v93, 4294901760
    %1975 = vmatpush1.msra.mxu0 %v1974
    %1976 = vmatprep.subr.mxu0 0.0
    %v1977 = vand.u32 %v92, 4294901760
    %1978 = vmatpush1.msra.mxu0 %v1977
    %1979 = vmatprep.subr.mxu0 0.0
    %v1980 = vand.u32 %v91, 4294901760
    %1981 = vmatpush1.msra.mxu0 %v1980
    %1982 = vmatprep.subr.mxu0 0.0
    %v1983 = vand.u32 %v90, 4294901760
    %1984 = vmatpush1.msra.mxu0 %v1983
    %1985 = vmatprep.subr.mxu0 0.0
    %v1986 = vand.u32 %v89, 4294901760
    %1987 = vmatpush1.msra.mxu0 %v1986
    %1988 = vmatprep.subr.mxu0 0.0
    %v1989 = vand.u32 %v120, 4294901760
    %1990 = vmatpush2.msra.mxu0 %v1989
    %1991 = vmatprep.subr.mxu0 0.0
    %v1992 = vand.u32 %v119, 4294901760
    %1993 = vmatpush2.msra.mxu0 %v1992
    %1994 = vmatprep.subr.mxu0 0.0
    %v1995 = vand.u32 %v118, 4294901760
    %1996 = vmatpush2.msra.mxu0 %v1995
    %1997 = vmatprep.subr.mxu0 0.0
    %v1998 = vand.u32 %v117, 4294901760
    %1999 = vmatpush2.msra.mxu0 %v1998
    %2000 = vmatprep.subr.mxu0 0.0
    %v2001 = vand.u32 %v116, 4294901760
    %2002 = vmatpush2.msra.mxu0 %v2001
    %2003 = vmatprep.subr.mxu0 0.0
    %v2004 = vand.u32 %v115, 4294901760
    %2005 = vmatpush2.msra.mxu0 %v2004
    %2006 = vmatprep.subr.mxu0 0.0
    %v2007 = vand.u32 %v114, 4294901760
    %2008 = vmatpush2.msra.mxu0 %v2007
    %2009 = vmatprep.subr.mxu0 0.0
    %v2010 = vand.u32 %v113, 4294901760
    %2011 = vmatpush2.msra.mxu0 %v2010
    %2012 = vmatprep.subr.mxu0 0.0
    %v2013 = vand.u32 %v112, 4294901760
    %2014 = vmatpush2.msra.mxu0 %v2013
    %2015 = vmatprep.subr.mxu0 0.0
    %v2016 = vand.u32 %v111, 4294901760
    %2017 = vmatpush2.msra.mxu0 %v2016
    %2018 = vmatprep.subr.mxu0 0.0
    %v2019 = vand.u32 %v110, 4294901760
    %2020 = vmatpush2.msra.mxu0 %v2019
    %2021 = vmatprep.subr.mxu0 0.0
    %v2022 = vand.u32 %v109, 4294901760
    %2023 = vmatpush2.msra.mxu0 %v2022
    %2024 = vmatprep.subr.mxu0 0.0
    %v2025 = vand.u32 %v108, 4294901760
    %2026 = vmatpush2.msra.mxu0 %v2025
    %2027 = vmatprep.subr.mxu0 0.0
    %v2028 = vand.u32 %v107, 4294901760
    %2029 = vmatpush2.msra.mxu0 %v2028
    %2030 = vmatprep.subr.mxu0 0.0
    %v2031 = vand.u32 %v106, 4294901760
    %2032 = vmatpush2.msra.mxu0 %v2031
    %2033 = vmatprep.subr.mxu0 0.0
    %v2034 = vand.u32 %v105, 4294901760
    %2035 = vmatpush2.msra.mxu0 %v2034
    %v2036 = vand.u32 %v44, 4294901760
    %2037 = vmatprep.mubr.f32.mxu0 %v2036
    %v2038 = vand.u32 %v43, 4294901760
    %2039 = vmatmul.mubr.f32.gmra.mxu0 %v2038
    %v2040 = vpop.f32.mrf.mxu0
    %v2041 = vadd.f32 %v1937, %v2040
    %v2042 = vpop.f32.mrf.mxu0
    %2043 = vdwg.mxu0
    %2044 = vmatprep.subr.mxu0 0.0
    %v2045 = vand.u32 %v136, 4294901760
    %2046 = vmatpush1.msra.mxu0 %v2045
    %2047 = vmatprep.subr.mxu0 0.0
    %v2048 = vand.u32 %v135, 4294901760
    %2049 = vmatpush1.msra.mxu0 %v2048
    %2050 = vmatprep.subr.mxu0 0.0
    %v2051 = vand.u32 %v134, 4294901760
    %2052 = vmatpush1.msra.mxu0 %v2051
    %2053 = vmatprep.subr.mxu0 0.0
    %v2054 = vand.u32 %v133, 4294901760
    %2055 = vmatpush1.msra.mxu0 %v2054
    %2056 = vmatprep.subr.mxu0 0.0
    %v2057 = vand.u32 %v132, 4294901760
    %2058 = vmatpush1.msra.mxu0 %v2057
    %2059 = vmatprep.subr.mxu0 0.0
    %v2060 = vand.u32 %v131, 4294901760
    %2061 = vmatpush1.msra.mxu0 %v2060
    %2062 = vmatprep.subr.mxu0 0.0
    %v2063 = vand.u32 %v130, 4294901760
    %2064 = vmatpush1.msra.mxu0 %v2063
    %2065 = vmatprep.subr.mxu0 0.0
    %v2066 = vand.u32 %v129, 4294901760
    %2067 = vmatpush1.msra.mxu0 %v2066
    %2068 = vmatprep.subr.mxu0 0.0
    %v2069 = vand.u32 %v128, 4294901760
    %2070 = vmatpush1.msra.mxu0 %v2069
    %2071 = vmatprep.subr.mxu0 0.0
    %v2072 = vand.u32 %v127, 4294901760
    %2073 = vmatpush1.msra.mxu0 %v2072
    %2074 = vmatprep.subr.mxu0 0.0
    %v2075 = vand.u32 %v126, 4294901760
    %2076 = vmatpush1.msra.mxu0 %v2075
    %2077 = vmatprep.subr.mxu0 0.0
    %v2078 = vand.u32 %v125, 4294901760
    %2079 = vmatpush1.msra.mxu0 %v2078
    %2080 = vmatprep.subr.mxu0 0.0
    %v2081 = vand.u32 %v124, 4294901760
    %2082 = vmatpush1.msra.mxu0 %v2081
    %2083 = vmatprep.subr.mxu0 0.0
    %v2084 = vand.u32 %v123, 4294901760
    %2085 = vmatpush1.msra.mxu0 %v2084
    %2086 = vmatprep.subr.mxu0 0.0
    %v2087 = vand.u32 %v122, 4294901760
    %2088 = vmatpush1.msra.mxu0 %v2087
    %2089 = vmatprep.subr.mxu0 0.0
    %v2090 = vand.u32 %v121, 4294901760
    %2091 = vmatpush1.msra.mxu0 %v2090
    %2092 = vmatprep.subr.mxu0 0.0
    %v2093 = vand.u32 %v152, 4294901760
    %2094 = vmatpush2.msra.mxu0 %v2093
    %2095 = vmatprep.subr.mxu0 0.0
    %v2096 = vand.u32 %v151, 4294901760
    %2097 = vmatpush2.msra.mxu0 %v2096
    %2098 = vmatprep.subr.mxu0 0.0
    %v2099 = vand.u32 %v150, 4294901760
    %2100 = vmatpush2.msra.mxu0 %v2099
    %2101 = vmatprep.subr.mxu0 0.0
    %v2102 = vand.u32 %v149, 4294901760
    %2103 = vmatpush2.msra.mxu0 %v2102
    %2104 = vmatprep.subr.mxu0 0.0
    %v2105 = vand.u32 %v148, 4294901760
    %2106 = vmatpush2.msra.mxu0 %v2105
    %2107 = vmatprep.subr.mxu0 0.0
    %v2108 = vand.u32 %v147, 4294901760
    %2109 = vmatpush2.msra.mxu0 %v2108
    %2110 = vmatprep.subr.mxu0 0.0
    %v2111 = vand.u32 %v146, 4294901760
    %2112 = vmatpush2.msra.mxu0 %v2111
    %2113 = vmatprep.subr.mxu0 0.0
    %v2114 = vand.u32 %v145, 4294901760
    %2115 = vmatpush2.msra.mxu0 %v2114
    %2116 = vmatprep.subr.mxu0 0.0
    %v2117 = vand.u32 %v144, 4294901760
    %2118 = vmatpush2.msra.mxu0 %v2117
    %2119 = vmatprep.subr.mxu0 0.0
    %v2120 = vand.u32 %v143, 4294901760
    %2121 = vmatpush2.msra.mxu0 %v2120
    %2122 = vmatprep.subr.mxu0 0.0
    %v2123 = vand.u32 %v142, 4294901760
    %2124 = vmatpush2.msra.mxu0 %v2123
    %2125 = vmatprep.subr.mxu0 0.0
    %v2126 = vand.u32 %v141, 4294901760
    %2127 = vmatpush2.msra.mxu0 %v2126
    %2128 = vmatprep.subr.mxu0 0.0
    %v2129 = vand.u32 %v140, 4294901760
    %2130 = vmatpush2.msra.mxu0 %v2129
    %2131 = vmatprep.subr.mxu0 0.0
    %v2132 = vand.u32 %v139, 4294901760
    %2133 = vmatpush2.msra.mxu0 %v2132
    %2134 = vmatprep.subr.mxu0 0.0
    %v2135 = vand.u32 %v138, 4294901760
    %2136 = vmatpush2.msra.mxu0 %v2135
    %2137 = vmatprep.subr.mxu0 0.0
    %v2138 = vand.u32 %v137, 4294901760
    %2139 = vmatpush2.msra.mxu0 %v2138
    %v2140 = vand.u32 %v46, 4294901760
    %v2141 = vsub.f32 %v46, %v2140
    %v2142 = vand.u32 %v2141, 4294901760
    %v2143 = vsub.f32 %v2141, %v2142
    %v2144 = vand.u32 %v2143, 4294901760
    %2145 = vmatprep.mubr.f32.mxu0 %v2144
    %v2146 = vand.u32 %v45, 4294901760
    %v2147 = vsub.f32 %v45, %v2146
    %v2148 = vand.u32 %v2147, 4294901760
    %v2149 = vsub.f32 %v2147, %v2148
    %v2150 = vand.u32 %v2149, 4294901760
    %2151 = vmatmul.mubr.f32.gmra.mxu0 %v2150
    %v2152 = vpop.f32.mrf.mxu0
    %v2153 = vadd.f32 %v2041, %v2152
    %v2154 = vpop.f32.mrf.mxu0
    %2155 = vdwg.mxu0
    %2156 = vmatprep.subr.mxu0 0.0
    %v2157 = vand.u32 %v136, 4294901760
    %v2158 = vsub.f32 %v136, %v2157
    %v2159 = vand.u32 %v2158, 4294901760
    %v2160 = vsub.f32 %v2158, %v2159
    %v2161 = vand.u32 %v2160, 4294901760
    %2162 = vmatpush1.msra.mxu0 %v2161
    %2163 = vmatprep.subr.mxu0 0.0
    %v2164 = vand.u32 %v135, 4294901760
    %v2165 = vsub.f32 %v135, %v2164
    %v2166 = vand.u32 %v2165, 4294901760
    %v2167 = vsub.f32 %v2165, %v2166
    %v2168 = vand.u32 %v2167, 4294901760
    %2169 = vmatpush1.msra.mxu0 %v2168
    %2170 = vmatprep.subr.mxu0 0.0
    %v2171 = vand.u32 %v134, 4294901760
    %v2172 = vsub.f32 %v134, %v2171
    %v2173 = vand.u32 %v2172, 4294901760
    %v2174 = vsub.f32 %v2172, %v2173
    %v2175 = vand.u32 %v2174, 4294901760
    %2176 = vmatpush1.msra.mxu0 %v2175
    %2177 = vmatprep.subr.mxu0 0.0
    %v2178 = vand.u32 %v133, 4294901760
    %v2179 = vsub.f32 %v133, %v2178
    %v2180 = vand.u32 %v2179, 4294901760
    %v2181 = vsub.f32 %v2179, %v2180
    %v2182 = vand.u32 %v2181, 4294901760
    %2183 = vmatpush1.msra.mxu0 %v2182
    %2184 = vmatprep.subr.mxu0 0.0
    %v2185 = vand.u32 %v132, 4294901760
    %v2186 = vsub.f32 %v132, %v2185
    %v2187 = vand.u32 %v2186, 4294901760
    %v2188 = vsub.f32 %v2186, %v2187
    %v2189 = vand.u32 %v2188, 4294901760
    %2190 = vmatpush1.msra.mxu0 %v2189
    %2191 = vmatprep.subr.mxu0 0.0
    %v2192 = vand.u32 %v131, 4294901760
    %v2193 = vsub.f32 %v131, %v2192
    %v2194 = vand.u32 %v2193, 4294901760
    %v2195 = vsub.f32 %v2193, %v2194
    %v2196 = vand.u32 %v2195, 4294901760
    %2197 = vmatpush1.msra.mxu0 %v2196
    %2198 = vmatprep.subr.mxu0 0.0
    %v2199 = vand.u32 %v130, 4294901760
    %v2200 = vsub.f32 %v130, %v2199
    %v2201 = vand.u32 %v2200, 4294901760
    %v2202 = vsub.f32 %v2200, %v2201
    %v2203 = vand.u32 %v2202, 4294901760
    %2204 = vmatpush1.msra.mxu0 %v2203
    %2205 = vmatprep.subr.mxu0 0.0
    %v2206 = vand.u32 %v129, 4294901760
    %v2207 = vsub.f32 %v129, %v2206
    %v2208 = vand.u32 %v2207, 4294901760
    %v2209 = vsub.f32 %v2207, %v2208
    %v2210 = vand.u32 %v2209, 4294901760
    %2211 = vmatpush1.msra.mxu0 %v2210
    %2212 = vmatprep.subr.mxu0 0.0
    %v2213 = vand.u32 %v128, 4294901760
    %v2214 = vsub.f32 %v128, %v2213
    %v2215 = vand.u32 %v2214, 4294901760
    %v2216 = vsub.f32 %v2214, %v2215
    %v2217 = vand.u32 %v2216, 4294901760
    %2218 = vmatpush1.msra.mxu0 %v2217
    %2219 = vmatprep.subr.mxu0 0.0
    %v2220 = vand.u32 %v127, 4294901760
    %v2221 = vsub.f32 %v127, %v2220
    %v2222 = vand.u32 %v2221, 4294901760
    %v2223 = vsub.f32 %v2221, %v2222
    %v2224 = vand.u32 %v2223, 4294901760
    %2225 = vmatpush1.msra.mxu0 %v2224
    %2226 = vmatprep.subr.mxu0 0.0
    %v2227 = vand.u32 %v126, 4294901760
    %v2228 = vsub.f32 %v126, %v2227
    %v2229 = vand.u32 %v2228, 4294901760
    %v2230 = vsub.f32 %v2228, %v2229
    %v2231 = vand.u32 %v2230, 4294901760
    %2232 = vmatpush1.msra.mxu0 %v2231
    %2233 = vmatprep.subr.mxu0 0.0
    %v2234 = vand.u32 %v125, 4294901760
    %v2235 = vsub.f32 %v125, %v2234
    %v2236 = vand.u32 %v2235, 4294901760
    %v2237 = vsub.f32 %v2235, %v2236
    %v2238 = vand.u32 %v2237, 4294901760
    %2239 = vmatpush1.msra.mxu0 %v2238
    %2240 = vmatprep.subr.mxu0 0.0
    %v2241 = vand.u32 %v124, 4294901760
    %v2242 = vsub.f32 %v124, %v2241
    %v2243 = vand.u32 %v2242, 4294901760
    %v2244 = vsub.f32 %v2242, %v2243
    %v2245 = vand.u32 %v2244, 4294901760
    %2246 = vmatpush1.msra.mxu0 %v2245
    %2247 = vmatprep.subr.mxu0 0.0
    %v2248 = vand.u32 %v123, 4294901760
    %v2249 = vsub.f32 %v123, %v2248
    %v2250 = vand.u32 %v2249, 4294901760
    %v2251 = vsub.f32 %v2249, %v2250
    %v2252 = vand.u32 %v2251, 4294901760
    %2253 = vmatpush1.msra.mxu0 %v2252
    %2254 = vmatprep.subr.mxu0 0.0
    %v2255 = vand.u32 %v122, 4294901760
    %v2256 = vsub.f32 %v122, %v2255
    %v2257 = vand.u32 %v2256, 4294901760
    %v2258 = vsub.f32 %v2256, %v2257
    %v2259 = vand.u32 %v2258, 4294901760
    %2260 = vmatpush1.msra.mxu0 %v2259
    %2261 = vmatprep.subr.mxu0 0.0
    %v2262 = vand.u32 %v121, 4294901760
    %v2263 = vsub.f32 %v121, %v2262
    %v2264 = vand.u32 %v2263, 4294901760
    %v2265 = vsub.f32 %v2263, %v2264
    %v2266 = vand.u32 %v2265, 4294901760
    %2267 = vmatpush1.msra.mxu0 %v2266
    %2268 = vmatprep.subr.mxu0 0.0
    %v2269 = vand.u32 %v152, 4294901760
    %v2270 = vsub.f32 %v152, %v2269
    %v2271 = vand.u32 %v2270, 4294901760
    %v2272 = vsub.f32 %v2270, %v2271
    %v2273 = vand.u32 %v2272, 4294901760
    %2274 = vmatpush2.msra.mxu0 %v2273
    %2275 = vmatprep.subr.mxu0 0.0
    %v2276 = vand.u32 %v151, 4294901760
    %v2277 = vsub.f32 %v151, %v2276
    %v2278 = vand.u32 %v2277, 4294901760
    %v2279 = vsub.f32 %v2277, %v2278
    %v2280 = vand.u32 %v2279, 4294901760
    %2281 = vmatpush2.msra.mxu0 %v2280
    %2282 = vmatprep.subr.mxu0 0.0
    %v2283 = vand.u32 %v150, 4294901760
    %v2284 = vsub.f32 %v150, %v2283
    %v2285 = vand.u32 %v2284, 4294901760
    %v2286 = vsub.f32 %v2284, %v2285
    %v2287 = vand.u32 %v2286, 4294901760
    %2288 = vmatpush2.msra.mxu0 %v2287
    %2289 = vmatprep.subr.mxu0 0.0
    %v2290 = vand.u32 %v149, 4294901760
    %v2291 = vsub.f32 %v149, %v2290
    %v2292 = vand.u32 %v2291, 4294901760
    %v2293 = vsub.f32 %v2291, %v2292
    %v2294 = vand.u32 %v2293, 4294901760
    %2295 = vmatpush2.msra.mxu0 %v2294
    %2296 = vmatprep.subr.mxu0 0.0
    %v2297 = vand.u32 %v148, 4294901760
    %v2298 = vsub.f32 %v148, %v2297
    %v2299 = vand.u32 %v2298, 4294901760
    %v2300 = vsub.f32 %v2298, %v2299
    %v2301 = vand.u32 %v2300, 4294901760
    %2302 = vmatpush2.msra.mxu0 %v2301
    %2303 = vmatprep.subr.mxu0 0.0
    %v2304 = vand.u32 %v147, 4294901760
    %v2305 = vsub.f32 %v147, %v2304
    %v2306 = vand.u32 %v2305, 4294901760
    %v2307 = vsub.f32 %v2305, %v2306
    %v2308 = vand.u32 %v2307, 4294901760
    %2309 = vmatpush2.msra.mxu0 %v2308
    %2310 = vmatprep.subr.mxu0 0.0
    %v2311 = vand.u32 %v146, 4294901760
    %v2312 = vsub.f32 %v146, %v2311
    %v2313 = vand.u32 %v2312, 4294901760
    %v2314 = vsub.f32 %v2312, %v2313
    %v2315 = vand.u32 %v2314, 4294901760
    %2316 = vmatpush2.msra.mxu0 %v2315
    %2317 = vmatprep.subr.mxu0 0.0
    %v2318 = vand.u32 %v145, 4294901760
    %v2319 = vsub.f32 %v145, %v2318
    %v2320 = vand.u32 %v2319, 4294901760
    %v2321 = vsub.f32 %v2319, %v2320
    %v2322 = vand.u32 %v2321, 4294901760
    %2323 = vmatpush2.msra.mxu0 %v2322
    %2324 = vmatprep.subr.mxu0 0.0
    %v2325 = vand.u32 %v144, 4294901760
    %v2326 = vsub.f32 %v144, %v2325
    %v2327 = vand.u32 %v2326, 4294901760
    %v2328 = vsub.f32 %v2326, %v2327
    %v2329 = vand.u32 %v2328, 4294901760
    %2330 = vmatpush2.msra.mxu0 %v2329
    %2331 = vmatprep.subr.mxu0 0.0
    %v2332 = vand.u32 %v143, 4294901760
    %v2333 = vsub.f32 %v143, %v2332
    %v2334 = vand.u32 %v2333, 4294901760
    %v2335 = vsub.f32 %v2333, %v2334
    %v2336 = vand.u32 %v2335, 4294901760
    %2337 = vmatpush2.msra.mxu0 %v2336
    %2338 = vmatprep.subr.mxu0 0.0
    %v2339 = vand.u32 %v142, 4294901760
    %v2340 = vsub.f32 %v142, %v2339
    %v2341 = vand.u32 %v2340, 4294901760
    %v2342 = vsub.f32 %v2340, %v2341
    %v2343 = vand.u32 %v2342, 4294901760
    %2344 = vmatpush2.msra.mxu0 %v2343
    %2345 = vmatprep.subr.mxu0 0.0
    %v2346 = vand.u32 %v141, 4294901760
    %v2347 = vsub.f32 %v141, %v2346
    %v2348 = vand.u32 %v2347, 4294901760
    %v2349 = vsub.f32 %v2347, %v2348
    %v2350 = vand.u32 %v2349, 4294901760
    %2351 = vmatpush2.msra.mxu0 %v2350
    %2352 = vmatprep.subr.mxu0 0.0
    %v2353 = vand.u32 %v140, 4294901760
    %v2354 = vsub.f32 %v140, %v2353
    %v2355 = vand.u32 %v2354, 4294901760
    %v2356 = vsub.f32 %v2354, %v2355
    %v2357 = vand.u32 %v2356, 4294901760
    %2358 = vmatpush2.msra.mxu0 %v2357
    %2359 = vmatprep.subr.mxu0 0.0
    %v2360 = vand.u32 %v139, 4294901760
    %v2361 = vsub.f32 %v139, %v2360
    %v2362 = vand.u32 %v2361, 4294901760
    %v2363 = vsub.f32 %v2361, %v2362
    %v2364 = vand.u32 %v2363, 4294901760
    %2365 = vmatpush2.msra.mxu0 %v2364
    %2366 = vmatprep.subr.mxu0 0.0
    %v2367 = vand.u32 %v138, 4294901760
    %v2368 = vsub.f32 %v138, %v2367
    %v2369 = vand.u32 %v2368, 4294901760
    %v2370 = vsub.f32 %v2368, %v2369
    %v2371 = vand.u32 %v2370, 4294901760
    %2372 = vmatpush2.msra.mxu0 %v2371
    %2373 = vmatprep.subr.mxu0 0.0
    %v2374 = vand.u32 %v137, 4294901760
    %v2375 = vsub.f32 %v137, %v2374
    %v2376 = vand.u32 %v2375, 4294901760
    %v2377 = vsub.f32 %v2375, %v2376
    %v2378 = vand.u32 %v2377, 4294901760
    %2379 = vmatpush2.msra.mxu0 %v2378
    %v2380 = vand.u32 %v46, 4294901760
    %2381 = vmatprep.mubr.f32.mxu0 %v2380
    %v2382 = vand.u32 %v45, 4294901760
    %2383 = vmatmul.mubr.f32.gmra.mxu0 %v2382
    %v2384 = vpop.f32.mrf.mxu0
    %v2385 = vadd.f32 %v2153, %v2384
    %v2386 = vpop.f32.mrf.mxu0
    %2387 = vdwg.mxu0
    %2388 = vmatprep.subr.mxu0 0.0
    %v2389 = vand.u32 %v136, 4294901760
    %v2390 = vsub.f32 %v136, %v2389
    %2391 = vmatpush1.msra.mxu0 %v2390
    %2392 = vmatprep.subr.mxu0 0.0
    %v2393 = vand.u32 %v135, 4294901760
    %v2394 = vsub.f32 %v135, %v2393
    %2395 = vmatpush1.msra.mxu0 %v2394
    %2396 = vmatprep.subr.mxu0 0.0
    %v2397 = vand.u32 %v134, 4294901760
    %v2398 = vsub.f32 %v134, %v2397
    %2399 = vmatpush1.msra.mxu0 %v2398
    %2400 = vmatprep.subr.mxu0 0.0
    %v2401 = vand.u32 %v133, 4294901760
    %v2402 = vsub.f32 %v133, %v2401
    %2403 = vmatpush1.msra.mxu0 %v2402
    %2404 = vmatprep.subr.mxu0 0.0
    %v2405 = vand.u32 %v132, 4294901760
    %v2406 = vsub.f32 %v132, %v2405
    %2407 = vmatpush1.msra.mxu0 %v2406
    %2408 = vmatprep.subr.mxu0 0.0
    %v2409 = vand.u32 %v131, 4294901760
    %v2410 = vsub.f32 %v131, %v2409
    %2411 = vmatpush1.msra.mxu0 %v2410
    %2412 = vmatprep.subr.mxu0 0.0
    %v2413 = vand.u32 %v130, 4294901760
    %v2414 = vsub.f32 %v130, %v2413
    %2415 = vmatpush1.msra.mxu0 %v2414
    %2416 = vmatprep.subr.mxu0 0.0
    %v2417 = vand.u32 %v129, 4294901760
    %v2418 = vsub.f32 %v129, %v2417
    %2419 = vmatpush1.msra.mxu0 %v2418
    %2420 = vmatprep.subr.mxu0 0.0
    %v2421 = vand.u32 %v128, 4294901760
    %v2422 = vsub.f32 %v128, %v2421
    %2423 = vmatpush1.msra.mxu0 %v2422
    %2424 = vmatprep.subr.mxu0 0.0
    %v2425 = vand.u32 %v127, 4294901760
    %v2426 = vsub.f32 %v127, %v2425
    %2427 = vmatpush1.msra.mxu0 %v2426
    %2428 = vmatprep.subr.mxu0 0.0
    %v2429 = vand.u32 %v126, 4294901760
    %v2430 = vsub.f32 %v126, %v2429
    %2431 = vmatpush1.msra.mxu0 %v2430
    %2432 = vmatprep.subr.mxu0 0.0
    %v2433 = vand.u32 %v125, 4294901760
    %v2434 = vsub.f32 %v125, %v2433
    %2435 = vmatpush1.msra.mxu0 %v2434
    %2436 = vmatprep.subr.mxu0 0.0
    %v2437 = vand.u32 %v124, 4294901760
    %v2438 = vsub.f32 %v124, %v2437
    %2439 = vmatpush1.msra.mxu0 %v2438
    %2440 = vmatprep.subr.mxu0 0.0
    %v2441 = vand.u32 %v123, 4294901760
    %v2442 = vsub.f32 %v123, %v2441
    %2443 = vmatpush1.msra.mxu0 %v2442
    %2444 = vmatprep.subr.mxu0 0.0
    %v2445 = vand.u32 %v122, 4294901760
    %v2446 = vsub.f32 %v122, %v2445
    %2447 = vmatpush1.msra.mxu0 %v2446
    %2448 = vmatprep.subr.mxu0 0.0
    %v2449 = vand.u32 %v121, 4294901760
    %v2450 = vsub.f32 %v121, %v2449
    %2451 = vmatpush1.msra.mxu0 %v2450
    %2452 = vmatprep.subr.mxu0 0.0
    %v2453 = vand.u32 %v152, 4294901760
    %v2454 = vsub.f32 %v152, %v2453
    %2455 = vmatpush2.msra.mxu0 %v2454
    %2456 = vmatprep.subr.mxu0 0.0
    %v2457 = vand.u32 %v151, 4294901760
    %v2458 = vsub.f32 %v151, %v2457
    %2459 = vmatpush2.msra.mxu0 %v2458
    %2460 = vmatprep.subr.mxu0 0.0
    %v2461 = vand.u32 %v150, 4294901760
    %v2462 = vsub.f32 %v150, %v2461
    %2463 = vmatpush2.msra.mxu0 %v2462
    %2464 = vmatprep.subr.mxu0 0.0
    %v2465 = vand.u32 %v149, 4294901760
    %v2466 = vsub.f32 %v149, %v2465
    %2467 = vmatpush2.msra.mxu0 %v2466
    %2468 = vmatprep.subr.mxu0 0.0
    %v2469 = vand.u32 %v148, 4294901760
    %v2470 = vsub.f32 %v148, %v2469
    %2471 = vmatpush2.msra.mxu0 %v2470
    %2472 = vmatprep.subr.mxu0 0.0
    %v2473 = vand.u32 %v147, 4294901760
    %v2474 = vsub.f32 %v147, %v2473
    %2475 = vmatpush2.msra.mxu0 %v2474
    %2476 = vmatprep.subr.mxu0 0.0
    %v2477 = vand.u32 %v146, 4294901760
    %v2478 = vsub.f32 %v146, %v2477
    %2479 = vmatpush2.msra.mxu0 %v2478
    %2480 = vmatprep.subr.mxu0 0.0
    %v2481 = vand.u32 %v145, 4294901760
    %v2482 = vsub.f32 %v145, %v2481
    %2483 = vmatpush2.msra.mxu0 %v2482
    %2484 = vmatprep.subr.mxu0 0.0
    %v2485 = vand.u32 %v144, 4294901760
    %v2486 = vsub.f32 %v144, %v2485
    %2487 = vmatpush2.msra.mxu0 %v2486
    %2488 = vmatprep.subr.mxu0 0.0
    %v2489 = vand.u32 %v143, 4294901760
    %v2490 = vsub.f32 %v143, %v2489
    %2491 = vmatpush2.msra.mxu0 %v2490
    %2492 = vmatprep.subr.mxu0 0.0
    %v2493 = vand.u32 %v142, 4294901760
    %v2494 = vsub.f32 %v142, %v2493
    %2495 = vmatpush2.msra.mxu0 %v2494
    %2496 = vmatprep.subr.mxu0 0.0
    %v2497 = vand.u32 %v141, 4294901760
    %v2498 = vsub.f32 %v141, %v2497
    %2499 = vmatpush2.msra.mxu0 %v2498
    %2500 = vmatprep.subr.mxu0 0.0
    %v2501 = vand.u32 %v140, 4294901760
    %v2502 = vsub.f32 %v140, %v2501
    %2503 = vmatpush2.msra.mxu0 %v2502
    %2504 = vmatprep.subr.mxu0 0.0
    %v2505 = vand.u32 %v139, 4294901760
    %v2506 = vsub.f32 %v139, %v2505
    %2507 = vmatpush2.msra.mxu0 %v2506
    %2508 = vmatprep.subr.mxu0 0.0
    %v2509 = vand.u32 %v138, 4294901760
    %v2510 = vsub.f32 %v138, %v2509
    %2511 = vmatpush2.msra.mxu0 %v2510
    %2512 = vmatprep.subr.mxu0 0.0
    %v2513 = vand.u32 %v137, 4294901760
    %v2514 = vsub.f32 %v137, %v2513
    %2515 = vmatpush2.msra.mxu0 %v2514
    %v2516 = vand.u32 %v46, 4294901760
    %v2517 = vsub.f32 %v46, %v2516
    %2518 = vmatprep.mubr.f32.mxu0 %v2517
    %v2519 = vand.u32 %v45, 4294901760
    %v2520 = vsub.f32 %v45, %v2519
    %2521 = vmatmul.mubr.f32.gmra.mxu0 %v2520
    %v2522 = vpop.f32.mrf.mxu0
    %v2523 = vadd.f32 %v2385, %v2522
    %v2524 = vpop.f32.mrf.mxu0
    %2525 = vdwg.mxu0
    %2526 = vmatprep.subr.mxu0 0.0
    %v2527 = vand.u32 %v136, 4294901760
    %2528 = vmatpush1.msra.mxu0 %v2527
    %2529 = vmatprep.subr.mxu0 0.0
    %v2530 = vand.u32 %v135, 4294901760
    %2531 = vmatpush1.msra.mxu0 %v2530
    %2532 = vmatprep.subr.mxu0 0.0
    %v2533 = vand.u32 %v134, 4294901760
    %2534 = vmatpush1.msra.mxu0 %v2533
    %2535 = vmatprep.subr.mxu0 0.0
    %v2536 = vand.u32 %v133, 4294901760
    %2537 = vmatpush1.msra.mxu0 %v2536
    %2538 = vmatprep.subr.mxu0 0.0
    %v2539 = vand.u32 %v132, 4294901760
    %2540 = vmatpush1.msra.mxu0 %v2539
    %2541 = vmatprep.subr.mxu0 0.0
    %v2542 = vand.u32 %v131, 4294901760
    %2543 = vmatpush1.msra.mxu0 %v2542
    %2544 = vmatprep.subr.mxu0 0.0
    %v2545 = vand.u32 %v130, 4294901760
    %2546 = vmatpush1.msra.mxu0 %v2545
    %2547 = vmatprep.subr.mxu0 0.0
    %v2548 = vand.u32 %v129, 4294901760
    %2549 = vmatpush1.msra.mxu0 %v2548
    %2550 = vmatprep.subr.mxu0 0.0
    %v2551 = vand.u32 %v128, 4294901760
    %2552 = vmatpush1.msra.mxu0 %v2551
    %2553 = vmatprep.subr.mxu0 0.0
    %v2554 = vand.u32 %v127, 4294901760
    %2555 = vmatpush1.msra.mxu0 %v2554
    %2556 = vmatprep.subr.mxu0 0.0
    %v2557 = vand.u32 %v126, 4294901760
    %2558 = vmatpush1.msra.mxu0 %v2557
    %2559 = vmatprep.subr.mxu0 0.0
    %v2560 = vand.u32 %v125, 4294901760
    %2561 = vmatpush1.msra.mxu0 %v2560
    %2562 = vmatprep.subr.mxu0 0.0
    %v2563 = vand.u32 %v124, 4294901760
    %2564 = vmatpush1.msra.mxu0 %v2563
    %2565 = vmatprep.subr.mxu0 0.0
    %v2566 = vand.u32 %v123, 4294901760
    %2567 = vmatpush1.msra.mxu0 %v2566
    %2568 = vmatprep.subr.mxu0 0.0
    %v2569 = vand.u32 %v122, 4294901760
    %2570 = vmatpush1.msra.mxu0 %v2569
    %2571 = vmatprep.subr.mxu0 0.0
    %v2572 = vand.u32 %v121, 4294901760
    %2573 = vmatpush1.msra.mxu0 %v2572
    %2574 = vmatprep.subr.mxu0 0.0
    %v2575 = vand.u32 %v152, 4294901760
    %2576 = vmatpush2.msra.mxu0 %v2575
    %2577 = vmatprep.subr.mxu0 0.0
    %v2578 = vand.u32 %v151, 4294901760
    %2579 = vmatpush2.msra.mxu0 %v2578
    %2580 = vmatprep.subr.mxu0 0.0
    %v2581 = vand.u32 %v150, 4294901760
    %2582 = vmatpush2.msra.mxu0 %v2581
    %2583 = vmatprep.subr.mxu0 0.0
    %v2584 = vand.u32 %v149, 4294901760
    %2585 = vmatpush2.msra.mxu0 %v2584
    %2586 = vmatprep.subr.mxu0 0.0
    %v2587 = vand.u32 %v148, 4294901760
    %2588 = vmatpush2.msra.mxu0 %v2587
    %2589 = vmatprep.subr.mxu0 0.0
    %v2590 = vand.u32 %v147, 4294901760
    %2591 = vmatpush2.msra.mxu0 %v2590
    %2592 = vmatprep.subr.mxu0 0.0
    %v2593 = vand.u32 %v146, 4294901760
    %2594 = vmatpush2.msra.mxu0 %v2593
    %2595 = vmatprep.subr.mxu0 0.0
    %v2596 = vand.u32 %v145, 4294901760
    %2597 = vmatpush2.msra.mxu0 %v2596
    %2598 = vmatprep.subr.mxu0 0.0
    %v2599 = vand.u32 %v144, 4294901760
    %2600 = vmatpush2.msra.mxu0 %v2599
    %2601 = vmatprep.subr.mxu0 0.0
    %v2602 = vand.u32 %v143, 4294901760
    %2603 = vmatpush2.msra.mxu0 %v2602
    %2604 = vmatprep.subr.mxu0 0.0
    %v2605 = vand.u32 %v142, 4294901760
    %2606 = vmatpush2.msra.mxu0 %v2605
    %2607 = vmatprep.subr.mxu0 0.0
    %v2608 = vand.u32 %v141, 4294901760
    %2609 = vmatpush2.msra.mxu0 %v2608
    %2610 = vmatprep.subr.mxu0 0.0
    %v2611 = vand.u32 %v140, 4294901760
    %2612 = vmatpush2.msra.mxu0 %v2611
    %2613 = vmatprep.subr.mxu0 0.0
    %v2614 = vand.u32 %v139, 4294901760
    %2615 = vmatpush2.msra.mxu0 %v2614
    %2616 = vmatprep.subr.mxu0 0.0
    %v2617 = vand.u32 %v138, 4294901760
    %2618 = vmatpush2.msra.mxu0 %v2617
    %2619 = vmatprep.subr.mxu0 0.0
    %v2620 = vand.u32 %v137, 4294901760
    %2621 = vmatpush2.msra.mxu0 %v2620
    %v2622 = vand.u32 %v46, 4294901760
    %v2623 = vsub.f32 %v46, %v2622
    %v2624 = vand.u32 %v2623, 4294901760
    %2625 = vmatprep.mubr.f32.mxu0 %v2624
    %v2626 = vand.u32 %v45, 4294901760
    %v2627 = vsub.f32 %v45, %v2626
    %v2628 = vand.u32 %v2627, 4294901760
    %2629 = vmatmul.mubr.f32.gmra.mxu0 %v2628
    %v2630 = vpop.f32.mrf.mxu0
    %v2631 = vadd.f32 %v2523, %v2630
    %v2632 = vpop.f32.mrf.mxu0
    %2633 = vdwg.mxu0
    %2634 = vmatprep.subr.mxu0 0.0
    %v2635 = vand.u32 %v136, 4294901760
    %v2636 = vsub.f32 %v136, %v2635
    %v2637 = vand.u32 %v2636, 4294901760
    %2638 = vmatpush1.msra.mxu0 %v2637
    %2639 = vmatprep.subr.mxu0 0.0
    %v2640 = vand.u32 %v135, 4294901760
    %v2641 = vsub.f32 %v135, %v2640
    %v2642 = vand.u32 %v2641, 4294901760
    %2643 = vmatpush1.msra.mxu0 %v2642
    %2644 = vmatprep.subr.mxu0 0.0
    %v2645 = vand.u32 %v134, 4294901760
    %v2646 = vsub.f32 %v134, %v2645
    %v2647 = vand.u32 %v2646, 4294901760
    %2648 = vmatpush1.msra.mxu0 %v2647
    %2649 = vmatprep.subr.mxu0 0.0
    %v2650 = vand.u32 %v133, 4294901760
    %v2651 = vsub.f32 %v133, %v2650
    %v2652 = vand.u32 %v2651, 4294901760
    %2653 = vmatpush1.msra.mxu0 %v2652
    %2654 = vmatprep.subr.mxu0 0.0
    %v2655 = vand.u32 %v132, 4294901760
    %v2656 = vsub.f32 %v132, %v2655
    %v2657 = vand.u32 %v2656, 4294901760
    %2658 = vmatpush1.msra.mxu0 %v2657
    %2659 = vmatprep.subr.mxu0 0.0
    %v2660 = vand.u32 %v131, 4294901760
    %v2661 = vsub.f32 %v131, %v2660
    %v2662 = vand.u32 %v2661, 4294901760
    %2663 = vmatpush1.msra.mxu0 %v2662
    %2664 = vmatprep.subr.mxu0 0.0
    %v2665 = vand.u32 %v130, 4294901760
    %v2666 = vsub.f32 %v130, %v2665
    %v2667 = vand.u32 %v2666, 4294901760
    %2668 = vmatpush1.msra.mxu0 %v2667
    %2669 = vmatprep.subr.mxu0 0.0
    %v2670 = vand.u32 %v129, 4294901760
    %v2671 = vsub.f32 %v129, %v2670
    %v2672 = vand.u32 %v2671, 4294901760
    %2673 = vmatpush1.msra.mxu0 %v2672
    %2674 = vmatprep.subr.mxu0 0.0
    %v2675 = vand.u32 %v128, 4294901760
    %v2676 = vsub.f32 %v128, %v2675
    %v2677 = vand.u32 %v2676, 4294901760
    %2678 = vmatpush1.msra.mxu0 %v2677
    %2679 = vmatprep.subr.mxu0 0.0
    %v2680 = vand.u32 %v127, 4294901760
    %v2681 = vsub.f32 %v127, %v2680
    %v2682 = vand.u32 %v2681, 4294901760
    %2683 = vmatpush1.msra.mxu0 %v2682
    %2684 = vmatprep.subr.mxu0 0.0
    %v2685 = vand.u32 %v126, 4294901760
    %v2686 = vsub.f32 %v126, %v2685
    %v2687 = vand.u32 %v2686, 4294901760
    %2688 = vmatpush1.msra.mxu0 %v2687
    %2689 = vmatprep.subr.mxu0 0.0
    %v2690 = vand.u32 %v125, 4294901760
    %v2691 = vsub.f32 %v125, %v2690
    %v2692 = vand.u32 %v2691, 4294901760
    %2693 = vmatpush1.msra.mxu0 %v2692
    %2694 = vmatprep.subr.mxu0 0.0
    %v2695 = vand.u32 %v124, 4294901760
    %v2696 = vsub.f32 %v124, %v2695
    %v2697 = vand.u32 %v2696, 4294901760
    %2698 = vmatpush1.msra.mxu0 %v2697
    %2699 = vmatprep.subr.mxu0 0.0
    %v2700 = vand.u32 %v123, 4294901760
    %v2701 = vsub.f32 %v123, %v2700
    %v2702 = vand.u32 %v2701, 4294901760
    %2703 = vmatpush1.msra.mxu0 %v2702
    %2704 = vmatprep.subr.mxu0 0.0
    %v2705 = vand.u32 %v122, 4294901760
    %v2706 = vsub.f32 %v122, %v2705
    %v2707 = vand.u32 %v2706, 4294901760
    %2708 = vmatpush1.msra.mxu0 %v2707
    %2709 = vmatprep.subr.mxu0 0.0
    %v2710 = vand.u32 %v121, 4294901760
    %v2711 = vsub.f32 %v121, %v2710
    %v2712 = vand.u32 %v2711, 4294901760
    %2713 = vmatpush1.msra.mxu0 %v2712
    %2714 = vmatprep.subr.mxu0 0.0
    %v2715 = vand.u32 %v152, 4294901760
    %v2716 = vsub.f32 %v152, %v2715
    %v2717 = vand.u32 %v2716, 4294901760
    %2718 = vmatpush2.msra.mxu0 %v2717
    %2719 = vmatprep.subr.mxu0 0.0
    %v2720 = vand.u32 %v151, 4294901760
    %v2721 = vsub.f32 %v151, %v2720
    %v2722 = vand.u32 %v2721, 4294901760
    %2723 = vmatpush2.msra.mxu0 %v2722
    %2724 = vmatprep.subr.mxu0 0.0
    %v2725 = vand.u32 %v150, 4294901760
    %v2726 = vsub.f32 %v150, %v2725
    %v2727 = vand.u32 %v2726, 4294901760
    %2728 = vmatpush2.msra.mxu0 %v2727
    %2729 = vmatprep.subr.mxu0 0.0
    %v2730 = vand.u32 %v149, 4294901760
    %v2731 = vsub.f32 %v149, %v2730
    %v2732 = vand.u32 %v2731, 4294901760
    %2733 = vmatpush2.msra.mxu0 %v2732
    %2734 = vmatprep.subr.mxu0 0.0
    %v2735 = vand.u32 %v148, 4294901760
    %v2736 = vsub.f32 %v148, %v2735
    %v2737 = vand.u32 %v2736, 4294901760
    %2738 = vmatpush2.msra.mxu0 %v2737
    %2739 = vmatprep.subr.mxu0 0.0
    %v2740 = vand.u32 %v147, 4294901760
    %v2741 = vsub.f32 %v147, %v2740
    %v2742 = vand.u32 %v2741, 4294901760
    %2743 = vmatpush2.msra.mxu0 %v2742
    %2744 = vmatprep.subr.mxu0 0.0
    %v2745 = vand.u32 %v146, 4294901760
    %v2746 = vsub.f32 %v146, %v2745
    %v2747 = vand.u32 %v2746, 4294901760
    %2748 = vmatpush2.msra.mxu0 %v2747
    %2749 = vmatprep.subr.mxu0 0.0
    %v2750 = vand.u32 %v145, 4294901760
    %v2751 = vsub.f32 %v145, %v2750
    %v2752 = vand.u32 %v2751, 4294901760
    %2753 = vmatpush2.msra.mxu0 %v2752
    %2754 = vmatprep.subr.mxu0 0.0
    %v2755 = vand.u32 %v144, 4294901760
    %v2756 = vsub.f32 %v144, %v2755
    %v2757 = vand.u32 %v2756, 4294901760
    %2758 = vmatpush2.msra.mxu0 %v2757
    %2759 = vmatprep.subr.mxu0 0.0
    %v2760 = vand.u32 %v143, 4294901760
    %v2761 = vsub.f32 %v143, %v2760
    %v2762 = vand.u32 %v2761, 4294901760
    %2763 = vmatpush2.msra.mxu0 %v2762
    %2764 = vmatprep.subr.mxu0 0.0
    %v2765 = vand.u32 %v142, 4294901760
    %v2766 = vsub.f32 %v142, %v2765
    %v2767 = vand.u32 %v2766, 4294901760
    %2768 = vmatpush2.msra.mxu0 %v2767
    %2769 = vmatprep.subr.mxu0 0.0
    %v2770 = vand.u32 %v141, 4294901760
    %v2771 = vsub.f32 %v141, %v2770
    %v2772 = vand.u32 %v2771, 4294901760
    %2773 = vmatpush2.msra.mxu0 %v2772
    %2774 = vmatprep.subr.mxu0 0.0
    %v2775 = vand.u32 %v140, 4294901760
    %v2776 = vsub.f32 %v140, %v2775
    %v2777 = vand.u32 %v2776, 4294901760
    %2778 = vmatpush2.msra.mxu0 %v2777
    %2779 = vmatprep.subr.mxu0 0.0
    %v2780 = vand.u32 %v139, 4294901760
    %v2781 = vsub.f32 %v139, %v2780
    %v2782 = vand.u32 %v2781, 4294901760
    %2783 = vmatpush2.msra.mxu0 %v2782
    %2784 = vmatprep.subr.mxu0 0.0
    %v2785 = vand.u32 %v138, 4294901760
    %v2786 = vsub.f32 %v138, %v2785
    %v2787 = vand.u32 %v2786, 4294901760
    %2788 = vmatpush2.msra.mxu0 %v2787
    %2789 = vmatprep.subr.mxu0 0.0
    %v2790 = vand.u32 %v137, 4294901760
    %v2791 = vsub.f32 %v137, %v2790
    %v2792 = vand.u32 %v2791, 4294901760
    %2793 = vmatpush2.msra.mxu0 %v2792
    %v2794 = vand.u32 %v46, 4294901760
    %2795 = vmatprep.mubr.f32.mxu0 %v2794
    %v2796 = vand.u32 %v45, 4294901760
    %2797 = vmatmul.mubr.f32.gmra.mxu0 %v2796
    %v2798 = vpop.f32.mrf.mxu0
    %v2799 = vadd.f32 %v2631, %v2798
    %v2800 = vpop.f32.mrf.mxu0
    %2801 = vdwg.mxu0
    %2802 = vmatprep.subr.mxu0 0.0
    %v2803 = vand.u32 %v136, 4294901760
    %2804 = vmatpush1.msra.mxu0 %v2803
    %2805 = vmatprep.subr.mxu0 0.0
    %v2806 = vand.u32 %v135, 4294901760
    %2807 = vmatpush1.msra.mxu0 %v2806
    %2808 = vmatprep.subr.mxu0 0.0
    %v2809 = vand.u32 %v134, 4294901760
    %2810 = vmatpush1.msra.mxu0 %v2809
    %2811 = vmatprep.subr.mxu0 0.0
    %v2812 = vand.u32 %v133, 4294901760
    %2813 = vmatpush1.msra.mxu0 %v2812
    %2814 = vmatprep.subr.mxu0 0.0
    %v2815 = vand.u32 %v132, 4294901760
    %2816 = vmatpush1.msra.mxu0 %v2815
    %2817 = vmatprep.subr.mxu0 0.0
    %v2818 = vand.u32 %v131, 4294901760
    %2819 = vmatpush1.msra.mxu0 %v2818
    %2820 = vmatprep.subr.mxu0 0.0
    %v2821 = vand.u32 %v130, 4294901760
    %2822 = vmatpush1.msra.mxu0 %v2821
    %2823 = vmatprep.subr.mxu0 0.0
    %v2824 = vand.u32 %v129, 4294901760
    %2825 = vmatpush1.msra.mxu0 %v2824
    %2826 = vmatprep.subr.mxu0 0.0
    %v2827 = vand.u32 %v128, 4294901760
    %2828 = vmatpush1.msra.mxu0 %v2827
    %2829 = vmatprep.subr.mxu0 0.0
    %v2830 = vand.u32 %v127, 4294901760
    %2831 = vmatpush1.msra.mxu0 %v2830
    %2832 = vmatprep.subr.mxu0 0.0
    %v2833 = vand.u32 %v126, 4294901760
    %2834 = vmatpush1.msra.mxu0 %v2833
    %2835 = vmatprep.subr.mxu0 0.0
    %v2836 = vand.u32 %v125, 4294901760
    %2837 = vmatpush1.msra.mxu0 %v2836
    %2838 = vmatprep.subr.mxu0 0.0
    %v2839 = vand.u32 %v124, 4294901760
    %2840 = vmatpush1.msra.mxu0 %v2839
    %2841 = vmatprep.subr.mxu0 0.0
    %v2842 = vand.u32 %v123, 4294901760
    %2843 = vmatpush1.msra.mxu0 %v2842
    %2844 = vmatprep.subr.mxu0 0.0
    %v2845 = vand.u32 %v122, 4294901760
    %2846 = vmatpush1.msra.mxu0 %v2845
    %2847 = vmatprep.subr.mxu0 0.0
    %v2848 = vand.u32 %v121, 4294901760
    %2849 = vmatpush1.msra.mxu0 %v2848
    %2850 = vmatprep.subr.mxu0 0.0
    %v2851 = vand.u32 %v152, 4294901760
    %2852 = vmatpush2.msra.mxu0 %v2851
    %2853 = vmatprep.subr.mxu0 0.0
    %v2854 = vand.u32 %v151, 4294901760
    %2855 = vmatpush2.msra.mxu0 %v2854
    %2856 = vmatprep.subr.mxu0 0.0
    %v2857 = vand.u32 %v150, 4294901760
    %2858 = vmatpush2.msra.mxu0 %v2857
    %2859 = vmatprep.subr.mxu0 0.0
    %v2860 = vand.u32 %v149, 4294901760
    %2861 = vmatpush2.msra.mxu0 %v2860
    %2862 = vmatprep.subr.mxu0 0.0
    %v2863 = vand.u32 %v148, 4294901760
    %2864 = vmatpush2.msra.mxu0 %v2863
    %2865 = vmatprep.subr.mxu0 0.0
    %v2866 = vand.u32 %v147, 4294901760
    %2867 = vmatpush2.msra.mxu0 %v2866
    %2868 = vmatprep.subr.mxu0 0.0
    %v2869 = vand.u32 %v146, 4294901760
    %2870 = vmatpush2.msra.mxu0 %v2869
    %2871 = vmatprep.subr.mxu0 0.0
    %v2872 = vand.u32 %v145, 4294901760
    %2873 = vmatpush2.msra.mxu0 %v2872
    %2874 = vmatprep.subr.mxu0 0.0
    %v2875 = vand.u32 %v144, 4294901760
    %2876 = vmatpush2.msra.mxu0 %v2875
    %2877 = vmatprep.subr.mxu0 0.0
    %v2878 = vand.u32 %v143, 4294901760
    %2879 = vmatpush2.msra.mxu0 %v2878
    %2880 = vmatprep.subr.mxu0 0.0
    %v2881 = vand.u32 %v142, 4294901760
    %2882 = vmatpush2.msra.mxu0 %v2881
    %2883 = vmatprep.subr.mxu0 0.0
    %v2884 = vand.u32 %v141, 4294901760
    %2885 = vmatpush2.msra.mxu0 %v2884
    %2886 = vmatprep.subr.mxu0 0.0
    %v2887 = vand.u32 %v140, 4294901760
    %2888 = vmatpush2.msra.mxu0 %v2887
    %2889 = vmatprep.subr.mxu0 0.0
    %v2890 = vand.u32 %v139, 4294901760
    %2891 = vmatpush2.msra.mxu0 %v2890
    %2892 = vmatprep.subr.mxu0 0.0
    %v2893 = vand.u32 %v138, 4294901760
    %2894 = vmatpush2.msra.mxu0 %v2893
    %2895 = vmatprep.subr.mxu0 0.0
    %v2896 = vand.u32 %v137, 4294901760
    %2897 = vmatpush2.msra.mxu0 %v2896
    %v2898 = vand.u32 %v46, 4294901760
    %2899 = vmatprep.mubr.f32.mxu0 %v2898
    %v2900 = vand.u32 %v45, 4294901760
    %2901 = vmatmul.mubr.f32.gmra.mxu0 %v2900
    %v2902 = vpop.f32.mrf.mxu0
    %v2903 = vadd.f32 %v2799, %v2902
    %v2904 = vpop.f32.mrf.mxu0
    %2905 = vdwg.mxu0
    %2906 = vmatprep.subr.mxu0 0.0
    %v2907 = vand.u32 %v168, 4294901760
    %2908 = vmatpush1.msra.mxu0 %v2907
    %2909 = vmatprep.subr.mxu0 0.0
    %v2910 = vand.u32 %v167, 4294901760
    %2911 = vmatpush1.msra.mxu0 %v2910
    %2912 = vmatprep.subr.mxu0 0.0
    %v2913 = vand.u32 %v166, 4294901760
    %2914 = vmatpush1.msra.mxu0 %v2913
    %2915 = vmatprep.subr.mxu0 0.0
    %v2916 = vand.u32 %v165, 4294901760
    %2917 = vmatpush1.msra.mxu0 %v2916
    %2918 = vmatprep.subr.mxu0 0.0
    %v2919 = vand.u32 %v164, 4294901760
    %2920 = vmatpush1.msra.mxu0 %v2919
    %2921 = vmatprep.subr.mxu0 0.0
    %v2922 = vand.u32 %v163, 4294901760
    %2923 = vmatpush1.msra.mxu0 %v2922
    %2924 = vmatprep.subr.mxu0 0.0
    %v2925 = vand.u32 %v162, 4294901760
    %2926 = vmatpush1.msra.mxu0 %v2925
    %2927 = vmatprep.subr.mxu0 0.0
    %v2928 = vand.u32 %v161, 4294901760
    %2929 = vmatpush1.msra.mxu0 %v2928
    %2930 = vmatprep.subr.mxu0 0.0
    %v2931 = vand.u32 %v160, 4294901760
    %2932 = vmatpush1.msra.mxu0 %v2931
    %2933 = vmatprep.subr.mxu0 0.0
    %v2934 = vand.u32 %v159, 4294901760
    %2935 = vmatpush1.msra.mxu0 %v2934
    %2936 = vmatprep.subr.mxu0 0.0
    %v2937 = vand.u32 %v158, 4294901760
    %2938 = vmatpush1.msra.mxu0 %v2937
    %2939 = vmatprep.subr.mxu0 0.0
    %v2940 = vand.u32 %v157, 4294901760
    %2941 = vmatpush1.msra.mxu0 %v2940
    %2942 = vmatprep.subr.mxu0 0.0
    %v2943 = vand.u32 %v156, 4294901760
    %2944 = vmatpush1.msra.mxu0 %v2943
    %2945 = vmatprep.subr.mxu0 0.0
    %v2946 = vand.u32 %v155, 4294901760
    %2947 = vmatpush1.msra.mxu0 %v2946
    %2948 = vmatprep.subr.mxu0 0.0
    %v2949 = vand.u32 %v154, 4294901760
    %2950 = vmatpush1.msra.mxu0 %v2949
    %2951 = vmatprep.subr.mxu0 0.0
    %v2952 = vand.u32 %v153, 4294901760
    %2953 = vmatpush1.msra.mxu0 %v2952
    %2954 = vmatprep.subr.mxu0 0.0
    %v2955 = vand.u32 %v184, 4294901760
    %2956 = vmatpush2.msra.mxu0 %v2955
    %2957 = vmatprep.subr.mxu0 0.0
    %v2958 = vand.u32 %v183, 4294901760
    %2959 = vmatpush2.msra.mxu0 %v2958
    %2960 = vmatprep.subr.mxu0 0.0
    %v2961 = vand.u32 %v182, 4294901760
    %2962 = vmatpush2.msra.mxu0 %v2961
    %2963 = vmatprep.subr.mxu0 0.0
    %v2964 = vand.u32 %v181, 4294901760
    %2965 = vmatpush2.msra.mxu0 %v2964
    %2966 = vmatprep.subr.mxu0 0.0
    %v2967 = vand.u32 %v180, 4294901760
    %2968 = vmatpush2.msra.mxu0 %v2967
    %2969 = vmatprep.subr.mxu0 0.0
    %v2970 = vand.u32 %v179, 4294901760
    %2971 = vmatpush2.msra.mxu0 %v2970
    %2972 = vmatprep.subr.mxu0 0.0
    %v2973 = vand.u32 %v178, 4294901760
    %2974 = vmatpush2.msra.mxu0 %v2973
    %2975 = vmatprep.subr.mxu0 0.0
    %v2976 = vand.u32 %v177, 4294901760
    %2977 = vmatpush2.msra.mxu0 %v2976
    %2978 = vmatprep.subr.mxu0 0.0
    %v2979 = vand.u32 %v176, 4294901760
    %2980 = vmatpush2.msra.mxu0 %v2979
    %2981 = vmatprep.subr.mxu0 0.0
    %v2982 = vand.u32 %v175, 4294901760
    %2983 = vmatpush2.msra.mxu0 %v2982
    %2984 = vmatprep.subr.mxu0 0.0
    %v2985 = vand.u32 %v174, 4294901760
    %2986 = vmatpush2.msra.mxu0 %v2985
    %2987 = vmatprep.subr.mxu0 0.0
    %v2988 = vand.u32 %v173, 4294901760
    %2989 = vmatpush2.msra.mxu0 %v2988
    %2990 = vmatprep.subr.mxu0 0.0
    %v2991 = vand.u32 %v172, 4294901760
    %2992 = vmatpush2.msra.mxu0 %v2991
    %2993 = vmatprep.subr.mxu0 0.0
    %v2994 = vand.u32 %v171, 4294901760
    %2995 = vmatpush2.msra.mxu0 %v2994
    %2996 = vmatprep.subr.mxu0 0.0
    %v2997 = vand.u32 %v170, 4294901760
    %2998 = vmatpush2.msra.mxu0 %v2997
    %2999 = vmatprep.subr.mxu0 0.0
    %v3000 = vand.u32 %v169, 4294901760
    %3001 = vmatpush2.msra.mxu0 %v3000
    %v3002 = vand.u32 %v48, 4294901760
    %v3003 = vsub.f32 %v48, %v3002
    %v3004 = vand.u32 %v3003, 4294901760
    %v3005 = vsub.f32 %v3003, %v3004
    %v3006 = vand.u32 %v3005, 4294901760
    %3007 = vmatprep.mubr.f32.mxu0 %v3006
    %v3008 = vand.u32 %v47, 4294901760
    %v3009 = vsub.f32 %v47, %v3008
    %v3010 = vand.u32 %v3009, 4294901760
    %v3011 = vsub.f32 %v3009, %v3010
    %v3012 = vand.u32 %v3011, 4294901760
    %3013 = vmatmul.mubr.f32.gmra.mxu0 %v3012
    %v3014 = vpop.f32.mrf.mxu0
    %v3015 = vadd.f32 %v2903, %v3014
    %v3016 = vpop.f32.mrf.mxu0
    %3017 = vdwg.mxu0
    %3018 = vmatprep.subr.mxu0 0.0
    %v3019 = vand.u32 %v168, 4294901760
    %v3020 = vsub.f32 %v168, %v3019
    %v3021 = vand.u32 %v3020, 4294901760
    %v3022 = vsub.f32 %v3020, %v3021
    %v3023 = vand.u32 %v3022, 4294901760
    %3024 = vmatpush1.msra.mxu0 %v3023
    %3025 = vmatprep.subr.mxu0 0.0
    %v3026 = vand.u32 %v167, 4294901760
    %v3027 = vsub.f32 %v167, %v3026
    %v3028 = vand.u32 %v3027, 4294901760
    %v3029 = vsub.f32 %v3027, %v3028
    %v3030 = vand.u32 %v3029, 4294901760
    %3031 = vmatpush1.msra.mxu0 %v3030
    %3032 = vmatprep.subr.mxu0 0.0
    %v3033 = vand.u32 %v166, 4294901760
    %v3034 = vsub.f32 %v166, %v3033
    %v3035 = vand.u32 %v3034, 4294901760
    %v3036 = vsub.f32 %v3034, %v3035
    %v3037 = vand.u32 %v3036, 4294901760
    %3038 = vmatpush1.msra.mxu0 %v3037
    %3039 = vmatprep.subr.mxu0 0.0
    %v3040 = vand.u32 %v165, 4294901760
    %v3041 = vsub.f32 %v165, %v3040
    %v3042 = vand.u32 %v3041, 4294901760
    %v3043 = vsub.f32 %v3041, %v3042
    %v3044 = vand.u32 %v3043, 4294901760
    %3045 = vmatpush1.msra.mxu0 %v3044
    %3046 = vmatprep.subr.mxu0 0.0
    %v3047 = vand.u32 %v164, 4294901760
    %v3048 = vsub.f32 %v164, %v3047
    %v3049 = vand.u32 %v3048, 4294901760
    %v3050 = vsub.f32 %v3048, %v3049
    %v3051 = vand.u32 %v3050, 4294901760
    %3052 = vmatpush1.msra.mxu0 %v3051
    %3053 = vmatprep.subr.mxu0 0.0
    %v3054 = vand.u32 %v163, 4294901760
    %v3055 = vsub.f32 %v163, %v3054
    %v3056 = vand.u32 %v3055, 4294901760
    %v3057 = vsub.f32 %v3055, %v3056
    %v3058 = vand.u32 %v3057, 4294901760
    %3059 = vmatpush1.msra.mxu0 %v3058
    %3060 = vmatprep.subr.mxu0 0.0
    %v3061 = vand.u32 %v162, 4294901760
    %v3062 = vsub.f32 %v162, %v3061
    %v3063 = vand.u32 %v3062, 4294901760
    %v3064 = vsub.f32 %v3062, %v3063
    %v3065 = vand.u32 %v3064, 4294901760
    %3066 = vmatpush1.msra.mxu0 %v3065
    %3067 = vmatprep.subr.mxu0 0.0
    %v3068 = vand.u32 %v161, 4294901760
    %v3069 = vsub.f32 %v161, %v3068
    %v3070 = vand.u32 %v3069, 4294901760
    %v3071 = vsub.f32 %v3069, %v3070
    %v3072 = vand.u32 %v3071, 4294901760
    %3073 = vmatpush1.msra.mxu0 %v3072
    %3074 = vmatprep.subr.mxu0 0.0
    %v3075 = vand.u32 %v160, 4294901760
    %v3076 = vsub.f32 %v160, %v3075
    %v3077 = vand.u32 %v3076, 4294901760
    %v3078 = vsub.f32 %v3076, %v3077
    %v3079 = vand.u32 %v3078, 4294901760
    %3080 = vmatpush1.msra.mxu0 %v3079
    %3081 = vmatprep.subr.mxu0 0.0
    %v3082 = vand.u32 %v159, 4294901760
    %v3083 = vsub.f32 %v159, %v3082
    %v3084 = vand.u32 %v3083, 4294901760
    %v3085 = vsub.f32 %v3083, %v3084
    %v3086 = vand.u32 %v3085, 4294901760
    %3087 = vmatpush1.msra.mxu0 %v3086
    %3088 = vmatprep.subr.mxu0 0.0
    %v3089 = vand.u32 %v158, 4294901760
    %v3090 = vsub.f32 %v158, %v3089
    %v3091 = vand.u32 %v3090, 4294901760
    %v3092 = vsub.f32 %v3090, %v3091
    %v3093 = vand.u32 %v3092, 4294901760
    %3094 = vmatpush1.msra.mxu0 %v3093
    %3095 = vmatprep.subr.mxu0 0.0
    %v3096 = vand.u32 %v157, 4294901760
    %v3097 = vsub.f32 %v157, %v3096
    %v3098 = vand.u32 %v3097, 4294901760
    %v3099 = vsub.f32 %v3097, %v3098
    %v3100 = vand.u32 %v3099, 4294901760
    %3101 = vmatpush1.msra.mxu0 %v3100
    %3102 = vmatprep.subr.mxu0 0.0
    %v3103 = vand.u32 %v156, 4294901760
    %v3104 = vsub.f32 %v156, %v3103
    %v3105 = vand.u32 %v3104, 4294901760
    %v3106 = vsub.f32 %v3104, %v3105
    %v3107 = vand.u32 %v3106, 4294901760
    %3108 = vmatpush1.msra.mxu0 %v3107
    %3109 = vmatprep.subr.mxu0 0.0
    %v3110 = vand.u32 %v155, 4294901760
    %v3111 = vsub.f32 %v155, %v3110
    %v3112 = vand.u32 %v3111, 4294901760
    %v3113 = vsub.f32 %v3111, %v3112
    %v3114 = vand.u32 %v3113, 4294901760
    %3115 = vmatpush1.msra.mxu0 %v3114
    %3116 = vmatprep.subr.mxu0 0.0
    %v3117 = vand.u32 %v154, 4294901760
    %v3118 = vsub.f32 %v154, %v3117
    %v3119 = vand.u32 %v3118, 4294901760
    %v3120 = vsub.f32 %v3118, %v3119
    %v3121 = vand.u32 %v3120, 4294901760
    %3122 = vmatpush1.msra.mxu0 %v3121
    %3123 = vmatprep.subr.mxu0 0.0
    %v3124 = vand.u32 %v153, 4294901760
    %v3125 = vsub.f32 %v153, %v3124
    %v3126 = vand.u32 %v3125, 4294901760
    %v3127 = vsub.f32 %v3125, %v3126
    %v3128 = vand.u32 %v3127, 4294901760
    %3129 = vmatpush1.msra.mxu0 %v3128
    %3130 = vmatprep.subr.mxu0 0.0
    %v3131 = vand.u32 %v184, 4294901760
    %v3132 = vsub.f32 %v184, %v3131
    %v3133 = vand.u32 %v3132, 4294901760
    %v3134 = vsub.f32 %v3132, %v3133
    %v3135 = vand.u32 %v3134, 4294901760
    %3136 = vmatpush2.msra.mxu0 %v3135
    %3137 = vmatprep.subr.mxu0 0.0
    %v3138 = vand.u32 %v183, 4294901760
    %v3139 = vsub.f32 %v183, %v3138
    %v3140 = vand.u32 %v3139, 4294901760
    %v3141 = vsub.f32 %v3139, %v3140
    %v3142 = vand.u32 %v3141, 4294901760
    %3143 = vmatpush2.msra.mxu0 %v3142
    %3144 = vmatprep.subr.mxu0 0.0
    %v3145 = vand.u32 %v182, 4294901760
    %v3146 = vsub.f32 %v182, %v3145
    %v3147 = vand.u32 %v3146, 4294901760
    %v3148 = vsub.f32 %v3146, %v3147
    %v3149 = vand.u32 %v3148, 4294901760
    %3150 = vmatpush2.msra.mxu0 %v3149
    %3151 = vmatprep.subr.mxu0 0.0
    %v3152 = vand.u32 %v181, 4294901760
    %v3153 = vsub.f32 %v181, %v3152
    %v3154 = vand.u32 %v3153, 4294901760
    %v3155 = vsub.f32 %v3153, %v3154
    %v3156 = vand.u32 %v3155, 4294901760
    %3157 = vmatpush2.msra.mxu0 %v3156
    %3158 = vmatprep.subr.mxu0 0.0
    %v3159 = vand.u32 %v180, 4294901760
    %v3160 = vsub.f32 %v180, %v3159
    %v3161 = vand.u32 %v3160, 4294901760
    %v3162 = vsub.f32 %v3160, %v3161
    %v3163 = vand.u32 %v3162, 4294901760
    %3164 = vmatpush2.msra.mxu0 %v3163
    %3165 = vmatprep.subr.mxu0 0.0
    %v3166 = vand.u32 %v179, 4294901760
    %v3167 = vsub.f32 %v179, %v3166
    %v3168 = vand.u32 %v3167, 4294901760
    %v3169 = vsub.f32 %v3167, %v3168
    %v3170 = vand.u32 %v3169, 4294901760
    %3171 = vmatpush2.msra.mxu0 %v3170
    %3172 = vmatprep.subr.mxu0 0.0
    %v3173 = vand.u32 %v178, 4294901760
    %v3174 = vsub.f32 %v178, %v3173
    %v3175 = vand.u32 %v3174, 4294901760
    %v3176 = vsub.f32 %v3174, %v3175
    %v3177 = vand.u32 %v3176, 4294901760
    %3178 = vmatpush2.msra.mxu0 %v3177
    %3179 = vmatprep.subr.mxu0 0.0
    %v3180 = vand.u32 %v177, 4294901760
    %v3181 = vsub.f32 %v177, %v3180
    %v3182 = vand.u32 %v3181, 4294901760
    %v3183 = vsub.f32 %v3181, %v3182
    %v3184 = vand.u32 %v3183, 4294901760
    %3185 = vmatpush2.msra.mxu0 %v3184
    %3186 = vmatprep.subr.mxu0 0.0
    %v3187 = vand.u32 %v176, 4294901760
    %v3188 = vsub.f32 %v176, %v3187
    %v3189 = vand.u32 %v3188, 4294901760
    %v3190 = vsub.f32 %v3188, %v3189
    %v3191 = vand.u32 %v3190, 4294901760
    %3192 = vmatpush2.msra.mxu0 %v3191
    %3193 = vmatprep.subr.mxu0 0.0
    %v3194 = vand.u32 %v175, 4294901760
    %v3195 = vsub.f32 %v175, %v3194
    %v3196 = vand.u32 %v3195, 4294901760
    %v3197 = vsub.f32 %v3195, %v3196
    %v3198 = vand.u32 %v3197, 4294901760
    %3199 = vmatpush2.msra.mxu0 %v3198
    %3200 = vmatprep.subr.mxu0 0.0
    %v3201 = vand.u32 %v174, 4294901760
    %v3202 = vsub.f32 %v174, %v3201
    %v3203 = vand.u32 %v3202, 4294901760
    %v3204 = vsub.f32 %v3202, %v3203
    %v3205 = vand.u32 %v3204, 4294901760
    %3206 = vmatpush2.msra.mxu0 %v3205
    %3207 = vmatprep.subr.mxu0 0.0
    %v3208 = vand.u32 %v173, 4294901760
    %v3209 = vsub.f32 %v173, %v3208
    %v3210 = vand.u32 %v3209, 4294901760
    %v3211 = vsub.f32 %v3209, %v3210
    %v3212 = vand.u32 %v3211, 4294901760
    %3213 = vmatpush2.msra.mxu0 %v3212
    %3214 = vmatprep.subr.mxu0 0.0
    %v3215 = vand.u32 %v172, 4294901760
    %v3216 = vsub.f32 %v172, %v3215
    %v3217 = vand.u32 %v3216, 4294901760
    %v3218 = vsub.f32 %v3216, %v3217
    %v3219 = vand.u32 %v3218, 4294901760
    %3220 = vmatpush2.msra.mxu0 %v3219
    %3221 = vmatprep.subr.mxu0 0.0
    %v3222 = vand.u32 %v171, 4294901760
    %v3223 = vsub.f32 %v171, %v3222
    %v3224 = vand.u32 %v3223, 4294901760
    %v3225 = vsub.f32 %v3223, %v3224
    %v3226 = vand.u32 %v3225, 4294901760
    %3227 = vmatpush2.msra.mxu0 %v3226
    %3228 = vmatprep.subr.mxu0 0.0
    %v3229 = vand.u32 %v170, 4294901760
    %v3230 = vsub.f32 %v170, %v3229
    %v3231 = vand.u32 %v3230, 4294901760
    %v3232 = vsub.f32 %v3230, %v3231
    %v3233 = vand.u32 %v3232, 4294901760
    %3234 = vmatpush2.msra.mxu0 %v3233
    %3235 = vmatprep.subr.mxu0 0.0
    %v3236 = vand.u32 %v169, 4294901760
    %v3237 = vsub.f32 %v169, %v3236
    %v3238 = vand.u32 %v3237, 4294901760
    %v3239 = vsub.f32 %v3237, %v3238
    %v3240 = vand.u32 %v3239, 4294901760
    %3241 = vmatpush2.msra.mxu0 %v3240
    %v3242 = vand.u32 %v48, 4294901760
    %3243 = vmatprep.mubr.f32.mxu0 %v3242
    %v3244 = vand.u32 %v47, 4294901760
    %3245 = vmatmul.mubr.f32.gmra.mxu0 %v3244
    %v3246 = vpop.f32.mrf.mxu0
    %v3247 = vadd.f32 %v3015, %v3246
    %v3248 = vpop.f32.mrf.mxu0
    %3249 = vdwg.mxu0
    %3250 = vmatprep.subr.mxu0 0.0
    %v3251 = vand.u32 %v168, 4294901760
    %v3252 = vsub.f32 %v168, %v3251
    %3253 = vmatpush1.msra.mxu0 %v3252
    %3254 = vmatprep.subr.mxu0 0.0
    %v3255 = vand.u32 %v167, 4294901760
    %v3256 = vsub.f32 %v167, %v3255
    %3257 = vmatpush1.msra.mxu0 %v3256
    %3258 = vmatprep.subr.mxu0 0.0
    %v3259 = vand.u32 %v166, 4294901760
    %v3260 = vsub.f32 %v166, %v3259
    %3261 = vmatpush1.msra.mxu0 %v3260
    %3262 = vmatprep.subr.mxu0 0.0
    %v3263 = vand.u32 %v165, 4294901760
    %v3264 = vsub.f32 %v165, %v3263
    %3265 = vmatpush1.msra.mxu0 %v3264
    %3266 = vmatprep.subr.mxu0 0.0
    %v3267 = vand.u32 %v164, 4294901760
    %v3268 = vsub.f32 %v164, %v3267
    %3269 = vmatpush1.msra.mxu0 %v3268
    %3270 = vmatprep.subr.mxu0 0.0
    %v3271 = vand.u32 %v163, 4294901760
    %v3272 = vsub.f32 %v163, %v3271
    %3273 = vmatpush1.msra.mxu0 %v3272
    %3274 = vmatprep.subr.mxu0 0.0
    %v3275 = vand.u32 %v162, 4294901760
    %v3276 = vsub.f32 %v162, %v3275
    %3277 = vmatpush1.msra.mxu0 %v3276
    %3278 = vmatprep.subr.mxu0 0.0
    %v3279 = vand.u32 %v161, 4294901760
    %v3280 = vsub.f32 %v161, %v3279
    %3281 = vmatpush1.msra.mxu0 %v3280
    %3282 = vmatprep.subr.mxu0 0.0
    %v3283 = vand.u32 %v160, 4294901760
    %v3284 = vsub.f32 %v160, %v3283
    %3285 = vmatpush1.msra.mxu0 %v3284
    %3286 = vmatprep.subr.mxu0 0.0
    %v3287 = vand.u32 %v159, 4294901760
    %v3288 = vsub.f32 %v159, %v3287
    %3289 = vmatpush1.msra.mxu0 %v3288
    %3290 = vmatprep.subr.mxu0 0.0
    %v3291 = vand.u32 %v158, 4294901760
    %v3292 = vsub.f32 %v158, %v3291
    %3293 = vmatpush1.msra.mxu0 %v3292
    %3294 = vmatprep.subr.mxu0 0.0
    %v3295 = vand.u32 %v157, 4294901760
    %v3296 = vsub.f32 %v157, %v3295
    %3297 = vmatpush1.msra.mxu0 %v3296
    %3298 = vmatprep.subr.mxu0 0.0
    %v3299 = vand.u32 %v156, 4294901760
    %v3300 = vsub.f32 %v156, %v3299
    %3301 = vmatpush1.msra.mxu0 %v3300
    %3302 = vmatprep.subr.mxu0 0.0
    %v3303 = vand.u32 %v155, 4294901760
    %v3304 = vsub.f32 %v155, %v3303
    %3305 = vmatpush1.msra.mxu0 %v3304
    %3306 = vmatprep.subr.mxu0 0.0
    %v3307 = vand.u32 %v154, 4294901760
    %v3308 = vsub.f32 %v154, %v3307
    %3309 = vmatpush1.msra.mxu0 %v3308
    %3310 = vmatprep.subr.mxu0 0.0
    %v3311 = vand.u32 %v153, 4294901760
    %v3312 = vsub.f32 %v153, %v3311
    %3313 = vmatpush1.msra.mxu0 %v3312
    %3314 = vmatprep.subr.mxu0 0.0
    %v3315 = vand.u32 %v184, 4294901760
    %v3316 = vsub.f32 %v184, %v3315
    %3317 = vmatpush2.msra.mxu0 %v3316
    %3318 = vmatprep.subr.mxu0 0.0
    %v3319 = vand.u32 %v183, 4294901760
    %v3320 = vsub.f32 %v183, %v3319
    %3321 = vmatpush2.msra.mxu0 %v3320
    %3322 = vmatprep.subr.mxu0 0.0
    %v3323 = vand.u32 %v182, 4294901760
    %v3324 = vsub.f32 %v182, %v3323
    %3325 = vmatpush2.msra.mxu0 %v3324
    %3326 = vmatprep.subr.mxu0 0.0
    %v3327 = vand.u32 %v181, 4294901760
    %v3328 = vsub.f32 %v181, %v3327
    %3329 = vmatpush2.msra.mxu0 %v3328
    %3330 = vmatprep.subr.mxu0 0.0
    %v3331 = vand.u32 %v180, 4294901760
    %v3332 = vsub.f32 %v180, %v3331
    %3333 = vmatpush2.msra.mxu0 %v3332
    %3334 = vmatprep.subr.mxu0 0.0
    %v3335 = vand.u32 %v179, 4294901760
    %v3336 = vsub.f32 %v179, %v3335
    %3337 = vmatpush2.msra.mxu0 %v3336
    %3338 = vmatprep.subr.mxu0 0.0
    %v3339 = vand.u32 %v178, 4294901760
    %v3340 = vsub.f32 %v178, %v3339
    %3341 = vmatpush2.msra.mxu0 %v3340
    %3342 = vmatprep.subr.mxu0 0.0
    %v3343 = vand.u32 %v177, 4294901760
    %v3344 = vsub.f32 %v177, %v3343
    %3345 = vmatpush2.msra.mxu0 %v3344
    %3346 = vmatprep.subr.mxu0 0.0
    %v3347 = vand.u32 %v176, 4294901760
    %v3348 = vsub.f32 %v176, %v3347
    %3349 = vmatpush2.msra.mxu0 %v3348
    %3350 = vmatprep.subr.mxu0 0.0
    %v3351 = vand.u32 %v175, 4294901760
    %v3352 = vsub.f32 %v175, %v3351
    %3353 = vmatpush2.msra.mxu0 %v3352
    %3354 = vmatprep.subr.mxu0 0.0
    %v3355 = vand.u32 %v174, 4294901760
    %v3356 = vsub.f32 %v174, %v3355
    %3357 = vmatpush2.msra.mxu0 %v3356
    %3358 = vmatprep.subr.mxu0 0.0
    %v3359 = vand.u32 %v173, 4294901760
    %v3360 = vsub.f32 %v173, %v3359
    %3361 = vmatpush2.msra.mxu0 %v3360
    %3362 = vmatprep.subr.mxu0 0.0
    %v3363 = vand.u32 %v172, 4294901760
    %v3364 = vsub.f32 %v172, %v3363
    %3365 = vmatpush2.msra.mxu0 %v3364
    %3366 = vmatprep.subr.mxu0 0.0
    %v3367 = vand.u32 %v171, 4294901760
    %v3368 = vsub.f32 %v171, %v3367
    %3369 = vmatpush2.msra.mxu0 %v3368
    %3370 = vmatprep.subr.mxu0 0.0
    %v3371 = vand.u32 %v170, 4294901760
    %v3372 = vsub.f32 %v170, %v3371
    %3373 = vmatpush2.msra.mxu0 %v3372
    %3374 = vmatprep.subr.mxu0 0.0
    %v3375 = vand.u32 %v169, 4294901760
    %v3376 = vsub.f32 %v169, %v3375
    %3377 = vmatpush2.msra.mxu0 %v3376
    %v3378 = vand.u32 %v48, 4294901760
    %v3379 = vsub.f32 %v48, %v3378
    %3380 = vmatprep.mubr.f32.mxu0 %v3379
    %v3381 = vand.u32 %v47, 4294901760
    %v3382 = vsub.f32 %v47, %v3381
    %3383 = vmatmul.mubr.f32.gmra.mxu0 %v3382
    %v3384 = vpop.f32.mrf.mxu0
    %v3385 = vadd.f32 %v3247, %v3384
    %v3386 = vpop.f32.mrf.mxu0
    %3387 = vdwg.mxu0
    %3388 = vmatprep.subr.mxu0 0.0
    %v3389 = vand.u32 %v168, 4294901760
    %3390 = vmatpush1.msra.mxu0 %v3389
    %3391 = vmatprep.subr.mxu0 0.0
    %v3392 = vand.u32 %v167, 4294901760
    %3393 = vmatpush1.msra.mxu0 %v3392
    %3394 = vmatprep.subr.mxu0 0.0
    %v3395 = vand.u32 %v166, 4294901760
    %3396 = vmatpush1.msra.mxu0 %v3395
    %3397 = vmatprep.subr.mxu0 0.0
    %v3398 = vand.u32 %v165, 4294901760
    %3399 = vmatpush1.msra.mxu0 %v3398
    %3400 = vmatprep.subr.mxu0 0.0
    %v3401 = vand.u32 %v164, 4294901760
    %3402 = vmatpush1.msra.mxu0 %v3401
    %3403 = vmatprep.subr.mxu0 0.0
    %v3404 = vand.u32 %v163, 4294901760
    %3405 = vmatpush1.msra.mxu0 %v3404
    %3406 = vmatprep.subr.mxu0 0.0
    %v3407 = vand.u32 %v162, 4294901760
    %3408 = vmatpush1.msra.mxu0 %v3407
    %3409 = vmatprep.subr.mxu0 0.0
    %v3410 = vand.u32 %v161, 4294901760
    %3411 = vmatpush1.msra.mxu0 %v3410
    %3412 = vmatprep.subr.mxu0 0.0
    %v3413 = vand.u32 %v160, 4294901760
    %3414 = vmatpush1.msra.mxu0 %v3413
    %3415 = vmatprep.subr.mxu0 0.0
    %v3416 = vand.u32 %v159, 4294901760
    %3417 = vmatpush1.msra.mxu0 %v3416
    %3418 = vmatprep.subr.mxu0 0.0
    %v3419 = vand.u32 %v158, 4294901760
    %3420 = vmatpush1.msra.mxu0 %v3419
    %3421 = vmatprep.subr.mxu0 0.0
    %v3422 = vand.u32 %v157, 4294901760
    %3423 = vmatpush1.msra.mxu0 %v3422
    %3424 = vmatprep.subr.mxu0 0.0
    %v3425 = vand.u32 %v156, 4294901760
    %3426 = vmatpush1.msra.mxu0 %v3425
    %3427 = vmatprep.subr.mxu0 0.0
    %v3428 = vand.u32 %v155, 4294901760
    %3429 = vmatpush1.msra.mxu0 %v3428
    %3430 = vmatprep.subr.mxu0 0.0
    %v3431 = vand.u32 %v154, 4294901760
    %3432 = vmatpush1.msra.mxu0 %v3431
    %3433 = vmatprep.subr.mxu0 0.0
    %v3434 = vand.u32 %v153, 4294901760
    %3435 = vmatpush1.msra.mxu0 %v3434
    %3436 = vmatprep.subr.mxu0 0.0
    %v3437 = vand.u32 %v184, 4294901760
    %3438 = vmatpush2.msra.mxu0 %v3437
    %3439 = vmatprep.subr.mxu0 0.0
    %v3440 = vand.u32 %v183, 4294901760
    %3441 = vmatpush2.msra.mxu0 %v3440
    %3442 = vmatprep.subr.mxu0 0.0
    %v3443 = vand.u32 %v182, 4294901760
    %3444 = vmatpush2.msra.mxu0 %v3443
    %3445 = vmatprep.subr.mxu0 0.0
    %v3446 = vand.u32 %v181, 4294901760
    %3447 = vmatpush2.msra.mxu0 %v3446
    %3448 = vmatprep.subr.mxu0 0.0
    %v3449 = vand.u32 %v180, 4294901760
    %3450 = vmatpush2.msra.mxu0 %v3449
    %3451 = vmatprep.subr.mxu0 0.0
    %v3452 = vand.u32 %v179, 4294901760
    %3453 = vmatpush2.msra.mxu0 %v3452
    %3454 = vmatprep.subr.mxu0 0.0
    %v3455 = vand.u32 %v178, 4294901760
    %3456 = vmatpush2.msra.mxu0 %v3455
    %3457 = vmatprep.subr.mxu0 0.0
    %v3458 = vand.u32 %v177, 4294901760
    %3459 = vmatpush2.msra.mxu0 %v3458
    %3460 = vmatprep.subr.mxu0 0.0
    %v3461 = vand.u32 %v176, 4294901760
    %3462 = vmatpush2.msra.mxu0 %v3461
    %3463 = vmatprep.subr.mxu0 0.0
    %v3464 = vand.u32 %v175, 4294901760
    %3465 = vmatpush2.msra.mxu0 %v3464
    %3466 = vmatprep.subr.mxu0 0.0
    %v3467 = vand.u32 %v174, 4294901760
    %3468 = vmatpush2.msra.mxu0 %v3467
    %3469 = vmatprep.subr.mxu0 0.0
    %v3470 = vand.u32 %v173, 4294901760
    %3471 = vmatpush2.msra.mxu0 %v3470
    %3472 = vmatprep.subr.mxu0 0.0
    %v3473 = vand.u32 %v172, 4294901760
    %3474 = vmatpush2.msra.mxu0 %v3473
    %3475 = vmatprep.subr.mxu0 0.0
    %v3476 = vand.u32 %v171, 4294901760
    %3477 = vmatpush2.msra.mxu0 %v3476
    %3478 = vmatprep.subr.mxu0 0.0
    %v3479 = vand.u32 %v170, 4294901760
    %3480 = vmatpush2.msra.mxu0 %v3479
    %3481 = vmatprep.subr.mxu0 0.0
    %v3482 = vand.u32 %v169, 4294901760
    %3483 = vmatpush2.msra.mxu0 %v3482
    %v3484 = vand.u32 %v48, 4294901760
    %v3485 = vsub.f32 %v48, %v3484
    %v3486 = vand.u32 %v3485, 4294901760
    %3487 = vmatprep.mubr.f32.mxu0 %v3486
    %v3488 = vand.u32 %v47, 4294901760
    %v3489 = vsub.f32 %v47, %v3488
    %v3490 = vand.u32 %v3489, 4294901760
    %3491 = vmatmul.mubr.f32.gmra.mxu0 %v3490
    %v3492 = vpop.f32.mrf.mxu0
    %v3493 = vadd.f32 %v3385, %v3492
    %v3494 = vpop.f32.mrf.mxu0
    %3495 = vdwg.mxu0
    %3496 = vmatprep.subr.mxu0 0.0
    %v3497 = vand.u32 %v168, 4294901760
    %v3498 = vsub.f32 %v168, %v3497
    %v3499 = vand.u32 %v3498, 4294901760
    %3500 = vmatpush1.msra.mxu0 %v3499
    %3501 = vmatprep.subr.mxu0 0.0
    %v3502 = vand.u32 %v167, 4294901760
    %v3503 = vsub.f32 %v167, %v3502
    %v3504 = vand.u32 %v3503, 4294901760
    %3505 = vmatpush1.msra.mxu0 %v3504
    %3506 = vmatprep.subr.mxu0 0.0
    %v3507 = vand.u32 %v166, 4294901760
    %v3508 = vsub.f32 %v166, %v3507
    %v3509 = vand.u32 %v3508, 4294901760
    %3510 = vmatpush1.msra.mxu0 %v3509
    %3511 = vmatprep.subr.mxu0 0.0
    %v3512 = vand.u32 %v165, 4294901760
    %v3513 = vsub.f32 %v165, %v3512
    %v3514 = vand.u32 %v3513, 4294901760
    %3515 = vmatpush1.msra.mxu0 %v3514
    %3516 = vmatprep.subr.mxu0 0.0
    %v3517 = vand.u32 %v164, 4294901760
    %v3518 = vsub.f32 %v164, %v3517
    %v3519 = vand.u32 %v3518, 4294901760
    %3520 = vmatpush1.msra.mxu0 %v3519
    %3521 = vmatprep.subr.mxu0 0.0
    %v3522 = vand.u32 %v163, 4294901760
    %v3523 = vsub.f32 %v163, %v3522
    %v3524 = vand.u32 %v3523, 4294901760
    %3525 = vmatpush1.msra.mxu0 %v3524
    %3526 = vmatprep.subr.mxu0 0.0
    %v3527 = vand.u32 %v162, 4294901760
    %v3528 = vsub.f32 %v162, %v3527
    %v3529 = vand.u32 %v3528, 4294901760
    %3530 = vmatpush1.msra.mxu0 %v3529
    %3531 = vmatprep.subr.mxu0 0.0
    %v3532 = vand.u32 %v161, 4294901760
    %v3533 = vsub.f32 %v161, %v3532
    %v3534 = vand.u32 %v3533, 4294901760
    %3535 = vmatpush1.msra.mxu0 %v3534
    %3536 = vmatprep.subr.mxu0 0.0
    %v3537 = vand.u32 %v160, 4294901760
    %v3538 = vsub.f32 %v160, %v3537
    %v3539 = vand.u32 %v3538, 4294901760
    %3540 = vmatpush1.msra.mxu0 %v3539
    %3541 = vmatprep.subr.mxu0 0.0
    %v3542 = vand.u32 %v159, 4294901760
    %v3543 = vsub.f32 %v159, %v3542
    %v3544 = vand.u32 %v3543, 4294901760
    %3545 = vmatpush1.msra.mxu0 %v3544
    %3546 = vmatprep.subr.mxu0 0.0
    %v3547 = vand.u32 %v158, 4294901760
    %v3548 = vsub.f32 %v158, %v3547
    %v3549 = vand.u32 %v3548, 4294901760
    %3550 = vmatpush1.msra.mxu0 %v3549
    %3551 = vmatprep.subr.mxu0 0.0
    %v3552 = vand.u32 %v157, 4294901760
    %v3553 = vsub.f32 %v157, %v3552
    %v3554 = vand.u32 %v3553, 4294901760
    %3555 = vmatpush1.msra.mxu0 %v3554
    %3556 = vmatprep.subr.mxu0 0.0
    %v3557 = vand.u32 %v156, 4294901760
    %v3558 = vsub.f32 %v156, %v3557
    %v3559 = vand.u32 %v3558, 4294901760
    %3560 = vmatpush1.msra.mxu0 %v3559
    %3561 = vmatprep.subr.mxu0 0.0
    %v3562 = vand.u32 %v155, 4294901760
    %v3563 = vsub.f32 %v155, %v3562
    %v3564 = vand.u32 %v3563, 4294901760
    %3565 = vmatpush1.msra.mxu0 %v3564
    %3566 = vmatprep.subr.mxu0 0.0
    %v3567 = vand.u32 %v154, 4294901760
    %v3568 = vsub.f32 %v154, %v3567
    %v3569 = vand.u32 %v3568, 4294901760
    %3570 = vmatpush1.msra.mxu0 %v3569
    %3571 = vmatprep.subr.mxu0 0.0
    %v3572 = vand.u32 %v153, 4294901760
    %v3573 = vsub.f32 %v153, %v3572
    %v3574 = vand.u32 %v3573, 4294901760
    %3575 = vmatpush1.msra.mxu0 %v3574
    %3576 = vmatprep.subr.mxu0 0.0
    %v3577 = vand.u32 %v184, 4294901760
    %v3578 = vsub.f32 %v184, %v3577
    %v3579 = vand.u32 %v3578, 4294901760
    %3580 = vmatpush2.msra.mxu0 %v3579
    %3581 = vmatprep.subr.mxu0 0.0
    %v3582 = vand.u32 %v183, 4294901760
    %v3583 = vsub.f32 %v183, %v3582
    %v3584 = vand.u32 %v3583, 4294901760
    %3585 = vmatpush2.msra.mxu0 %v3584
    %3586 = vmatprep.subr.mxu0 0.0
    %v3587 = vand.u32 %v182, 4294901760
    %v3588 = vsub.f32 %v182, %v3587
    %v3589 = vand.u32 %v3588, 4294901760
    %3590 = vmatpush2.msra.mxu0 %v3589
    %3591 = vmatprep.subr.mxu0 0.0
    %v3592 = vand.u32 %v181, 4294901760
    %v3593 = vsub.f32 %v181, %v3592
    %v3594 = vand.u32 %v3593, 4294901760
    %3595 = vmatpush2.msra.mxu0 %v3594
    %3596 = vmatprep.subr.mxu0 0.0
    %v3597 = vand.u32 %v180, 4294901760
    %v3598 = vsub.f32 %v180, %v3597
    %v3599 = vand.u32 %v3598, 4294901760
    %3600 = vmatpush2.msra.mxu0 %v3599
    %3601 = vmatprep.subr.mxu0 0.0
    %v3602 = vand.u32 %v179, 4294901760
    %v3603 = vsub.f32 %v179, %v3602
    %v3604 = vand.u32 %v3603, 4294901760
    %3605 = vmatpush2.msra.mxu0 %v3604
    %3606 = vmatprep.subr.mxu0 0.0
    %v3607 = vand.u32 %v178, 4294901760
    %v3608 = vsub.f32 %v178, %v3607
    %v3609 = vand.u32 %v3608, 4294901760
    %3610 = vmatpush2.msra.mxu0 %v3609
    %3611 = vmatprep.subr.mxu0 0.0
    %v3612 = vand.u32 %v177, 4294901760
    %v3613 = vsub.f32 %v177, %v3612
    %v3614 = vand.u32 %v3613, 4294901760
    %3615 = vmatpush2.msra.mxu0 %v3614
    %3616 = vmatprep.subr.mxu0 0.0
    %v3617 = vand.u32 %v176, 4294901760
    %v3618 = vsub.f32 %v176, %v3617
    %v3619 = vand.u32 %v3618, 4294901760
    %3620 = vmatpush2.msra.mxu0 %v3619
    %3621 = vmatprep.subr.mxu0 0.0
    %v3622 = vand.u32 %v175, 4294901760
    %v3623 = vsub.f32 %v175, %v3622
    %v3624 = vand.u32 %v3623, 4294901760
    %3625 = vmatpush2.msra.mxu0 %v3624
    %3626 = vmatprep.subr.mxu0 0.0
    %v3627 = vand.u32 %v174, 4294901760
    %v3628 = vsub.f32 %v174, %v3627
    %v3629 = vand.u32 %v3628, 4294901760
    %3630 = vmatpush2.msra.mxu0 %v3629
    %3631 = vmatprep.subr.mxu0 0.0
    %v3632 = vand.u32 %v173, 4294901760
    %v3633 = vsub.f32 %v173, %v3632
    %v3634 = vand.u32 %v3633, 4294901760
    %3635 = vmatpush2.msra.mxu0 %v3634
    %3636 = vmatprep.subr.mxu0 0.0
    %v3637 = vand.u32 %v172, 4294901760
    %v3638 = vsub.f32 %v172, %v3637
    %v3639 = vand.u32 %v3638, 4294901760
    %3640 = vmatpush2.msra.mxu0 %v3639
    %3641 = vmatprep.subr.mxu0 0.0
    %v3642 = vand.u32 %v171, 4294901760
    %v3643 = vsub.f32 %v171, %v3642
    %v3644 = vand.u32 %v3643, 4294901760
    %3645 = vmatpush2.msra.mxu0 %v3644
    %3646 = vmatprep.subr.mxu0 0.0
    %v3647 = vand.u32 %v170, 4294901760
    %v3648 = vsub.f32 %v170, %v3647
    %v3649 = vand.u32 %v3648, 4294901760
    %3650 = vmatpush2.msra.mxu0 %v3649
    %3651 = vmatprep.subr.mxu0 0.0
    %v3652 = vand.u32 %v169, 4294901760
    %v3653 = vsub.f32 %v169, %v3652
    %v3654 = vand.u32 %v3653, 4294901760
    %3655 = vmatpush2.msra.mxu0 %v3654
    %v3656 = vand.u32 %v48, 4294901760
    %3657 = vmatprep.mubr.f32.mxu0 %v3656
    %v3658 = vand.u32 %v47, 4294901760
    %3659 = vmatmul.mubr.f32.gmra.mxu0 %v3658
    %v3660 = vpop.f32.mrf.mxu0
    %v3661 = vadd.f32 %v3493, %v3660
    %v3662 = vpop.f32.mrf.mxu0
    %3663 = vdwg.mxu0
    %3664 = vmatprep.subr.mxu0 0.0
    %v3665 = vand.u32 %v168, 4294901760
    %3666 = vmatpush1.msra.mxu0 %v3665
    %3667 = vmatprep.subr.mxu0 0.0
    %v3668 = vand.u32 %v167, 4294901760
    %3669 = vmatpush1.msra.mxu0 %v3668
    %3670 = vmatprep.subr.mxu0 0.0
    %v3671 = vand.u32 %v166, 4294901760
    %3672 = vmatpush1.msra.mxu0 %v3671
    %3673 = vmatprep.subr.mxu0 0.0
    %v3674 = vand.u32 %v165, 4294901760
    %3675 = vmatpush1.msra.mxu0 %v3674
    %3676 = vmatprep.subr.mxu0 0.0
    %v3677 = vand.u32 %v164, 4294901760
    %3678 = vmatpush1.msra.mxu0 %v3677
    %3679 = vmatprep.subr.mxu0 0.0
    %v3680 = vand.u32 %v163, 4294901760
    %3681 = vmatpush1.msra.mxu0 %v3680
    %3682 = vmatprep.subr.mxu0 0.0
    %v3683 = vand.u32 %v162, 4294901760
    %3684 = vmatpush1.msra.mxu0 %v3683
    %3685 = vmatprep.subr.mxu0 0.0
    %v3686 = vand.u32 %v161, 4294901760
    %3687 = vmatpush1.msra.mxu0 %v3686
    %3688 = vmatprep.subr.mxu0 0.0
    %v3689 = vand.u32 %v160, 4294901760
    %3690 = vmatpush1.msra.mxu0 %v3689
    %3691 = vmatprep.subr.mxu0 0.0
    %v3692 = vand.u32 %v159, 4294901760
    %3693 = vmatpush1.msra.mxu0 %v3692
    %3694 = vmatprep.subr.mxu0 0.0
    %v3695 = vand.u32 %v158, 4294901760
    %3696 = vmatpush1.msra.mxu0 %v3695
    %3697 = vmatprep.subr.mxu0 0.0
    %v3698 = vand.u32 %v157, 4294901760
    %3699 = vmatpush1.msra.mxu0 %v3698
    %3700 = vmatprep.subr.mxu0 0.0
    %v3701 = vand.u32 %v156, 4294901760
    %3702 = vmatpush1.msra.mxu0 %v3701
    %3703 = vmatprep.subr.mxu0 0.0
    %v3704 = vand.u32 %v155, 4294901760
    %3705 = vmatpush1.msra.mxu0 %v3704
    %3706 = vmatprep.subr.mxu0 0.0
    %v3707 = vand.u32 %v154, 4294901760
    %3708 = vmatpush1.msra.mxu0 %v3707
    %3709 = vmatprep.subr.mxu0 0.0
    %v3710 = vand.u32 %v153, 4294901760
    %3711 = vmatpush1.msra.mxu0 %v3710
    %3712 = vmatprep.subr.mxu0 0.0
    %v3713 = vand.u32 %v184, 4294901760
    %3714 = vmatpush2.msra.mxu0 %v3713
    %3715 = vmatprep.subr.mxu0 0.0
    %v3716 = vand.u32 %v183, 4294901760
    %3717 = vmatpush2.msra.mxu0 %v3716
    %3718 = vmatprep.subr.mxu0 0.0
    %v3719 = vand.u32 %v182, 4294901760
    %3720 = vmatpush2.msra.mxu0 %v3719
    %3721 = vmatprep.subr.mxu0 0.0
    %v3722 = vand.u32 %v181, 4294901760
    %3723 = vmatpush2.msra.mxu0 %v3722
    %3724 = vmatprep.subr.mxu0 0.0
    %v3725 = vand.u32 %v180, 4294901760
    %3726 = vmatpush2.msra.mxu0 %v3725
    %3727 = vmatprep.subr.mxu0 0.0
    %v3728 = vand.u32 %v179, 4294901760
    %3729 = vmatpush2.msra.mxu0 %v3728
    %3730 = vmatprep.subr.mxu0 0.0
    %v3731 = vand.u32 %v178, 4294901760
    %3732 = vmatpush2.msra.mxu0 %v3731
    %3733 = vmatprep.subr.mxu0 0.0
    %v3734 = vand.u32 %v177, 4294901760
    %3735 = vmatpush2.msra.mxu0 %v3734
    %3736 = vmatprep.subr.mxu0 0.0
    %v3737 = vand.u32 %v176, 4294901760
    %3738 = vmatpush2.msra.mxu0 %v3737
    %3739 = vmatprep.subr.mxu0 0.0
    %v3740 = vand.u32 %v175, 4294901760
    %3741 = vmatpush2.msra.mxu0 %v3740
    %3742 = vmatprep.subr.mxu0 0.0
    %v3743 = vand.u32 %v174, 4294901760
    %3744 = vmatpush2.msra.mxu0 %v3743
    %3745 = vmatprep.subr.mxu0 0.0
    %v3746 = vand.u32 %v173, 4294901760
    %3747 = vmatpush2.msra.mxu0 %v3746
    %3748 = vmatprep.subr.mxu0 0.0
    %v3749 = vand.u32 %v172, 4294901760
    %3750 = vmatpush2.msra.mxu0 %v3749
    %3751 = vmatprep.subr.mxu0 0.0
    %v3752 = vand.u32 %v171, 4294901760
    %3753 = vmatpush2.msra.mxu0 %v3752
    %3754 = vmatprep.subr.mxu0 0.0
    %v3755 = vand.u32 %v170, 4294901760
    %3756 = vmatpush2.msra.mxu0 %v3755
    %3757 = vmatprep.subr.mxu0 0.0
    %v3758 = vand.u32 %v169, 4294901760
    %3759 = vmatpush2.msra.mxu0 %v3758
    %v3760 = vand.u32 %v48, 4294901760
    %3761 = vmatprep.mubr.f32.mxu0 %v3760
    %v3762 = vand.u32 %v47, 4294901760
    %3763 = vmatmul.mubr.f32.gmra.mxu0 %v3762
    %v3764 = vpop.f32.mrf.mxu0
    %v3765 = vadd.f32 %v3661, %v3764
    %v3766 = vpop.f32.mrf.mxu0
    %3767 = vdwg.mxu0
    %3768 = vmatprep.subr.mxu0 0.0
    %v3769 = vand.u32 %v200, 4294901760
    %3770 = vmatpush1.msra.mxu0 %v3769
    %3771 = vmatprep.subr.mxu0 0.0
    %v3772 = vand.u32 %v199, 4294901760
    %3773 = vmatpush1.msra.mxu0 %v3772
    %3774 = vmatprep.subr.mxu0 0.0
    %v3775 = vand.u32 %v198, 4294901760
    %3776 = vmatpush1.msra.mxu0 %v3775
    %3777 = vmatprep.subr.mxu0 0.0
    %v3778 = vand.u32 %v197, 4294901760
    %3779 = vmatpush1.msra.mxu0 %v3778
    %3780 = vmatprep.subr.mxu0 0.0
    %v3781 = vand.u32 %v196, 4294901760
    %3782 = vmatpush1.msra.mxu0 %v3781
    %3783 = vmatprep.subr.mxu0 0.0
    %v3784 = vand.u32 %v195, 4294901760
    %3785 = vmatpush1.msra.mxu0 %v3784
    %3786 = vmatprep.subr.mxu0 0.0
    %v3787 = vand.u32 %v194, 4294901760
    %3788 = vmatpush1.msra.mxu0 %v3787
    %3789 = vmatprep.subr.mxu0 0.0
    %v3790 = vand.u32 %v193, 4294901760
    %3791 = vmatpush1.msra.mxu0 %v3790
    %3792 = vmatprep.subr.mxu0 0.0
    %v3793 = vand.u32 %v192, 4294901760
    %3794 = vmatpush1.msra.mxu0 %v3793
    %3795 = vmatprep.subr.mxu0 0.0
    %v3796 = vand.u32 %v191, 4294901760
    %3797 = vmatpush1.msra.mxu0 %v3796
    %3798 = vmatprep.subr.mxu0 0.0
    %v3799 = vand.u32 %v190, 4294901760
    %3800 = vmatpush1.msra.mxu0 %v3799
    %3801 = vmatprep.subr.mxu0 0.0
    %v3802 = vand.u32 %v189, 4294901760
    %3803 = vmatpush1.msra.mxu0 %v3802
    %3804 = vmatprep.subr.mxu0 0.0
    %v3805 = vand.u32 %v188, 4294901760
    %3806 = vmatpush1.msra.mxu0 %v3805
    %3807 = vmatprep.subr.mxu0 0.0
    %v3808 = vand.u32 %v187, 4294901760
    %3809 = vmatpush1.msra.mxu0 %v3808
    %3810 = vmatprep.subr.mxu0 0.0
    %v3811 = vand.u32 %v186, 4294901760
    %3812 = vmatpush1.msra.mxu0 %v3811
    %3813 = vmatprep.subr.mxu0 0.0
    %v3814 = vand.u32 %v185, 4294901760
    %3815 = vmatpush1.msra.mxu0 %v3814
    %3816 = vmatprep.subr.mxu0 0.0
    %v3817 = vand.u32 %v216, 4294901760
    %3818 = vmatpush2.msra.mxu0 %v3817
    %3819 = vmatprep.subr.mxu0 0.0
    %v3820 = vand.u32 %v215, 4294901760
    %3821 = vmatpush2.msra.mxu0 %v3820
    %3822 = vmatprep.subr.mxu0 0.0
    %v3823 = vand.u32 %v214, 4294901760
    %3824 = vmatpush2.msra.mxu0 %v3823
    %3825 = vmatprep.subr.mxu0 0.0
    %v3826 = vand.u32 %v213, 4294901760
    %3827 = vmatpush2.msra.mxu0 %v3826
    %3828 = vmatprep.subr.mxu0 0.0
    %v3829 = vand.u32 %v212, 4294901760
    %3830 = vmatpush2.msra.mxu0 %v3829
    %3831 = vmatprep.subr.mxu0 0.0
    %v3832 = vand.u32 %v211, 4294901760
    %3833 = vmatpush2.msra.mxu0 %v3832
    %3834 = vmatprep.subr.mxu0 0.0
    %v3835 = vand.u32 %v210, 4294901760
    %3836 = vmatpush2.msra.mxu0 %v3835
    %3837 = vmatprep.subr.mxu0 0.0
    %v3838 = vand.u32 %v209, 4294901760
    %3839 = vmatpush2.msra.mxu0 %v3838
    %3840 = vmatprep.subr.mxu0 0.0
    %v3841 = vand.u32 %v208, 4294901760
    %3842 = vmatpush2.msra.mxu0 %v3841
    %3843 = vmatprep.subr.mxu0 0.0
    %v3844 = vand.u32 %v207, 4294901760
    %3845 = vmatpush2.msra.mxu0 %v3844
    %3846 = vmatprep.subr.mxu0 0.0
    %v3847 = vand.u32 %v206, 4294901760
    %3848 = vmatpush2.msra.mxu0 %v3847
    %3849 = vmatprep.subr.mxu0 0.0
    %v3850 = vand.u32 %v205, 4294901760
    %3851 = vmatpush2.msra.mxu0 %v3850
    %3852 = vmatprep.subr.mxu0 0.0
    %v3853 = vand.u32 %v204, 4294901760
    %3854 = vmatpush2.msra.mxu0 %v3853
    %3855 = vmatprep.subr.mxu0 0.0
    %v3856 = vand.u32 %v203, 4294901760
    %3857 = vmatpush2.msra.mxu0 %v3856
    %3858 = vmatprep.subr.mxu0 0.0
    %v3859 = vand.u32 %v202, 4294901760
    %3860 = vmatpush2.msra.mxu0 %v3859
    %3861 = vmatprep.subr.mxu0 0.0
    %v3862 = vand.u32 %v201, 4294901760
    %3863 = vmatpush2.msra.mxu0 %v3862
    %v3864 = vand.u32 %v50, 4294901760
    %v3865 = vsub.f32 %v50, %v3864
    %v3866 = vand.u32 %v3865, 4294901760
    %v3867 = vsub.f32 %v3865, %v3866
    %v3868 = vand.u32 %v3867, 4294901760
    %3869 = vmatprep.mubr.f32.mxu0 %v3868
    %v3870 = vand.u32 %v49, 4294901760
    %v3871 = vsub.f32 %v49, %v3870
    %v3872 = vand.u32 %v3871, 4294901760
    %v3873 = vsub.f32 %v3871, %v3872
    %v3874 = vand.u32 %v3873, 4294901760
    %3875 = vmatmul.mubr.f32.gmra.mxu0 %v3874
    %v3876 = vpop.f32.mrf.mxu0
    %v3877 = vadd.f32 %v3765, %v3876
    %v3878 = vpop.f32.mrf.mxu0
    %3879 = vdwg.mxu0
    %3880 = vmatprep.subr.mxu0 0.0
    %v3881 = vand.u32 %v200, 4294901760
    %v3882 = vsub.f32 %v200, %v3881
    %v3883 = vand.u32 %v3882, 4294901760
    %v3884 = vsub.f32 %v3882, %v3883
    %v3885 = vand.u32 %v3884, 4294901760
    %3886 = vmatpush1.msra.mxu0 %v3885
    %3887 = vmatprep.subr.mxu0 0.0
    %v3888 = vand.u32 %v199, 4294901760
    %v3889 = vsub.f32 %v199, %v3888
    %v3890 = vand.u32 %v3889, 4294901760
    %v3891 = vsub.f32 %v3889, %v3890
    %v3892 = vand.u32 %v3891, 4294901760
    %3893 = vmatpush1.msra.mxu0 %v3892
    %3894 = vmatprep.subr.mxu0 0.0
    %v3895 = vand.u32 %v198, 4294901760
    %v3896 = vsub.f32 %v198, %v3895
    %v3897 = vand.u32 %v3896, 4294901760
    %v3898 = vsub.f32 %v3896, %v3897
    %v3899 = vand.u32 %v3898, 4294901760
    %3900 = vmatpush1.msra.mxu0 %v3899
    %3901 = vmatprep.subr.mxu0 0.0
    %v3902 = vand.u32 %v197, 4294901760
    %v3903 = vsub.f32 %v197, %v3902
    %v3904 = vand.u32 %v3903, 4294901760
    %v3905 = vsub.f32 %v3903, %v3904
    %v3906 = vand.u32 %v3905, 4294901760
    %3907 = vmatpush1.msra.mxu0 %v3906
    %3908 = vmatprep.subr.mxu0 0.0
    %v3909 = vand.u32 %v196, 4294901760
    %v3910 = vsub.f32 %v196, %v3909
    %v3911 = vand.u32 %v3910, 4294901760
    %v3912 = vsub.f32 %v3910, %v3911
    %v3913 = vand.u32 %v3912, 4294901760
    %3914 = vmatpush1.msra.mxu0 %v3913
    %3915 = vmatprep.subr.mxu0 0.0
    %v3916 = vand.u32 %v195, 4294901760
    %v3917 = vsub.f32 %v195, %v3916
    %v3918 = vand.u32 %v3917, 4294901760
    %v3919 = vsub.f32 %v3917, %v3918
    %v3920 = vand.u32 %v3919, 4294901760
    %3921 = vmatpush1.msra.mxu0 %v3920
    %3922 = vmatprep.subr.mxu0 0.0
    %v3923 = vand.u32 %v194, 4294901760
    %v3924 = vsub.f32 %v194, %v3923
    %v3925 = vand.u32 %v3924, 4294901760
    %v3926 = vsub.f32 %v3924, %v3925
    %v3927 = vand.u32 %v3926, 4294901760
    %3928 = vmatpush1.msra.mxu0 %v3927
    %3929 = vmatprep.subr.mxu0 0.0
    %v3930 = vand.u32 %v193, 4294901760
    %v3931 = vsub.f32 %v193, %v3930
    %v3932 = vand.u32 %v3931, 4294901760
    %v3933 = vsub.f32 %v3931, %v3932
    %v3934 = vand.u32 %v3933, 4294901760
    %3935 = vmatpush1.msra.mxu0 %v3934
    %3936 = vmatprep.subr.mxu0 0.0
    %v3937 = vand.u32 %v192, 4294901760
    %v3938 = vsub.f32 %v192, %v3937
    %v3939 = vand.u32 %v3938, 4294901760
    %v3940 = vsub.f32 %v3938, %v3939
    %v3941 = vand.u32 %v3940, 4294901760
    %3942 = vmatpush1.msra.mxu0 %v3941
    %3943 = vmatprep.subr.mxu0 0.0
    %v3944 = vand.u32 %v191, 4294901760
    %v3945 = vsub.f32 %v191, %v3944
    %v3946 = vand.u32 %v3945, 4294901760
    %v3947 = vsub.f32 %v3945, %v3946
    %v3948 = vand.u32 %v3947, 4294901760
    %3949 = vmatpush1.msra.mxu0 %v3948
    %3950 = vmatprep.subr.mxu0 0.0
    %v3951 = vand.u32 %v190, 4294901760
    %v3952 = vsub.f32 %v190, %v3951
    %v3953 = vand.u32 %v3952, 4294901760
    %v3954 = vsub.f32 %v3952, %v3953
    %v3955 = vand.u32 %v3954, 4294901760
    %3956 = vmatpush1.msra.mxu0 %v3955
    %3957 = vmatprep.subr.mxu0 0.0
    %v3958 = vand.u32 %v189, 4294901760
    %v3959 = vsub.f32 %v189, %v3958
    %v3960 = vand.u32 %v3959, 4294901760
    %v3961 = vsub.f32 %v3959, %v3960
    %v3962 = vand.u32 %v3961, 4294901760
    %3963 = vmatpush1.msra.mxu0 %v3962
    %3964 = vmatprep.subr.mxu0 0.0
    %v3965 = vand.u32 %v188, 4294901760
    %v3966 = vsub.f32 %v188, %v3965
    %v3967 = vand.u32 %v3966, 4294901760
    %v3968 = vsub.f32 %v3966, %v3967
    %v3969 = vand.u32 %v3968, 4294901760
    %3970 = vmatpush1.msra.mxu0 %v3969
    %3971 = vmatprep.subr.mxu0 0.0
    %v3972 = vand.u32 %v187, 4294901760
    %v3973 = vsub.f32 %v187, %v3972
    %v3974 = vand.u32 %v3973, 4294901760
    %v3975 = vsub.f32 %v3973, %v3974
    %v3976 = vand.u32 %v3975, 4294901760
    %3977 = vmatpush1.msra.mxu0 %v3976
    %3978 = vmatprep.subr.mxu0 0.0
    %v3979 = vand.u32 %v186, 4294901760
    %v3980 = vsub.f32 %v186, %v3979
    %v3981 = vand.u32 %v3980, 4294901760
    %v3982 = vsub.f32 %v3980, %v3981
    %v3983 = vand.u32 %v3982, 4294901760
    %3984 = vmatpush1.msra.mxu0 %v3983
    %3985 = vmatprep.subr.mxu0 0.0
    %v3986 = vand.u32 %v185, 4294901760
    %v3987 = vsub.f32 %v185, %v3986
    %v3988 = vand.u32 %v3987, 4294901760
    %v3989 = vsub.f32 %v3987, %v3988
    %v3990 = vand.u32 %v3989, 4294901760
    %3991 = vmatpush1.msra.mxu0 %v3990
    %3992 = vmatprep.subr.mxu0 0.0
    %v3993 = vand.u32 %v216, 4294901760
    %v3994 = vsub.f32 %v216, %v3993
    %v3995 = vand.u32 %v3994, 4294901760
    %v3996 = vsub.f32 %v3994, %v3995
    %v3997 = vand.u32 %v3996, 4294901760
    %3998 = vmatpush2.msra.mxu0 %v3997
    %3999 = vmatprep.subr.mxu0 0.0
    %v4000 = vand.u32 %v215, 4294901760
    %v4001 = vsub.f32 %v215, %v4000
    %v4002 = vand.u32 %v4001, 4294901760
    %v4003 = vsub.f32 %v4001, %v4002
    %v4004 = vand.u32 %v4003, 4294901760
    %4005 = vmatpush2.msra.mxu0 %v4004
    %4006 = vmatprep.subr.mxu0 0.0
    %v4007 = vand.u32 %v214, 4294901760
    %v4008 = vsub.f32 %v214, %v4007
    %v4009 = vand.u32 %v4008, 4294901760
    %v4010 = vsub.f32 %v4008, %v4009
    %v4011 = vand.u32 %v4010, 4294901760
    %4012 = vmatpush2.msra.mxu0 %v4011
    %4013 = vmatprep.subr.mxu0 0.0
    %v4014 = vand.u32 %v213, 4294901760
    %v4015 = vsub.f32 %v213, %v4014
    %v4016 = vand.u32 %v4015, 4294901760
    %v4017 = vsub.f32 %v4015, %v4016
    %v4018 = vand.u32 %v4017, 4294901760
    %4019 = vmatpush2.msra.mxu0 %v4018
    %4020 = vmatprep.subr.mxu0 0.0
    %v4021 = vand.u32 %v212, 4294901760
    %v4022 = vsub.f32 %v212, %v4021
    %v4023 = vand.u32 %v4022, 4294901760
    %v4024 = vsub.f32 %v4022, %v4023
    %v4025 = vand.u32 %v4024, 4294901760
    %4026 = vmatpush2.msra.mxu0 %v4025
    %4027 = vmatprep.subr.mxu0 0.0
    %v4028 = vand.u32 %v211, 4294901760
    %v4029 = vsub.f32 %v211, %v4028
    %v4030 = vand.u32 %v4029, 4294901760
    %v4031 = vsub.f32 %v4029, %v4030
    %v4032 = vand.u32 %v4031, 4294901760
    %4033 = vmatpush2.msra.mxu0 %v4032
    %4034 = vmatprep.subr.mxu0 0.0
    %v4035 = vand.u32 %v210, 4294901760
    %v4036 = vsub.f32 %v210, %v4035
    %v4037 = vand.u32 %v4036, 4294901760
    %v4038 = vsub.f32 %v4036, %v4037
    %v4039 = vand.u32 %v4038, 4294901760
    %4040 = vmatpush2.msra.mxu0 %v4039
    %4041 = vmatprep.subr.mxu0 0.0
    %v4042 = vand.u32 %v209, 4294901760
    %v4043 = vsub.f32 %v209, %v4042
    %v4044 = vand.u32 %v4043, 4294901760
    %v4045 = vsub.f32 %v4043, %v4044
    %v4046 = vand.u32 %v4045, 4294901760
    %4047 = vmatpush2.msra.mxu0 %v4046
    %4048 = vmatprep.subr.mxu0 0.0
    %v4049 = vand.u32 %v208, 4294901760
    %v4050 = vsub.f32 %v208, %v4049
    %v4051 = vand.u32 %v4050, 4294901760
    %v4052 = vsub.f32 %v4050, %v4051
    %v4053 = vand.u32 %v4052, 4294901760
    %4054 = vmatpush2.msra.mxu0 %v4053
    %4055 = vmatprep.subr.mxu0 0.0
    %v4056 = vand.u32 %v207, 4294901760
    %v4057 = vsub.f32 %v207, %v4056
    %v4058 = vand.u32 %v4057, 4294901760
    %v4059 = vsub.f32 %v4057, %v4058
    %v4060 = vand.u32 %v4059, 4294901760
    %4061 = vmatpush2.msra.mxu0 %v4060
    %4062 = vmatprep.subr.mxu0 0.0
    %v4063 = vand.u32 %v206, 4294901760
    %v4064 = vsub.f32 %v206, %v4063
    %v4065 = vand.u32 %v4064, 4294901760
    %v4066 = vsub.f32 %v4064, %v4065
    %v4067 = vand.u32 %v4066, 4294901760
    %4068 = vmatpush2.msra.mxu0 %v4067
    %4069 = vmatprep.subr.mxu0 0.0
    %v4070 = vand.u32 %v205, 4294901760
    %v4071 = vsub.f32 %v205, %v4070
    %v4072 = vand.u32 %v4071, 4294901760
    %v4073 = vsub.f32 %v4071, %v4072
    %v4074 = vand.u32 %v4073, 4294901760
    %4075 = vmatpush2.msra.mxu0 %v4074
    %4076 = vmatprep.subr.mxu0 0.0
    %v4077 = vand.u32 %v204, 4294901760
    %v4078 = vsub.f32 %v204, %v4077
    %v4079 = vand.u32 %v4078, 4294901760
    %v4080 = vsub.f32 %v4078, %v4079
    %v4081 = vand.u32 %v4080, 4294901760
    %4082 = vmatpush2.msra.mxu0 %v4081
    %4083 = vmatprep.subr.mxu0 0.0
    %v4084 = vand.u32 %v203, 4294901760
    %v4085 = vsub.f32 %v203, %v4084
    %v4086 = vand.u32 %v4085, 4294901760
    %v4087 = vsub.f32 %v4085, %v4086
    %v4088 = vand.u32 %v4087, 4294901760
    %4089 = vmatpush2.msra.mxu0 %v4088
    %4090 = vmatprep.subr.mxu0 0.0
    %v4091 = vand.u32 %v202, 4294901760
    %v4092 = vsub.f32 %v202, %v4091
    %v4093 = vand.u32 %v4092, 4294901760
    %v4094 = vsub.f32 %v4092, %v4093
    %v4095 = vand.u32 %v4094, 4294901760
    %4096 = vmatpush2.msra.mxu0 %v4095
    %4097 = vmatprep.subr.mxu0 0.0
    %v4098 = vand.u32 %v201, 4294901760
    %v4099 = vsub.f32 %v201, %v4098
    %v4100 = vand.u32 %v4099, 4294901760
    %v4101 = vsub.f32 %v4099, %v4100
    %v4102 = vand.u32 %v4101, 4294901760
    %4103 = vmatpush2.msra.mxu0 %v4102
    %v4104 = vand.u32 %v50, 4294901760
    %4105 = vmatprep.mubr.f32.mxu0 %v4104
    %v4106 = vand.u32 %v49, 4294901760
    %4107 = vmatmul.mubr.f32.gmra.mxu0 %v4106
    %v4108 = vpop.f32.mrf.mxu0
    %v4109 = vadd.f32 %v3877, %v4108
    %v4110 = vpop.f32.mrf.mxu0
    %4111 = vdwg.mxu0
    %4112 = vmatprep.subr.mxu0 0.0
    %v4113 = vand.u32 %v200, 4294901760
    %v4114 = vsub.f32 %v200, %v4113
    %4115 = vmatpush1.msra.mxu0 %v4114
    %4116 = vmatprep.subr.mxu0 0.0
    %v4117 = vand.u32 %v199, 4294901760
    %v4118 = vsub.f32 %v199, %v4117
    %4119 = vmatpush1.msra.mxu0 %v4118
    %4120 = vmatprep.subr.mxu0 0.0
    %v4121 = vand.u32 %v198, 4294901760
    %v4122 = vsub.f32 %v198, %v4121
    %4123 = vmatpush1.msra.mxu0 %v4122
    %4124 = vmatprep.subr.mxu0 0.0
    %v4125 = vand.u32 %v197, 4294901760
    %v4126 = vsub.f32 %v197, %v4125
    %4127 = vmatpush1.msra.mxu0 %v4126
    %4128 = vmatprep.subr.mxu0 0.0
    %v4129 = vand.u32 %v196, 4294901760
    %v4130 = vsub.f32 %v196, %v4129
    %4131 = vmatpush1.msra.mxu0 %v4130
    %4132 = vmatprep.subr.mxu0 0.0
    %v4133 = vand.u32 %v195, 4294901760
    %v4134 = vsub.f32 %v195, %v4133
    %4135 = vmatpush1.msra.mxu0 %v4134
    %4136 = vmatprep.subr.mxu0 0.0
    %v4137 = vand.u32 %v194, 4294901760
    %v4138 = vsub.f32 %v194, %v4137
    %4139 = vmatpush1.msra.mxu0 %v4138
    %4140 = vmatprep.subr.mxu0 0.0
    %v4141 = vand.u32 %v193, 4294901760
    %v4142 = vsub.f32 %v193, %v4141
    %4143 = vmatpush1.msra.mxu0 %v4142
    %4144 = vmatprep.subr.mxu0 0.0
    %v4145 = vand.u32 %v192, 4294901760
    %v4146 = vsub.f32 %v192, %v4145
    %4147 = vmatpush1.msra.mxu0 %v4146
    %4148 = vmatprep.subr.mxu0 0.0
    %v4149 = vand.u32 %v191, 4294901760
    %v4150 = vsub.f32 %v191, %v4149
    %4151 = vmatpush1.msra.mxu0 %v4150
    %4152 = vmatprep.subr.mxu0 0.0
    %v4153 = vand.u32 %v190, 4294901760
    %v4154 = vsub.f32 %v190, %v4153
    %4155 = vmatpush1.msra.mxu0 %v4154
    %4156 = vmatprep.subr.mxu0 0.0
    %v4157 = vand.u32 %v189, 4294901760
    %v4158 = vsub.f32 %v189, %v4157
    %4159 = vmatpush1.msra.mxu0 %v4158
    %4160 = vmatprep.subr.mxu0 0.0
    %v4161 = vand.u32 %v188, 4294901760
    %v4162 = vsub.f32 %v188, %v4161
    %4163 = vmatpush1.msra.mxu0 %v4162
    %4164 = vmatprep.subr.mxu0 0.0
    %v4165 = vand.u32 %v187, 4294901760
    %v4166 = vsub.f32 %v187, %v4165
    %4167 = vmatpush1.msra.mxu0 %v4166
    %4168 = vmatprep.subr.mxu0 0.0
    %v4169 = vand.u32 %v186, 4294901760
    %v4170 = vsub.f32 %v186, %v4169
    %4171 = vmatpush1.msra.mxu0 %v4170
    %4172 = vmatprep.subr.mxu0 0.0
    %v4173 = vand.u32 %v185, 4294901760
    %v4174 = vsub.f32 %v185, %v4173
    %4175 = vmatpush1.msra.mxu0 %v4174
    %4176 = vmatprep.subr.mxu0 0.0
    %v4177 = vand.u32 %v216, 4294901760
    %v4178 = vsub.f32 %v216, %v4177
    %4179 = vmatpush2.msra.mxu0 %v4178
    %4180 = vmatprep.subr.mxu0 0.0
    %v4181 = vand.u32 %v215, 4294901760
    %v4182 = vsub.f32 %v215, %v4181
    %4183 = vmatpush2.msra.mxu0 %v4182
    %4184 = vmatprep.subr.mxu0 0.0
    %v4185 = vand.u32 %v214, 4294901760
    %v4186 = vsub.f32 %v214, %v4185
    %4187 = vmatpush2.msra.mxu0 %v4186
    %4188 = vmatprep.subr.mxu0 0.0
    %v4189 = vand.u32 %v213, 4294901760
    %v4190 = vsub.f32 %v213, %v4189
    %4191 = vmatpush2.msra.mxu0 %v4190
    %4192 = vmatprep.subr.mxu0 0.0
    %v4193 = vand.u32 %v212, 4294901760
    %v4194 = vsub.f32 %v212, %v4193
    %4195 = vmatpush2.msra.mxu0 %v4194
    %4196 = vmatprep.subr.mxu0 0.0
    %v4197 = vand.u32 %v211, 4294901760
    %v4198 = vsub.f32 %v211, %v4197
    %4199 = vmatpush2.msra.mxu0 %v4198
    %4200 = vmatprep.subr.mxu0 0.0
    %v4201 = vand.u32 %v210, 4294901760
    %v4202 = vsub.f32 %v210, %v4201
    %4203 = vmatpush2.msra.mxu0 %v4202
    %4204 = vmatprep.subr.mxu0 0.0
    %v4205 = vand.u32 %v209, 4294901760
    %v4206 = vsub.f32 %v209, %v4205
    %4207 = vmatpush2.msra.mxu0 %v4206
    %4208 = vmatprep.subr.mxu0 0.0
    %v4209 = vand.u32 %v208, 4294901760
    %v4210 = vsub.f32 %v208, %v4209
    %4211 = vmatpush2.msra.mxu0 %v4210
    %4212 = vmatprep.subr.mxu0 0.0
    %v4213 = vand.u32 %v207, 4294901760
    %v4214 = vsub.f32 %v207, %v4213
    %4215 = vmatpush2.msra.mxu0 %v4214
    %4216 = vmatprep.subr.mxu0 0.0
    %v4217 = vand.u32 %v206, 4294901760
    %v4218 = vsub.f32 %v206, %v4217
    %4219 = vmatpush2.msra.mxu0 %v4218
    %4220 = vmatprep.subr.mxu0 0.0
    %v4221 = vand.u32 %v205, 4294901760
    %v4222 = vsub.f32 %v205, %v4221
    %4223 = vmatpush2.msra.mxu0 %v4222
    %4224 = vmatprep.subr.mxu0 0.0
    %v4225 = vand.u32 %v204, 4294901760
    %v4226 = vsub.f32 %v204, %v4225
    %4227 = vmatpush2.msra.mxu0 %v4226
    %4228 = vmatprep.subr.mxu0 0.0
    %v4229 = vand.u32 %v203, 4294901760
    %v4230 = vsub.f32 %v203, %v4229
    %4231 = vmatpush2.msra.mxu0 %v4230
    %4232 = vmatprep.subr.mxu0 0.0
    %v4233 = vand.u32 %v202, 4294901760
    %v4234 = vsub.f32 %v202, %v4233
    %4235 = vmatpush2.msra.mxu0 %v4234
    %4236 = vmatprep.subr.mxu0 0.0
    %v4237 = vand.u32 %v201, 4294901760
    %v4238 = vsub.f32 %v201, %v4237
    %4239 = vmatpush2.msra.mxu0 %v4238
    %v4240 = vand.u32 %v50, 4294901760
    %v4241 = vsub.f32 %v50, %v4240
    %4242 = vmatprep.mubr.f32.mxu0 %v4241
    %v4243 = vand.u32 %v49, 4294901760
    %v4244 = vsub.f32 %v49, %v4243
    %4245 = vmatmul.mubr.f32.gmra.mxu0 %v4244
    %v4246 = vpop.f32.mrf.mxu0
    %v4247 = vadd.f32 %v4109, %v4246
    %v4248 = vpop.f32.mrf.mxu0
    %4249 = vdwg.mxu0
    %4250 = vmatprep.subr.mxu0 0.0
    %v4251 = vand.u32 %v200, 4294901760
    %4252 = vmatpush1.msra.mxu0 %v4251
    %4253 = vmatprep.subr.mxu0 0.0
    %v4254 = vand.u32 %v199, 4294901760
    %4255 = vmatpush1.msra.mxu0 %v4254
    %4256 = vmatprep.subr.mxu0 0.0
    %v4257 = vand.u32 %v198, 4294901760
    %4258 = vmatpush1.msra.mxu0 %v4257
    %4259 = vmatprep.subr.mxu0 0.0
    %v4260 = vand.u32 %v197, 4294901760
    %4261 = vmatpush1.msra.mxu0 %v4260
    %4262 = vmatprep.subr.mxu0 0.0
    %v4263 = vand.u32 %v196, 4294901760
    %4264 = vmatpush1.msra.mxu0 %v4263
    %4265 = vmatprep.subr.mxu0 0.0
    %v4266 = vand.u32 %v195, 4294901760
    %4267 = vmatpush1.msra.mxu0 %v4266
    %4268 = vmatprep.subr.mxu0 0.0
    %v4269 = vand.u32 %v194, 4294901760
    %4270 = vmatpush1.msra.mxu0 %v4269
    %4271 = vmatprep.subr.mxu0 0.0
    %v4272 = vand.u32 %v193, 4294901760
    %4273 = vmatpush1.msra.mxu0 %v4272
    %4274 = vmatprep.subr.mxu0 0.0
    %v4275 = vand.u32 %v192, 4294901760
    %4276 = vmatpush1.msra.mxu0 %v4275
    %4277 = vmatprep.subr.mxu0 0.0
    %v4278 = vand.u32 %v191, 4294901760
    %4279 = vmatpush1.msra.mxu0 %v4278
    %4280 = vmatprep.subr.mxu0 0.0
    %v4281 = vand.u32 %v190, 4294901760
    %4282 = vmatpush1.msra.mxu0 %v4281
    %4283 = vmatprep.subr.mxu0 0.0
    %v4284 = vand.u32 %v189, 4294901760
    %4285 = vmatpush1.msra.mxu0 %v4284
    %4286 = vmatprep.subr.mxu0 0.0
    %v4287 = vand.u32 %v188, 4294901760
    %4288 = vmatpush1.msra.mxu0 %v4287
    %4289 = vmatprep.subr.mxu0 0.0
    %v4290 = vand.u32 %v187, 4294901760
    %4291 = vmatpush1.msra.mxu0 %v4290
    %4292 = vmatprep.subr.mxu0 0.0
    %v4293 = vand.u32 %v186, 4294901760
    %4294 = vmatpush1.msra.mxu0 %v4293
    %4295 = vmatprep.subr.mxu0 0.0
    %v4296 = vand.u32 %v185, 4294901760
    %4297 = vmatpush1.msra.mxu0 %v4296
    %4298 = vmatprep.subr.mxu0 0.0
    %v4299 = vand.u32 %v216, 4294901760
    %4300 = vmatpush2.msra.mxu0 %v4299
    %4301 = vmatprep.subr.mxu0 0.0
    %v4302 = vand.u32 %v215, 4294901760
    %4303 = vmatpush2.msra.mxu0 %v4302
    %4304 = vmatprep.subr.mxu0 0.0
    %v4305 = vand.u32 %v214, 4294901760
    %4306 = vmatpush2.msra.mxu0 %v4305
    %4307 = vmatprep.subr.mxu0 0.0
    %v4308 = vand.u32 %v213, 4294901760
    %4309 = vmatpush2.msra.mxu0 %v4308
    %4310 = vmatprep.subr.mxu0 0.0
    %v4311 = vand.u32 %v212, 4294901760
    %4312 = vmatpush2.msra.mxu0 %v4311
    %4313 = vmatprep.subr.mxu0 0.0
    %v4314 = vand.u32 %v211, 4294901760
    %4315 = vmatpush2.msra.mxu0 %v4314
    %4316 = vmatprep.subr.mxu0 0.0
    %v4317 = vand.u32 %v210, 4294901760
    %4318 = vmatpush2.msra.mxu0 %v4317
    %4319 = vmatprep.subr.mxu0 0.0
    %v4320 = vand.u32 %v209, 4294901760
    %4321 = vmatpush2.msra.mxu0 %v4320
    %4322 = vmatprep.subr.mxu0 0.0
    %v4323 = vand.u32 %v208, 4294901760
    %4324 = vmatpush2.msra.mxu0 %v4323
    %4325 = vmatprep.subr.mxu0 0.0
    %v4326 = vand.u32 %v207, 4294901760
    %4327 = vmatpush2.msra.mxu0 %v4326
    %4328 = vmatprep.subr.mxu0 0.0
    %v4329 = vand.u32 %v206, 4294901760
    %4330 = vmatpush2.msra.mxu0 %v4329
    %4331 = vmatprep.subr.mxu0 0.0
    %v4332 = vand.u32 %v205, 4294901760
    %4333 = vmatpush2.msra.mxu0 %v4332
    %4334 = vmatprep.subr.mxu0 0.0
    %v4335 = vand.u32 %v204, 4294901760
    %4336 = vmatpush2.msra.mxu0 %v4335
    %4337 = vmatprep.subr.mxu0 0.0
    %v4338 = vand.u32 %v203, 4294901760
    %4339 = vmatpush2.msra.mxu0 %v4338
    %4340 = vmatprep.subr.mxu0 0.0
    %v4341 = vand.u32 %v202, 4294901760
    %4342 = vmatpush2.msra.mxu0 %v4341
    %4343 = vmatprep.subr.mxu0 0.0
    %v4344 = vand.u32 %v201, 4294901760
    %4345 = vmatpush2.msra.mxu0 %v4344
    %v4346 = vand.u32 %v50, 4294901760
    %v4347 = vsub.f32 %v50, %v4346
    %v4348 = vand.u32 %v4347, 4294901760
    %4349 = vmatprep.mubr.f32.mxu0 %v4348
    %v4350 = vand.u32 %v49, 4294901760
    %v4351 = vsub.f32 %v49, %v4350
    %v4352 = vand.u32 %v4351, 4294901760
    %4353 = vmatmul.mubr.f32.gmra.mxu0 %v4352
    %v4354 = vpop.f32.mrf.mxu0
    %v4355 = vadd.f32 %v4247, %v4354
    %v4356 = vpop.f32.mrf.mxu0
    %4357 = vdwg.mxu0
    %4358 = vmatprep.subr.mxu0 0.0
    %v4359 = vand.u32 %v200, 4294901760
    %v4360 = vsub.f32 %v200, %v4359
    %v4361 = vand.u32 %v4360, 4294901760
    %4362 = vmatpush1.msra.mxu0 %v4361
    %4363 = vmatprep.subr.mxu0 0.0
    %v4364 = vand.u32 %v199, 4294901760
    %v4365 = vsub.f32 %v199, %v4364
    %v4366 = vand.u32 %v4365, 4294901760
    %4367 = vmatpush1.msra.mxu0 %v4366
    %4368 = vmatprep.subr.mxu0 0.0
    %v4369 = vand.u32 %v198, 4294901760
    %v4370 = vsub.f32 %v198, %v4369
    %v4371 = vand.u32 %v4370, 4294901760
    %4372 = vmatpush1.msra.mxu0 %v4371
    %4373 = vmatprep.subr.mxu0 0.0
    %v4374 = vand.u32 %v197, 4294901760
    %v4375 = vsub.f32 %v197, %v4374
    %v4376 = vand.u32 %v4375, 4294901760
    %4377 = vmatpush1.msra.mxu0 %v4376
    %4378 = vmatprep.subr.mxu0 0.0
    %v4379 = vand.u32 %v196, 4294901760
    %v4380 = vsub.f32 %v196, %v4379
    %v4381 = vand.u32 %v4380, 4294901760
    %4382 = vmatpush1.msra.mxu0 %v4381
    %4383 = vmatprep.subr.mxu0 0.0
    %v4384 = vand.u32 %v195, 4294901760
    %v4385 = vsub.f32 %v195, %v4384
    %v4386 = vand.u32 %v4385, 4294901760
    %4387 = vmatpush1.msra.mxu0 %v4386
    %4388 = vmatprep.subr.mxu0 0.0
    %v4389 = vand.u32 %v194, 4294901760
    %v4390 = vsub.f32 %v194, %v4389
    %v4391 = vand.u32 %v4390, 4294901760
    %4392 = vmatpush1.msra.mxu0 %v4391
    %4393 = vmatprep.subr.mxu0 0.0
    %v4394 = vand.u32 %v193, 4294901760
    %v4395 = vsub.f32 %v193, %v4394
    %v4396 = vand.u32 %v4395, 4294901760
    %4397 = vmatpush1.msra.mxu0 %v4396
    %4398 = vmatprep.subr.mxu0 0.0
    %v4399 = vand.u32 %v192, 4294901760
    %v4400 = vsub.f32 %v192, %v4399
    %v4401 = vand.u32 %v4400, 4294901760
    %4402 = vmatpush1.msra.mxu0 %v4401
    %4403 = vmatprep.subr.mxu0 0.0
    %v4404 = vand.u32 %v191, 4294901760
    %v4405 = vsub.f32 %v191, %v4404
    %v4406 = vand.u32 %v4405, 4294901760
    %4407 = vmatpush1.msra.mxu0 %v4406
    %4408 = vmatprep.subr.mxu0 0.0
    %v4409 = vand.u32 %v190, 4294901760
    %v4410 = vsub.f32 %v190, %v4409
    %v4411 = vand.u32 %v4410, 4294901760
    %4412 = vmatpush1.msra.mxu0 %v4411
    %4413 = vmatprep.subr.mxu0 0.0
    %v4414 = vand.u32 %v189, 4294901760
    %v4415 = vsub.f32 %v189, %v4414
    %v4416 = vand.u32 %v4415, 4294901760
    %4417 = vmatpush1.msra.mxu0 %v4416
    %4418 = vmatprep.subr.mxu0 0.0
    %v4419 = vand.u32 %v188, 4294901760
    %v4420 = vsub.f32 %v188, %v4419
    %v4421 = vand.u32 %v4420, 4294901760
    %4422 = vmatpush1.msra.mxu0 %v4421
    %4423 = vmatprep.subr.mxu0 0.0
    %v4424 = vand.u32 %v187, 4294901760
    %v4425 = vsub.f32 %v187, %v4424
    %v4426 = vand.u32 %v4425, 4294901760
    %4427 = vmatpush1.msra.mxu0 %v4426
    %4428 = vmatprep.subr.mxu0 0.0
    %v4429 = vand.u32 %v186, 4294901760
    %v4430 = vsub.f32 %v186, %v4429
    %v4431 = vand.u32 %v4430, 4294901760
    %4432 = vmatpush1.msra.mxu0 %v4431
    %4433 = vmatprep.subr.mxu0 0.0
    %v4434 = vand.u32 %v185, 4294901760
    %v4435 = vsub.f32 %v185, %v4434
    %v4436 = vand.u32 %v4435, 4294901760
    %4437 = vmatpush1.msra.mxu0 %v4436
    %4438 = vmatprep.subr.mxu0 0.0
    %v4439 = vand.u32 %v216, 4294901760
    %v4440 = vsub.f32 %v216, %v4439
    %v4441 = vand.u32 %v4440, 4294901760
    %4442 = vmatpush2.msra.mxu0 %v4441
    %4443 = vmatprep.subr.mxu0 0.0
    %v4444 = vand.u32 %v215, 4294901760
    %v4445 = vsub.f32 %v215, %v4444
    %v4446 = vand.u32 %v4445, 4294901760
    %4447 = vmatpush2.msra.mxu0 %v4446
    %4448 = vmatprep.subr.mxu0 0.0
    %v4449 = vand.u32 %v214, 4294901760
    %v4450 = vsub.f32 %v214, %v4449
    %v4451 = vand.u32 %v4450, 4294901760
    %4452 = vmatpush2.msra.mxu0 %v4451
    %4453 = vmatprep.subr.mxu0 0.0
    %v4454 = vand.u32 %v213, 4294901760
    %v4455 = vsub.f32 %v213, %v4454
    %v4456 = vand.u32 %v4455, 4294901760
    %4457 = vmatpush2.msra.mxu0 %v4456
    %4458 = vmatprep.subr.mxu0 0.0
    %v4459 = vand.u32 %v212, 4294901760
    %v4460 = vsub.f32 %v212, %v4459
    %v4461 = vand.u32 %v4460, 4294901760
    %4462 = vmatpush2.msra.mxu0 %v4461
    %4463 = vmatprep.subr.mxu0 0.0
    %v4464 = vand.u32 %v211, 4294901760
    %v4465 = vsub.f32 %v211, %v4464
    %v4466 = vand.u32 %v4465, 4294901760
    %4467 = vmatpush2.msra.mxu0 %v4466
    %4468 = vmatprep.subr.mxu0 0.0
    %v4469 = vand.u32 %v210, 4294901760
    %v4470 = vsub.f32 %v210, %v4469
    %v4471 = vand.u32 %v4470, 4294901760
    %4472 = vmatpush2.msra.mxu0 %v4471
    %4473 = vmatprep.subr.mxu0 0.0
    %v4474 = vand.u32 %v209, 4294901760
    %v4475 = vsub.f32 %v209, %v4474
    %v4476 = vand.u32 %v4475, 4294901760
    %4477 = vmatpush2.msra.mxu0 %v4476
    %4478 = vmatprep.subr.mxu0 0.0
    %v4479 = vand.u32 %v208, 4294901760
    %v4480 = vsub.f32 %v208, %v4479
    %v4481 = vand.u32 %v4480, 4294901760
    %4482 = vmatpush2.msra.mxu0 %v4481
    %4483 = vmatprep.subr.mxu0 0.0
    %v4484 = vand.u32 %v207, 4294901760
    %v4485 = vsub.f32 %v207, %v4484
    %v4486 = vand.u32 %v4485, 4294901760
    %4487 = vmatpush2.msra.mxu0 %v4486
    %4488 = vmatprep.subr.mxu0 0.0
    %v4489 = vand.u32 %v206, 4294901760
    %v4490 = vsub.f32 %v206, %v4489
    %v4491 = vand.u32 %v4490, 4294901760
    %4492 = vmatpush2.msra.mxu0 %v4491
    %4493 = vmatprep.subr.mxu0 0.0
    %v4494 = vand.u32 %v205, 4294901760
    %v4495 = vsub.f32 %v205, %v4494
    %v4496 = vand.u32 %v4495, 4294901760
    %4497 = vmatpush2.msra.mxu0 %v4496
    %4498 = vmatprep.subr.mxu0 0.0
    %v4499 = vand.u32 %v204, 4294901760
    %v4500 = vsub.f32 %v204, %v4499
    %v4501 = vand.u32 %v4500, 4294901760
    %4502 = vmatpush2.msra.mxu0 %v4501
    %4503 = vmatprep.subr.mxu0 0.0
    %v4504 = vand.u32 %v203, 4294901760
    %v4505 = vsub.f32 %v203, %v4504
    %v4506 = vand.u32 %v4505, 4294901760
    %4507 = vmatpush2.msra.mxu0 %v4506
    %4508 = vmatprep.subr.mxu0 0.0
    %v4509 = vand.u32 %v202, 4294901760
    %v4510 = vsub.f32 %v202, %v4509
    %v4511 = vand.u32 %v4510, 4294901760
    %4512 = vmatpush2.msra.mxu0 %v4511
    %4513 = vmatprep.subr.mxu0 0.0
    %v4514 = vand.u32 %v201, 4294901760
    %v4515 = vsub.f32 %v201, %v4514
    %v4516 = vand.u32 %v4515, 4294901760
    %4517 = vmatpush2.msra.mxu0 %v4516
    %v4518 = vand.u32 %v50, 4294901760
    %4519 = vmatprep.mubr.f32.mxu0 %v4518
    %v4520 = vand.u32 %v49, 4294901760
    %4521 = vmatmul.mubr.f32.gmra.mxu0 %v4520
    %v4522 = vpop.f32.mrf.mxu0
    %v4523 = vadd.f32 %v4355, %v4522
    %v4524 = vpop.f32.mrf.mxu0
    %4525 = vdwg.mxu0
    %4526 = vmatprep.subr.mxu0 0.0
    %v4527 = vand.u32 %v200, 4294901760
    %4528 = vmatpush1.msra.mxu0 %v4527
    %4529 = vmatprep.subr.mxu0 0.0
    %v4530 = vand.u32 %v199, 4294901760
    %4531 = vmatpush1.msra.mxu0 %v4530
    %4532 = vmatprep.subr.mxu0 0.0
    %v4533 = vand.u32 %v198, 4294901760
    %4534 = vmatpush1.msra.mxu0 %v4533
    %4535 = vmatprep.subr.mxu0 0.0
    %v4536 = vand.u32 %v197, 4294901760
    %4537 = vmatpush1.msra.mxu0 %v4536
    %4538 = vmatprep.subr.mxu0 0.0
    %v4539 = vand.u32 %v196, 4294901760
    %4540 = vmatpush1.msra.mxu0 %v4539
    %4541 = vmatprep.subr.mxu0 0.0
    %v4542 = vand.u32 %v195, 4294901760
    %4543 = vmatpush1.msra.mxu0 %v4542
    %4544 = vmatprep.subr.mxu0 0.0
    %v4545 = vand.u32 %v194, 4294901760
    %4546 = vmatpush1.msra.mxu0 %v4545
    %4547 = vmatprep.subr.mxu0 0.0
    %v4548 = vand.u32 %v193, 4294901760
    %4549 = vmatpush1.msra.mxu0 %v4548
    %4550 = vmatprep.subr.mxu0 0.0
    %v4551 = vand.u32 %v192, 4294901760
    %4552 = vmatpush1.msra.mxu0 %v4551
    %4553 = vmatprep.subr.mxu0 0.0
    %v4554 = vand.u32 %v191, 4294901760
    %4555 = vmatpush1.msra.mxu0 %v4554
    %4556 = vmatprep.subr.mxu0 0.0
    %v4557 = vand.u32 %v190, 4294901760
    %4558 = vmatpush1.msra.mxu0 %v4557
    %4559 = vmatprep.subr.mxu0 0.0
    %v4560 = vand.u32 %v189, 4294901760
    %4561 = vmatpush1.msra.mxu0 %v4560
    %4562 = vmatprep.subr.mxu0 0.0
    %v4563 = vand.u32 %v188, 4294901760
    %4564 = vmatpush1.msra.mxu0 %v4563
    %4565 = vmatprep.subr.mxu0 0.0
    %v4566 = vand.u32 %v187, 4294901760
    %4567 = vmatpush1.msra.mxu0 %v4566
    %4568 = vmatprep.subr.mxu0 0.0
    %v4569 = vand.u32 %v186, 4294901760
    %4570 = vmatpush1.msra.mxu0 %v4569
    %4571 = vmatprep.subr.mxu0 0.0
    %v4572 = vand.u32 %v185, 4294901760
    %4573 = vmatpush1.msra.mxu0 %v4572
    %4574 = vmatprep.subr.mxu0 0.0
    %v4575 = vand.u32 %v216, 4294901760
    %4576 = vmatpush2.msra.mxu0 %v4575
    %4577 = vmatprep.subr.mxu0 0.0
    %v4578 = vand.u32 %v215, 4294901760
    %4579 = vmatpush2.msra.mxu0 %v4578
    %4580 = vmatprep.subr.mxu0 0.0
    %v4581 = vand.u32 %v214, 4294901760
    %4582 = vmatpush2.msra.mxu0 %v4581
    %4583 = vmatprep.subr.mxu0 0.0
    %v4584 = vand.u32 %v213, 4294901760
    %4585 = vmatpush2.msra.mxu0 %v4584
    %4586 = vmatprep.subr.mxu0 0.0
    %v4587 = vand.u32 %v212, 4294901760
    %4588 = vmatpush2.msra.mxu0 %v4587
    %4589 = vmatprep.subr.mxu0 0.0
    %v4590 = vand.u32 %v211, 4294901760
    %4591 = vmatpush2.msra.mxu0 %v4590
    %4592 = vmatprep.subr.mxu0 0.0
    %v4593 = vand.u32 %v210, 4294901760
    %4594 = vmatpush2.msra.mxu0 %v4593
    %4595 = vmatprep.subr.mxu0 0.0
    %v4596 = vand.u32 %v209, 4294901760
    %4597 = vmatpush2.msra.mxu0 %v4596
    %4598 = vmatprep.subr.mxu0 0.0
    %v4599 = vand.u32 %v208, 4294901760
    %4600 = vmatpush2.msra.mxu0 %v4599
    %4601 = vmatprep.subr.mxu0 0.0
    %v4602 = vand.u32 %v207, 4294901760
    %4603 = vmatpush2.msra.mxu0 %v4602
    %4604 = vmatprep.subr.mxu0 0.0
    %v4605 = vand.u32 %v206, 4294901760
    %4606 = vmatpush2.msra.mxu0 %v4605
    %4607 = vmatprep.subr.mxu0 0.0
    %v4608 = vand.u32 %v205, 4294901760
    %4609 = vmatpush2.msra.mxu0 %v4608
    %4610 = vmatprep.subr.mxu0 0.0
    %v4611 = vand.u32 %v204, 4294901760
    %4612 = vmatpush2.msra.mxu0 %v4611
    %4613 = vmatprep.subr.mxu0 0.0
    %v4614 = vand.u32 %v203, 4294901760
    %4615 = vmatpush2.msra.mxu0 %v4614
    %4616 = vmatprep.subr.mxu0 0.0
    %v4617 = vand.u32 %v202, 4294901760
    %4618 = vmatpush2.msra.mxu0 %v4617
    %4619 = vmatprep.subr.mxu0 0.0
    %v4620 = vand.u32 %v201, 4294901760
    %4621 = vmatpush2.msra.mxu0 %v4620
    %v4622 = vand.u32 %v50, 4294901760
    %4623 = vmatprep.mubr.f32.mxu0 %v4622
    %v4624 = vand.u32 %v49, 4294901760
    %4625 = vmatmul.mubr.f32.gmra.mxu0 %v4624
    %v4626 = vpop.f32.mrf.mxu0
    %v4627 = vadd.f32 %v4523, %v4626
    %v4628 = vpop.f32.mrf.mxu0
    %4629 = vdwg.mxu0
    %4630 = vmatprep.subr.mxu0 0.0
    %v4631 = vand.u32 %v232, 4294901760
    %4632 = vmatpush1.msra.mxu0 %v4631
    %4633 = vmatprep.subr.mxu0 0.0
    %v4634 = vand.u32 %v231, 4294901760
    %4635 = vmatpush1.msra.mxu0 %v4634
    %4636 = vmatprep.subr.mxu0 0.0
    %v4637 = vand.u32 %v230, 4294901760
    %4638 = vmatpush1.msra.mxu0 %v4637
    %4639 = vmatprep.subr.mxu0 0.0
    %v4640 = vand.u32 %v229, 4294901760
    %4641 = vmatpush1.msra.mxu0 %v4640
    %4642 = vmatprep.subr.mxu0 0.0
    %v4643 = vand.u32 %v228, 4294901760
    %4644 = vmatpush1.msra.mxu0 %v4643
    %4645 = vmatprep.subr.mxu0 0.0
    %v4646 = vand.u32 %v227, 4294901760
    %4647 = vmatpush1.msra.mxu0 %v4646
    %4648 = vmatprep.subr.mxu0 0.0
    %v4649 = vand.u32 %v226, 4294901760
    %4650 = vmatpush1.msra.mxu0 %v4649
    %4651 = vmatprep.subr.mxu0 0.0
    %v4652 = vand.u32 %v225, 4294901760
    %4653 = vmatpush1.msra.mxu0 %v4652
    %4654 = vmatprep.subr.mxu0 0.0
    %v4655 = vand.u32 %v224, 4294901760
    %4656 = vmatpush1.msra.mxu0 %v4655
    %4657 = vmatprep.subr.mxu0 0.0
    %v4658 = vand.u32 %v223, 4294901760
    %4659 = vmatpush1.msra.mxu0 %v4658
    %4660 = vmatprep.subr.mxu0 0.0
    %v4661 = vand.u32 %v222, 4294901760
    %4662 = vmatpush1.msra.mxu0 %v4661
    %4663 = vmatprep.subr.mxu0 0.0
    %v4664 = vand.u32 %v221, 4294901760
    %4665 = vmatpush1.msra.mxu0 %v4664
    %4666 = vmatprep.subr.mxu0 0.0
    %v4667 = vand.u32 %v220, 4294901760
    %4668 = vmatpush1.msra.mxu0 %v4667
    %4669 = vmatprep.subr.mxu0 0.0
    %v4670 = vand.u32 %v219, 4294901760
    %4671 = vmatpush1.msra.mxu0 %v4670
    %4672 = vmatprep.subr.mxu0 0.0
    %v4673 = vand.u32 %v218, 4294901760
    %4674 = vmatpush1.msra.mxu0 %v4673
    %4675 = vmatprep.subr.mxu0 0.0
    %v4676 = vand.u32 %v217, 4294901760
    %4677 = vmatpush1.msra.mxu0 %v4676
    %4678 = vmatprep.subr.mxu0 0.0
    %v4679 = vand.u32 %v248, 4294901760
    %4680 = vmatpush2.msra.mxu0 %v4679
    %4681 = vmatprep.subr.mxu0 0.0
    %v4682 = vand.u32 %v247, 4294901760
    %4683 = vmatpush2.msra.mxu0 %v4682
    %4684 = vmatprep.subr.mxu0 0.0
    %v4685 = vand.u32 %v246, 4294901760
    %4686 = vmatpush2.msra.mxu0 %v4685
    %4687 = vmatprep.subr.mxu0 0.0
    %v4688 = vand.u32 %v245, 4294901760
    %4689 = vmatpush2.msra.mxu0 %v4688
    %4690 = vmatprep.subr.mxu0 0.0
    %v4691 = vand.u32 %v244, 4294901760
    %4692 = vmatpush2.msra.mxu0 %v4691
    %4693 = vmatprep.subr.mxu0 0.0
    %v4694 = vand.u32 %v243, 4294901760
    %4695 = vmatpush2.msra.mxu0 %v4694
    %4696 = vmatprep.subr.mxu0 0.0
    %v4697 = vand.u32 %v242, 4294901760
    %4698 = vmatpush2.msra.mxu0 %v4697
    %4699 = vmatprep.subr.mxu0 0.0
    %v4700 = vand.u32 %v241, 4294901760
    %4701 = vmatpush2.msra.mxu0 %v4700
    %4702 = vmatprep.subr.mxu0 0.0
    %v4703 = vand.u32 %v240, 4294901760
    %4704 = vmatpush2.msra.mxu0 %v4703
    %4705 = vmatprep.subr.mxu0 0.0
    %v4706 = vand.u32 %v239, 4294901760
    %4707 = vmatpush2.msra.mxu0 %v4706
    %4708 = vmatprep.subr.mxu0 0.0
    %v4709 = vand.u32 %v238, 4294901760
    %4710 = vmatpush2.msra.mxu0 %v4709
    %4711 = vmatprep.subr.mxu0 0.0
    %v4712 = vand.u32 %v237, 4294901760
    %4713 = vmatpush2.msra.mxu0 %v4712
    %4714 = vmatprep.subr.mxu0 0.0
    %v4715 = vand.u32 %v236, 4294901760
    %4716 = vmatpush2.msra.mxu0 %v4715
    %4717 = vmatprep.subr.mxu0 0.0
    %v4718 = vand.u32 %v235, 4294901760
    %4719 = vmatpush2.msra.mxu0 %v4718
    %4720 = vmatprep.subr.mxu0 0.0
    %v4721 = vand.u32 %v234, 4294901760
    %4722 = vmatpush2.msra.mxu0 %v4721
    %4723 = vmatprep.subr.mxu0 0.0
    %v4724 = vand.u32 %v233, 4294901760
    %4725 = vmatpush2.msra.mxu0 %v4724
    %v4726 = vand.u32 %v52, 4294901760
    %v4727 = vsub.f32 %v52, %v4726
    %v4728 = vand.u32 %v4727, 4294901760
    %v4729 = vsub.f32 %v4727, %v4728
    %v4730 = vand.u32 %v4729, 4294901760
    %4731 = vmatprep.mubr.f32.mxu0 %v4730
    %v4732 = vand.u32 %v51, 4294901760
    %v4733 = vsub.f32 %v51, %v4732
    %v4734 = vand.u32 %v4733, 4294901760
    %v4735 = vsub.f32 %v4733, %v4734
    %v4736 = vand.u32 %v4735, 4294901760
    %4737 = vmatmul.mubr.f32.gmra.mxu0 %v4736
    %v4738 = vpop.f32.mrf.mxu0
    %v4739 = vadd.f32 %v4627, %v4738
    %v4740 = vpop.f32.mrf.mxu0
    %4741 = vdwg.mxu0
    %4742 = vmatprep.subr.mxu0 0.0
    %v4743 = vand.u32 %v232, 4294901760
    %v4744 = vsub.f32 %v232, %v4743
    %v4745 = vand.u32 %v4744, 4294901760
    %v4746 = vsub.f32 %v4744, %v4745
    %v4747 = vand.u32 %v4746, 4294901760
    %4748 = vmatpush1.msra.mxu0 %v4747
    %4749 = vmatprep.subr.mxu0 0.0
    %v4750 = vand.u32 %v231, 4294901760
    %v4751 = vsub.f32 %v231, %v4750
    %v4752 = vand.u32 %v4751, 4294901760
    %v4753 = vsub.f32 %v4751, %v4752
    %v4754 = vand.u32 %v4753, 4294901760
    %4755 = vmatpush1.msra.mxu0 %v4754
    %4756 = vmatprep.subr.mxu0 0.0
    %v4757 = vand.u32 %v230, 4294901760
    %v4758 = vsub.f32 %v230, %v4757
    %v4759 = vand.u32 %v4758, 4294901760
    %v4760 = vsub.f32 %v4758, %v4759
    %v4761 = vand.u32 %v4760, 4294901760
    %4762 = vmatpush1.msra.mxu0 %v4761
    %4763 = vmatprep.subr.mxu0 0.0
    %v4764 = vand.u32 %v229, 4294901760
    %v4765 = vsub.f32 %v229, %v4764
    %v4766 = vand.u32 %v4765, 4294901760
    %v4767 = vsub.f32 %v4765, %v4766
    %v4768 = vand.u32 %v4767, 4294901760
    %4769 = vmatpush1.msra.mxu0 %v4768
    %4770 = vmatprep.subr.mxu0 0.0
    %v4771 = vand.u32 %v228, 4294901760
    %v4772 = vsub.f32 %v228, %v4771
    %v4773 = vand.u32 %v4772, 4294901760
    %v4774 = vsub.f32 %v4772, %v4773
    %v4775 = vand.u32 %v4774, 4294901760
    %4776 = vmatpush1.msra.mxu0 %v4775
    %4777 = vmatprep.subr.mxu0 0.0
    %v4778 = vand.u32 %v227, 4294901760
    %v4779 = vsub.f32 %v227, %v4778
    %v4780 = vand.u32 %v4779, 4294901760
    %v4781 = vsub.f32 %v4779, %v4780
    %v4782 = vand.u32 %v4781, 4294901760
    %4783 = vmatpush1.msra.mxu0 %v4782
    %4784 = vmatprep.subr.mxu0 0.0
    %v4785 = vand.u32 %v226, 4294901760
    %v4786 = vsub.f32 %v226, %v4785
    %v4787 = vand.u32 %v4786, 4294901760
    %v4788 = vsub.f32 %v4786, %v4787
    %v4789 = vand.u32 %v4788, 4294901760
    %4790 = vmatpush1.msra.mxu0 %v4789
    %4791 = vmatprep.subr.mxu0 0.0
    %v4792 = vand.u32 %v225, 4294901760
    %v4793 = vsub.f32 %v225, %v4792
    %v4794 = vand.u32 %v4793, 4294901760
    %v4795 = vsub.f32 %v4793, %v4794
    %v4796 = vand.u32 %v4795, 4294901760
    %4797 = vmatpush1.msra.mxu0 %v4796
    %4798 = vmatprep.subr.mxu0 0.0
    %v4799 = vand.u32 %v224, 4294901760
    %v4800 = vsub.f32 %v224, %v4799
    %v4801 = vand.u32 %v4800, 4294901760
    %v4802 = vsub.f32 %v4800, %v4801
    %v4803 = vand.u32 %v4802, 4294901760
    %4804 = vmatpush1.msra.mxu0 %v4803
    %4805 = vmatprep.subr.mxu0 0.0
    %v4806 = vand.u32 %v223, 4294901760
    %v4807 = vsub.f32 %v223, %v4806
    %v4808 = vand.u32 %v4807, 4294901760
    %v4809 = vsub.f32 %v4807, %v4808
    %v4810 = vand.u32 %v4809, 4294901760
    %4811 = vmatpush1.msra.mxu0 %v4810
    %4812 = vmatprep.subr.mxu0 0.0
    %v4813 = vand.u32 %v222, 4294901760
    %v4814 = vsub.f32 %v222, %v4813
    %v4815 = vand.u32 %v4814, 4294901760
    %v4816 = vsub.f32 %v4814, %v4815
    %v4817 = vand.u32 %v4816, 4294901760
    %4818 = vmatpush1.msra.mxu0 %v4817
    %4819 = vmatprep.subr.mxu0 0.0
    %v4820 = vand.u32 %v221, 4294901760
    %v4821 = vsub.f32 %v221, %v4820
    %v4822 = vand.u32 %v4821, 4294901760
    %v4823 = vsub.f32 %v4821, %v4822
    %v4824 = vand.u32 %v4823, 4294901760
    %4825 = vmatpush1.msra.mxu0 %v4824
    %4826 = vmatprep.subr.mxu0 0.0
    %v4827 = vand.u32 %v220, 4294901760
    %v4828 = vsub.f32 %v220, %v4827
    %v4829 = vand.u32 %v4828, 4294901760
    %v4830 = vsub.f32 %v4828, %v4829
    %v4831 = vand.u32 %v4830, 4294901760
    %4832 = vmatpush1.msra.mxu0 %v4831
    %4833 = vmatprep.subr.mxu0 0.0
    %v4834 = vand.u32 %v219, 4294901760
    %v4835 = vsub.f32 %v219, %v4834
    %v4836 = vand.u32 %v4835, 4294901760
    %v4837 = vsub.f32 %v4835, %v4836
    %v4838 = vand.u32 %v4837, 4294901760
    %4839 = vmatpush1.msra.mxu0 %v4838
    %4840 = vmatprep.subr.mxu0 0.0
    %v4841 = vand.u32 %v218, 4294901760
    %v4842 = vsub.f32 %v218, %v4841
    %v4843 = vand.u32 %v4842, 4294901760
    %v4844 = vsub.f32 %v4842, %v4843
    %v4845 = vand.u32 %v4844, 4294901760
    %4846 = vmatpush1.msra.mxu0 %v4845
    %4847 = vmatprep.subr.mxu0 0.0
    %v4848 = vand.u32 %v217, 4294901760
    %v4849 = vsub.f32 %v217, %v4848
    %v4850 = vand.u32 %v4849, 4294901760
    %v4851 = vsub.f32 %v4849, %v4850
    %v4852 = vand.u32 %v4851, 4294901760
    %4853 = vmatpush1.msra.mxu0 %v4852
    %4854 = vmatprep.subr.mxu0 0.0
    %v4855 = vand.u32 %v248, 4294901760
    %v4856 = vsub.f32 %v248, %v4855
    %v4857 = vand.u32 %v4856, 4294901760
    %v4858 = vsub.f32 %v4856, %v4857
    %v4859 = vand.u32 %v4858, 4294901760
    %4860 = vmatpush2.msra.mxu0 %v4859
    %4861 = vmatprep.subr.mxu0 0.0
    %v4862 = vand.u32 %v247, 4294901760
    %v4863 = vsub.f32 %v247, %v4862
    %v4864 = vand.u32 %v4863, 4294901760
    %v4865 = vsub.f32 %v4863, %v4864
    %v4866 = vand.u32 %v4865, 4294901760
    %4867 = vmatpush2.msra.mxu0 %v4866
    %4868 = vmatprep.subr.mxu0 0.0
    %v4869 = vand.u32 %v246, 4294901760
    %v4870 = vsub.f32 %v246, %v4869
    %v4871 = vand.u32 %v4870, 4294901760
    %v4872 = vsub.f32 %v4870, %v4871
    %v4873 = vand.u32 %v4872, 4294901760
    %4874 = vmatpush2.msra.mxu0 %v4873
    %4875 = vmatprep.subr.mxu0 0.0
    %v4876 = vand.u32 %v245, 4294901760
    %v4877 = vsub.f32 %v245, %v4876
    %v4878 = vand.u32 %v4877, 4294901760
    %v4879 = vsub.f32 %v4877, %v4878
    %v4880 = vand.u32 %v4879, 4294901760
    %4881 = vmatpush2.msra.mxu0 %v4880
    %4882 = vmatprep.subr.mxu0 0.0
    %v4883 = vand.u32 %v244, 4294901760
    %v4884 = vsub.f32 %v244, %v4883
    %v4885 = vand.u32 %v4884, 4294901760
    %v4886 = vsub.f32 %v4884, %v4885
    %v4887 = vand.u32 %v4886, 4294901760
    %4888 = vmatpush2.msra.mxu0 %v4887
    %4889 = vmatprep.subr.mxu0 0.0
    %v4890 = vand.u32 %v243, 4294901760
    %v4891 = vsub.f32 %v243, %v4890
    %v4892 = vand.u32 %v4891, 4294901760
    %v4893 = vsub.f32 %v4891, %v4892
    %v4894 = vand.u32 %v4893, 4294901760
    %4895 = vmatpush2.msra.mxu0 %v4894
    %4896 = vmatprep.subr.mxu0 0.0
    %v4897 = vand.u32 %v242, 4294901760
    %v4898 = vsub.f32 %v242, %v4897
    %v4899 = vand.u32 %v4898, 4294901760
    %v4900 = vsub.f32 %v4898, %v4899
    %v4901 = vand.u32 %v4900, 4294901760
    %4902 = vmatpush2.msra.mxu0 %v4901
    %4903 = vmatprep.subr.mxu0 0.0
    %v4904 = vand.u32 %v241, 4294901760
    %v4905 = vsub.f32 %v241, %v4904
    %v4906 = vand.u32 %v4905, 4294901760
    %v4907 = vsub.f32 %v4905, %v4906
    %v4908 = vand.u32 %v4907, 4294901760
    %4909 = vmatpush2.msra.mxu0 %v4908
    %4910 = vmatprep.subr.mxu0 0.0
    %v4911 = vand.u32 %v240, 4294901760
    %v4912 = vsub.f32 %v240, %v4911
    %v4913 = vand.u32 %v4912, 4294901760
    %v4914 = vsub.f32 %v4912, %v4913
    %v4915 = vand.u32 %v4914, 4294901760
    %4916 = vmatpush2.msra.mxu0 %v4915
    %4917 = vmatprep.subr.mxu0 0.0
    %v4918 = vand.u32 %v239, 4294901760
    %v4919 = vsub.f32 %v239, %v4918
    %v4920 = vand.u32 %v4919, 4294901760
    %v4921 = vsub.f32 %v4919, %v4920
    %v4922 = vand.u32 %v4921, 4294901760
    %4923 = vmatpush2.msra.mxu0 %v4922
    %4924 = vmatprep.subr.mxu0 0.0
    %v4925 = vand.u32 %v238, 4294901760
    %v4926 = vsub.f32 %v238, %v4925
    %v4927 = vand.u32 %v4926, 4294901760
    %v4928 = vsub.f32 %v4926, %v4927
    %v4929 = vand.u32 %v4928, 4294901760
    %4930 = vmatpush2.msra.mxu0 %v4929
    %4931 = vmatprep.subr.mxu0 0.0
    %v4932 = vand.u32 %v237, 4294901760
    %v4933 = vsub.f32 %v237, %v4932
    %v4934 = vand.u32 %v4933, 4294901760
    %v4935 = vsub.f32 %v4933, %v4934
    %v4936 = vand.u32 %v4935, 4294901760
    %4937 = vmatpush2.msra.mxu0 %v4936
    %4938 = vmatprep.subr.mxu0 0.0
    %v4939 = vand.u32 %v236, 4294901760
    %v4940 = vsub.f32 %v236, %v4939
    %v4941 = vand.u32 %v4940, 4294901760
    %v4942 = vsub.f32 %v4940, %v4941
    %v4943 = vand.u32 %v4942, 4294901760
    %4944 = vmatpush2.msra.mxu0 %v4943
    %4945 = vmatprep.subr.mxu0 0.0
    %v4946 = vand.u32 %v235, 4294901760
    %v4947 = vsub.f32 %v235, %v4946
    %v4948 = vand.u32 %v4947, 4294901760
    %v4949 = vsub.f32 %v4947, %v4948
    %v4950 = vand.u32 %v4949, 4294901760
    %4951 = vmatpush2.msra.mxu0 %v4950
    %4952 = vmatprep.subr.mxu0 0.0
    %v4953 = vand.u32 %v234, 4294901760
    %v4954 = vsub.f32 %v234, %v4953
    %v4955 = vand.u32 %v4954, 4294901760
    %v4956 = vsub.f32 %v4954, %v4955
    %v4957 = vand.u32 %v4956, 4294901760
    %4958 = vmatpush2.msra.mxu0 %v4957
    %4959 = vmatprep.subr.mxu0 0.0
    %v4960 = vand.u32 %v233, 4294901760
    %v4961 = vsub.f32 %v233, %v4960
    %v4962 = vand.u32 %v4961, 4294901760
    %v4963 = vsub.f32 %v4961, %v4962
    %v4964 = vand.u32 %v4963, 4294901760
    %4965 = vmatpush2.msra.mxu0 %v4964
    %v4966 = vand.u32 %v52, 4294901760
    %4967 = vmatprep.mubr.f32.mxu0 %v4966
    %v4968 = vand.u32 %v51, 4294901760
    %4969 = vmatmul.mubr.f32.gmra.mxu0 %v4968
    %v4970 = vpop.f32.mrf.mxu0
    %v4971 = vadd.f32 %v4739, %v4970
    %v4972 = vpop.f32.mrf.mxu0
    %4973 = vdwg.mxu0
    %4974 = vmatprep.subr.mxu0 0.0
    %v4975 = vand.u32 %v232, 4294901760
    %v4976 = vsub.f32 %v232, %v4975
    %4977 = vmatpush1.msra.mxu0 %v4976
    %4978 = vmatprep.subr.mxu0 0.0
    %v4979 = vand.u32 %v231, 4294901760
    %v4980 = vsub.f32 %v231, %v4979
    %4981 = vmatpush1.msra.mxu0 %v4980
    %4982 = vmatprep.subr.mxu0 0.0
    %v4983 = vand.u32 %v230, 4294901760
    %v4984 = vsub.f32 %v230, %v4983
    %4985 = vmatpush1.msra.mxu0 %v4984
    %4986 = vmatprep.subr.mxu0 0.0
    %v4987 = vand.u32 %v229, 4294901760
    %v4988 = vsub.f32 %v229, %v4987
    %4989 = vmatpush1.msra.mxu0 %v4988
    %4990 = vmatprep.subr.mxu0 0.0
    %v4991 = vand.u32 %v228, 4294901760
    %v4992 = vsub.f32 %v228, %v4991
    %4993 = vmatpush1.msra.mxu0 %v4992
    %4994 = vmatprep.subr.mxu0 0.0
    %v4995 = vand.u32 %v227, 4294901760
    %v4996 = vsub.f32 %v227, %v4995
    %4997 = vmatpush1.msra.mxu0 %v4996
    %4998 = vmatprep.subr.mxu0 0.0
    %v4999 = vand.u32 %v226, 4294901760
    %v5000 = vsub.f32 %v226, %v4999
    %5001 = vmatpush1.msra.mxu0 %v5000
    %5002 = vmatprep.subr.mxu0 0.0
    %v5003 = vand.u32 %v225, 4294901760
    %v5004 = vsub.f32 %v225, %v5003
    %5005 = vmatpush1.msra.mxu0 %v5004
    %5006 = vmatprep.subr.mxu0 0.0
    %v5007 = vand.u32 %v224, 4294901760
    %v5008 = vsub.f32 %v224, %v5007
    %5009 = vmatpush1.msra.mxu0 %v5008
    %5010 = vmatprep.subr.mxu0 0.0
    %v5011 = vand.u32 %v223, 4294901760
    %v5012 = vsub.f32 %v223, %v5011
    %5013 = vmatpush1.msra.mxu0 %v5012
    %5014 = vmatprep.subr.mxu0 0.0
    %v5015 = vand.u32 %v222, 4294901760
    %v5016 = vsub.f32 %v222, %v5015
    %5017 = vmatpush1.msra.mxu0 %v5016
    %5018 = vmatprep.subr.mxu0 0.0
    %v5019 = vand.u32 %v221, 4294901760
    %v5020 = vsub.f32 %v221, %v5019
    %5021 = vmatpush1.msra.mxu0 %v5020
    %5022 = vmatprep.subr.mxu0 0.0
    %v5023 = vand.u32 %v220, 4294901760
    %v5024 = vsub.f32 %v220, %v5023
    %5025 = vmatpush1.msra.mxu0 %v5024
    %5026 = vmatprep.subr.mxu0 0.0
    %v5027 = vand.u32 %v219, 4294901760
    %v5028 = vsub.f32 %v219, %v5027
    %5029 = vmatpush1.msra.mxu0 %v5028
    %5030 = vmatprep.subr.mxu0 0.0
    %v5031 = vand.u32 %v218, 4294901760
    %v5032 = vsub.f32 %v218, %v5031
    %5033 = vmatpush1.msra.mxu0 %v5032
    %5034 = vmatprep.subr.mxu0 0.0
    %v5035 = vand.u32 %v217, 4294901760
    %v5036 = vsub.f32 %v217, %v5035
    %5037 = vmatpush1.msra.mxu0 %v5036
    %5038 = vmatprep.subr.mxu0 0.0
    %v5039 = vand.u32 %v248, 4294901760
    %v5040 = vsub.f32 %v248, %v5039
    %5041 = vmatpush2.msra.mxu0 %v5040
    %5042 = vmatprep.subr.mxu0 0.0
    %v5043 = vand.u32 %v247, 4294901760
    %v5044 = vsub.f32 %v247, %v5043
    %5045 = vmatpush2.msra.mxu0 %v5044
    %5046 = vmatprep.subr.mxu0 0.0
    %v5047 = vand.u32 %v246, 4294901760
    %v5048 = vsub.f32 %v246, %v5047
    %5049 = vmatpush2.msra.mxu0 %v5048
    %5050 = vmatprep.subr.mxu0 0.0
    %v5051 = vand.u32 %v245, 4294901760
    %v5052 = vsub.f32 %v245, %v5051
    %5053 = vmatpush2.msra.mxu0 %v5052
    %5054 = vmatprep.subr.mxu0 0.0
    %v5055 = vand.u32 %v244, 4294901760
    %v5056 = vsub.f32 %v244, %v5055
    %5057 = vmatpush2.msra.mxu0 %v5056
    %5058 = vmatprep.subr.mxu0 0.0
    %v5059 = vand.u32 %v243, 4294901760
    %v5060 = vsub.f32 %v243, %v5059
    %5061 = vmatpush2.msra.mxu0 %v5060
    %5062 = vmatprep.subr.mxu0 0.0
    %v5063 = vand.u32 %v242, 4294901760
    %v5064 = vsub.f32 %v242, %v5063
    %5065 = vmatpush2.msra.mxu0 %v5064
    %5066 = vmatprep.subr.mxu0 0.0
    %v5067 = vand.u32 %v241, 4294901760
    %v5068 = vsub.f32 %v241, %v5067
    %5069 = vmatpush2.msra.mxu0 %v5068
    %5070 = vmatprep.subr.mxu0 0.0
    %v5071 = vand.u32 %v240, 4294901760
    %v5072 = vsub.f32 %v240, %v5071
    %5073 = vmatpush2.msra.mxu0 %v5072
    %5074 = vmatprep.subr.mxu0 0.0
    %v5075 = vand.u32 %v239, 4294901760
    %v5076 = vsub.f32 %v239, %v5075
    %5077 = vmatpush2.msra.mxu0 %v5076
    %5078 = vmatprep.subr.mxu0 0.0
    %v5079 = vand.u32 %v238, 4294901760
    %v5080 = vsub.f32 %v238, %v5079
    %5081 = vmatpush2.msra.mxu0 %v5080
    %5082 = vmatprep.subr.mxu0 0.0
    %v5083 = vand.u32 %v237, 4294901760
    %v5084 = vsub.f32 %v237, %v5083
    %5085 = vmatpush2.msra.mxu0 %v5084
    %5086 = vmatprep.subr.mxu0 0.0
    %v5087 = vand.u32 %v236, 4294901760
    %v5088 = vsub.f32 %v236, %v5087
    %5089 = vmatpush2.msra.mxu0 %v5088
    %5090 = vmatprep.subr.mxu0 0.0
    %v5091 = vand.u32 %v235, 4294901760
    %v5092 = vsub.f32 %v235, %v5091
    %5093 = vmatpush2.msra.mxu0 %v5092
    %5094 = vmatprep.subr.mxu0 0.0
    %v5095 = vand.u32 %v234, 4294901760
    %v5096 = vsub.f32 %v234, %v5095
    %5097 = vmatpush2.msra.mxu0 %v5096
    %5098 = vmatprep.subr.mxu0 0.0
    %v5099 = vand.u32 %v233, 4294901760
    %v5100 = vsub.f32 %v233, %v5099
    %5101 = vmatpush2.msra.mxu0 %v5100
    %v5102 = vand.u32 %v52, 4294901760
    %v5103 = vsub.f32 %v52, %v5102
    %5104 = vmatprep.mubr.f32.mxu0 %v5103
    %v5105 = vand.u32 %v51, 4294901760
    %v5106 = vsub.f32 %v51, %v5105
    %5107 = vmatmul.mubr.f32.gmra.mxu0 %v5106
    %v5108 = vpop.f32.mrf.mxu0
    %v5109 = vadd.f32 %v4971, %v5108
    %v5110 = vpop.f32.mrf.mxu0
    %5111 = vdwg.mxu0
    %5112 = vmatprep.subr.mxu0 0.0
    %v5113 = vand.u32 %v232, 4294901760
    %5114 = vmatpush1.msra.mxu0 %v5113
    %5115 = vmatprep.subr.mxu0 0.0
    %v5116 = vand.u32 %v231, 4294901760
    %5117 = vmatpush1.msra.mxu0 %v5116
    %5118 = vmatprep.subr.mxu0 0.0
    %v5119 = vand.u32 %v230, 4294901760
    %5120 = vmatpush1.msra.mxu0 %v5119
    %5121 = vmatprep.subr.mxu0 0.0
    %v5122 = vand.u32 %v229, 4294901760
    %5123 = vmatpush1.msra.mxu0 %v5122
    %5124 = vmatprep.subr.mxu0 0.0
    %v5125 = vand.u32 %v228, 4294901760
    %5126 = vmatpush1.msra.mxu0 %v5125
    %5127 = vmatprep.subr.mxu0 0.0
    %v5128 = vand.u32 %v227, 4294901760
    %5129 = vmatpush1.msra.mxu0 %v5128
    %5130 = vmatprep.subr.mxu0 0.0
    %v5131 = vand.u32 %v226, 4294901760
    %5132 = vmatpush1.msra.mxu0 %v5131
    %5133 = vmatprep.subr.mxu0 0.0
    %v5134 = vand.u32 %v225, 4294901760
    %5135 = vmatpush1.msra.mxu0 %v5134
    %5136 = vmatprep.subr.mxu0 0.0
    %v5137 = vand.u32 %v224, 4294901760
    %5138 = vmatpush1.msra.mxu0 %v5137
    %5139 = vmatprep.subr.mxu0 0.0
    %v5140 = vand.u32 %v223, 4294901760
    %5141 = vmatpush1.msra.mxu0 %v5140
    %5142 = vmatprep.subr.mxu0 0.0
    %v5143 = vand.u32 %v222, 4294901760
    %5144 = vmatpush1.msra.mxu0 %v5143
    %5145 = vmatprep.subr.mxu0 0.0
    %v5146 = vand.u32 %v221, 4294901760
    %5147 = vmatpush1.msra.mxu0 %v5146
    %5148 = vmatprep.subr.mxu0 0.0
    %v5149 = vand.u32 %v220, 4294901760
    %5150 = vmatpush1.msra.mxu0 %v5149
    %5151 = vmatprep.subr.mxu0 0.0
    %v5152 = vand.u32 %v219, 4294901760
    %5153 = vmatpush1.msra.mxu0 %v5152
    %5154 = vmatprep.subr.mxu0 0.0
    %v5155 = vand.u32 %v218, 4294901760
    %5156 = vmatpush1.msra.mxu0 %v5155
    %5157 = vmatprep.subr.mxu0 0.0
    %v5158 = vand.u32 %v217, 4294901760
    %5159 = vmatpush1.msra.mxu0 %v5158
    %5160 = vmatprep.subr.mxu0 0.0
    %v5161 = vand.u32 %v248, 4294901760
    %5162 = vmatpush2.msra.mxu0 %v5161
    %5163 = vmatprep.subr.mxu0 0.0
    %v5164 = vand.u32 %v247, 4294901760
    %5165 = vmatpush2.msra.mxu0 %v5164
    %5166 = vmatprep.subr.mxu0 0.0
    %v5167 = vand.u32 %v246, 4294901760
    %5168 = vmatpush2.msra.mxu0 %v5167
    %5169 = vmatprep.subr.mxu0 0.0
    %v5170 = vand.u32 %v245, 4294901760
    %5171 = vmatpush2.msra.mxu0 %v5170
    %5172 = vmatprep.subr.mxu0 0.0
    %v5173 = vand.u32 %v244, 4294901760
    %5174 = vmatpush2.msra.mxu0 %v5173
    %5175 = vmatprep.subr.mxu0 0.0
    %v5176 = vand.u32 %v243, 4294901760
    %5177 = vmatpush2.msra.mxu0 %v5176
    %5178 = vmatprep.subr.mxu0 0.0
    %v5179 = vand.u32 %v242, 4294901760
    %5180 = vmatpush2.msra.mxu0 %v5179
    %5181 = vmatprep.subr.mxu0 0.0
    %v5182 = vand.u32 %v241, 4294901760
    %5183 = vmatpush2.msra.mxu0 %v5182
    %5184 = vmatprep.subr.mxu0 0.0
    %v5185 = vand.u32 %v240, 4294901760
    %5186 = vmatpush2.msra.mxu0 %v5185
    %5187 = vmatprep.subr.mxu0 0.0
    %v5188 = vand.u32 %v239, 4294901760
    %5189 = vmatpush2.msra.mxu0 %v5188
    %5190 = vmatprep.subr.mxu0 0.0
    %v5191 = vand.u32 %v238, 4294901760
    %5192 = vmatpush2.msra.mxu0 %v5191
    %5193 = vmatprep.subr.mxu0 0.0
    %v5194 = vand.u32 %v237, 4294901760
    %5195 = vmatpush2.msra.mxu0 %v5194
    %5196 = vmatprep.subr.mxu0 0.0
    %v5197 = vand.u32 %v236, 4294901760
    %5198 = vmatpush2.msra.mxu0 %v5197
    %5199 = vmatprep.subr.mxu0 0.0
    %v5200 = vand.u32 %v235, 4294901760
    %5201 = vmatpush2.msra.mxu0 %v5200
    %5202 = vmatprep.subr.mxu0 0.0
    %v5203 = vand.u32 %v234, 4294901760
    %5204 = vmatpush2.msra.mxu0 %v5203
    %5205 = vmatprep.subr.mxu0 0.0
    %v5206 = vand.u32 %v233, 4294901760
    %5207 = vmatpush2.msra.mxu0 %v5206
    %v5208 = vand.u32 %v52, 4294901760
    %v5209 = vsub.f32 %v52, %v5208
    %v5210 = vand.u32 %v5209, 4294901760
    %5211 = vmatprep.mubr.f32.mxu0 %v5210
    %v5212 = vand.u32 %v51, 4294901760
    %v5213 = vsub.f32 %v51, %v5212
    %v5214 = vand.u32 %v5213, 4294901760
    %5215 = vmatmul.mubr.f32.gmra.mxu0 %v5214
    %v5216 = vpop.f32.mrf.mxu0
    %v5217 = vadd.f32 %v5109, %v5216
    %v5218 = vpop.f32.mrf.mxu0
    %5219 = vdwg.mxu0
    %5220 = vmatprep.subr.mxu0 0.0
    %v5221 = vand.u32 %v232, 4294901760
    %v5222 = vsub.f32 %v232, %v5221
    %v5223 = vand.u32 %v5222, 4294901760
    %5224 = vmatpush1.msra.mxu0 %v5223
    %5225 = vmatprep.subr.mxu0 0.0
    %v5226 = vand.u32 %v231, 4294901760
    %v5227 = vsub.f32 %v231, %v5226
    %v5228 = vand.u32 %v5227, 4294901760
    %5229 = vmatpush1.msra.mxu0 %v5228
    %5230 = vmatprep.subr.mxu0 0.0
    %v5231 = vand.u32 %v230, 4294901760
    %v5232 = vsub.f32 %v230, %v5231
    %v5233 = vand.u32 %v5232, 4294901760
    %5234 = vmatpush1.msra.mxu0 %v5233
    %5235 = vmatprep.subr.mxu0 0.0
    %v5236 = vand.u32 %v229, 4294901760
    %v5237 = vsub.f32 %v229, %v5236
    %v5238 = vand.u32 %v5237, 4294901760
    %5239 = vmatpush1.msra.mxu0 %v5238
    %5240 = vmatprep.subr.mxu0 0.0
    %v5241 = vand.u32 %v228, 4294901760
    %v5242 = vsub.f32 %v228, %v5241
    %v5243 = vand.u32 %v5242, 4294901760
    %5244 = vmatpush1.msra.mxu0 %v5243
    %5245 = vmatprep.subr.mxu0 0.0
    %v5246 = vand.u32 %v227, 4294901760
    %v5247 = vsub.f32 %v227, %v5246
    %v5248 = vand.u32 %v5247, 4294901760
    %5249 = vmatpush1.msra.mxu0 %v5248
    %5250 = vmatprep.subr.mxu0 0.0
    %v5251 = vand.u32 %v226, 4294901760
    %v5252 = vsub.f32 %v226, %v5251
    %v5253 = vand.u32 %v5252, 4294901760
    %5254 = vmatpush1.msra.mxu0 %v5253
    %5255 = vmatprep.subr.mxu0 0.0
    %v5256 = vand.u32 %v225, 4294901760
    %v5257 = vsub.f32 %v225, %v5256
    %v5258 = vand.u32 %v5257, 4294901760
    %5259 = vmatpush1.msra.mxu0 %v5258
    %5260 = vmatprep.subr.mxu0 0.0
    %v5261 = vand.u32 %v224, 4294901760
    %v5262 = vsub.f32 %v224, %v5261
    %v5263 = vand.u32 %v5262, 4294901760
    %5264 = vmatpush1.msra.mxu0 %v5263
    %5265 = vmatprep.subr.mxu0 0.0
    %v5266 = vand.u32 %v223, 4294901760
    %v5267 = vsub.f32 %v223, %v5266
    %v5268 = vand.u32 %v5267, 4294901760
    %5269 = vmatpush1.msra.mxu0 %v5268
    %5270 = vmatprep.subr.mxu0 0.0
    %v5271 = vand.u32 %v222, 4294901760
    %v5272 = vsub.f32 %v222, %v5271
    %v5273 = vand.u32 %v5272, 4294901760
    %5274 = vmatpush1.msra.mxu0 %v5273
    %5275 = vmatprep.subr.mxu0 0.0
    %v5276 = vand.u32 %v221, 4294901760
    %v5277 = vsub.f32 %v221, %v5276
    %v5278 = vand.u32 %v5277, 4294901760
    %5279 = vmatpush1.msra.mxu0 %v5278
    %5280 = vmatprep.subr.mxu0 0.0
    %v5281 = vand.u32 %v220, 4294901760
    %v5282 = vsub.f32 %v220, %v5281
    %v5283 = vand.u32 %v5282, 4294901760
    %5284 = vmatpush1.msra.mxu0 %v5283
    %5285 = vmatprep.subr.mxu0 0.0
    %v5286 = vand.u32 %v219, 4294901760
    %v5287 = vsub.f32 %v219, %v5286
    %v5288 = vand.u32 %v5287, 4294901760
    %5289 = vmatpush1.msra.mxu0 %v5288
    %5290 = vmatprep.subr.mxu0 0.0
    %v5291 = vand.u32 %v218, 4294901760
    %v5292 = vsub.f32 %v218, %v5291
    %v5293 = vand.u32 %v5292, 4294901760
    %5294 = vmatpush1.msra.mxu0 %v5293
    %5295 = vmatprep.subr.mxu0 0.0
    %v5296 = vand.u32 %v217, 4294901760
    %v5297 = vsub.f32 %v217, %v5296
    %v5298 = vand.u32 %v5297, 4294901760
    %5299 = vmatpush1.msra.mxu0 %v5298
    %5300 = vmatprep.subr.mxu0 0.0
    %v5301 = vand.u32 %v248, 4294901760
    %v5302 = vsub.f32 %v248, %v5301
    %v5303 = vand.u32 %v5302, 4294901760
    %5304 = vmatpush2.msra.mxu0 %v5303
    %5305 = vmatprep.subr.mxu0 0.0
    %v5306 = vand.u32 %v247, 4294901760
    %v5307 = vsub.f32 %v247, %v5306
    %v5308 = vand.u32 %v5307, 4294901760
    %5309 = vmatpush2.msra.mxu0 %v5308
    %5310 = vmatprep.subr.mxu0 0.0
    %v5311 = vand.u32 %v246, 4294901760
    %v5312 = vsub.f32 %v246, %v5311
    %v5313 = vand.u32 %v5312, 4294901760
    %5314 = vmatpush2.msra.mxu0 %v5313
    %5315 = vmatprep.subr.mxu0 0.0
    %v5316 = vand.u32 %v245, 4294901760
    %v5317 = vsub.f32 %v245, %v5316
    %v5318 = vand.u32 %v5317, 4294901760
    %5319 = vmatpush2.msra.mxu0 %v5318
    %5320 = vmatprep.subr.mxu0 0.0
    %v5321 = vand.u32 %v244, 4294901760
    %v5322 = vsub.f32 %v244, %v5321
    %v5323 = vand.u32 %v5322, 4294901760
    %5324 = vmatpush2.msra.mxu0 %v5323
    %5325 = vmatprep.subr.mxu0 0.0
    %v5326 = vand.u32 %v243, 4294901760
    %v5327 = vsub.f32 %v243, %v5326
    %v5328 = vand.u32 %v5327, 4294901760
    %5329 = vmatpush2.msra.mxu0 %v5328
    %5330 = vmatprep.subr.mxu0 0.0
    %v5331 = vand.u32 %v242, 4294901760
    %v5332 = vsub.f32 %v242, %v5331
    %v5333 = vand.u32 %v5332, 4294901760
    %5334 = vmatpush2.msra.mxu0 %v5333
    %5335 = vmatprep.subr.mxu0 0.0
    %v5336 = vand.u32 %v241, 4294901760
    %v5337 = vsub.f32 %v241, %v5336
    %v5338 = vand.u32 %v5337, 4294901760
    %5339 = vmatpush2.msra.mxu0 %v5338
    %5340 = vmatprep.subr.mxu0 0.0
    %v5341 = vand.u32 %v240, 4294901760
    %v5342 = vsub.f32 %v240, %v5341
    %v5343 = vand.u32 %v5342, 4294901760
    %5344 = vmatpush2.msra.mxu0 %v5343
    %5345 = vmatprep.subr.mxu0 0.0
    %v5346 = vand.u32 %v239, 4294901760
    %v5347 = vsub.f32 %v239, %v5346
    %v5348 = vand.u32 %v5347, 4294901760
    %5349 = vmatpush2.msra.mxu0 %v5348
    %5350 = vmatprep.subr.mxu0 0.0
    %v5351 = vand.u32 %v238, 4294901760
    %v5352 = vsub.f32 %v238, %v5351
    %v5353 = vand.u32 %v5352, 4294901760
    %5354 = vmatpush2.msra.mxu0 %v5353
    %5355 = vmatprep.subr.mxu0 0.0
    %v5356 = vand.u32 %v237, 4294901760
    %v5357 = vsub.f32 %v237, %v5356
    %v5358 = vand.u32 %v5357, 4294901760
    %5359 = vmatpush2.msra.mxu0 %v5358
    %5360 = vmatprep.subr.mxu0 0.0
    %v5361 = vand.u32 %v236, 4294901760
    %v5362 = vsub.f32 %v236, %v5361
    %v5363 = vand.u32 %v5362, 4294901760
    %5364 = vmatpush2.msra.mxu0 %v5363
    %5365 = vmatprep.subr.mxu0 0.0
    %v5366 = vand.u32 %v235, 4294901760
    %v5367 = vsub.f32 %v235, %v5366
    %v5368 = vand.u32 %v5367, 4294901760
    %5369 = vmatpush2.msra.mxu0 %v5368
    %5370 = vmatprep.subr.mxu0 0.0
    %v5371 = vand.u32 %v234, 4294901760
    %v5372 = vsub.f32 %v234, %v5371
    %v5373 = vand.u32 %v5372, 4294901760
    %5374 = vmatpush2.msra.mxu0 %v5373
    %5375 = vmatprep.subr.mxu0 0.0
    %v5376 = vand.u32 %v233, 4294901760
    %v5377 = vsub.f32 %v233, %v5376
    %v5378 = vand.u32 %v5377, 4294901760
    %5379 = vmatpush2.msra.mxu0 %v5378
    %v5380 = vand.u32 %v52, 4294901760
    %5381 = vmatprep.mubr.f32.mxu0 %v5380
    %v5382 = vand.u32 %v51, 4294901760
    %5383 = vmatmul.mubr.f32.gmra.mxu0 %v5382
    %v5384 = vpop.f32.mrf.mxu0
    %v5385 = vadd.f32 %v5217, %v5384
    %v5386 = vpop.f32.mrf.mxu0
    %5387 = vdwg.mxu0
    %5388 = vmatprep.subr.mxu0 0.0
    %v5389 = vand.u32 %v232, 4294901760
    %5390 = vmatpush1.msra.mxu0 %v5389
    %5391 = vmatprep.subr.mxu0 0.0
    %v5392 = vand.u32 %v231, 4294901760
    %5393 = vmatpush1.msra.mxu0 %v5392
    %5394 = vmatprep.subr.mxu0 0.0
    %v5395 = vand.u32 %v230, 4294901760
    %5396 = vmatpush1.msra.mxu0 %v5395
    %5397 = vmatprep.subr.mxu0 0.0
    %v5398 = vand.u32 %v229, 4294901760
    %5399 = vmatpush1.msra.mxu0 %v5398
    %5400 = vmatprep.subr.mxu0 0.0
    %v5401 = vand.u32 %v228, 4294901760
    %5402 = vmatpush1.msra.mxu0 %v5401
    %5403 = vmatprep.subr.mxu0 0.0
    %v5404 = vand.u32 %v227, 4294901760
    %5405 = vmatpush1.msra.mxu0 %v5404
    %5406 = vmatprep.subr.mxu0 0.0
    %v5407 = vand.u32 %v226, 4294901760
    %5408 = vmatpush1.msra.mxu0 %v5407
    %5409 = vmatprep.subr.mxu0 0.0
    %v5410 = vand.u32 %v225, 4294901760
    %5411 = vmatpush1.msra.mxu0 %v5410
    %5412 = vmatprep.subr.mxu0 0.0
    %v5413 = vand.u32 %v224, 4294901760
    %5414 = vmatpush1.msra.mxu0 %v5413
    %5415 = vmatprep.subr.mxu0 0.0
    %v5416 = vand.u32 %v223, 4294901760
    %5417 = vmatpush1.msra.mxu0 %v5416
    %5418 = vmatprep.subr.mxu0 0.0
    %v5419 = vand.u32 %v222, 4294901760
    %5420 = vmatpush1.msra.mxu0 %v5419
    %5421 = vmatprep.subr.mxu0 0.0
    %v5422 = vand.u32 %v221, 4294901760
    %5423 = vmatpush1.msra.mxu0 %v5422
    %5424 = vmatprep.subr.mxu0 0.0
    %v5425 = vand.u32 %v220, 4294901760
    %5426 = vmatpush1.msra.mxu0 %v5425
    %5427 = vmatprep.subr.mxu0 0.0
    %v5428 = vand.u32 %v219, 4294901760
    %5429 = vmatpush1.msra.mxu0 %v5428
    %5430 = vmatprep.subr.mxu0 0.0
    %v5431 = vand.u32 %v218, 4294901760
    %5432 = vmatpush1.msra.mxu0 %v5431
    %5433 = vmatprep.subr.mxu0 0.0
    %v5434 = vand.u32 %v217, 4294901760
    %5435 = vmatpush1.msra.mxu0 %v5434
    %5436 = vmatprep.subr.mxu0 0.0
    %v5437 = vand.u32 %v248, 4294901760
    %5438 = vmatpush2.msra.mxu0 %v5437
    %5439 = vmatprep.subr.mxu0 0.0
    %v5440 = vand.u32 %v247, 4294901760
    %5441 = vmatpush2.msra.mxu0 %v5440
    %5442 = vmatprep.subr.mxu0 0.0
    %v5443 = vand.u32 %v246, 4294901760
    %5444 = vmatpush2.msra.mxu0 %v5443
    %5445 = vmatprep.subr.mxu0 0.0
    %v5446 = vand.u32 %v245, 4294901760
    %5447 = vmatpush2.msra.mxu0 %v5446
    %5448 = vmatprep.subr.mxu0 0.0
    %v5449 = vand.u32 %v244, 4294901760
    %5450 = vmatpush2.msra.mxu0 %v5449
    %5451 = vmatprep.subr.mxu0 0.0
    %v5452 = vand.u32 %v243, 4294901760
    %5453 = vmatpush2.msra.mxu0 %v5452
    %5454 = vmatprep.subr.mxu0 0.0
    %v5455 = vand.u32 %v242, 4294901760
    %5456 = vmatpush2.msra.mxu0 %v5455
    %5457 = vmatprep.subr.mxu0 0.0
    %v5458 = vand.u32 %v241, 4294901760
    %5459 = vmatpush2.msra.mxu0 %v5458
    %5460 = vmatprep.subr.mxu0 0.0
    %v5461 = vand.u32 %v240, 4294901760
    %5462 = vmatpush2.msra.mxu0 %v5461
    %5463 = vmatprep.subr.mxu0 0.0
    %v5464 = vand.u32 %v239, 4294901760
    %5465 = vmatpush2.msra.mxu0 %v5464
    %5466 = vmatprep.subr.mxu0 0.0
    %v5467 = vand.u32 %v238, 4294901760
    %5468 = vmatpush2.msra.mxu0 %v5467
    %5469 = vmatprep.subr.mxu0 0.0
    %v5470 = vand.u32 %v237, 4294901760
    %5471 = vmatpush2.msra.mxu0 %v5470
    %5472 = vmatprep.subr.mxu0 0.0
    %v5473 = vand.u32 %v236, 4294901760
    %5474 = vmatpush2.msra.mxu0 %v5473
    %5475 = vmatprep.subr.mxu0 0.0
    %v5476 = vand.u32 %v235, 4294901760
    %5477 = vmatpush2.msra.mxu0 %v5476
    %5478 = vmatprep.subr.mxu0 0.0
    %v5479 = vand.u32 %v234, 4294901760
    %5480 = vmatpush2.msra.mxu0 %v5479
    %5481 = vmatprep.subr.mxu0 0.0
    %v5482 = vand.u32 %v233, 4294901760
    %5483 = vmatpush2.msra.mxu0 %v5482
    %v5484 = vand.u32 %v52, 4294901760
    %5485 = vmatprep.mubr.f32.mxu0 %v5484
    %v5486 = vand.u32 %v51, 4294901760
    %5487 = vmatmul.mubr.f32.gmra.mxu0 %v5486
    %v5488 = vpop.f32.mrf.mxu0
    %v5489 = vadd.f32 %v5385, %v5488
    %v5490 = vpop.f32.mrf.mxu0
    %5491 = vdwg.mxu0
    %5492 = vmatprep.subr.mxu0 0.0
    %v5493 = vand.u32 %v264, 4294901760
    %5494 = vmatpush1.msra.mxu0 %v5493
    %5495 = vmatprep.subr.mxu0 0.0
    %v5496 = vand.u32 %v263, 4294901760
    %5497 = vmatpush1.msra.mxu0 %v5496
    %5498 = vmatprep.subr.mxu0 0.0
    %v5499 = vand.u32 %v262, 4294901760
    %5500 = vmatpush1.msra.mxu0 %v5499
    %5501 = vmatprep.subr.mxu0 0.0
    %v5502 = vand.u32 %v261, 4294901760
    %5503 = vmatpush1.msra.mxu0 %v5502
    %5504 = vmatprep.subr.mxu0 0.0
    %v5505 = vand.u32 %v260, 4294901760
    %5506 = vmatpush1.msra.mxu0 %v5505
    %5507 = vmatprep.subr.mxu0 0.0
    %v5508 = vand.u32 %v259, 4294901760
    %5509 = vmatpush1.msra.mxu0 %v5508
    %5510 = vmatprep.subr.mxu0 0.0
    %v5511 = vand.u32 %v258, 4294901760
    %5512 = vmatpush1.msra.mxu0 %v5511
    %5513 = vmatprep.subr.mxu0 0.0
    %v5514 = vand.u32 %v257, 4294901760
    %5515 = vmatpush1.msra.mxu0 %v5514
    %5516 = vmatprep.subr.mxu0 0.0
    %v5517 = vand.u32 %v256, 4294901760
    %5518 = vmatpush1.msra.mxu0 %v5517
    %5519 = vmatprep.subr.mxu0 0.0
    %v5520 = vand.u32 %v255, 4294901760
    %5521 = vmatpush1.msra.mxu0 %v5520
    %5522 = vmatprep.subr.mxu0 0.0
    %v5523 = vand.u32 %v254, 4294901760
    %5524 = vmatpush1.msra.mxu0 %v5523
    %5525 = vmatprep.subr.mxu0 0.0
    %v5526 = vand.u32 %v253, 4294901760
    %5527 = vmatpush1.msra.mxu0 %v5526
    %5528 = vmatprep.subr.mxu0 0.0
    %v5529 = vand.u32 %v252, 4294901760
    %5530 = vmatpush1.msra.mxu0 %v5529
    %5531 = vmatprep.subr.mxu0 0.0
    %v5532 = vand.u32 %v251, 4294901760
    %5533 = vmatpush1.msra.mxu0 %v5532
    %5534 = vmatprep.subr.mxu0 0.0
    %v5535 = vand.u32 %v250, 4294901760
    %5536 = vmatpush1.msra.mxu0 %v5535
    %5537 = vmatprep.subr.mxu0 0.0
    %v5538 = vand.u32 %v249, 4294901760
    %5539 = vmatpush1.msra.mxu0 %v5538
    %5540 = vmatprep.subr.mxu0 0.0
    %v5541 = vand.u32 %v280, 4294901760
    %5542 = vmatpush2.msra.mxu0 %v5541
    %5543 = vmatprep.subr.mxu0 0.0
    %v5544 = vand.u32 %v279, 4294901760
    %5545 = vmatpush2.msra.mxu0 %v5544
    %5546 = vmatprep.subr.mxu0 0.0
    %v5547 = vand.u32 %v278, 4294901760
    %5548 = vmatpush2.msra.mxu0 %v5547
    %5549 = vmatprep.subr.mxu0 0.0
    %v5550 = vand.u32 %v277, 4294901760
    %5551 = vmatpush2.msra.mxu0 %v5550
    %5552 = vmatprep.subr.mxu0 0.0
    %v5553 = vand.u32 %v276, 4294901760
    %5554 = vmatpush2.msra.mxu0 %v5553
    %5555 = vmatprep.subr.mxu0 0.0
    %v5556 = vand.u32 %v275, 4294901760
    %5557 = vmatpush2.msra.mxu0 %v5556
    %5558 = vmatprep.subr.mxu0 0.0
    %v5559 = vand.u32 %v274, 4294901760
    %5560 = vmatpush2.msra.mxu0 %v5559
    %5561 = vmatprep.subr.mxu0 0.0
    %v5562 = vand.u32 %v273, 4294901760
    %5563 = vmatpush2.msra.mxu0 %v5562
    %5564 = vmatprep.subr.mxu0 0.0
    %v5565 = vand.u32 %v272, 4294901760
    %5566 = vmatpush2.msra.mxu0 %v5565
    %5567 = vmatprep.subr.mxu0 0.0
    %v5568 = vand.u32 %v271, 4294901760
    %5569 = vmatpush2.msra.mxu0 %v5568
    %5570 = vmatprep.subr.mxu0 0.0
    %v5571 = vand.u32 %v270, 4294901760
    %5572 = vmatpush2.msra.mxu0 %v5571
    %5573 = vmatprep.subr.mxu0 0.0
    %v5574 = vand.u32 %v269, 4294901760
    %5575 = vmatpush2.msra.mxu0 %v5574
    %5576 = vmatprep.subr.mxu0 0.0
    %v5577 = vand.u32 %v268, 4294901760
    %5578 = vmatpush2.msra.mxu0 %v5577
    %5579 = vmatprep.subr.mxu0 0.0
    %v5580 = vand.u32 %v267, 4294901760
    %5581 = vmatpush2.msra.mxu0 %v5580
    %5582 = vmatprep.subr.mxu0 0.0
    %v5583 = vand.u32 %v266, 4294901760
    %5584 = vmatpush2.msra.mxu0 %v5583
    %5585 = vmatprep.subr.mxu0 0.0
    %v5586 = vand.u32 %v265, 4294901760
    %5587 = vmatpush2.msra.mxu0 %v5586
    %v5588 = vand.u32 %v54, 4294901760
    %v5589 = vsub.f32 %v54, %v5588
    %v5590 = vand.u32 %v5589, 4294901760
    %v5591 = vsub.f32 %v5589, %v5590
    %v5592 = vand.u32 %v5591, 4294901760
    %5593 = vmatprep.mubr.f32.mxu0 %v5592
    %v5594 = vand.u32 %v53, 4294901760
    %v5595 = vsub.f32 %v53, %v5594
    %v5596 = vand.u32 %v5595, 4294901760
    %v5597 = vsub.f32 %v5595, %v5596
    %v5598 = vand.u32 %v5597, 4294901760
    %5599 = vmatmul.mubr.f32.gmra.mxu0 %v5598
    %v5600 = vpop.f32.mrf.mxu0
    %v5601 = vadd.f32 %v5489, %v5600
    %v5602 = vpop.f32.mrf.mxu0
    %5603 = vdwg.mxu0
    %5604 = vmatprep.subr.mxu0 0.0
    %v5605 = vand.u32 %v264, 4294901760
    %v5606 = vsub.f32 %v264, %v5605
    %v5607 = vand.u32 %v5606, 4294901760
    %v5608 = vsub.f32 %v5606, %v5607
    %v5609 = vand.u32 %v5608, 4294901760
    %5610 = vmatpush1.msra.mxu0 %v5609
    %5611 = vmatprep.subr.mxu0 0.0
    %v5612 = vand.u32 %v263, 4294901760
    %v5613 = vsub.f32 %v263, %v5612
    %v5614 = vand.u32 %v5613, 4294901760
    %v5615 = vsub.f32 %v5613, %v5614
    %v5616 = vand.u32 %v5615, 4294901760
    %5617 = vmatpush1.msra.mxu0 %v5616
    %5618 = vmatprep.subr.mxu0 0.0
    %v5619 = vand.u32 %v262, 4294901760
    %v5620 = vsub.f32 %v262, %v5619
    %v5621 = vand.u32 %v5620, 4294901760
    %v5622 = vsub.f32 %v5620, %v5621
    %v5623 = vand.u32 %v5622, 4294901760
    %5624 = vmatpush1.msra.mxu0 %v5623
    %5625 = vmatprep.subr.mxu0 0.0
    %v5626 = vand.u32 %v261, 4294901760
    %v5627 = vsub.f32 %v261, %v5626
    %v5628 = vand.u32 %v5627, 4294901760
    %v5629 = vsub.f32 %v5627, %v5628
    %v5630 = vand.u32 %v5629, 4294901760
    %5631 = vmatpush1.msra.mxu0 %v5630
    %5632 = vmatprep.subr.mxu0 0.0
    %v5633 = vand.u32 %v260, 4294901760
    %v5634 = vsub.f32 %v260, %v5633
    %v5635 = vand.u32 %v5634, 4294901760
    %v5636 = vsub.f32 %v5634, %v5635
    %v5637 = vand.u32 %v5636, 4294901760
    %5638 = vmatpush1.msra.mxu0 %v5637
    %5639 = vmatprep.subr.mxu0 0.0
    %v5640 = vand.u32 %v259, 4294901760
    %v5641 = vsub.f32 %v259, %v5640
    %v5642 = vand.u32 %v5641, 4294901760
    %v5643 = vsub.f32 %v5641, %v5642
    %v5644 = vand.u32 %v5643, 4294901760
    %5645 = vmatpush1.msra.mxu0 %v5644
    %5646 = vmatprep.subr.mxu0 0.0
    %v5647 = vand.u32 %v258, 4294901760
    %v5648 = vsub.f32 %v258, %v5647
    %v5649 = vand.u32 %v5648, 4294901760
    %v5650 = vsub.f32 %v5648, %v5649
    %v5651 = vand.u32 %v5650, 4294901760
    %5652 = vmatpush1.msra.mxu0 %v5651
    %5653 = vmatprep.subr.mxu0 0.0
    %v5654 = vand.u32 %v257, 4294901760
    %v5655 = vsub.f32 %v257, %v5654
    %v5656 = vand.u32 %v5655, 4294901760
    %v5657 = vsub.f32 %v5655, %v5656
    %v5658 = vand.u32 %v5657, 4294901760
    %5659 = vmatpush1.msra.mxu0 %v5658
    %5660 = vmatprep.subr.mxu0 0.0
    %v5661 = vand.u32 %v256, 4294901760
    %v5662 = vsub.f32 %v256, %v5661
    %v5663 = vand.u32 %v5662, 4294901760
    %v5664 = vsub.f32 %v5662, %v5663
    %v5665 = vand.u32 %v5664, 4294901760
    %5666 = vmatpush1.msra.mxu0 %v5665
    %5667 = vmatprep.subr.mxu0 0.0
    %v5668 = vand.u32 %v255, 4294901760
    %v5669 = vsub.f32 %v255, %v5668
    %v5670 = vand.u32 %v5669, 4294901760
    %v5671 = vsub.f32 %v5669, %v5670
    %v5672 = vand.u32 %v5671, 4294901760
    %5673 = vmatpush1.msra.mxu0 %v5672
    %5674 = vmatprep.subr.mxu0 0.0
    %v5675 = vand.u32 %v254, 4294901760
    %v5676 = vsub.f32 %v254, %v5675
    %v5677 = vand.u32 %v5676, 4294901760
    %v5678 = vsub.f32 %v5676, %v5677
    %v5679 = vand.u32 %v5678, 4294901760
    %5680 = vmatpush1.msra.mxu0 %v5679
    %5681 = vmatprep.subr.mxu0 0.0
    %v5682 = vand.u32 %v253, 4294901760
    %v5683 = vsub.f32 %v253, %v5682
    %v5684 = vand.u32 %v5683, 4294901760
    %v5685 = vsub.f32 %v5683, %v5684
    %v5686 = vand.u32 %v5685, 4294901760
    %5687 = vmatpush1.msra.mxu0 %v5686
    %5688 = vmatprep.subr.mxu0 0.0
    %v5689 = vand.u32 %v252, 4294901760
    %v5690 = vsub.f32 %v252, %v5689
    %v5691 = vand.u32 %v5690, 4294901760
    %v5692 = vsub.f32 %v5690, %v5691
    %v5693 = vand.u32 %v5692, 4294901760
    %5694 = vmatpush1.msra.mxu0 %v5693
    %5695 = vmatprep.subr.mxu0 0.0
    %v5696 = vand.u32 %v251, 4294901760
    %v5697 = vsub.f32 %v251, %v5696
    %v5698 = vand.u32 %v5697, 4294901760
    %v5699 = vsub.f32 %v5697, %v5698
    %v5700 = vand.u32 %v5699, 4294901760
    %5701 = vmatpush1.msra.mxu0 %v5700
    %5702 = vmatprep.subr.mxu0 0.0
    %v5703 = vand.u32 %v250, 4294901760
    %v5704 = vsub.f32 %v250, %v5703
    %v5705 = vand.u32 %v5704, 4294901760
    %v5706 = vsub.f32 %v5704, %v5705
    %v5707 = vand.u32 %v5706, 4294901760
    %5708 = vmatpush1.msra.mxu0 %v5707
    %5709 = vmatprep.subr.mxu0 0.0
    %v5710 = vand.u32 %v249, 4294901760
    %v5711 = vsub.f32 %v249, %v5710
    %v5712 = vand.u32 %v5711, 4294901760
    %v5713 = vsub.f32 %v5711, %v5712
    %v5714 = vand.u32 %v5713, 4294901760
    %5715 = vmatpush1.msra.mxu0 %v5714
    %5716 = vmatprep.subr.mxu0 0.0
    %v5717 = vand.u32 %v280, 4294901760
    %v5718 = vsub.f32 %v280, %v5717
    %v5719 = vand.u32 %v5718, 4294901760
    %v5720 = vsub.f32 %v5718, %v5719
    %v5721 = vand.u32 %v5720, 4294901760
    %5722 = vmatpush2.msra.mxu0 %v5721
    %5723 = vmatprep.subr.mxu0 0.0
    %v5724 = vand.u32 %v279, 4294901760
    %v5725 = vsub.f32 %v279, %v5724
    %v5726 = vand.u32 %v5725, 4294901760
    %v5727 = vsub.f32 %v5725, %v5726
    %v5728 = vand.u32 %v5727, 4294901760
    %5729 = vmatpush2.msra.mxu0 %v5728
    %5730 = vmatprep.subr.mxu0 0.0
    %v5731 = vand.u32 %v278, 4294901760
    %v5732 = vsub.f32 %v278, %v5731
    %v5733 = vand.u32 %v5732, 4294901760
    %v5734 = vsub.f32 %v5732, %v5733
    %v5735 = vand.u32 %v5734, 4294901760
    %5736 = vmatpush2.msra.mxu0 %v5735
    %5737 = vmatprep.subr.mxu0 0.0
    %v5738 = vand.u32 %v277, 4294901760
    %v5739 = vsub.f32 %v277, %v5738
    %v5740 = vand.u32 %v5739, 4294901760
    %v5741 = vsub.f32 %v5739, %v5740
    %v5742 = vand.u32 %v5741, 4294901760
    %5743 = vmatpush2.msra.mxu0 %v5742
    %5744 = vmatprep.subr.mxu0 0.0
    %v5745 = vand.u32 %v276, 4294901760
    %v5746 = vsub.f32 %v276, %v5745
    %v5747 = vand.u32 %v5746, 4294901760
    %v5748 = vsub.f32 %v5746, %v5747
    %v5749 = vand.u32 %v5748, 4294901760
    %5750 = vmatpush2.msra.mxu0 %v5749
    %5751 = vmatprep.subr.mxu0 0.0
    %v5752 = vand.u32 %v275, 4294901760
    %v5753 = vsub.f32 %v275, %v5752
    %v5754 = vand.u32 %v5753, 4294901760
    %v5755 = vsub.f32 %v5753, %v5754
    %v5756 = vand.u32 %v5755, 4294901760
    %5757 = vmatpush2.msra.mxu0 %v5756
    %5758 = vmatprep.subr.mxu0 0.0
    %v5759 = vand.u32 %v274, 4294901760
    %v5760 = vsub.f32 %v274, %v5759
    %v5761 = vand.u32 %v5760, 4294901760
    %v5762 = vsub.f32 %v5760, %v5761
    %v5763 = vand.u32 %v5762, 4294901760
    %5764 = vmatpush2.msra.mxu0 %v5763
    %5765 = vmatprep.subr.mxu0 0.0
    %v5766 = vand.u32 %v273, 4294901760
    %v5767 = vsub.f32 %v273, %v5766
    %v5768 = vand.u32 %v5767, 4294901760
    %v5769 = vsub.f32 %v5767, %v5768
    %v5770 = vand.u32 %v5769, 4294901760
    %5771 = vmatpush2.msra.mxu0 %v5770
    %5772 = vmatprep.subr.mxu0 0.0
    %v5773 = vand.u32 %v272, 4294901760
    %v5774 = vsub.f32 %v272, %v5773
    %v5775 = vand.u32 %v5774, 4294901760
    %v5776 = vsub.f32 %v5774, %v5775
    %v5777 = vand.u32 %v5776, 4294901760
    %5778 = vmatpush2.msra.mxu0 %v5777
    %5779 = vmatprep.subr.mxu0 0.0
    %v5780 = vand.u32 %v271, 4294901760
    %v5781 = vsub.f32 %v271, %v5780
    %v5782 = vand.u32 %v5781, 4294901760
    %v5783 = vsub.f32 %v5781, %v5782
    %v5784 = vand.u32 %v5783, 4294901760
    %5785 = vmatpush2.msra.mxu0 %v5784
    %5786 = vmatprep.subr.mxu0 0.0
    %v5787 = vand.u32 %v270, 4294901760
    %v5788 = vsub.f32 %v270, %v5787
    %v5789 = vand.u32 %v5788, 4294901760
    %v5790 = vsub.f32 %v5788, %v5789
    %v5791 = vand.u32 %v5790, 4294901760
    %5792 = vmatpush2.msra.mxu0 %v5791
    %5793 = vmatprep.subr.mxu0 0.0
    %v5794 = vand.u32 %v269, 4294901760
    %v5795 = vsub.f32 %v269, %v5794
    %v5796 = vand.u32 %v5795, 4294901760
    %v5797 = vsub.f32 %v5795, %v5796
    %v5798 = vand.u32 %v5797, 4294901760
    %5799 = vmatpush2.msra.mxu0 %v5798
    %5800 = vmatprep.subr.mxu0 0.0
    %v5801 = vand.u32 %v268, 4294901760
    %v5802 = vsub.f32 %v268, %v5801
    %v5803 = vand.u32 %v5802, 4294901760
    %v5804 = vsub.f32 %v5802, %v5803
    %v5805 = vand.u32 %v5804, 4294901760
    %5806 = vmatpush2.msra.mxu0 %v5805
    %5807 = vmatprep.subr.mxu0 0.0
    %v5808 = vand.u32 %v267, 4294901760
    %v5809 = vsub.f32 %v267, %v5808
    %v5810 = vand.u32 %v5809, 4294901760
    %v5811 = vsub.f32 %v5809, %v5810
    %v5812 = vand.u32 %v5811, 4294901760
    %5813 = vmatpush2.msra.mxu0 %v5812
    %5814 = vmatprep.subr.mxu0 0.0
    %v5815 = vand.u32 %v266, 4294901760
    %v5816 = vsub.f32 %v266, %v5815
    %v5817 = vand.u32 %v5816, 4294901760
    %v5818 = vsub.f32 %v5816, %v5817
    %v5819 = vand.u32 %v5818, 4294901760
    %5820 = vmatpush2.msra.mxu0 %v5819
    %5821 = vmatprep.subr.mxu0 0.0
    %v5822 = vand.u32 %v265, 4294901760
    %v5823 = vsub.f32 %v265, %v5822
    %v5824 = vand.u32 %v5823, 4294901760
    %v5825 = vsub.f32 %v5823, %v5824
    %v5826 = vand.u32 %v5825, 4294901760
    %5827 = vmatpush2.msra.mxu0 %v5826
    %v5828 = vand.u32 %v54, 4294901760
    %5829 = vmatprep.mubr.f32.mxu0 %v5828
    %v5830 = vand.u32 %v53, 4294901760
    %5831 = vmatmul.mubr.f32.gmra.mxu0 %v5830
    %v5832 = vpop.f32.mrf.mxu0
    %v5833 = vadd.f32 %v5601, %v5832
    %v5834 = vpop.f32.mrf.mxu0
    %5835 = vdwg.mxu0
    %5836 = vmatprep.subr.mxu0 0.0
    %v5837 = vand.u32 %v264, 4294901760
    %v5838 = vsub.f32 %v264, %v5837
    %5839 = vmatpush1.msra.mxu0 %v5838
    %5840 = vmatprep.subr.mxu0 0.0
    %v5841 = vand.u32 %v263, 4294901760
    %v5842 = vsub.f32 %v263, %v5841
    %5843 = vmatpush1.msra.mxu0 %v5842
    %5844 = vmatprep.subr.mxu0 0.0
    %v5845 = vand.u32 %v262, 4294901760
    %v5846 = vsub.f32 %v262, %v5845
    %5847 = vmatpush1.msra.mxu0 %v5846
    %5848 = vmatprep.subr.mxu0 0.0
    %v5849 = vand.u32 %v261, 4294901760
    %v5850 = vsub.f32 %v261, %v5849
    %5851 = vmatpush1.msra.mxu0 %v5850
    %5852 = vmatprep.subr.mxu0 0.0
    %v5853 = vand.u32 %v260, 4294901760
    %v5854 = vsub.f32 %v260, %v5853
    %5855 = vmatpush1.msra.mxu0 %v5854
    %5856 = vmatprep.subr.mxu0 0.0
    %v5857 = vand.u32 %v259, 4294901760
    %v5858 = vsub.f32 %v259, %v5857
    %5859 = vmatpush1.msra.mxu0 %v5858
    %5860 = vmatprep.subr.mxu0 0.0
    %v5861 = vand.u32 %v258, 4294901760
    %v5862 = vsub.f32 %v258, %v5861
    %5863 = vmatpush1.msra.mxu0 %v5862
    %5864 = vmatprep.subr.mxu0 0.0
    %v5865 = vand.u32 %v257, 4294901760
    %v5866 = vsub.f32 %v257, %v5865
    %5867 = vmatpush1.msra.mxu0 %v5866
    %5868 = vmatprep.subr.mxu0 0.0
    %v5869 = vand.u32 %v256, 4294901760
    %v5870 = vsub.f32 %v256, %v5869
    %5871 = vmatpush1.msra.mxu0 %v5870
    %5872 = vmatprep.subr.mxu0 0.0
    %v5873 = vand.u32 %v255, 4294901760
    %v5874 = vsub.f32 %v255, %v5873
    %5875 = vmatpush1.msra.mxu0 %v5874
    %5876 = vmatprep.subr.mxu0 0.0
    %v5877 = vand.u32 %v254, 4294901760
    %v5878 = vsub.f32 %v254, %v5877
    %5879 = vmatpush1.msra.mxu0 %v5878
    %5880 = vmatprep.subr.mxu0 0.0
    %v5881 = vand.u32 %v253, 4294901760
    %v5882 = vsub.f32 %v253, %v5881
    %5883 = vmatpush1.msra.mxu0 %v5882
    %5884 = vmatprep.subr.mxu0 0.0
    %v5885 = vand.u32 %v252, 4294901760
    %v5886 = vsub.f32 %v252, %v5885
    %5887 = vmatpush1.msra.mxu0 %v5886
    %5888 = vmatprep.subr.mxu0 0.0
    %v5889 = vand.u32 %v251, 4294901760
    %v5890 = vsub.f32 %v251, %v5889
    %5891 = vmatpush1.msra.mxu0 %v5890
    %5892 = vmatprep.subr.mxu0 0.0
    %v5893 = vand.u32 %v250, 4294901760
    %v5894 = vsub.f32 %v250, %v5893
    %5895 = vmatpush1.msra.mxu0 %v5894
    %5896 = vmatprep.subr.mxu0 0.0
    %v5897 = vand.u32 %v249, 4294901760
    %v5898 = vsub.f32 %v249, %v5897
    %5899 = vmatpush1.msra.mxu0 %v5898
    %5900 = vmatprep.subr.mxu0 0.0
    %v5901 = vand.u32 %v280, 4294901760
    %v5902 = vsub.f32 %v280, %v5901
    %5903 = vmatpush2.msra.mxu0 %v5902
    %5904 = vmatprep.subr.mxu0 0.0
    %v5905 = vand.u32 %v279, 4294901760
    %v5906 = vsub.f32 %v279, %v5905
    %5907 = vmatpush2.msra.mxu0 %v5906
    %5908 = vmatprep.subr.mxu0 0.0
    %v5909 = vand.u32 %v278, 4294901760
    %v5910 = vsub.f32 %v278, %v5909
    %5911 = vmatpush2.msra.mxu0 %v5910
    %5912 = vmatprep.subr.mxu0 0.0
    %v5913 = vand.u32 %v277, 4294901760
    %v5914 = vsub.f32 %v277, %v5913
    %5915 = vmatpush2.msra.mxu0 %v5914
    %5916 = vmatprep.subr.mxu0 0.0
    %v5917 = vand.u32 %v276, 4294901760
    %v5918 = vsub.f32 %v276, %v5917
    %5919 = vmatpush2.msra.mxu0 %v5918
    %5920 = vmatprep.subr.mxu0 0.0
    %v5921 = vand.u32 %v275, 4294901760
    %v5922 = vsub.f32 %v275, %v5921
    %5923 = vmatpush2.msra.mxu0 %v5922
    %5924 = vmatprep.subr.mxu0 0.0
    %v5925 = vand.u32 %v274, 4294901760
    %v5926 = vsub.f32 %v274, %v5925
    %5927 = vmatpush2.msra.mxu0 %v5926
    %5928 = vmatprep.subr.mxu0 0.0
    %v5929 = vand.u32 %v273, 4294901760
    %v5930 = vsub.f32 %v273, %v5929
    %5931 = vmatpush2.msra.mxu0 %v5930
    %5932 = vmatprep.subr.mxu0 0.0
    %v5933 = vand.u32 %v272, 4294901760
    %v5934 = vsub.f32 %v272, %v5933
    %5935 = vmatpush2.msra.mxu0 %v5934
    %5936 = vmatprep.subr.mxu0 0.0
    %v5937 = vand.u32 %v271, 4294901760
    %v5938 = vsub.f32 %v271, %v5937
    %5939 = vmatpush2.msra.mxu0 %v5938
    %5940 = vmatprep.subr.mxu0 0.0
    %v5941 = vand.u32 %v270, 4294901760
    %v5942 = vsub.f32 %v270, %v5941
    %5943 = vmatpush2.msra.mxu0 %v5942
    %5944 = vmatprep.subr.mxu0 0.0
    %v5945 = vand.u32 %v269, 4294901760
    %v5946 = vsub.f32 %v269, %v5945
    %5947 = vmatpush2.msra.mxu0 %v5946
    %5948 = vmatprep.subr.mxu0 0.0
    %v5949 = vand.u32 %v268, 4294901760
    %v5950 = vsub.f32 %v268, %v5949
    %5951 = vmatpush2.msra.mxu0 %v5950
    %5952 = vmatprep.subr.mxu0 0.0
    %v5953 = vand.u32 %v267, 4294901760
    %v5954 = vsub.f32 %v267, %v5953
    %5955 = vmatpush2.msra.mxu0 %v5954
    %5956 = vmatprep.subr.mxu0 0.0
    %v5957 = vand.u32 %v266, 4294901760
    %v5958 = vsub.f32 %v266, %v5957
    %5959 = vmatpush2.msra.mxu0 %v5958
    %5960 = vmatprep.subr.mxu0 0.0
    %v5961 = vand.u32 %v265, 4294901760
    %v5962 = vsub.f32 %v265, %v5961
    %5963 = vmatpush2.msra.mxu0 %v5962
    %v5964 = vand.u32 %v54, 4294901760
    %v5965 = vsub.f32 %v54, %v5964
    %5966 = vmatprep.mubr.f32.mxu0 %v5965
    %v5967 = vand.u32 %v53, 4294901760
    %v5968 = vsub.f32 %v53, %v5967
    %5969 = vmatmul.mubr.f32.gmra.mxu0 %v5968
    %v5970 = vpop.f32.mrf.mxu0
    %v5971 = vadd.f32 %v5833, %v5970
    %v5972 = vpop.f32.mrf.mxu0
    %5973 = vdwg.mxu0
    %5974 = vmatprep.subr.mxu0 0.0
    %v5975 = vand.u32 %v264, 4294901760
    %5976 = vmatpush1.msra.mxu0 %v5975
    %5977 = vmatprep.subr.mxu0 0.0
    %v5978 = vand.u32 %v263, 4294901760
    %5979 = vmatpush1.msra.mxu0 %v5978
    %5980 = vmatprep.subr.mxu0 0.0
    %v5981 = vand.u32 %v262, 4294901760
    %5982 = vmatpush1.msra.mxu0 %v5981
    %5983 = vmatprep.subr.mxu0 0.0
    %v5984 = vand.u32 %v261, 4294901760
    %5985 = vmatpush1.msra.mxu0 %v5984
    %5986 = vmatprep.subr.mxu0 0.0
    %v5987 = vand.u32 %v260, 4294901760
    %5988 = vmatpush1.msra.mxu0 %v5987
    %5989 = vmatprep.subr.mxu0 0.0
    %v5990 = vand.u32 %v259, 4294901760
    %5991 = vmatpush1.msra.mxu0 %v5990
    %5992 = vmatprep.subr.mxu0 0.0
    %v5993 = vand.u32 %v258, 4294901760
    %5994 = vmatpush1.msra.mxu0 %v5993
    %5995 = vmatprep.subr.mxu0 0.0
    %v5996 = vand.u32 %v257, 4294901760
    %5997 = vmatpush1.msra.mxu0 %v5996
    %5998 = vmatprep.subr.mxu0 0.0
    %v5999 = vand.u32 %v256, 4294901760
    %6000 = vmatpush1.msra.mxu0 %v5999
    %6001 = vmatprep.subr.mxu0 0.0
    %v6002 = vand.u32 %v255, 4294901760
    %6003 = vmatpush1.msra.mxu0 %v6002
    %6004 = vmatprep.subr.mxu0 0.0
    %v6005 = vand.u32 %v254, 4294901760
    %6006 = vmatpush1.msra.mxu0 %v6005
    %6007 = vmatprep.subr.mxu0 0.0
    %v6008 = vand.u32 %v253, 4294901760
    %6009 = vmatpush1.msra.mxu0 %v6008
    %6010 = vmatprep.subr.mxu0 0.0
    %v6011 = vand.u32 %v252, 4294901760
    %6012 = vmatpush1.msra.mxu0 %v6011
    %6013 = vmatprep.subr.mxu0 0.0
    %v6014 = vand.u32 %v251, 4294901760
    %6015 = vmatpush1.msra.mxu0 %v6014
    %6016 = vmatprep.subr.mxu0 0.0
    %v6017 = vand.u32 %v250, 4294901760
    %6018 = vmatpush1.msra.mxu0 %v6017
    %6019 = vmatprep.subr.mxu0 0.0
    %v6020 = vand.u32 %v249, 4294901760
    %6021 = vmatpush1.msra.mxu0 %v6020
    %6022 = vmatprep.subr.mxu0 0.0
    %v6023 = vand.u32 %v280, 4294901760
    %6024 = vmatpush2.msra.mxu0 %v6023
    %6025 = vmatprep.subr.mxu0 0.0
    %v6026 = vand.u32 %v279, 4294901760
    %6027 = vmatpush2.msra.mxu0 %v6026
    %6028 = vmatprep.subr.mxu0 0.0
    %v6029 = vand.u32 %v278, 4294901760
    %6030 = vmatpush2.msra.mxu0 %v6029
    %6031 = vmatprep.subr.mxu0 0.0
    %v6032 = vand.u32 %v277, 4294901760
    %6033 = vmatpush2.msra.mxu0 %v6032
    %6034 = vmatprep.subr.mxu0 0.0
    %v6035 = vand.u32 %v276, 4294901760
    %6036 = vmatpush2.msra.mxu0 %v6035
    %6037 = vmatprep.subr.mxu0 0.0
    %v6038 = vand.u32 %v275, 4294901760
    %6039 = vmatpush2.msra.mxu0 %v6038
    %6040 = vmatprep.subr.mxu0 0.0
    %v6041 = vand.u32 %v274, 4294901760
    %6042 = vmatpush2.msra.mxu0 %v6041
    %6043 = vmatprep.subr.mxu0 0.0
    %v6044 = vand.u32 %v273, 4294901760
    %6045 = vmatpush2.msra.mxu0 %v6044
    %6046 = vmatprep.subr.mxu0 0.0
    %v6047 = vand.u32 %v272, 4294901760
    %6048 = vmatpush2.msra.mxu0 %v6047
    %6049 = vmatprep.subr.mxu0 0.0
    %v6050 = vand.u32 %v271, 4294901760
    %6051 = vmatpush2.msra.mxu0 %v6050
    %6052 = vmatprep.subr.mxu0 0.0
    %v6053 = vand.u32 %v270, 4294901760
    %6054 = vmatpush2.msra.mxu0 %v6053
    %6055 = vmatprep.subr.mxu0 0.0
    %v6056 = vand.u32 %v269, 4294901760
    %6057 = vmatpush2.msra.mxu0 %v6056
    %6058 = vmatprep.subr.mxu0 0.0
    %v6059 = vand.u32 %v268, 4294901760
    %6060 = vmatpush2.msra.mxu0 %v6059
    %6061 = vmatprep.subr.mxu0 0.0
    %v6062 = vand.u32 %v267, 4294901760
    %6063 = vmatpush2.msra.mxu0 %v6062
    %6064 = vmatprep.subr.mxu0 0.0
    %v6065 = vand.u32 %v266, 4294901760
    %6066 = vmatpush2.msra.mxu0 %v6065
    %6067 = vmatprep.subr.mxu0 0.0
    %v6068 = vand.u32 %v265, 4294901760
    %6069 = vmatpush2.msra.mxu0 %v6068
    %v6070 = vand.u32 %v54, 4294901760
    %v6071 = vsub.f32 %v54, %v6070
    %v6072 = vand.u32 %v6071, 4294901760
    %6073 = vmatprep.mubr.f32.mxu0 %v6072
    %v6074 = vand.u32 %v53, 4294901760
    %v6075 = vsub.f32 %v53, %v6074
    %v6076 = vand.u32 %v6075, 4294901760
    %6077 = vmatmul.mubr.f32.gmra.mxu0 %v6076
    %v6078 = vpop.f32.mrf.mxu0
    %v6079 = vadd.f32 %v5971, %v6078
    %v6080 = vpop.f32.mrf.mxu0
    %6081 = vdwg.mxu0
    %6082 = vmatprep.subr.mxu0 0.0
    %v6083 = vand.u32 %v264, 4294901760
    %v6084 = vsub.f32 %v264, %v6083
    %v6085 = vand.u32 %v6084, 4294901760
    %6086 = vmatpush1.msra.mxu0 %v6085
    %6087 = vmatprep.subr.mxu0 0.0
    %v6088 = vand.u32 %v263, 4294901760
    %v6089 = vsub.f32 %v263, %v6088
    %v6090 = vand.u32 %v6089, 4294901760
    %6091 = vmatpush1.msra.mxu0 %v6090
    %6092 = vmatprep.subr.mxu0 0.0
    %v6093 = vand.u32 %v262, 4294901760
    %v6094 = vsub.f32 %v262, %v6093
    %v6095 = vand.u32 %v6094, 4294901760
    %6096 = vmatpush1.msra.mxu0 %v6095
    %6097 = vmatprep.subr.mxu0 0.0
    %v6098 = vand.u32 %v261, 4294901760
    %v6099 = vsub.f32 %v261, %v6098
    %v6100 = vand.u32 %v6099, 4294901760
    %6101 = vmatpush1.msra.mxu0 %v6100
    %6102 = vmatprep.subr.mxu0 0.0
    %v6103 = vand.u32 %v260, 4294901760
    %v6104 = vsub.f32 %v260, %v6103
    %v6105 = vand.u32 %v6104, 4294901760
    %6106 = vmatpush1.msra.mxu0 %v6105
    %6107 = vmatprep.subr.mxu0 0.0
    %v6108 = vand.u32 %v259, 4294901760
    %v6109 = vsub.f32 %v259, %v6108
    %v6110 = vand.u32 %v6109, 4294901760
    %6111 = vmatpush1.msra.mxu0 %v6110
    %6112 = vmatprep.subr.mxu0 0.0
    %v6113 = vand.u32 %v258, 4294901760
    %v6114 = vsub.f32 %v258, %v6113
    %v6115 = vand.u32 %v6114, 4294901760
    %6116 = vmatpush1.msra.mxu0 %v6115
    %6117 = vmatprep.subr.mxu0 0.0
    %v6118 = vand.u32 %v257, 4294901760
    %v6119 = vsub.f32 %v257, %v6118
    %v6120 = vand.u32 %v6119, 4294901760
    %6121 = vmatpush1.msra.mxu0 %v6120
    %6122 = vmatprep.subr.mxu0 0.0
    %v6123 = vand.u32 %v256, 4294901760
    %v6124 = vsub.f32 %v256, %v6123
    %v6125 = vand.u32 %v6124, 4294901760
    %6126 = vmatpush1.msra.mxu0 %v6125
    %6127 = vmatprep.subr.mxu0 0.0
    %v6128 = vand.u32 %v255, 4294901760
    %v6129 = vsub.f32 %v255, %v6128
    %v6130 = vand.u32 %v6129, 4294901760
    %6131 = vmatpush1.msra.mxu0 %v6130
    %6132 = vmatprep.subr.mxu0 0.0
    %v6133 = vand.u32 %v254, 4294901760
    %v6134 = vsub.f32 %v254, %v6133
    %v6135 = vand.u32 %v6134, 4294901760
    %6136 = vmatpush1.msra.mxu0 %v6135
    %6137 = vmatprep.subr.mxu0 0.0
    %v6138 = vand.u32 %v253, 4294901760
    %v6139 = vsub.f32 %v253, %v6138
    %v6140 = vand.u32 %v6139, 4294901760
    %6141 = vmatpush1.msra.mxu0 %v6140
    %6142 = vmatprep.subr.mxu0 0.0
    %v6143 = vand.u32 %v252, 4294901760
    %v6144 = vsub.f32 %v252, %v6143
    %v6145 = vand.u32 %v6144, 4294901760
    %6146 = vmatpush1.msra.mxu0 %v6145
    %6147 = vmatprep.subr.mxu0 0.0
    %v6148 = vand.u32 %v251, 4294901760
    %v6149 = vsub.f32 %v251, %v6148
    %v6150 = vand.u32 %v6149, 4294901760
    %6151 = vmatpush1.msra.mxu0 %v6150
    %6152 = vmatprep.subr.mxu0 0.0
    %v6153 = vand.u32 %v250, 4294901760
    %v6154 = vsub.f32 %v250, %v6153
    %v6155 = vand.u32 %v6154, 4294901760
    %6156 = vmatpush1.msra.mxu0 %v6155
    %6157 = vmatprep.subr.mxu0 0.0
    %v6158 = vand.u32 %v249, 4294901760
    %v6159 = vsub.f32 %v249, %v6158
    %v6160 = vand.u32 %v6159, 4294901760
    %6161 = vmatpush1.msra.mxu0 %v6160
    %6162 = vmatprep.subr.mxu0 0.0
    %v6163 = vand.u32 %v280, 4294901760
    %v6164 = vsub.f32 %v280, %v6163
    %v6165 = vand.u32 %v6164, 4294901760
    %6166 = vmatpush2.msra.mxu0 %v6165
    %6167 = vmatprep.subr.mxu0 0.0
    %v6168 = vand.u32 %v279, 4294901760
    %v6169 = vsub.f32 %v279, %v6168
    %v6170 = vand.u32 %v6169, 4294901760
    %6171 = vmatpush2.msra.mxu0 %v6170
    %6172 = vmatprep.subr.mxu0 0.0
    %v6173 = vand.u32 %v278, 4294901760
    %v6174 = vsub.f32 %v278, %v6173
    %v6175 = vand.u32 %v6174, 4294901760
    %6176 = vmatpush2.msra.mxu0 %v6175
    %6177 = vmatprep.subr.mxu0 0.0
    %v6178 = vand.u32 %v277, 4294901760
    %v6179 = vsub.f32 %v277, %v6178
    %v6180 = vand.u32 %v6179, 4294901760
    %6181 = vmatpush2.msra.mxu0 %v6180
    %6182 = vmatprep.subr.mxu0 0.0
    %v6183 = vand.u32 %v276, 4294901760
    %v6184 = vsub.f32 %v276, %v6183
    %v6185 = vand.u32 %v6184, 4294901760
    %6186 = vmatpush2.msra.mxu0 %v6185
    %6187 = vmatprep.subr.mxu0 0.0
    %v6188 = vand.u32 %v275, 4294901760
    %v6189 = vsub.f32 %v275, %v6188
    %v6190 = vand.u32 %v6189, 4294901760
    %6191 = vmatpush2.msra.mxu0 %v6190
    %6192 = vmatprep.subr.mxu0 0.0
    %v6193 = vand.u32 %v274, 4294901760
    %v6194 = vsub.f32 %v274, %v6193
    %v6195 = vand.u32 %v6194, 4294901760
    %6196 = vmatpush2.msra.mxu0 %v6195
    %6197 = vmatprep.subr.mxu0 0.0
    %v6198 = vand.u32 %v273, 4294901760
    %v6199 = vsub.f32 %v273, %v6198
    %v6200 = vand.u32 %v6199, 4294901760
    %6201 = vmatpush2.msra.mxu0 %v6200
    %6202 = vmatprep.subr.mxu0 0.0
    %v6203 = vand.u32 %v272, 4294901760
    %v6204 = vsub.f32 %v272, %v6203
    %v6205 = vand.u32 %v6204, 4294901760
    %6206 = vmatpush2.msra.mxu0 %v6205
    %6207 = vmatprep.subr.mxu0 0.0
    %v6208 = vand.u32 %v271, 4294901760
    %v6209 = vsub.f32 %v271, %v6208
    %v6210 = vand.u32 %v6209, 4294901760
    %6211 = vmatpush2.msra.mxu0 %v6210
    %6212 = vmatprep.subr.mxu0 0.0
    %v6213 = vand.u32 %v270, 4294901760
    %v6214 = vsub.f32 %v270, %v6213
    %v6215 = vand.u32 %v6214, 4294901760
    %6216 = vmatpush2.msra.mxu0 %v6215
    %6217 = vmatprep.subr.mxu0 0.0
    %v6218 = vand.u32 %v269, 4294901760
    %v6219 = vsub.f32 %v269, %v6218
    %v6220 = vand.u32 %v6219, 4294901760
    %6221 = vmatpush2.msra.mxu0 %v6220
    %6222 = vmatprep.subr.mxu0 0.0
    %v6223 = vand.u32 %v268, 4294901760
    %v6224 = vsub.f32 %v268, %v6223
    %v6225 = vand.u32 %v6224, 4294901760
    %6226 = vmatpush2.msra.mxu0 %v6225
    %6227 = vmatprep.subr.mxu0 0.0
    %v6228 = vand.u32 %v267, 4294901760
    %v6229 = vsub.f32 %v267, %v6228
    %v6230 = vand.u32 %v6229, 4294901760
    %6231 = vmatpush2.msra.mxu0 %v6230
    %6232 = vmatprep.subr.mxu0 0.0
    %v6233 = vand.u32 %v266, 4294901760
    %v6234 = vsub.f32 %v266, %v6233
    %v6235 = vand.u32 %v6234, 4294901760
    %6236 = vmatpush2.msra.mxu0 %v6235
    %6237 = vmatprep.subr.mxu0 0.0
    %v6238 = vand.u32 %v265, 4294901760
    %v6239 = vsub.f32 %v265, %v6238
    %v6240 = vand.u32 %v6239, 4294901760
    %6241 = vmatpush2.msra.mxu0 %v6240
    %v6242 = vand.u32 %v54, 4294901760
    %6243 = vmatprep.mubr.f32.mxu0 %v6242
    %v6244 = vand.u32 %v53, 4294901760
    %6245 = vmatmul.mubr.f32.gmra.mxu0 %v6244
    %v6246 = vpop.f32.mrf.mxu0
    %v6247 = vadd.f32 %v6079, %v6246
    %v6248 = vpop.f32.mrf.mxu0
    %6249 = vdwg.mxu0
    %6250 = vmatprep.subr.mxu0 0.0
    %v6251 = vand.u32 %v264, 4294901760
    %6252 = vmatpush1.msra.mxu0 %v6251
    %6253 = vmatprep.subr.mxu0 0.0
    %v6254 = vand.u32 %v263, 4294901760
    %6255 = vmatpush1.msra.mxu0 %v6254
    %6256 = vmatprep.subr.mxu0 0.0
    %v6257 = vand.u32 %v262, 4294901760
    %6258 = vmatpush1.msra.mxu0 %v6257
    %6259 = vmatprep.subr.mxu0 0.0
    %v6260 = vand.u32 %v261, 4294901760
    %6261 = vmatpush1.msra.mxu0 %v6260
    %6262 = vmatprep.subr.mxu0 0.0
    %v6263 = vand.u32 %v260, 4294901760
    %6264 = vmatpush1.msra.mxu0 %v6263
    %6265 = vmatprep.subr.mxu0 0.0
    %v6266 = vand.u32 %v259, 4294901760
    %6267 = vmatpush1.msra.mxu0 %v6266
    %6268 = vmatprep.subr.mxu0 0.0
    %v6269 = vand.u32 %v258, 4294901760
    %6270 = vmatpush1.msra.mxu0 %v6269
    %6271 = vmatprep.subr.mxu0 0.0
    %v6272 = vand.u32 %v257, 4294901760
    %6273 = vmatpush1.msra.mxu0 %v6272
    %6274 = vmatprep.subr.mxu0 0.0
    %v6275 = vand.u32 %v256, 4294901760
    %6276 = vmatpush1.msra.mxu0 %v6275
    %6277 = vmatprep.subr.mxu0 0.0
    %v6278 = vand.u32 %v255, 4294901760
    %6279 = vmatpush1.msra.mxu0 %v6278
    %6280 = vmatprep.subr.mxu0 0.0
    %v6281 = vand.u32 %v254, 4294901760
    %6282 = vmatpush1.msra.mxu0 %v6281
    %6283 = vmatprep.subr.mxu0 0.0
    %v6284 = vand.u32 %v253, 4294901760
    %6285 = vmatpush1.msra.mxu0 %v6284
    %6286 = vmatprep.subr.mxu0 0.0
    %v6287 = vand.u32 %v252, 4294901760
    %6288 = vmatpush1.msra.mxu0 %v6287
    %6289 = vmatprep.subr.mxu0 0.0
    %v6290 = vand.u32 %v251, 4294901760
    %6291 = vmatpush1.msra.mxu0 %v6290
    %6292 = vmatprep.subr.mxu0 0.0
    %v6293 = vand.u32 %v250, 4294901760
    %6294 = vmatpush1.msra.mxu0 %v6293
    %6295 = vmatprep.subr.mxu0 0.0
    %v6296 = vand.u32 %v249, 4294901760
    %6297 = vmatpush1.msra.mxu0 %v6296
    %6298 = vmatprep.subr.mxu0 0.0
    %v6299 = vand.u32 %v280, 4294901760
    %6300 = vmatpush2.msra.mxu0 %v6299
    %6301 = vmatprep.subr.mxu0 0.0
    %v6302 = vand.u32 %v279, 4294901760
    %6303 = vmatpush2.msra.mxu0 %v6302
    %6304 = vmatprep.subr.mxu0 0.0
    %v6305 = vand.u32 %v278, 4294901760
    %6306 = vmatpush2.msra.mxu0 %v6305
    %6307 = vmatprep.subr.mxu0 0.0
    %v6308 = vand.u32 %v277, 4294901760
    %6309 = vmatpush2.msra.mxu0 %v6308
    %6310 = vmatprep.subr.mxu0 0.0
    %v6311 = vand.u32 %v276, 4294901760
    %6312 = vmatpush2.msra.mxu0 %v6311
    %6313 = vmatprep.subr.mxu0 0.0
    %v6314 = vand.u32 %v275, 4294901760
    %6315 = vmatpush2.msra.mxu0 %v6314
    %6316 = vmatprep.subr.mxu0 0.0
    %v6317 = vand.u32 %v274, 4294901760
    %6318 = vmatpush2.msra.mxu0 %v6317
    %6319 = vmatprep.subr.mxu0 0.0
    %v6320 = vand.u32 %v273, 4294901760
    %6321 = vmatpush2.msra.mxu0 %v6320
    %6322 = vmatprep.subr.mxu0 0.0
    %v6323 = vand.u32 %v272, 4294901760
    %6324 = vmatpush2.msra.mxu0 %v6323
    %6325 = vmatprep.subr.mxu0 0.0
    %v6326 = vand.u32 %v271, 4294901760
    %6327 = vmatpush2.msra.mxu0 %v6326
    %6328 = vmatprep.subr.mxu0 0.0
    %v6329 = vand.u32 %v270, 4294901760
    %6330 = vmatpush2.msra.mxu0 %v6329
    %6331 = vmatprep.subr.mxu0 0.0
    %v6332 = vand.u32 %v269, 4294901760
    %6333 = vmatpush2.msra.mxu0 %v6332
    %6334 = vmatprep.subr.mxu0 0.0
    %v6335 = vand.u32 %v268, 4294901760
    %6336 = vmatpush2.msra.mxu0 %v6335
    %6337 = vmatprep.subr.mxu0 0.0
    %v6338 = vand.u32 %v267, 4294901760
    %6339 = vmatpush2.msra.mxu0 %v6338
    %6340 = vmatprep.subr.mxu0 0.0
    %v6341 = vand.u32 %v266, 4294901760
    %6342 = vmatpush2.msra.mxu0 %v6341
    %6343 = vmatprep.subr.mxu0 0.0
    %v6344 = vand.u32 %v265, 4294901760
    %6345 = vmatpush2.msra.mxu0 %v6344
    %v6346 = vand.u32 %v54, 4294901760
    %6347 = vmatprep.mubr.f32.mxu0 %v6346
    %v6348 = vand.u32 %v53, 4294901760
    %6349 = vmatmul.mubr.f32.gmra.mxu0 %v6348
    %v6350 = vpop.f32.mrf.mxu0
    %v6351 = vadd.f32 %v6247, %v6350
    %v6352 = vpop.f32.mrf.mxu0
    %6353 = vdwg.mxu0
    %6354 = vmatprep.subr.mxu0 0.0
    %v6355 = vand.u32 %v296, 4294901760
    %6356 = vmatpush1.msra.mxu0 %v6355
    %6357 = vmatprep.subr.mxu0 0.0
    %v6358 = vand.u32 %v295, 4294901760
    %6359 = vmatpush1.msra.mxu0 %v6358
    %6360 = vmatprep.subr.mxu0 0.0
    %v6361 = vand.u32 %v294, 4294901760
    %6362 = vmatpush1.msra.mxu0 %v6361
    %6363 = vmatprep.subr.mxu0 0.0
    %v6364 = vand.u32 %v293, 4294901760
    %6365 = vmatpush1.msra.mxu0 %v6364
    %6366 = vmatprep.subr.mxu0 0.0
    %v6367 = vand.u32 %v292, 4294901760
    %6368 = vmatpush1.msra.mxu0 %v6367
    %6369 = vmatprep.subr.mxu0 0.0
    %v6370 = vand.u32 %v291, 4294901760
    %6371 = vmatpush1.msra.mxu0 %v6370
    %6372 = vmatprep.subr.mxu0 0.0
    %v6373 = vand.u32 %v290, 4294901760
    %6374 = vmatpush1.msra.mxu0 %v6373
    %6375 = vmatprep.subr.mxu0 0.0
    %v6376 = vand.u32 %v289, 4294901760
    %6377 = vmatpush1.msra.mxu0 %v6376
    %6378 = vmatprep.subr.mxu0 0.0
    %v6379 = vand.u32 %v288, 4294901760
    %6380 = vmatpush1.msra.mxu0 %v6379
    %6381 = vmatprep.subr.mxu0 0.0
    %v6382 = vand.u32 %v287, 4294901760
    %6383 = vmatpush1.msra.mxu0 %v6382
    %6384 = vmatprep.subr.mxu0 0.0
    %v6385 = vand.u32 %v286, 4294901760
    %6386 = vmatpush1.msra.mxu0 %v6385
    %6387 = vmatprep.subr.mxu0 0.0
    %v6388 = vand.u32 %v285, 4294901760
    %6389 = vmatpush1.msra.mxu0 %v6388
    %6390 = vmatprep.subr.mxu0 0.0
    %v6391 = vand.u32 %v284, 4294901760
    %6392 = vmatpush1.msra.mxu0 %v6391
    %6393 = vmatprep.subr.mxu0 0.0
    %v6394 = vand.u32 %v283, 4294901760
    %6395 = vmatpush1.msra.mxu0 %v6394
    %6396 = vmatprep.subr.mxu0 0.0
    %v6397 = vand.u32 %v282, 4294901760
    %6398 = vmatpush1.msra.mxu0 %v6397
    %6399 = vmatprep.subr.mxu0 0.0
    %v6400 = vand.u32 %v281, 4294901760
    %6401 = vmatpush1.msra.mxu0 %v6400
    %6402 = vmatprep.subr.mxu0 0.0
    %v6403 = vand.u32 %v312, 4294901760
    %6404 = vmatpush2.msra.mxu0 %v6403
    %6405 = vmatprep.subr.mxu0 0.0
    %v6406 = vand.u32 %v311, 4294901760
    %6407 = vmatpush2.msra.mxu0 %v6406
    %6408 = vmatprep.subr.mxu0 0.0
    %v6409 = vand.u32 %v310, 4294901760
    %6410 = vmatpush2.msra.mxu0 %v6409
    %6411 = vmatprep.subr.mxu0 0.0
    %v6412 = vand.u32 %v309, 4294901760
    %6413 = vmatpush2.msra.mxu0 %v6412
    %6414 = vmatprep.subr.mxu0 0.0
    %v6415 = vand.u32 %v308, 4294901760
    %6416 = vmatpush2.msra.mxu0 %v6415
    %6417 = vmatprep.subr.mxu0 0.0
    %v6418 = vand.u32 %v307, 4294901760
    %6419 = vmatpush2.msra.mxu0 %v6418
    %6420 = vmatprep.subr.mxu0 0.0
    %v6421 = vand.u32 %v306, 4294901760
    %6422 = vmatpush2.msra.mxu0 %v6421
    %6423 = vmatprep.subr.mxu0 0.0
    %v6424 = vand.u32 %v305, 4294901760
    %6425 = vmatpush2.msra.mxu0 %v6424
    %6426 = vmatprep.subr.mxu0 0.0
    %v6427 = vand.u32 %v304, 4294901760
    %6428 = vmatpush2.msra.mxu0 %v6427
    %6429 = vmatprep.subr.mxu0 0.0
    %v6430 = vand.u32 %v303, 4294901760
    %6431 = vmatpush2.msra.mxu0 %v6430
    %6432 = vmatprep.subr.mxu0 0.0
    %v6433 = vand.u32 %v302, 4294901760
    %6434 = vmatpush2.msra.mxu0 %v6433
    %6435 = vmatprep.subr.mxu0 0.0
    %v6436 = vand.u32 %v301, 4294901760
    %6437 = vmatpush2.msra.mxu0 %v6436
    %6438 = vmatprep.subr.mxu0 0.0
    %v6439 = vand.u32 %v300, 4294901760
    %6440 = vmatpush2.msra.mxu0 %v6439
    %6441 = vmatprep.subr.mxu0 0.0
    %v6442 = vand.u32 %v299, 4294901760
    %6443 = vmatpush2.msra.mxu0 %v6442
    %6444 = vmatprep.subr.mxu0 0.0
    %v6445 = vand.u32 %v298, 4294901760
    %6446 = vmatpush2.msra.mxu0 %v6445
    %6447 = vmatprep.subr.mxu0 0.0
    %v6448 = vand.u32 %v297, 4294901760
    %6449 = vmatpush2.msra.mxu0 %v6448
    %v6450 = vand.u32 %v56, 4294901760
    %v6451 = vsub.f32 %v56, %v6450
    %v6452 = vand.u32 %v6451, 4294901760
    %v6453 = vsub.f32 %v6451, %v6452
    %v6454 = vand.u32 %v6453, 4294901760
    %6455 = vmatprep.mubr.f32.mxu0 %v6454
    %v6456 = vand.u32 %v55, 4294901760
    %v6457 = vsub.f32 %v55, %v6456
    %v6458 = vand.u32 %v6457, 4294901760
    %v6459 = vsub.f32 %v6457, %v6458
    %v6460 = vand.u32 %v6459, 4294901760
    %6461 = vmatmul.mubr.f32.gmra.mxu0 %v6460
    %v6462 = vpop.f32.mrf.mxu0
    %v6463 = vadd.f32 %v6351, %v6462
    %v6464 = vpop.f32.mrf.mxu0
    %6465 = vdwg.mxu0
    %6466 = vmatprep.subr.mxu0 0.0
    %v6467 = vand.u32 %v296, 4294901760
    %v6468 = vsub.f32 %v296, %v6467
    %v6469 = vand.u32 %v6468, 4294901760
    %v6470 = vsub.f32 %v6468, %v6469
    %v6471 = vand.u32 %v6470, 4294901760
    %6472 = vmatpush1.msra.mxu0 %v6471
    %6473 = vmatprep.subr.mxu0 0.0
    %v6474 = vand.u32 %v295, 4294901760
    %v6475 = vsub.f32 %v295, %v6474
    %v6476 = vand.u32 %v6475, 4294901760
    %v6477 = vsub.f32 %v6475, %v6476
    %v6478 = vand.u32 %v6477, 4294901760
    %6479 = vmatpush1.msra.mxu0 %v6478
    %6480 = vmatprep.subr.mxu0 0.0
    %v6481 = vand.u32 %v294, 4294901760
    %v6482 = vsub.f32 %v294, %v6481
    %v6483 = vand.u32 %v6482, 4294901760
    %v6484 = vsub.f32 %v6482, %v6483
    %v6485 = vand.u32 %v6484, 4294901760
    %6486 = vmatpush1.msra.mxu0 %v6485
    %6487 = vmatprep.subr.mxu0 0.0
    %v6488 = vand.u32 %v293, 4294901760
    %v6489 = vsub.f32 %v293, %v6488
    %v6490 = vand.u32 %v6489, 4294901760
    %v6491 = vsub.f32 %v6489, %v6490
    %v6492 = vand.u32 %v6491, 4294901760
    %6493 = vmatpush1.msra.mxu0 %v6492
    %6494 = vmatprep.subr.mxu0 0.0
    %v6495 = vand.u32 %v292, 4294901760
    %v6496 = vsub.f32 %v292, %v6495
    %v6497 = vand.u32 %v6496, 4294901760
    %v6498 = vsub.f32 %v6496, %v6497
    %v6499 = vand.u32 %v6498, 4294901760
    %6500 = vmatpush1.msra.mxu0 %v6499
    %6501 = vmatprep.subr.mxu0 0.0
    %v6502 = vand.u32 %v291, 4294901760
    %v6503 = vsub.f32 %v291, %v6502
    %v6504 = vand.u32 %v6503, 4294901760
    %v6505 = vsub.f32 %v6503, %v6504
    %v6506 = vand.u32 %v6505, 4294901760
    %6507 = vmatpush1.msra.mxu0 %v6506
    %6508 = vmatprep.subr.mxu0 0.0
    %v6509 = vand.u32 %v290, 4294901760
    %v6510 = vsub.f32 %v290, %v6509
    %v6511 = vand.u32 %v6510, 4294901760
    %v6512 = vsub.f32 %v6510, %v6511
    %v6513 = vand.u32 %v6512, 4294901760
    %6514 = vmatpush1.msra.mxu0 %v6513
    %6515 = vmatprep.subr.mxu0 0.0
    %v6516 = vand.u32 %v289, 4294901760
    %v6517 = vsub.f32 %v289, %v6516
    %v6518 = vand.u32 %v6517, 4294901760
    %v6519 = vsub.f32 %v6517, %v6518
    %v6520 = vand.u32 %v6519, 4294901760
    %6521 = vmatpush1.msra.mxu0 %v6520
    %6522 = vmatprep.subr.mxu0 0.0
    %v6523 = vand.u32 %v288, 4294901760
    %v6524 = vsub.f32 %v288, %v6523
    %v6525 = vand.u32 %v6524, 4294901760
    %v6526 = vsub.f32 %v6524, %v6525
    %v6527 = vand.u32 %v6526, 4294901760
    %6528 = vmatpush1.msra.mxu0 %v6527
    %6529 = vmatprep.subr.mxu0 0.0
    %v6530 = vand.u32 %v287, 4294901760
    %v6531 = vsub.f32 %v287, %v6530
    %v6532 = vand.u32 %v6531, 4294901760
    %v6533 = vsub.f32 %v6531, %v6532
    %v6534 = vand.u32 %v6533, 4294901760
    %6535 = vmatpush1.msra.mxu0 %v6534
    %6536 = vmatprep.subr.mxu0 0.0
    %v6537 = vand.u32 %v286, 4294901760
    %v6538 = vsub.f32 %v286, %v6537
    %v6539 = vand.u32 %v6538, 4294901760
    %v6540 = vsub.f32 %v6538, %v6539
    %v6541 = vand.u32 %v6540, 4294901760
    %6542 = vmatpush1.msra.mxu0 %v6541
    %6543 = vmatprep.subr.mxu0 0.0
    %v6544 = vand.u32 %v285, 4294901760
    %v6545 = vsub.f32 %v285, %v6544
    %v6546 = vand.u32 %v6545, 4294901760
    %v6547 = vsub.f32 %v6545, %v6546
    %v6548 = vand.u32 %v6547, 4294901760
    %6549 = vmatpush1.msra.mxu0 %v6548
    %6550 = vmatprep.subr.mxu0 0.0
    %v6551 = vand.u32 %v284, 4294901760
    %v6552 = vsub.f32 %v284, %v6551
    %v6553 = vand.u32 %v6552, 4294901760
    %v6554 = vsub.f32 %v6552, %v6553
    %v6555 = vand.u32 %v6554, 4294901760
    %6556 = vmatpush1.msra.mxu0 %v6555
    %6557 = vmatprep.subr.mxu0 0.0
    %v6558 = vand.u32 %v283, 4294901760
    %v6559 = vsub.f32 %v283, %v6558
    %v6560 = vand.u32 %v6559, 4294901760
    %v6561 = vsub.f32 %v6559, %v6560
    %v6562 = vand.u32 %v6561, 4294901760
    %6563 = vmatpush1.msra.mxu0 %v6562
    %6564 = vmatprep.subr.mxu0 0.0
    %v6565 = vand.u32 %v282, 4294901760
    %v6566 = vsub.f32 %v282, %v6565
    %v6567 = vand.u32 %v6566, 4294901760
    %v6568 = vsub.f32 %v6566, %v6567
    %v6569 = vand.u32 %v6568, 4294901760
    %6570 = vmatpush1.msra.mxu0 %v6569
    %6571 = vmatprep.subr.mxu0 0.0
    %v6572 = vand.u32 %v281, 4294901760
    %v6573 = vsub.f32 %v281, %v6572
    %v6574 = vand.u32 %v6573, 4294901760
    %v6575 = vsub.f32 %v6573, %v6574
    %v6576 = vand.u32 %v6575, 4294901760
    %6577 = vmatpush1.msra.mxu0 %v6576
    %6578 = vmatprep.subr.mxu0 0.0
    %v6579 = vand.u32 %v312, 4294901760
    %v6580 = vsub.f32 %v312, %v6579
    %v6581 = vand.u32 %v6580, 4294901760
    %v6582 = vsub.f32 %v6580, %v6581
    %v6583 = vand.u32 %v6582, 4294901760
    %6584 = vmatpush2.msra.mxu0 %v6583
    %6585 = vmatprep.subr.mxu0 0.0
    %v6586 = vand.u32 %v311, 4294901760
    %v6587 = vsub.f32 %v311, %v6586
    %v6588 = vand.u32 %v6587, 4294901760
    %v6589 = vsub.f32 %v6587, %v6588
    %v6590 = vand.u32 %v6589, 4294901760
    %6591 = vmatpush2.msra.mxu0 %v6590
    %6592 = vmatprep.subr.mxu0 0.0
    %v6593 = vand.u32 %v310, 4294901760
    %v6594 = vsub.f32 %v310, %v6593
    %v6595 = vand.u32 %v6594, 4294901760
    %v6596 = vsub.f32 %v6594, %v6595
    %v6597 = vand.u32 %v6596, 4294901760
    %6598 = vmatpush2.msra.mxu0 %v6597
    %6599 = vmatprep.subr.mxu0 0.0
    %v6600 = vand.u32 %v309, 4294901760
    %v6601 = vsub.f32 %v309, %v6600
    %v6602 = vand.u32 %v6601, 4294901760
    %v6603 = vsub.f32 %v6601, %v6602
    %v6604 = vand.u32 %v6603, 4294901760
    %6605 = vmatpush2.msra.mxu0 %v6604
    %6606 = vmatprep.subr.mxu0 0.0
    %v6607 = vand.u32 %v308, 4294901760
    %v6608 = vsub.f32 %v308, %v6607
    %v6609 = vand.u32 %v6608, 4294901760
    %v6610 = vsub.f32 %v6608, %v6609
    %v6611 = vand.u32 %v6610, 4294901760
    %6612 = vmatpush2.msra.mxu0 %v6611
    %6613 = vmatprep.subr.mxu0 0.0
    %v6614 = vand.u32 %v307, 4294901760
    %v6615 = vsub.f32 %v307, %v6614
    %v6616 = vand.u32 %v6615, 4294901760
    %v6617 = vsub.f32 %v6615, %v6616
    %v6618 = vand.u32 %v6617, 4294901760
    %6619 = vmatpush2.msra.mxu0 %v6618
    %6620 = vmatprep.subr.mxu0 0.0
    %v6621 = vand.u32 %v306, 4294901760
    %v6622 = vsub.f32 %v306, %v6621
    %v6623 = vand.u32 %v6622, 4294901760
    %v6624 = vsub.f32 %v6622, %v6623
    %v6625 = vand.u32 %v6624, 4294901760
    %6626 = vmatpush2.msra.mxu0 %v6625
    %6627 = vmatprep.subr.mxu0 0.0
    %v6628 = vand.u32 %v305, 4294901760
    %v6629 = vsub.f32 %v305, %v6628
    %v6630 = vand.u32 %v6629, 4294901760
    %v6631 = vsub.f32 %v6629, %v6630
    %v6632 = vand.u32 %v6631, 4294901760
    %6633 = vmatpush2.msra.mxu0 %v6632
    %6634 = vmatprep.subr.mxu0 0.0
    %v6635 = vand.u32 %v304, 4294901760
    %v6636 = vsub.f32 %v304, %v6635
    %v6637 = vand.u32 %v6636, 4294901760
    %v6638 = vsub.f32 %v6636, %v6637
    %v6639 = vand.u32 %v6638, 4294901760
    %6640 = vmatpush2.msra.mxu0 %v6639
    %6641 = vmatprep.subr.mxu0 0.0
    %v6642 = vand.u32 %v303, 4294901760
    %v6643 = vsub.f32 %v303, %v6642
    %v6644 = vand.u32 %v6643, 4294901760
    %v6645 = vsub.f32 %v6643, %v6644
    %v6646 = vand.u32 %v6645, 4294901760
    %6647 = vmatpush2.msra.mxu0 %v6646
    %6648 = vmatprep.subr.mxu0 0.0
    %v6649 = vand.u32 %v302, 4294901760
    %v6650 = vsub.f32 %v302, %v6649
    %v6651 = vand.u32 %v6650, 4294901760
    %v6652 = vsub.f32 %v6650, %v6651
    %v6653 = vand.u32 %v6652, 4294901760
    %6654 = vmatpush2.msra.mxu0 %v6653
    %6655 = vmatprep.subr.mxu0 0.0
    %v6656 = vand.u32 %v301, 4294901760
    %v6657 = vsub.f32 %v301, %v6656
    %v6658 = vand.u32 %v6657, 4294901760
    %v6659 = vsub.f32 %v6657, %v6658
    %v6660 = vand.u32 %v6659, 4294901760
    %6661 = vmatpush2.msra.mxu0 %v6660
    %6662 = vmatprep.subr.mxu0 0.0
    %v6663 = vand.u32 %v300, 4294901760
    %v6664 = vsub.f32 %v300, %v6663
    %v6665 = vand.u32 %v6664, 4294901760
    %v6666 = vsub.f32 %v6664, %v6665
    %v6667 = vand.u32 %v6666, 4294901760
    %6668 = vmatpush2.msra.mxu0 %v6667
    %6669 = vmatprep.subr.mxu0 0.0
    %v6670 = vand.u32 %v299, 4294901760
    %v6671 = vsub.f32 %v299, %v6670
    %v6672 = vand.u32 %v6671, 4294901760
    %v6673 = vsub.f32 %v6671, %v6672
    %v6674 = vand.u32 %v6673, 4294901760
    %6675 = vmatpush2.msra.mxu0 %v6674
    %6676 = vmatprep.subr.mxu0 0.0
    %v6677 = vand.u32 %v298, 4294901760
    %v6678 = vsub.f32 %v298, %v6677
    %v6679 = vand.u32 %v6678, 4294901760
    %v6680 = vsub.f32 %v6678, %v6679
    %v6681 = vand.u32 %v6680, 4294901760
    %6682 = vmatpush2.msra.mxu0 %v6681
    %6683 = vmatprep.subr.mxu0 0.0
    %v6684 = vand.u32 %v297, 4294901760
    %v6685 = vsub.f32 %v297, %v6684
    %v6686 = vand.u32 %v6685, 4294901760
    %v6687 = vsub.f32 %v6685, %v6686
    %v6688 = vand.u32 %v6687, 4294901760
    %6689 = vmatpush2.msra.mxu0 %v6688
    %v6690 = vand.u32 %v56, 4294901760
    %6691 = vmatprep.mubr.f32.mxu0 %v6690
    %v6692 = vand.u32 %v55, 4294901760
    %6693 = vmatmul.mubr.f32.gmra.mxu0 %v6692
    %v6694 = vpop.f32.mrf.mxu0
    %v6695 = vadd.f32 %v6463, %v6694
    %v6696 = vpop.f32.mrf.mxu0
    %6697 = vdwg.mxu0
    %6698 = vmatprep.subr.mxu0 0.0
    %v6699 = vand.u32 %v296, 4294901760
    %v6700 = vsub.f32 %v296, %v6699
    %6701 = vmatpush1.msra.mxu0 %v6700
    %6702 = vmatprep.subr.mxu0 0.0
    %v6703 = vand.u32 %v295, 4294901760
    %v6704 = vsub.f32 %v295, %v6703
    %6705 = vmatpush1.msra.mxu0 %v6704
    %6706 = vmatprep.subr.mxu0 0.0
    %v6707 = vand.u32 %v294, 4294901760
    %v6708 = vsub.f32 %v294, %v6707
    %6709 = vmatpush1.msra.mxu0 %v6708
    %6710 = vmatprep.subr.mxu0 0.0
    %v6711 = vand.u32 %v293, 4294901760
    %v6712 = vsub.f32 %v293, %v6711
    %6713 = vmatpush1.msra.mxu0 %v6712
    %6714 = vmatprep.subr.mxu0 0.0
    %v6715 = vand.u32 %v292, 4294901760
    %v6716 = vsub.f32 %v292, %v6715
    %6717 = vmatpush1.msra.mxu0 %v6716
    %6718 = vmatprep.subr.mxu0 0.0
    %v6719 = vand.u32 %v291, 4294901760
    %v6720 = vsub.f32 %v291, %v6719
    %6721 = vmatpush1.msra.mxu0 %v6720
    %6722 = vmatprep.subr.mxu0 0.0
    %v6723 = vand.u32 %v290, 4294901760
    %v6724 = vsub.f32 %v290, %v6723
    %6725 = vmatpush1.msra.mxu0 %v6724
    %6726 = vmatprep.subr.mxu0 0.0
    %v6727 = vand.u32 %v289, 4294901760
    %v6728 = vsub.f32 %v289, %v6727
    %6729 = vmatpush1.msra.mxu0 %v6728
    %6730 = vmatprep.subr.mxu0 0.0
    %v6731 = vand.u32 %v288, 4294901760
    %v6732 = vsub.f32 %v288, %v6731
    %6733 = vmatpush1.msra.mxu0 %v6732
    %6734 = vmatprep.subr.mxu0 0.0
    %v6735 = vand.u32 %v287, 4294901760
    %v6736 = vsub.f32 %v287, %v6735
    %6737 = vmatpush1.msra.mxu0 %v6736
    %6738 = vmatprep.subr.mxu0 0.0
    %v6739 = vand.u32 %v286, 4294901760
    %v6740 = vsub.f32 %v286, %v6739
    %6741 = vmatpush1.msra.mxu0 %v6740
    %6742 = vmatprep.subr.mxu0 0.0
    %v6743 = vand.u32 %v285, 4294901760
    %v6744 = vsub.f32 %v285, %v6743
    %6745 = vmatpush1.msra.mxu0 %v6744
    %6746 = vmatprep.subr.mxu0 0.0
    %v6747 = vand.u32 %v284, 4294901760
    %v6748 = vsub.f32 %v284, %v6747
    %6749 = vmatpush1.msra.mxu0 %v6748
    %6750 = vmatprep.subr.mxu0 0.0
    %v6751 = vand.u32 %v283, 4294901760
    %v6752 = vsub.f32 %v283, %v6751
    %6753 = vmatpush1.msra.mxu0 %v6752
    %6754 = vmatprep.subr.mxu0 0.0
    %v6755 = vand.u32 %v282, 4294901760
    %v6756 = vsub.f32 %v282, %v6755
    %6757 = vmatpush1.msra.mxu0 %v6756
    %6758 = vmatprep.subr.mxu0 0.0
    %v6759 = vand.u32 %v281, 4294901760
    %v6760 = vsub.f32 %v281, %v6759
    %6761 = vmatpush1.msra.mxu0 %v6760
    %6762 = vmatprep.subr.mxu0 0.0
    %v6763 = vand.u32 %v312, 4294901760
    %v6764 = vsub.f32 %v312, %v6763
    %6765 = vmatpush2.msra.mxu0 %v6764
    %6766 = vmatprep.subr.mxu0 0.0
    %v6767 = vand.u32 %v311, 4294901760
    %v6768 = vsub.f32 %v311, %v6767
    %6769 = vmatpush2.msra.mxu0 %v6768
    %6770 = vmatprep.subr.mxu0 0.0
    %v6771 = vand.u32 %v310, 4294901760
    %v6772 = vsub.f32 %v310, %v6771
    %6773 = vmatpush2.msra.mxu0 %v6772
    %6774 = vmatprep.subr.mxu0 0.0
    %v6775 = vand.u32 %v309, 4294901760
    %v6776 = vsub.f32 %v309, %v6775
    %6777 = vmatpush2.msra.mxu0 %v6776
    %6778 = vmatprep.subr.mxu0 0.0
    %v6779 = vand.u32 %v308, 4294901760
    %v6780 = vsub.f32 %v308, %v6779
    %6781 = vmatpush2.msra.mxu0 %v6780
    %6782 = vmatprep.subr.mxu0 0.0
    %v6783 = vand.u32 %v307, 4294901760
    %v6784 = vsub.f32 %v307, %v6783
    %6785 = vmatpush2.msra.mxu0 %v6784
    %6786 = vmatprep.subr.mxu0 0.0
    %v6787 = vand.u32 %v306, 4294901760
    %v6788 = vsub.f32 %v306, %v6787
    %6789 = vmatpush2.msra.mxu0 %v6788
    %6790 = vmatprep.subr.mxu0 0.0
    %v6791 = vand.u32 %v305, 4294901760
    %v6792 = vsub.f32 %v305, %v6791
    %6793 = vmatpush2.msra.mxu0 %v6792
    %6794 = vmatprep.subr.mxu0 0.0
    %v6795 = vand.u32 %v304, 4294901760
    %v6796 = vsub.f32 %v304, %v6795
    %6797 = vmatpush2.msra.mxu0 %v6796
    %6798 = vmatprep.subr.mxu0 0.0
    %v6799 = vand.u32 %v303, 4294901760
    %v6800 = vsub.f32 %v303, %v6799
    %6801 = vmatpush2.msra.mxu0 %v6800
    %6802 = vmatprep.subr.mxu0 0.0
    %v6803 = vand.u32 %v302, 4294901760
    %v6804 = vsub.f32 %v302, %v6803
    %6805 = vmatpush2.msra.mxu0 %v6804
    %6806 = vmatprep.subr.mxu0 0.0
    %v6807 = vand.u32 %v301, 4294901760
    %v6808 = vsub.f32 %v301, %v6807
    %6809 = vmatpush2.msra.mxu0 %v6808
    %6810 = vmatprep.subr.mxu0 0.0
    %v6811 = vand.u32 %v300, 4294901760
    %v6812 = vsub.f32 %v300, %v6811
    %6813 = vmatpush2.msra.mxu0 %v6812
    %6814 = vmatprep.subr.mxu0 0.0
    %v6815 = vand.u32 %v299, 4294901760
    %v6816 = vsub.f32 %v299, %v6815
    %6817 = vmatpush2.msra.mxu0 %v6816
    %6818 = vmatprep.subr.mxu0 0.0
    %v6819 = vand.u32 %v298, 4294901760
    %v6820 = vsub.f32 %v298, %v6819
    %6821 = vmatpush2.msra.mxu0 %v6820
    %6822 = vmatprep.subr.mxu0 0.0
    %v6823 = vand.u32 %v297, 4294901760
    %v6824 = vsub.f32 %v297, %v6823
    %6825 = vmatpush2.msra.mxu0 %v6824
    %v6826 = vand.u32 %v56, 4294901760
    %v6827 = vsub.f32 %v56, %v6826
    %6828 = vmatprep.mubr.f32.mxu0 %v6827
    %v6829 = vand.u32 %v55, 4294901760
    %v6830 = vsub.f32 %v55, %v6829
    %6831 = vmatmul.mubr.f32.gmra.mxu0 %v6830
    %v6832 = vpop.f32.mrf.mxu0
    %v6833 = vadd.f32 %v6695, %v6832
    %v6834 = vpop.f32.mrf.mxu0
    %6835 = vdwg.mxu0
    %6836 = vmatprep.subr.mxu0 0.0
    %v6837 = vand.u32 %v296, 4294901760
    %6838 = vmatpush1.msra.mxu0 %v6837
    %6839 = vmatprep.subr.mxu0 0.0
    %v6840 = vand.u32 %v295, 4294901760
    %6841 = vmatpush1.msra.mxu0 %v6840
    %6842 = vmatprep.subr.mxu0 0.0
    %v6843 = vand.u32 %v294, 4294901760
    %6844 = vmatpush1.msra.mxu0 %v6843
    %6845 = vmatprep.subr.mxu0 0.0
    %v6846 = vand.u32 %v293, 4294901760
    %6847 = vmatpush1.msra.mxu0 %v6846
    %6848 = vmatprep.subr.mxu0 0.0
    %v6849 = vand.u32 %v292, 4294901760
    %6850 = vmatpush1.msra.mxu0 %v6849
    %6851 = vmatprep.subr.mxu0 0.0
    %v6852 = vand.u32 %v291, 4294901760
    %6853 = vmatpush1.msra.mxu0 %v6852
    %6854 = vmatprep.subr.mxu0 0.0
    %v6855 = vand.u32 %v290, 4294901760
    %6856 = vmatpush1.msra.mxu0 %v6855
    %6857 = vmatprep.subr.mxu0 0.0
    %v6858 = vand.u32 %v289, 4294901760
    %6859 = vmatpush1.msra.mxu0 %v6858
    %6860 = vmatprep.subr.mxu0 0.0
    %v6861 = vand.u32 %v288, 4294901760
    %6862 = vmatpush1.msra.mxu0 %v6861
    %6863 = vmatprep.subr.mxu0 0.0
    %v6864 = vand.u32 %v287, 4294901760
    %6865 = vmatpush1.msra.mxu0 %v6864
    %6866 = vmatprep.subr.mxu0 0.0
    %v6867 = vand.u32 %v286, 4294901760
    %6868 = vmatpush1.msra.mxu0 %v6867
    %6869 = vmatprep.subr.mxu0 0.0
    %v6870 = vand.u32 %v285, 4294901760
    %6871 = vmatpush1.msra.mxu0 %v6870
    %6872 = vmatprep.subr.mxu0 0.0
    %v6873 = vand.u32 %v284, 4294901760
    %6874 = vmatpush1.msra.mxu0 %v6873
    %6875 = vmatprep.subr.mxu0 0.0
    %v6876 = vand.u32 %v283, 4294901760
    %6877 = vmatpush1.msra.mxu0 %v6876
    %6878 = vmatprep.subr.mxu0 0.0
    %v6879 = vand.u32 %v282, 4294901760
    %6880 = vmatpush1.msra.mxu0 %v6879
    %6881 = vmatprep.subr.mxu0 0.0
    %v6882 = vand.u32 %v281, 4294901760
    %6883 = vmatpush1.msra.mxu0 %v6882
    %6884 = vmatprep.subr.mxu0 0.0
    %v6885 = vand.u32 %v312, 4294901760
    %6886 = vmatpush2.msra.mxu0 %v6885
    %6887 = vmatprep.subr.mxu0 0.0
    %v6888 = vand.u32 %v311, 4294901760
    %6889 = vmatpush2.msra.mxu0 %v6888
    %6890 = vmatprep.subr.mxu0 0.0
    %v6891 = vand.u32 %v310, 4294901760
    %6892 = vmatpush2.msra.mxu0 %v6891
    %6893 = vmatprep.subr.mxu0 0.0
    %v6894 = vand.u32 %v309, 4294901760
    %6895 = vmatpush2.msra.mxu0 %v6894
    %6896 = vmatprep.subr.mxu0 0.0
    %v6897 = vand.u32 %v308, 4294901760
    %6898 = vmatpush2.msra.mxu0 %v6897
    %6899 = vmatprep.subr.mxu0 0.0
    %v6900 = vand.u32 %v307, 4294901760
    %6901 = vmatpush2.msra.mxu0 %v6900
    %6902 = vmatprep.subr.mxu0 0.0
    %v6903 = vand.u32 %v306, 4294901760
    %6904 = vmatpush2.msra.mxu0 %v6903
    %6905 = vmatprep.subr.mxu0 0.0
    %v6906 = vand.u32 %v305, 4294901760
    %6907 = vmatpush2.msra.mxu0 %v6906
    %6908 = vmatprep.subr.mxu0 0.0
    %v6909 = vand.u32 %v304, 4294901760
    %6910 = vmatpush2.msra.mxu0 %v6909
    %6911 = vmatprep.subr.mxu0 0.0
    %v6912 = vand.u32 %v303, 4294901760
    %6913 = vmatpush2.msra.mxu0 %v6912
    %6914 = vmatprep.subr.mxu0 0.0
    %v6915 = vand.u32 %v302, 4294901760
    %6916 = vmatpush2.msra.mxu0 %v6915
    %6917 = vmatprep.subr.mxu0 0.0
    %v6918 = vand.u32 %v301, 4294901760
    %6919 = vmatpush2.msra.mxu0 %v6918
    %6920 = vmatprep.subr.mxu0 0.0
    %v6921 = vand.u32 %v300, 4294901760
    %6922 = vmatpush2.msra.mxu0 %v6921
    %6923 = vmatprep.subr.mxu0 0.0
    %v6924 = vand.u32 %v299, 4294901760
    %6925 = vmatpush2.msra.mxu0 %v6924
    %6926 = vmatprep.subr.mxu0 0.0
    %v6927 = vand.u32 %v298, 4294901760
    %6928 = vmatpush2.msra.mxu0 %v6927
    %6929 = vmatprep.subr.mxu0 0.0
    %v6930 = vand.u32 %v297, 4294901760
    %6931 = vmatpush2.msra.mxu0 %v6930
    %v6932 = vand.u32 %v56, 4294901760
    %v6933 = vsub.f32 %v56, %v6932
    %v6934 = vand.u32 %v6933, 4294901760
    %6935 = vmatprep.mubr.f32.mxu0 %v6934
    %v6936 = vand.u32 %v55, 4294901760
    %v6937 = vsub.f32 %v55, %v6936
    %v6938 = vand.u32 %v6937, 4294901760
    %6939 = vmatmul.mubr.f32.gmra.mxu0 %v6938
    %v6940 = vpop.f32.mrf.mxu0
    %v6941 = vadd.f32 %v6833, %v6940
    %v6942 = vpop.f32.mrf.mxu0
    %6943 = vdwg.mxu0
    %6944 = vmatprep.subr.mxu0 0.0
    %v6945 = vand.u32 %v296, 4294901760
    %v6946 = vsub.f32 %v296, %v6945
    %v6947 = vand.u32 %v6946, 4294901760
    %6948 = vmatpush1.msra.mxu0 %v6947
    %6949 = vmatprep.subr.mxu0 0.0
    %v6950 = vand.u32 %v295, 4294901760
    %v6951 = vsub.f32 %v295, %v6950
    %v6952 = vand.u32 %v6951, 4294901760
    %6953 = vmatpush1.msra.mxu0 %v6952
    %6954 = vmatprep.subr.mxu0 0.0
    %v6955 = vand.u32 %v294, 4294901760
    %v6956 = vsub.f32 %v294, %v6955
    %v6957 = vand.u32 %v6956, 4294901760
    %6958 = vmatpush1.msra.mxu0 %v6957
    %6959 = vmatprep.subr.mxu0 0.0
    %v6960 = vand.u32 %v293, 4294901760
    %v6961 = vsub.f32 %v293, %v6960
    %v6962 = vand.u32 %v6961, 4294901760
    %6963 = vmatpush1.msra.mxu0 %v6962
    %6964 = vmatprep.subr.mxu0 0.0
    %v6965 = vand.u32 %v292, 4294901760
    %v6966 = vsub.f32 %v292, %v6965
    %v6967 = vand.u32 %v6966, 4294901760
    %6968 = vmatpush1.msra.mxu0 %v6967
    %6969 = vmatprep.subr.mxu0 0.0
    %v6970 = vand.u32 %v291, 4294901760
    %v6971 = vsub.f32 %v291, %v6970
    %v6972 = vand.u32 %v6971, 4294901760
    %6973 = vmatpush1.msra.mxu0 %v6972
    %6974 = vmatprep.subr.mxu0 0.0
    %v6975 = vand.u32 %v290, 4294901760
    %v6976 = vsub.f32 %v290, %v6975
    %v6977 = vand.u32 %v6976, 4294901760
    %6978 = vmatpush1.msra.mxu0 %v6977
    %6979 = vmatprep.subr.mxu0 0.0
    %v6980 = vand.u32 %v289, 4294901760
    %v6981 = vsub.f32 %v289, %v6980
    %v6982 = vand.u32 %v6981, 4294901760
    %6983 = vmatpush1.msra.mxu0 %v6982
    %6984 = vmatprep.subr.mxu0 0.0
    %v6985 = vand.u32 %v288, 4294901760
    %v6986 = vsub.f32 %v288, %v6985
    %v6987 = vand.u32 %v6986, 4294901760
    %6988 = vmatpush1.msra.mxu0 %v6987
    %6989 = vmatprep.subr.mxu0 0.0
    %v6990 = vand.u32 %v287, 4294901760
    %v6991 = vsub.f32 %v287, %v6990
    %v6992 = vand.u32 %v6991, 4294901760
    %6993 = vmatpush1.msra.mxu0 %v6992
    %6994 = vmatprep.subr.mxu0 0.0
    %v6995 = vand.u32 %v286, 4294901760
    %v6996 = vsub.f32 %v286, %v6995
    %v6997 = vand.u32 %v6996, 4294901760
    %6998 = vmatpush1.msra.mxu0 %v6997
    %6999 = vmatprep.subr.mxu0 0.0
    %v7000 = vand.u32 %v285, 4294901760
    %v7001 = vsub.f32 %v285, %v7000
    %v7002 = vand.u32 %v7001, 4294901760
    %7003 = vmatpush1.msra.mxu0 %v7002
    %7004 = vmatprep.subr.mxu0 0.0
    %v7005 = vand.u32 %v284, 4294901760
    %v7006 = vsub.f32 %v284, %v7005
    %v7007 = vand.u32 %v7006, 4294901760
    %7008 = vmatpush1.msra.mxu0 %v7007
    %7009 = vmatprep.subr.mxu0 0.0
    %v7010 = vand.u32 %v283, 4294901760
    %v7011 = vsub.f32 %v283, %v7010
    %v7012 = vand.u32 %v7011, 4294901760
    %7013 = vmatpush1.msra.mxu0 %v7012
    %7014 = vmatprep.subr.mxu0 0.0
    %v7015 = vand.u32 %v282, 4294901760
    %v7016 = vsub.f32 %v282, %v7015
    %v7017 = vand.u32 %v7016, 4294901760
    %7018 = vmatpush1.msra.mxu0 %v7017
    %7019 = vmatprep.subr.mxu0 0.0
    %v7020 = vand.u32 %v281, 4294901760
    %v7021 = vsub.f32 %v281, %v7020
    %v7022 = vand.u32 %v7021, 4294901760
    %7023 = vmatpush1.msra.mxu0 %v7022
    %7024 = vmatprep.subr.mxu0 0.0
    %v7025 = vand.u32 %v312, 4294901760
    %v7026 = vsub.f32 %v312, %v7025
    %v7027 = vand.u32 %v7026, 4294901760
    %7028 = vmatpush2.msra.mxu0 %v7027
    %7029 = vmatprep.subr.mxu0 0.0
    %v7030 = vand.u32 %v311, 4294901760
    %v7031 = vsub.f32 %v311, %v7030
    %v7032 = vand.u32 %v7031, 4294901760
    %7033 = vmatpush2.msra.mxu0 %v7032
    %7034 = vmatprep.subr.mxu0 0.0
    %v7035 = vand.u32 %v310, 4294901760
    %v7036 = vsub.f32 %v310, %v7035
    %v7037 = vand.u32 %v7036, 4294901760
    %7038 = vmatpush2.msra.mxu0 %v7037
    %7039 = vmatprep.subr.mxu0 0.0
    %v7040 = vand.u32 %v309, 4294901760
    %v7041 = vsub.f32 %v309, %v7040
    %v7042 = vand.u32 %v7041, 4294901760
    %7043 = vmatpush2.msra.mxu0 %v7042
    %7044 = vmatprep.subr.mxu0 0.0
    %v7045 = vand.u32 %v308, 4294901760
    %v7046 = vsub.f32 %v308, %v7045
    %v7047 = vand.u32 %v7046, 4294901760
    %7048 = vmatpush2.msra.mxu0 %v7047
    %7049 = vmatprep.subr.mxu0 0.0
    %v7050 = vand.u32 %v307, 4294901760
    %v7051 = vsub.f32 %v307, %v7050
    %v7052 = vand.u32 %v7051, 4294901760
    %7053 = vmatpush2.msra.mxu0 %v7052
    %7054 = vmatprep.subr.mxu0 0.0
    %v7055 = vand.u32 %v306, 4294901760
    %v7056 = vsub.f32 %v306, %v7055
    %v7057 = vand.u32 %v7056, 4294901760
    %7058 = vmatpush2.msra.mxu0 %v7057
    %7059 = vmatprep.subr.mxu0 0.0
    %v7060 = vand.u32 %v305, 4294901760
    %v7061 = vsub.f32 %v305, %v7060
    %v7062 = vand.u32 %v7061, 4294901760
    %7063 = vmatpush2.msra.mxu0 %v7062
    %7064 = vmatprep.subr.mxu0 0.0
    %v7065 = vand.u32 %v304, 4294901760
    %v7066 = vsub.f32 %v304, %v7065
    %v7067 = vand.u32 %v7066, 4294901760
    %7068 = vmatpush2.msra.mxu0 %v7067
    %7069 = vmatprep.subr.mxu0 0.0
    %v7070 = vand.u32 %v303, 4294901760
    %v7071 = vsub.f32 %v303, %v7070
    %v7072 = vand.u32 %v7071, 4294901760
    %7073 = vmatpush2.msra.mxu0 %v7072
    %7074 = vmatprep.subr.mxu0 0.0
    %v7075 = vand.u32 %v302, 4294901760
    %v7076 = vsub.f32 %v302, %v7075
    %v7077 = vand.u32 %v7076, 4294901760
    %7078 = vmatpush2.msra.mxu0 %v7077
    %7079 = vmatprep.subr.mxu0 0.0
    %v7080 = vand.u32 %v301, 4294901760
    %v7081 = vsub.f32 %v301, %v7080
    %v7082 = vand.u32 %v7081, 4294901760
    %7083 = vmatpush2.msra.mxu0 %v7082
    %7084 = vmatprep.subr.mxu0 0.0
    %v7085 = vand.u32 %v300, 4294901760
    %v7086 = vsub.f32 %v300, %v7085
    %v7087 = vand.u32 %v7086, 4294901760
    %7088 = vmatpush2.msra.mxu0 %v7087
    %7089 = vmatprep.subr.mxu0 0.0
    %v7090 = vand.u32 %v299, 4294901760
    %v7091 = vsub.f32 %v299, %v7090
    %v7092 = vand.u32 %v7091, 4294901760
    %7093 = vmatpush2.msra.mxu0 %v7092
    %7094 = vmatprep.subr.mxu0 0.0
    %v7095 = vand.u32 %v298, 4294901760
    %v7096 = vsub.f32 %v298, %v7095
    %v7097 = vand.u32 %v7096, 4294901760
    %7098 = vmatpush2.msra.mxu0 %v7097
    %7099 = vmatprep.subr.mxu0 0.0
    %v7100 = vand.u32 %v297, 4294901760
    %v7101 = vsub.f32 %v297, %v7100
    %v7102 = vand.u32 %v7101, 4294901760
    %7103 = vmatpush2.msra.mxu0 %v7102
    %v7104 = vand.u32 %v56, 4294901760
    %7105 = vmatprep.mubr.f32.mxu0 %v7104
    %v7106 = vand.u32 %v55, 4294901760
    %7107 = vmatmul.mubr.f32.gmra.mxu0 %v7106
    %v7108 = vpop.f32.mrf.mxu0
    %v7109 = vadd.f32 %v6941, %v7108
    %v7110 = vpop.f32.mrf.mxu0
    %7111 = vdwg.mxu0
    %7112 = vmatprep.subr.mxu0 0.0
    %v7113 = vand.u32 %v296, 4294901760
    %7114 = vmatpush1.msra.mxu0 %v7113
    %7115 = vmatprep.subr.mxu0 0.0
    %v7116 = vand.u32 %v295, 4294901760
    %7117 = vmatpush1.msra.mxu0 %v7116
    %7118 = vmatprep.subr.mxu0 0.0
    %v7119 = vand.u32 %v294, 4294901760
    %7120 = vmatpush1.msra.mxu0 %v7119
    %7121 = vmatprep.subr.mxu0 0.0
    %v7122 = vand.u32 %v293, 4294901760
    %7123 = vmatpush1.msra.mxu0 %v7122
    %7124 = vmatprep.subr.mxu0 0.0
    %v7125 = vand.u32 %v292, 4294901760
    %7126 = vmatpush1.msra.mxu0 %v7125
    %7127 = vmatprep.subr.mxu0 0.0
    %v7128 = vand.u32 %v291, 4294901760
    %7129 = vmatpush1.msra.mxu0 %v7128
    %7130 = vmatprep.subr.mxu0 0.0
    %v7131 = vand.u32 %v290, 4294901760
    %7132 = vmatpush1.msra.mxu0 %v7131
    %7133 = vmatprep.subr.mxu0 0.0
    %v7134 = vand.u32 %v289, 4294901760
    %7135 = vmatpush1.msra.mxu0 %v7134
    %7136 = vmatprep.subr.mxu0 0.0
    %v7137 = vand.u32 %v288, 4294901760
    %7138 = vmatpush1.msra.mxu0 %v7137
    %7139 = vmatprep.subr.mxu0 0.0
    %v7140 = vand.u32 %v287, 4294901760
    %7141 = vmatpush1.msra.mxu0 %v7140
    %7142 = vmatprep.subr.mxu0 0.0
    %v7143 = vand.u32 %v286, 4294901760
    %7144 = vmatpush1.msra.mxu0 %v7143
    %7145 = vmatprep.subr.mxu0 0.0
    %v7146 = vand.u32 %v285, 4294901760
    %7147 = vmatpush1.msra.mxu0 %v7146
    %7148 = vmatprep.subr.mxu0 0.0
    %v7149 = vand.u32 %v284, 4294901760
    %7150 = vmatpush1.msra.mxu0 %v7149
    %7151 = vmatprep.subr.mxu0 0.0
    %v7152 = vand.u32 %v283, 4294901760
    %7153 = vmatpush1.msra.mxu0 %v7152
    %7154 = vmatprep.subr.mxu0 0.0
    %v7155 = vand.u32 %v282, 4294901760
    %7156 = vmatpush1.msra.mxu0 %v7155
    %7157 = vmatprep.subr.mxu0 0.0
    %v7158 = vand.u32 %v281, 4294901760
    %7159 = vmatpush1.msra.mxu0 %v7158
    %7160 = vmatprep.subr.mxu0 0.0
    %v7161 = vand.u32 %v312, 4294901760
    %7162 = vmatpush2.msra.mxu0 %v7161
    %7163 = vmatprep.subr.mxu0 0.0
    %v7164 = vand.u32 %v311, 4294901760
    %7165 = vmatpush2.msra.mxu0 %v7164
    %7166 = vmatprep.subr.mxu0 0.0
    %v7167 = vand.u32 %v310, 4294901760
    %7168 = vmatpush2.msra.mxu0 %v7167
    %7169 = vmatprep.subr.mxu0 0.0
    %v7170 = vand.u32 %v309, 4294901760
    %7171 = vmatpush2.msra.mxu0 %v7170
    %7172 = vmatprep.subr.mxu0 0.0
    %v7173 = vand.u32 %v308, 4294901760
    %7174 = vmatpush2.msra.mxu0 %v7173
    %7175 = vmatprep.subr.mxu0 0.0
    %v7176 = vand.u32 %v307, 4294901760
    %7177 = vmatpush2.msra.mxu0 %v7176
    %7178 = vmatprep.subr.mxu0 0.0
    %v7179 = vand.u32 %v306, 4294901760
    %7180 = vmatpush2.msra.mxu0 %v7179
    %7181 = vmatprep.subr.mxu0 0.0
    %v7182 = vand.u32 %v305, 4294901760
    %7183 = vmatpush2.msra.mxu0 %v7182
    %7184 = vmatprep.subr.mxu0 0.0
    %v7185 = vand.u32 %v304, 4294901760
    %7186 = vmatpush2.msra.mxu0 %v7185
    %7187 = vmatprep.subr.mxu0 0.0
    %v7188 = vand.u32 %v303, 4294901760
    %7189 = vmatpush2.msra.mxu0 %v7188
    %7190 = vmatprep.subr.mxu0 0.0
    %v7191 = vand.u32 %v302, 4294901760
    %7192 = vmatpush2.msra.mxu0 %v7191
    %7193 = vmatprep.subr.mxu0 0.0
    %v7194 = vand.u32 %v301, 4294901760
    %7195 = vmatpush2.msra.mxu0 %v7194
    %7196 = vmatprep.subr.mxu0 0.0
    %v7197 = vand.u32 %v300, 4294901760
    %7198 = vmatpush2.msra.mxu0 %v7197
    %7199 = vmatprep.subr.mxu0 0.0
    %v7200 = vand.u32 %v299, 4294901760
    %7201 = vmatpush2.msra.mxu0 %v7200
    %7202 = vmatprep.subr.mxu0 0.0
    %v7203 = vand.u32 %v298, 4294901760
    %7204 = vmatpush2.msra.mxu0 %v7203
    %7205 = vmatprep.subr.mxu0 0.0
    %v7206 = vand.u32 %v297, 4294901760
    %7207 = vmatpush2.msra.mxu0 %v7206
    %v7208 = vand.u32 %v56, 4294901760
    %7209 = vmatprep.mubr.f32.mxu0 %v7208
    %v7210 = vand.u32 %v55, 4294901760
    %7211 = vmatmul.mubr.f32.gmra.mxu0 %v7210
    %v7212 = vpop.f32.mrf.mxu0
    %v7213 = vadd.f32 %v7109, %v7212
    %v7214 = vpop.f32.mrf.mxu0
    %7215 = vdwg.mxu0
    %v7216 = vtanh.pop %v7213
    %7217 = vst [vmem:[#allocation7] sm:$0xff] %v7216
    // Predicated region
    $region22: #{tpu_custom_call.1} parent=1 // pred_check
      _
    $region23: #{tpu_custom_call.1} parent=1 // pred_check_branch
      %7219 = sbr.rel (0) target = $region25
    $region24: #{tpu_custom_call.1} parent=1 // pred_region
      %s7221 = ssub.s32 128, 128
      %7222 = vsyncadd [#allocation4], %s7221
      %s7224 = sshll.u32 [#allocation7], 4
      %s7225 = int_to_ptr.vmem [resolvable:$true] %s7224
      %7227 = dma.vmem_to_hbm [thread:$0]  %s7225, 128, %s3, [#allocation4]
    $region25: #{tpu_custom_call.1} parent=1 // pred_fallthru
      _
    // Predicated region
    $region26: #{tpu_custom_call.1} parent=1 // pred_check
      _
    $region27: #{tpu_custom_call.1} parent=1 // pred_check_branch
      %7229 = sbr.rel (0) target = $region29
    $region28: #{tpu_custom_call.1} parent=1 // pred_region
      %7230 = dma.done [#allocation4], 128
    $region29: #{tpu_custom_call.1} parent=1 // pred_fallthru
      _
    %7231 = vsyncpa [#allocation3], 1
    %7232 = vsyncpa [#allocation6], 1
    %7233 = vsyncpa [#allocation4], 1

</llo_original>
